<compile_context>
chip_gen: v6e
topology: v6e:2x2x1
jax: 0.10.0
libtpu: 0.0.40
codegen_flags: <defaults>
</compile_context>

<pallas_src>
import functools

import numpy as np
import jax
import jax.numpy as jnp
from jax.experimental import pallas as pl
from jax.experimental.pallas import tpu as pltpu


# ------------------------------- 1. PillarVFE ---------------------------------

def _vfe_kernel(x_ref, w_ref, s_ref, b_ref, o_ref, *, npts, ptile, cin):
    # x_ref: (npts, ptile, cin) bf16, point-major -> one tall matmul feeds the MXU.
    x = x_ref[...].reshape(npts * ptile, cin)
    y = jnp.dot(x, w_ref[...], preferred_element_type=jnp.float32)
    y = jnp.maximum(y * s_ref[...] + b_ref[...], 0.0)
    acc = y[0:ptile, :]
    for n in range(1, npts):                       # max over points: cheap VPU work
        acc = jnp.maximum(acc, y[n * ptile:(n + 1) * ptile, :])
    o_ref[...] = acc


def vfe_forward(voxel_feats, w, scale, shift):
    P, NPTS, Cin = voxel_feats.shape
    Cout = w.shape[1]
    ptile = P // 2 if (P % 2 == 0 and (P // 2) % 8 == 0) else P
    xT = jnp.transpose(voxel_feats, (1, 0, 2)).astype(jnp.bfloat16)    # (NPTS, P, Cin)
    kern = functools.partial(_vfe_kernel, npts=NPTS, ptile=ptile, cin=Cin)
    return pl.pallas_call(
        kern,
        out_shape=jax.ShapeDtypeStruct((P, Cout), jnp.float32),
        grid=(P // ptile,),
        in_specs=[
            pl.BlockSpec((NPTS, ptile, Cin), lambda i: (0, i, 0)),
            pl.BlockSpec((Cin, Cout), lambda i: (0, 0)),
            pl.BlockSpec((1, Cout), lambda i: (0, 0)),
            pl.BlockSpec((1, Cout), lambda i: (0, 0)),
        ],
        out_specs=pl.BlockSpec((ptile, Cout), lambda i: (i, 0)),
        compiler_params=pltpu.CompilerParams(dimension_semantics=("parallel",)),
    )(xT, w, scale, shift)


# --------------------------- 2. PointPillarScatter -----------------------------

def _scatter_kernel(idx_ref, pf_ref, o_ref):
    # idx_ref: (P,) int32 in SMEM (scalar prefetch); pf_ref: (P, C); o_ref: (B*ny*nx, C)
    o_ref[...] = jnp.zeros_like(o_ref)
    npillars = pf_ref.shape[0]

    def body(p, carry):
        o_ref[pl.ds(idx_ref[p], 1), :] = pf_ref[pl.ds(p, 1), :]
        return carry

    jax.lax.fori_loop(0, npillars, body, 0)


def scatter_to_bev(pillar_feats, lin_idx, n_cells):
    P, C = pillar_feats.shape
    return pl.pallas_call(
        _scatter_kernel,
        out_shape=jax.ShapeDtypeStruct((n_cells, C), jnp.float32),
        grid_spec=pltpu.PrefetchScalarGridSpec(
            num_scalar_prefetch=1,
            grid=(1,),
            in_specs=[pl.BlockSpec((P, C), lambda i, idx: (0, 0))],
            out_specs=pl.BlockSpec((n_cells, C), lambda i, idx: (0, 0)),
        ),
    )(lin_idx, pillar_feats)


# ----------------------- 3. Conv3x3 + BN + ReLU (fused) ------------------------

def _conv3x3_kernel(*args, stride, Ho, Wo, Cin, Cout):
    nph = stride * stride
    phase_refs = args[:nph]
    w_ref, s_ref, b_ref, o_ref = args[nph:]
    xs = [r[0] for r in phase_refs]                 # VMEM-resident padded input phases
    acc = jnp.zeros((Ho * Wo, Cout), jnp.float32)
    for kh in range(3):
        for kw in range(3):
            x = xs[(kh % stride) * stride + (kw % stride)]
            d0, d1 = kh // stride, kw // stride
            tile = x[d0:d0 + Ho, d1:d1 + Wo, :].reshape(Ho * Wo, Cin)
            acc = acc + jnp.dot(tile.astype(jnp.bfloat16), w_ref[kh * 3 + kw],
                                preferred_element_type=jnp.float32)
    y = jnp.maximum(acc * s_ref[...] + b_ref[...], 0.0)
    o_ref[0] = y.reshape(Ho, Wo, Cout)


def conv3x3_bn_relu(x, w9, scale, shift, stride):
    """ZeroPad2d(1) + Conv2d(3x3, stride) + folded BatchNorm + ReLU, NHWC."""
    B, H, W, Cin = x.shape
    Cout = w9.shape[-1]
    Ho = (H + 2 - 3) // stride + 1
    Wo = (W + 2 - 3) // stride + 1
    xp = jnp.pad(x, ((0, 0), (1, 1), (1, 1), (0, 0)))
    # phase decomposition keeps input traffic at 1x (vs 9x for im2col materialization)
    phases = [xp[:, ph::stride, pw::stride, :]
              for ph in range(stride) for pw in range(stride)]
    kern = functools.partial(_conv3x3_kernel, stride=stride,
                             Ho=Ho, Wo=Wo, Cin=Cin, Cout=Cout)
    in_specs = [pl.BlockSpec((1,) + p.shape[1:], lambda b: (b, 0, 0, 0))
                for p in phases]
    in_specs += [
        pl.BlockSpec(w9.shape, lambda b: (0, 0, 0)),
        pl.BlockSpec((1, Cout), lambda b: (0, 0)),
        pl.BlockSpec((1, Cout), lambda b: (0, 0)),
    ]
    return pl.pallas_call(
        kern,
        out_shape=jax.ShapeDtypeStruct((B, Ho, Wo, Cout), jnp.float32),
        grid=(B,),
        in_specs=in_specs,
        out_specs=pl.BlockSpec((1, Ho, Wo, Cout), lambda b: (b, 0, 0, 0)),
        compiler_params=pltpu.CompilerParams(dimension_semantics=("parallel",)),
    )(*phases, w9, scale, shift)


# --------------------- 4. Deblocks + AnchorHead (fused) ------------------------

def _deblock_head_kernel(x0g_ref, x1f_ref, d0w_ref, d0s_ref, d0b_ref,
                         d1w_ref, d1s_ref, d1b_ref,
                         wh0_ref, wh1_ref, hb_ref, o_ref):
    x1f = x1f_ref[0]                                  # (Hh*Wh, C1) bf16
    d0w = d0w_ref[...]
    wh0 = wh0_ref[...]
    wh1 = wh1_ref[...]
    nsub = x0g_ref.shape[1]                           # 4 subpixels of the 2x2 ConvTranspose
    for sub in range(nsub):
        a = x0g_ref[0, sub]                           # (Hh*Wh, C0) bf16
        up0 = jnp.dot(a, d0w, preferred_element_type=jnp.float32)
        up0 = jnp.maximum(up0 * d0s_ref[...] + d0b_ref[...], 0.0)
        up1 = jnp.dot(x1f, d1w_ref[sub], preferred_element_type=jnp.float32)
        up1 = jnp.maximum(up1 * d1s_ref[...] + d1b_ref[...], 0.0)
        # fused cls|box|dir head, zero-padded to 128 columns -> lane-dense store
        head = (jnp.dot(up0.astype(jnp.bfloat16), wh0, preferred_element_type=jnp.float32)
                + jnp.dot(up1.astype(jnp.bfloat16), wh1, preferred_element_type=jnp.float32)
                + hb_ref[...])
        o_ref[0, sub] = head


def deblock_head(x0, x1, p):
    B, H, W, C0 = x0.shape
    Hh, Wh, C1 = x1.shape[1:]
    NH = p['head_w0'].shape[1]
    # regroup x0 by output subpixel (dh, dw) == x0[:, dh::2, dw::2, :]
    x0g = (x0.reshape(B, Hh, 2, Wh, 2, C0).transpose(0, 2, 4, 1, 3, 5)
             .reshape(B, 4, Hh * Wh, C0).astype(jnp.bfloat16))
    x1f = x1.reshape(B, Hh * Wh, C1).astype(jnp.bfloat16)
    out = pl.pallas_call(
        _deblock_head_kernel,
        out_shape=jax.ShapeDtypeStruct((B, 4, Hh * Wh, NH), jnp.float32),
        grid=(B,),
        in_specs=[
            pl.BlockSpec((1, 4, Hh * Wh, C0), lambda b: (b, 0, 0, 0)),
            pl.BlockSpec((1, Hh * Wh, C1), lambda b: (b, 0, 0)),
            pl.BlockSpec(p['d0_w'].shape, lambda b: (0, 0)),
            pl.BlockSpec(p['d0_s'].shape, lambda b: (0, 0)),
            pl.BlockSpec(p['d0_b'].shape, lambda b: (0, 0)),
            pl.BlockSpec(p['d1_w'].shape, lambda b: (0, 0, 0)),
            pl.BlockSpec(p['d1_s'].shape, lambda b: (0, 0)),
            pl.BlockSpec(p['d1_b'].shape, lambda b: (0, 0)),
            pl.BlockSpec(p['head_w0'].shape, lambda b: (0, 0)),
            pl.BlockSpec(p['head_w1'].shape, lambda b: (0, 0)),
            pl.BlockSpec(p['head_b'].shape, lambda b: (0, 0)),
        ],
        out_specs=pl.BlockSpec((1, 4, Hh * Wh, NH), lambda b: (b, 0, 0, 0)),
        compiler_params=pltpu.CompilerParams(dimension_semantics=("parallel",)),
    )(x0g, x1f, p['d0_w'], p['d0_s'], p['d0_b'],
      p['d1_w'], p['d1_s'], p['d1_b'],
      p['head_w0'], p['head_w1'], p['head_b'])
    # un-group subpixels back to row-major (y, x) order (tiny tensor)
    out = (out.reshape(B, 2, 2, Hh, Wh, NH).transpose(0, 3, 1, 4, 2, 5)
              .reshape(B, H * W, NH))
    return out


# ------------------------------- 5. Box decode ---------------------------------

def _decode_kernel(box_ref, anc_ref, dir_ref, o_ref, *,
                   dir_offset, dir_limit_offset, period):
    box = box_ref[...]                                  # (8, Nt), row 7 is padding
    anc = anc_ref[...]
    row = jax.lax.broadcasted_iota(jnp.int32, box.shape, 0)
    dxa, dya, dza = anc[3:4, :], anc[4:5, :], anc[5:6, :]
    diag = jnp.sqrt(dxa * dxa + dya * dya)
    scale = jnp.where(row < 2, diag, jnp.where(row == 2, dza, 1.0))
    lin = box * scale + anc                             # rows 0,1,2,6
    expo = jnp.exp(box) * anc                           # rows 3,4,5
    out = jnp.where((row >= 3) & (row <= 5), expo, lin)
    # direction-bin correction, computed slab-wide then selected onto row 6
    val = out - dir_offset
    rot = val - jnp.floor(val / period + dir_limit_offset) * period
    out = jnp.where(row == 6, rot + dir_offset + period * dir_ref[...], out)
    o_ref[...] = out


def decode_boxes(box_preds, anchors_flat, dir_labels, *,
                 dir_offset, dir_limit_offset, period):
    B, A, _ = box_preds.shape
    N = B * A
    box8 = jnp.pad(box_preds.reshape(N, 7), ((0, 0), (0, 1))).T          # (8, N)
    anc8 = jnp.pad(jnp.broadcast_to(anchors_flat[None], (B, A, 7)).reshape(N, 7),
                   ((0, 0), (0, 1))).T
    dirf = dir_labels.reshape(1, N).astype(jnp.float32)
    col_tiles = 2 if N % 256 == 0 else 1
    nt = N // col_tiles
    kern = functools.partial(_decode_kernel, dir_offset=dir_offset,
                             dir_limit_offset=dir_limit_offset, period=period)
    out = pl.pallas_call(
        kern,
        out_shape=jax.ShapeDtypeStruct((8, N), jnp.float32),
        grid=(col_tiles,),
        in_specs=[pl.BlockSpec((8, nt), lambda i: (0, i)),
                  pl.BlockSpec((8, nt), lambda i: (0, i)),
                  pl.BlockSpec((1, nt), lambda i: (0, i))],
        out_specs=pl.BlockSpec((8, nt), lambda i: (0, i)),
        compiler_params=pltpu.CompilerParams(dimension_semantics=("parallel",)),
    )(box8, anc8, dirf)
    return out.T[:, :7].reshape(B, A, 7)


# ------------------------------- glue helpers ----------------------------------

def bn_fold(gamma, beta, running_mean, running_var, eps=1e-3):
    # general eval-mode BatchNorm fold (handles nonzero running stats)
    scale = gamma / jnp.sqrt(running_var + eps)
    shift = beta - running_mean * scale
    return scale[None, :].astype(jnp.float32), shift[None, :].astype(jnp.float32)


def pack_conv3x3(w):   # torch (Cout, Cin, 3, 3) -> (9, Cin, Cout), tap k = kh*3+kw
    return jnp.transpose(w, (2, 3, 1, 0)).reshape(9, w.shape[1], w.shape[0]).astype(jnp.bfloat16)


def generate_anchors_np(nx_fm, ny_fm, anchor_range, anchor_size, rotations, bottom_height):
    x_stride = (anchor_range[3] - anchor_range[0]) / (nx_fm - 1)
    y_stride = (anchor_range[4] - anchor_range[1]) / (ny_fm - 1)
    x_shifts = anchor_range[0] + np.arange(nx_fm) * x_stride
    y_shifts = anchor_range[1] + np.arange(ny_fm) * y_stride
    num_rot = len(rotations)
    anchors = np.zeros((1, ny_fm, nx_fm, 1, num_rot, 7), dtype=np.float64)
    anchors[..., 0] = x_shifts[None, None, :, None, None]
    anchors[..., 1] = y_shifts[None, :, None, None, None]
    anchors[..., 2] = bottom_height
    anchors[..., 3:6] = np.asarray(anchor_size)[None, None, None, :, None, :]
    anchors[..., 6] = np.asarray(rotations)[None, None, None, None, :]
    anchors[..., 2] += anchors[..., 5] / 2.0   # shift z to box center
    return anchors.astype(np.float32), 1 * num_rot


# ------------------------------- full forward ----------------------------------

def pointpillar_forward(params, voxel_feats, coords, anchors_flat, *,
                        batch_size, ny, nx, num_class, num_anchors_per_loc,
                        dir_offset, dir_limit_offset, num_dir_bins):
    # --- PillarVFE ---
    pillar_feats = vfe_forward(voxel_feats, params['vfe_w'],
                               params['vfe_s'], params['vfe_b'])        # (P, 32)
    # --- PointPillarScatter (coords columns: x, y, batch — as in the torch module) ---
    lin_idx = (coords[:, 2] * (ny * nx) + coords[:, 1] * nx + coords[:, 0]).astype(jnp.int32)
    spatial = scatter_to_bev(pillar_feats, lin_idx, batch_size * ny * nx)
    spatial = spatial.reshape(batch_size, ny, nx, -1)                   # (B, ny, nx, 32)

    # --- BevBackbone ---
    x = conv3x3_bn_relu(spatial, params['b0_c1_w'], params['b0_c1_s'], params['b0_c1_b'], 1)
    x0 = conv3x3_bn_relu(x, params['b0_c2_w'], params['b0_c2_s'], params['b0_c2_b'], 1)
    x = conv3x3_bn_relu(x0, params['b1_c1_w'], params['b1_c1_s'], params['b1_c1_b'], 2)
    x1 = conv3x3_bn_relu(x, params['b1_c2_w'], params['b1_c2_s'], params['b1_c2_b'], 1)

    # --- deblocks + AnchorHead (single fused lane-dense kernel) ---
    head = deblock_head(x0, x1, params)                 # (B, H*W, 128)
    B, HW, _ = head.shape
    npl = num_anchors_per_loc
    n_cls = npl * num_class
    n_box = npl * 7
    n_dir = npl * num_dir_bins
    A = HW * npl
    batch_cls_preds = head[..., :n_cls].reshape(B, A, num_class)
    box_preds = head[..., n_cls:n_cls + n_box].reshape(B, A, 7)
    dir_cls_preds = head[..., n_cls + n_box:n_cls + n_box + n_dir].reshape(B, A, num_dir_bins)
    dir_labels = jnp.argmax(dir_cls_preds, axis=-1)

    period = 2.0 * np.pi / num_dir_bins
    batch_box_preds = decode_boxes(box_preds, anchors_flat, dir_labels,
                                   dir_offset=dir_offset,
                                   dir_limit_offset=dir_limit_offset,
                                   period=period)
    return batch_cls_preds, batch_box_preds


# ------------------------------------ main --------------------------------------

if __name__ == "__main__":
    # ---- synthetic config (small) ----
    B = 2
    P, NPTS, CIN_VFE = 64, 16, 16          # pillars, points per pillar, vfe in-channels
    C_BEV = 32                             # num_bev_features
    NX = NY = 16                           # BEV grid
    NUM_CLASS = 1
    NUM_DIR_BINS = 2
    DIR_OFFSET, DIR_LIMIT_OFFSET = 0.78539, 0.0
    SCORE_TH = 0.1
    PC_RANGE = [0.0, 0.0, -3.0, 6.4, 6.4, 1.0]

    key = jax.random.PRNGKey(0)
    ks = iter(jax.random.split(key, 64))

    def nrm(shape, fan_in):
        return jax.random.normal(next(ks), shape, jnp.float32) / np.sqrt(fan_in)

    def bn_params(c):
        gamma = 1.0 + 0.1 * jax.random.normal(next(ks), (c,), jnp.float32)
        beta = 0.05 * jax.random.normal(next(ks), (c,), jnp.float32)
        running_mean = jnp.zeros((c,), jnp.float32)   # fresh torch module in eval mode
        running_var = jnp.ones((c,), jnp.float32)
        return bn_fold(gamma, beta, running_mean, running_var)

    params = {}
    # PillarVFE: Linear(16 -> 32, bias=False) + BN1d(32)
    params['vfe_w'] = nrm((CIN_VFE, C_BEV), CIN_VFE).astype(jnp.bfloat16)
    params['vfe_s'], params['vfe_b'] = bn_params(C_BEV)

    # BevBackbone (layer_nums=[1,1], strides=[1,2], filters=[32,64],
    #              upsample_strides=[1,2], upsample_filters=[64,64])
    w = nrm((32, 32, 3, 3), 32 * 9); params['b0_c1_w'] = pack_conv3x3(w)
    params['b0_c1_s'], params['b0_c1_b'] = bn_params(32)
    w = nrm((32, 32, 3, 3), 32 * 9); params['b0_c2_w'] = pack_conv3x3(w)
    params['b0_c2_s'], params['b0_c2_b'] = bn_params(32)
    w = nrm((64, 32, 3, 3), 32 * 9); params['b1_c1_w'] = pack_conv3x3(w)
    params['b1_c1_s'], params['b1_c1_b'] = bn_params(64)
    w = nrm((64, 64, 3, 3), 64 * 9); params['b1_c2_w'] = pack_conv3x3(w)
    params['b1_c2_s'], params['b1_c2_b'] = bn_params(64)

    # deblock0: ConvTranspose2d(32, 64, k=1, s=1) + BN + ReLU
    w = nrm((32, 64, 1, 1), 32)
    params['d0_w'] = w.reshape(32, 64).astype(jnp.bfloat16)
    params['d0_s'], params['d0_b'] = bn_params(64)
    # deblock1: ConvTranspose2d(64, 64, k=2, s=2) + BN + ReLU (per-subpixel weight slices)
    w = nrm((64, 64, 2, 2), 64)
    params['d1_w'] = jnp.transpose(w, (2, 3, 0, 1)).reshape(4, 64, 64).astype(jnp.bfloat16)
    params['d1_s'], params['d1_b'] = bn_params(64)

    # AnchorHead: three 1x1 convs fused (cls|box|dir) and zero-padded to 128 columns
    anchors6d, npl = generate_anchors_np(NX, NY, PC_RANGE, [[3.9, 1.6, 1.56]],
                                         [0.0, np.pi / 2], -1.78)
    anchors_flat = jnp.asarray(anchors6d.reshape(-1, 7))          # (512, 7)
    C_IN_HEAD = 128
    n_cls = npl * NUM_CLASS
    n_box = npl * 7
    n_dir = npl * NUM_DIR_BINS
    w_cls = nrm((C_IN_HEAD, n_cls), C_IN_HEAD)
    w_box = nrm((C_IN_HEAD, n_box), C_IN_HEAD)
    w_dir = nrm((C_IN_HEAD, n_dir), C_IN_HEAD)
    b_cls = 0.01 * jax.random.normal(next(ks), (n_cls,), jnp.float32)
    b_box = 0.01 * jax.random.normal(next(ks), (n_box,), jnp.float32)
    b_dir = 0.01 * jax.random.normal(next(ks), (n_dir,), jnp.float32)
    NH = 128
    w_head = jnp.pad(jnp.concatenate([w_cls, w_box, w_dir], axis=1),
                     ((0, 0), (0, NH - (n_cls + n_box + n_dir))))
    b_head = jnp.pad(jnp.concatenate([b_cls, b_box, b_dir], axis=0),
                     ((0, NH - (n_cls + n_box + n_dir)),))
    params['head_w0'] = w_head[:64].astype(jnp.bfloat16)    # rows acting on up0 (deblock0)
    params['head_w1'] = w_head[64:].astype(jnp.bfloat16)    # rows acting on up1 (deblock1)
    params['head_b'] = b_head[None, :]                      # (1, 128) f32

    # ---- deterministic inputs ----
    voxel_feats = jax.random.normal(next(ks), (P, NPTS, CIN_VFE), jnp.float32)
    lin0 = (np.arange(32) * 5) % 256          # unique BEV cells for batch 0
    lin1 = (np.arange(32) * 37 + 3) % 256     # unique BEV cells for batch 1
    def to_xyb(lin, b):
        return np.stack([lin % NX, lin // NX, np.full_like(lin, b)], axis=1)
    coords = jnp.asarray(np.concatenate([to_xyb(lin0, 0), to_xyb(lin1, 1)], 0).astype(np.int32))

    fwd = jax.jit(functools.partial(
        pointpillar_forward, batch_size=B, ny=NY, nx=NX, num_class=NUM_CLASS,
        num_anchors_per_loc=int(npl), dir_offset=DIR_OFFSET,
        dir_limit_offset=DIR_LIMIT_OFFSET, num_dir_bins=NUM_DIR_BINS))

    batch_cls_preds, batch_box_preds = fwd(params, voxel_feats, coords, anchors_flat)
    jax.block_until_ready((batch_cls_preds, batch_box_preds))

    # ---- post_process (host-side numpy, mirrors the torch @no_grad path) ----
    pred_dicts = []
    for bi in range(B):
        cls_np = np.asarray(batch_cls_preds[bi])          # (512, 1)
        box_np = np.asarray(batch_box_preds[bi])          # (512, 7)
        scores = 1.0 / (1.0 + np.exp(-cls_np))
        score_max = scores.max(-1)
        labels = scores.argmax(-1) + 1
        # TODO(synk): nms_3d (rotated-box NMS with data-dependent output count) has no
        # clean Pallas equivalent; using score-threshold selection only.
        sel = np.where(score_max > SCORE_TH)[0]
        pred_dicts.append({'pred_boxes': box_np[sel],
                           'pred_scores': score_max[sel],
                           'pred_labels': labels[sel]})

    assert batch_cls_preds.shape == (B, NX * NY * npl, NUM_CLASS)
    assert batch_box_preds.shape == (B, NX * NY * npl, 7)
    print("KERNEL_OK")
</pallas_src>

<mosaic_0001>
module attributes {stable_mosaic.version = 11 : i64} {
  func.func @_vfe_kernel(%arg0: i32, %arg1: memref<16x32x16xbf16, #tpu.memory_space<vmem>>, %arg2: memref<16x32xbf16, #tpu.memory_space<vmem>>, %arg3: memref<1x32xf32, #tpu.memory_space<vmem>>, %arg4: memref<1x32xf32, #tpu.memory_space<vmem>>, %arg5: memref<32x32xf32, #tpu.memory_space<vmem>>) attributes {dimension_semantics = [#tpu.dimension_semantics<parallel>], iteration_bounds = array<i64: 2>, scalar_prefetch = 0 : i64, scratch_operands = 0 : i64, tpu.core_type = #tpu.core_type<tc>, window_params = [{transform_indices = @transform_0, window_bounds = array<i64: 16, 32, 16>}, {pipeline_mode = #tpu.pipeline_mode<synchronous>, transform_indices = @transform_1, window_bounds = array<i64: 16, 32>}, {pipeline_mode = #tpu.pipeline_mode<synchronous>, transform_indices = @transform_2, window_bounds = array<i64: 1, 32>}, {pipeline_mode = #tpu.pipeline_mode<synchronous>, transform_indices = @transform_3, window_bounds = array<i64: 1, 32>}, {transform_indices = @transform_4, window_bounds = array<i64: 32, 32>}]} {
    %c0 = arith.constant 0 : index
    %c0_0 = arith.constant 0 : index
    %c0_1 = arith.constant 0 : index
    %0 = vector.load %arg1[%c0, %c0_0, %c0_1] : memref<16x32x16xbf16, #tpu.memory_space<vmem>>, vector<16x32x16xbf16>
    %1 = vector.shape_cast %0 : vector<16x32x16xbf16> to vector<512x16xbf16>
    %c0_2 = arith.constant 0 : index
    %c0_3 = arith.constant 0 : index
    %2 = vector.load %arg2[%c0_2, %c0_3] : memref<16x32xbf16, #tpu.memory_space<vmem>>, vector<16x32xbf16>
    %cst = arith.constant dense<0.000000e+00> : vector<512x32xf32>
    %3 = tpu.matmul %1, %2, %cst {dimension_numbers = #tpu.dot_dimension_numbers<[1], [0], [0], [1], [0, 0, 1, 1], [], []>} : vector<512x16xbf16>, vector<16x32xbf16>, vector<512x32xf32> -> vector<512x32xf32>
    %c0_4 = arith.constant 0 : index
    %c0_5 = arith.constant 0 : index
    %4 = vector.load %arg3[%c0_4, %c0_5] : memref<1x32xf32, #tpu.memory_space<vmem>>, vector<1x32xf32>
    %5 = vector.broadcast %4 : vector<1x32xf32> to vector<512x32xf32>
    %6 = arith.mulf %3, %5 : vector<512x32xf32>
    %c0_6 = arith.constant 0 : index
    %c0_7 = arith.constant 0 : index
    %7 = vector.load %arg4[%c0_6, %c0_7] : memref<1x32xf32, #tpu.memory_space<vmem>>, vector<1x32xf32>
    %8 = vector.broadcast %7 : vector<1x32xf32> to vector<512x32xf32>
    %9 = arith.addf %6, %8 : vector<512x32xf32>
    %cst_8 = arith.constant 0.000000e+00 : f32
    %10 = vector.broadcast %cst_8 : f32 to vector<512x32xf32>
    %11 = arith.maximumf %9, %10 : vector<512x32xf32>
    %12 = vector.extract_strided_slice %11 {offsets = [0, 0], sizes = [32, 32], strides = [1, 1]} : vector<512x32xf32> to vector<32x32xf32>
    %13 = vector.extract_strided_slice %11 {offsets = [32, 0], sizes = [32, 32], strides = [1, 1]} : vector<512x32xf32> to vector<32x32xf32>
    %14 = arith.maximumf %12, %13 : vector<32x32xf32>
    %15 = vector.extract_strided_slice %11 {offsets = [64, 0], sizes = [32, 32], strides = [1, 1]} : vector<512x32xf32> to vector<32x32xf32>
    %16 = arith.maximumf %14, %15 : vector<32x32xf32>
    %17 = vector.extract_strided_slice %11 {offsets = [96, 0], sizes = [32, 32], strides = [1, 1]} : vector<512x32xf32> to vector<32x32xf32>
    %18 = arith.maximumf %16, %17 : vector<32x32xf32>
    %19 = vector.extract_strided_slice %11 {offsets = [128, 0], sizes = [32, 32], strides = [1, 1]} : vector<512x32xf32> to vector<32x32xf32>
    %20 = arith.maximumf %18, %19 : vector<32x32xf32>
    %21 = vector.extract_strided_slice %11 {offsets = [160, 0], sizes = [32, 32], strides = [1, 1]} : vector<512x32xf32> to vector<32x32xf32>
    %22 = arith.maximumf %20, %21 : vector<32x32xf32>
    %23 = vector.extract_strided_slice %11 {offsets = [192, 0], sizes = [32, 32], strides = [1, 1]} : vector<512x32xf32> to vector<32x32xf32>
    %24 = arith.maximumf %22, %23 : vector<32x32xf32>
    %25 = vector.extract_strided_slice %11 {offsets = [224, 0], sizes = [32, 32], strides = [1, 1]} : vector<512x32xf32> to vector<32x32xf32>
    %26 = arith.maximumf %24, %25 : vector<32x32xf32>
    %27 = vector.extract_strided_slice %11 {offsets = [256, 0], sizes = [32, 32], strides = [1, 1]} : vector<512x32xf32> to vector<32x32xf32>
    %28 = arith.maximumf %26, %27 : vector<32x32xf32>
    %29 = vector.extract_strided_slice %11 {offsets = [288, 0], sizes = [32, 32], strides = [1, 1]} : vector<512x32xf32> to vector<32x32xf32>
    %30 = arith.maximumf %28, %29 : vector<32x32xf32>
    %31 = vector.extract_strided_slice %11 {offsets = [320, 0], sizes = [32, 32], strides = [1, 1]} : vector<512x32xf32> to vector<32x32xf32>
    %32 = arith.maximumf %30, %31 : vector<32x32xf32>
    %33 = vector.extract_strided_slice %11 {offsets = [352, 0], sizes = [32, 32], strides = [1, 1]} : vector<512x32xf32> to vector<32x32xf32>
    %34 = arith.maximumf %32, %33 : vector<32x32xf32>
    %35 = vector.extract_strided_slice %11 {offsets = [384, 0], sizes = [32, 32], strides = [1, 1]} : vector<512x32xf32> to vector<32x32xf32>
    %36 = arith.maximumf %34, %35 : vector<32x32xf32>
    %37 = vector.extract_strided_slice %11 {offsets = [416, 0], sizes = [32, 32], strides = [1, 1]} : vector<512x32xf32> to vector<32x32xf32>
    %38 = arith.maximumf %36, %37 : vector<32x32xf32>
    %39 = vector.extract_strided_slice %11 {offsets = [448, 0], sizes = [32, 32], strides = [1, 1]} : vector<512x32xf32> to vector<32x32xf32>
    %40 = arith.maximumf %38, %39 : vector<32x32xf32>
    %41 = vector.extract_strided_slice %11 {offsets = [480, 0], sizes = [32, 32], strides = [1, 1]} : vector<512x32xf32> to vector<32x32xf32>
    %42 = arith.maximumf %40, %41 : vector<32x32xf32>
    %c0_9 = arith.constant 0 : index
    %c0_10 = arith.constant 0 : index
    %43 = vector.load %arg5[%c0_9, %c0_10] : memref<32x32xf32, #tpu.memory_space<vmem>>, vector<32x32xf32>
    tpu.vector_store %arg5[%c0_9, %c0_10], %42 {strides = array<i32>} : memref<32x32xf32, #tpu.memory_space<vmem>>, vector<32x32xf32>,
    return
  }
  func.func @transform_0(%arg0: i32) -> (i32, i32, i32) {
    %c0_i32 = arith.constant 0 : i32
    %c0_i32_0 = arith.constant 0 : i32
    %c0_i32_1 = arith.constant 0 : i32
    return %c0_i32, %arg0, %c0_i32_0 : i32, i32, i32
  }
  func.func @transform_1(%arg0: i32) -> (i32, i32) {
    %c0_i32 = arith.constant 0 : i32
    %c0_i32_0 = arith.constant 0 : i32
    %c0_i32_1 = arith.constant 0 : i32
    return %c0_i32, %c0_i32_0 : i32, i32
  }
  func.func @transform_2(%arg0: i32) -> (i32, i32) {
    %c0_i32 = arith.constant 0 : i32
    %c0_i32_0 = arith.constant 0 : i32
    %c0_i32_1 = arith.constant 0 : i32
    return %c0_i32, %c0_i32_0 : i32, i32
  }
  func.func @transform_3(%arg0: i32) -> (i32, i32) {
    %c0_i32 = arith.constant 0 : i32
    %c0_i32_0 = arith.constant 0 : i32
    %c0_i32_1 = arith.constant 0 : i32
    return %c0_i32, %c0_i32_0 : i32, i32
  }
  func.func @transform_4(%arg0: i32) -> (i32, i32) {
    %c0_i32 = arith.constant 0 : i32
    %c0_i32_0 = arith.constant 0 : i32
    return %arg0, %c0_i32 : i32, i32
  }
}

module attributes {stable_mosaic.version = 11 : i64} {
  func.func @_conv3x3_kernel(%arg0: i32, %arg1: memref<1x18x18x32xf32, #tpu.memory_space<vmem>>, %arg2: memref<9x32x32xbf16, #tpu.memory_space<vmem>>, %arg3: memref<1x32xf32, #tpu.memory_space<vmem>>, %arg4: memref<1x32xf32, #tpu.memory_space<vmem>>, %arg5: memref<1x16x16x32xf32, #tpu.memory_space<vmem>>) attributes {dimension_semantics = [#tpu.dimension_semantics<parallel>], iteration_bounds = array<i64: 2>, scalar_prefetch = 0 : i64, scratch_operands = 0 : i64, tpu.core_type = #tpu.core_type<tc>, window_params = [{transform_indices = @transform_0, window_bounds = array<i64: 1, 18, 18, 32>}, {pipeline_mode = #tpu.pipeline_mode<synchronous>, transform_indices = @transform_1, window_bounds = array<i64: 9, 32, 32>}, {pipeline_mode = #tpu.pipeline_mode<synchronous>, transform_indices = @transform_2, window_bounds = array<i64: 1, 32>}, {pipeline_mode = #tpu.pipeline_mode<synchronous>, transform_indices = @transform_3, window_bounds = array<i64: 1, 32>}, {transform_indices = @transform_4, window_bounds = array<i64: 1, 16, 16, 32>}]} {
    %c0 = arith.constant 0 : index
    %c0_0 = arith.constant 0 : index
    %c0_1 = arith.constant 0 : index
    %c0_2 = arith.constant 0 : index
    %0 = vector.load %arg1[%c0, %c0_0, %c0_1, %c0_2] : memref<1x18x18x32xf32, #tpu.memory_space<vmem>>, vector<1x18x18x32xf32>
    %1 = vector.shape_cast %0 : vector<1x18x18x32xf32> to vector<18x18x32xf32>
    %cst = arith.constant 0.000000e+00 : f32
    %2 = vector.broadcast %cst : f32 to vector<256x32xf32>
    %3 = vector.extract_strided_slice %1 {offsets = [0, 0, 0], sizes = [16, 16, 32], strides = [1, 1, 1]} : vector<18x18x32xf32> to vector<16x16x32xf32>
    %4 = vector.shape_cast %3 : vector<16x16x32xf32> to vector<256x32xf32>
    %5 = arith.truncf %4 : vector<256x32xf32> to vector<256x32xbf16>
    %c0_3 = arith.constant 0 : index
    %c0_4 = arith.constant 0 : index
    %c0_5 = arith.constant 0 : index
    %6 = vector.load %arg2[%c0_3, %c0_4, %c0_5] : memref<9x32x32xbf16, #tpu.memory_space<vmem>>, vector<1x32x32xbf16>
    %7 = vector.shape_cast %6 : vector<1x32x32xbf16> to vector<32x32xbf16>
    %cst_6 = arith.constant dense<0.000000e+00> : vector<256x32xf32>
    %8 = tpu.matmul %5, %7, %cst_6 {dimension_numbers = #tpu.dot_dimension_numbers<[1], [0], [0], [1], [0, 0, 1, 1], [], []>} : vector<256x32xbf16>, vector<32x32xbf16>, vector<256x32xf32> -> vector<256x32xf32>
    %9 = arith.addf %2, %8 : vector<256x32xf32>
    %10 = vector.extract_strided_slice %1 {offsets = [0, 1, 0], sizes = [16, 16, 32], strides = [1, 1, 1]} : vector<18x18x32xf32> to vector<16x16x32xf32>
    %11 = vector.shape_cast %10 : vector<16x16x32xf32> to vector<256x32xf32>
    %12 = arith.truncf %11 : vector<256x32xf32> to vector<256x32xbf16>
    %c1 = arith.constant 1 : index
    %c0_7 = arith.constant 0 : index
    %c0_8 = arith.constant 0 : index
    %13 = vector.load %arg2[%c1, %c0_7, %c0_8] : memref<9x32x32xbf16, #tpu.memory_space<vmem>>, vector<1x32x32xbf16>
    %14 = vector.shape_cast %13 : vector<1x32x32xbf16> to vector<32x32xbf16>
    %cst_9 = arith.constant dense<0.000000e+00> : vector<256x32xf32>
    %15 = tpu.matmul %12, %14, %cst_9 {dimension_numbers = #tpu.dot_dimension_numbers<[1], [0], [0], [1], [0, 0, 1, 1], [], []>} : vector<256x32xbf16>, vector<32x32xbf16>, vector<256x32xf32> -> vector<256x32xf32>
    %16 = arith.addf %9, %15 : vector<256x32xf32>
    %17 = vector.extract_strided_slice %1 {offsets = [0, 2, 0], sizes = [16, 16, 32], strides = [1, 1, 1]} : vector<18x18x32xf32> to vector<16x16x32xf32>
    %18 = vector.shape_cast %17 : vector<16x16x32xf32> to vector<256x32xf32>
    %19 = arith.truncf %18 : vector<256x32xf32> to vector<256x32xbf16>
    %c2 = arith.constant 2 : index
    %c0_10 = arith.constant 0 : index
    %c0_11 = arith.constant 0 : index
    %20 = vector.load %arg2[%c2, %c0_10, %c0_11] : memref<9x32x32xbf16, #tpu.memory_space<vmem>>, vector<1x32x32xbf16>
    %21 = vector.shape_cast %20 : vector<1x32x32xbf16> to vector<32x32xbf16>
    %cst_12 = arith.constant dense<0.000000e+00> : vector<256x32xf32>
    %22 = tpu.matmul %19, %21, %cst_12 {dimension_numbers = #tpu.dot_dimension_numbers<[1], [0], [0], [1], [0, 0, 1, 1], [], []>} : vector<256x32xbf16>, vector<32x32xbf16>, vector<256x32xf32> -> vector<256x32xf32>
    %23 = arith.addf %16, %22 : vector<256x32xf32>
    %24 = vector.extract_strided_slice %1 {offsets = [1, 0, 0], sizes = [16, 16, 32], strides = [1, 1, 1]} : vector<18x18x32xf32> to vector<16x16x32xf32>
    %25 = vector.shape_cast %24 : vector<16x16x32xf32> to vector<256x32xf32>
    %26 = arith.truncf %25 : vector<256x32xf32> to vector<256x32xbf16>
    %c3 = arith.constant 3 : index
    %c0_13 = arith.constant 0 : index
    %c0_14 = arith.constant 0 : index
    %27 = vector.load %arg2[%c3, %c0_13, %c0_14] : memref<9x32x32xbf16, #tpu.memory_space<vmem>>, vector<1x32x32xbf16>
    %28 = vector.shape_cast %27 : vector<1x32x32xbf16> to vector<32x32xbf16>
    %cst_15 = arith.constant dense<0.000000e+00> : vector<256x32xf32>
    %29 = tpu.matmul %26, %28, %cst_15 {dimension_numbers = #tpu.dot_dimension_numbers<[1], [0], [0], [1], [0, 0, 1, 1], [], []>} : vector<256x32xbf16>, vector<32x32xbf16>, vector<256x32xf32> -> vector<256x32xf32>
    %30 = arith.addf %23, %29 : vector<256x32xf32>
    %31 = vector.extract_strided_slice %1 {offsets = [1, 1, 0], sizes = [16, 16, 32], strides = [1, 1, 1]} : vector<18x18x32xf32> to vector<16x16x32xf32>
    %32 = vector.shape_cast %31 : vector<16x16x32xf32> to vector<256x32xf32>
    %33 = arith.truncf %32 : vector<256x32xf32> to vector<256x32xbf16>
    %c4 = arith.constant 4 : index
    %c0_16 = arith.constant 0 : index
    %c0_17 = arith.constant 0 : index
    %34 = vector.load %arg2[%c4, %c0_16, %c0_17] : memref<9x32x32xbf16, #tpu.memory_space<vmem>>, vector<1x32x32xbf16>
    %35 = vector.shape_cast %34 : vector<1x32x32xbf16> to vector<32x32xbf16>
    %cst_18 = arith.constant dense<0.000000e+00> : vector<256x32xf32>
    %36 = tpu.matmul %33, %35, %cst_18 {dimension_numbers = #tpu.dot_dimension_numbers<[1], [0], [0], [1], [0, 0, 1, 1], [], []>} : vector<256x32xbf16>, vector<32x32xbf16>, vector<256x32xf32> -> vector<256x32xf32>
    %37 = arith.addf %30, %36 : vector<256x32xf32>
    %38 = vector.extract_strided_slice %1 {offsets = [1, 2, 0], sizes = [16, 16, 32], strides = [1, 1, 1]} : vector<18x18x32xf32> to vector<16x16x32xf32>
    %39 = vector.shape_cast %38 : vector<16x16x32xf32> to vector<256x32xf32>
    %40 = arith.truncf %39 : vector<256x32xf32> to vector<256x32xbf16>
    %c5 = arith.constant 5 : index
    %c0_19 = arith.constant 0 : index
    %c0_20 = arith.constant 0 : index
    %41 = vector.load %arg2[%c5, %c0_19, %c0_20] : memref<9x32x32xbf16, #tpu.memory_space<vmem>>, vector<1x32x32xbf16>
    %42 = vector.shape_cast %41 : vector<1x32x32xbf16> to vector<32x32xbf16>
    %cst_21 = arith.constant dense<0.000000e+00> : vector<256x32xf32>
    %43 = tpu.matmul %40, %42, %cst_21 {dimension_numbers = #tpu.dot_dimension_numbers<[1], [0], [0], [1], [0, 0, 1, 1], [], []>} : vector<256x32xbf16>, vector<32x32xbf16>, vector<256x32xf32> -> vector<256x32xf32>
    %44 = arith.addf %37, %43 : vector<256x32xf32>
    %45 = vector.extract_strided_slice %1 {offsets = [2, 0, 0], sizes = [16, 16, 32], strides = [1, 1, 1]} : vector<18x18x32xf32> to vector<16x16x32xf32>
    %46 = vector.shape_cast %45 : vector<16x16x32xf32> to vector<256x32xf32>
    %47 = arith.truncf %46 : vector<256x32xf32> to vector<256x32xbf16>
    %c6 = arith.constant 6 : index
    %c0_22 = arith.constant 0 : index
    %c0_23 = arith.constant 0 : index
    %48 = vector.load %arg2[%c6, %c0_22, %c0_23] : memref<9x32x32xbf16, #tpu.memory_space<vmem>>, vector<1x32x32xbf16>
    %49 = vector.shape_cast %48 : vector<1x32x32xbf16> to vector<32x32xbf16>
    %cst_24 = arith.constant dense<0.000000e+00> : vector<256x32xf32>
    %50 = tpu.matmul %47, %49, %cst_24 {dimension_numbers = #tpu.dot_dimension_numbers<[1], [0], [0], [1], [0, 0, 1, 1], [], []>} : vector<256x32xbf16>, vector<32x32xbf16>, vector<256x32xf32> -> vector<256x32xf32>
    %51 = arith.addf %44, %50 : vector<256x32xf32>
    %52 = vector.extract_strided_slice %1 {offsets = [2, 1, 0], sizes = [16, 16, 32], strides = [1, 1, 1]} : vector<18x18x32xf32> to vector<16x16x32xf32>
    %53 = vector.shape_cast %52 : vector<16x16x32xf32> to vector<256x32xf32>
    %54 = arith.truncf %53 : vector<256x32xf32> to vector<256x32xbf16>
    %c7 = arith.constant 7 : index
    %c0_25 = arith.constant 0 : index
    %c0_26 = arith.constant 0 : index
    %55 = vector.load %arg2[%c7, %c0_25, %c0_26] : memref<9x32x32xbf16, #tpu.memory_space<vmem>>, vector<1x32x32xbf16>
    %56 = vector.shape_cast %55 : vector<1x32x32xbf16> to vector<32x32xbf16>
    %cst_27 = arith.constant dense<0.000000e+00> : vector<256x32xf32>
    %57 = tpu.matmul %54, %56, %cst_27 {dimension_numbers = #tpu.dot_dimension_numbers<[1], [0], [0], [1], [0, 0, 1, 1], [], []>} : vector<256x32xbf16>, vector<32x32xbf16>, vector<256x32xf32> -> vector<256x32xf32>
    %58 = arith.addf %51, %57 : vector<256x32xf32>
    %59 = vector.extract_strided_slice %1 {offsets = [2, 2, 0], sizes = [16, 16, 32], strides = [1, 1, 1]} : vector<18x18x32xf32> to vector<16x16x32xf32>
    %60 = vector.shape_cast %59 : vector<16x16x32xf32> to vector<256x32xf32>
    %61 = arith.truncf %60 : vector<256x32xf32> to vector<256x32xbf16>
    %c8 = arith.constant 8 : index
    %c0_28 = arith.constant 0 : index
    %c0_29 = arith.constant 0 : index
    %62 = vector.load %arg2[%c8, %c0_28, %c0_29] : memref<9x32x32xbf16, #tpu.memory_space<vmem>>, vector<1x32x32xbf16>
    %63 = vector.shape_cast %62 : vector<1x32x32xbf16> to vector<32x32xbf16>
    %cst_30 = arith.constant dense<0.000000e+00> : vector<256x32xf32>
    %64 = tpu.matmul %61, %63, %cst_30 {dimension_numbers = #tpu.dot_dimension_numbers<[1], [0], [0], [1], [0, 0, 1, 1], [], []>} : vector<256x32xbf16>, vector<32x32xbf16>, vector<256x32xf32> -> vector<256x32xf32>
    %65 = arith.addf %58, %64 : vector<256x32xf32>
    %c0_31 = arith.constant 0 : index
    %c0_32 = arith.constant 0 : index
    %66 = vector.load %arg3[%c0_31, %c0_32] : memref<1x32xf32, #tpu.memory_space<vmem>>, vector<1x32xf32>
    %67 = vector.broadcast %66 : vector<1x32xf32> to vector<256x32xf32>
    %68 = arith.mulf %65, %67 : vector<256x32xf32>
    %c0_33 = arith.constant 0 : index
    %c0_34 = arith.constant 0 : index
    %69 = vector.load %arg4[%c0_33, %c0_34] : memref<1x32xf32, #tpu.memory_space<vmem>>, vector<1x32xf32>
    %70 = vector.broadcast %69 : vector<1x32xf32> to vector<256x32xf32>
    %71 = arith.addf %68, %70 : vector<256x32xf32>
    %cst_35 = arith.constant 0.000000e+00 : f32
    %72 = vector.broadcast %cst_35 : f32 to vector<256x32xf32>
    %73 = arith.maximumf %71, %72 : vector<256x32xf32>
    %74 = vector.shape_cast %73 : vector<256x32xf32> to vector<16x16x32xf32>
    %c0_36 = arith.constant 0 : index
    %c0_37 = arith.constant 0 : index
    %c0_38 = arith.constant 0 : index
    %c0_39 = arith.constant 0 : index
    %75 = vector.load %arg5[%c0_36, %c0_37, %c0_38, %c0_39] : memref<1x16x16x32xf32, #tpu.memory_space<vmem>>, vector<1x16x16x32xf32>
    %76 = vector.shape_cast %75 : vector<1x16x16x32xf32> to vector<16x16x32xf32>
    %77 = vector.shape_cast %74 : vector<16x16x32xf32> to vector<1x16x16x32xf32>
    tpu.vector_store %arg5[%c0_36, %c0_37, %c0_38, %c0_39], %77 {strides = array<i32>} : memref<1x16x16x32xf32, #tpu.memory_space<vmem>>, vector<1x16x16x32xf32>,
    return
  }
  func.func @transform_0(%arg0: i32) -> (i32, i32, i32, i32) {
    %c0_i32 = arith.constant 0 : i32
    %c0_i32_0 = arith.constant 0 : i32
    %c0_i32_1 = arith.constant 0 : i32
    %c0_i32_2 = arith.constant 0 : i32
    return %arg0, %c0_i32, %c0_i32_0, %c0_i32_1 : i32, i32, i32, i32
  }
  func.func @transform_1(%arg0: i32) -> (i32, i32, i32) {
    %c0_i32 = arith.constant 0 : i32
    %c0_i32_0 = arith.constant 0 : i32
    %c0_i32_1 = arith.constant 0 : i32
    %c0_i32_2 = arith.constant 0 : i32
    return %c0_i32, %c0_i32_0, %c0_i32_1 : i32, i32, i32
  }
  func.func @transform_2(%arg0: i32) -> (i32, i32) {
    %c0_i32 = arith.constant 0 : i32
    %c0_i32_0 = arith.constant 0 : i32
    %c0_i32_1 = arith.constant 0 : i32
    return %c0_i32, %c0_i32_0 : i32, i32
  }
  func.func @transform_3(%arg0: i32) -> (i32, i32) {
    %c0_i32 = arith.constant 0 : i32
    %c0_i32_0 = arith.constant 0 : i32
    %c0_i32_1 = arith.constant 0 : i32
    return %c0_i32, %c0_i32_0 : i32, i32
  }
  func.func @transform_4(%arg0: i32) -> (i32, i32, i32, i32) {
    %c0_i32 = arith.constant 0 : i32
    %c0_i32_0 = arith.constant 0 : i32
    %c0_i32_1 = arith.constant 0 : i32
    %c0_i32_2 = arith.constant 0 : i32
    return %arg0, %c0_i32, %c0_i32_0, %c0_i32_1 : i32, i32, i32, i32
  }
}

module attributes {stable_mosaic.version = 11 : i64} {
  func.func @_scatter_kernel(%arg0: i32, %arg1: memref<64xi32, #tpu.memory_space<smem>>, %arg2: memref<64x32xf32, #tpu.memory_space<vmem>>, %arg3: memref<512x32xf32, #tpu.memory_space<vmem>>) attributes {dimension_semantics = [#tpu.dimension_semantics<arbitrary>], iteration_bounds = array<i64: 1>, scalar_prefetch = 1 : i64, scratch_operands = 0 : i64, tpu.core_type = #tpu.core_type<tc>, window_params = [{pipeline_mode = #tpu.pipeline_mode<synchronous>, transform_indices = @transform_0, window_bounds = array<i64: 64, 32>}, {pipeline_mode = #tpu.pipeline_mode<synchronous>, transform_indices = @transform_1, window_bounds = array<i64: 512, 32>}]} {
    %cst = arith.constant 0.000000e+00 : f32
    %0 = vector.broadcast %cst : f32 to vector<512x32xf32>
    %c0 = arith.constant 0 : index
    %c0_0 = arith.constant 0 : index
    %1 = vector.load %arg3[%c0, %c0_0] : memref<512x32xf32, #tpu.memory_space<vmem>>, vector<512x32xf32>
    tpu.vector_store %arg3[%c0, %c0_0], %0 {strides = array<i32>} : memref<512x32xf32, #tpu.memory_space<vmem>>, vector<512x32xf32>,
    %c0_i32 = arith.constant 0 : i32
    %c64_i32 = arith.constant 64 : i32
    %2 = arith.addi %c0_i32, %c64_i32 : i32
    %c1_i32 = arith.constant 1 : i32
    scf.for %arg4 = %c0_i32 to %2 step %c1_i32  : i32 {
      %3 = arith.index_cast %arg4 : i32 to index
      %c0_2 = arith.constant 0 : index
      %4 = vector.load %arg2[%3, %c0_2] : memref<64x32xf32, #tpu.memory_space<vmem>>, vector<1x32xf32>
      %5 = arith.index_cast %arg4 : i32 to index
      %6 = memref.load %arg1[%5] : memref<64xi32, #tpu.memory_space<smem>>
      %7 = arith.index_cast %6 : i32 to index
      %c0_3 = arith.constant 0 : index
      %8 = vector.load %arg3[%7, %c0_3] : memref<512x32xf32, #tpu.memory_space<vmem>>, vector<1x32xf32>
      tpu.vector_store %arg3[%7, %c0_3], %4 {strides = array<i32>} : memref<512x32xf32, #tpu.memory_space<vmem>>, vector<1x32xf32>,
    }
    %c64_i32_1 = arith.constant 64 : i32
    return
  }
  func.func @transform_0(%arg0: i32, %arg1: memref<64xi32, #tpu.memory_space<smem>>) -> (i32, i32) {
    %c0_i32 = arith.constant 0 : i32
    %c0_i32_0 = arith.constant 0 : i32
    %c0_i32_1 = arith.constant 0 : i32
    return %c0_i32, %c0_i32_0 : i32, i32
  }
  func.func @transform_1(%arg0: i32, %arg1: memref<64xi32, #tpu.memory_space<smem>>) -> (i32, i32) {
    %c0_i32 = arith.constant 0 : i32
    %c0_i32_0 = arith.constant 0 : i32
    %c0_i32_1 = arith.constant 0 : i32
    return %c0_i32, %c0_i32_0 : i32, i32
  }
}

module attributes {stable_mosaic.version = 11 : i64} {
  func.func @_conv3x3_kernel(%arg0: i32, %arg1: memref<1x10x10x64xf32, #tpu.memory_space<vmem>>, %arg2: memref<9x64x64xbf16, #tpu.memory_space<vmem>>, %arg3: memref<1x64xf32, #tpu.memory_space<vmem>>, %arg4: memref<1x64xf32, #tpu.memory_space<vmem>>, %arg5: memref<1x8x8x64xf32, #tpu.memory_space<vmem>>) attributes {dimension_semantics = [#tpu.dimension_semantics<parallel>], iteration_bounds = array<i64: 2>, scalar_prefetch = 0 : i64, scratch_operands = 0 : i64, tpu.core_type = #tpu.core_type<tc>, window_params = [{transform_indices = @transform_0, window_bounds = array<i64: 1, 10, 10, 64>}, {pipeline_mode = #tpu.pipeline_mode<synchronous>, transform_indices = @transform_1, window_bounds = array<i64: 9, 64, 64>}, {pipeline_mode = #tpu.pipeline_mode<synchronous>, transform_indices = @transform_2, window_bounds = array<i64: 1, 64>}, {pipeline_mode = #tpu.pipeline_mode<synchronous>, transform_indices = @transform_3, window_bounds = array<i64: 1, 64>}, {transform_indices = @transform_4, window_bounds = array<i64: 1, 8, 8, 64>}]} {
    %c0 = arith.constant 0 : index
    %c0_0 = arith.constant 0 : index
    %c0_1 = arith.constant 0 : index
    %c0_2 = arith.constant 0 : index
    %0 = vector.load %arg1[%c0, %c0_0, %c0_1, %c0_2] : memref<1x10x10x64xf32, #tpu.memory_space<vmem>>, vector<1x10x10x64xf32>
    %1 = vector.shape_cast %0 : vector<1x10x10x64xf32> to vector<10x10x64xf32>
    %cst = arith.constant 0.000000e+00 : f32
    %2 = vector.broadcast %cst : f32 to vector<64x64xf32>
    %3 = vector.extract_strided_slice %1 {offsets = [0, 0, 0], sizes = [8, 8, 64], strides = [1, 1, 1]} : vector<10x10x64xf32> to vector<8x8x64xf32>
    %4 = vector.shape_cast %3 : vector<8x8x64xf32> to vector<64x64xf32>
    %5 = arith.truncf %4 : vector<64x64xf32> to vector<64x64xbf16>
    %c0_3 = arith.constant 0 : index
    %c0_4 = arith.constant 0 : index
    %c0_5 = arith.constant 0 : index
    %6 = vector.load %arg2[%c0_3, %c0_4, %c0_5] : memref<9x64x64xbf16, #tpu.memory_space<vmem>>, vector<1x64x64xbf16>
    %7 = vector.shape_cast %6 : vector<1x64x64xbf16> to vector<64x64xbf16>
    %cst_6 = arith.constant dense<0.000000e+00> : vector<64x64xf32>
    %8 = tpu.matmul %5, %7, %cst_6 {dimension_numbers = #tpu.dot_dimension_numbers<[1], [0], [0], [1], [0, 0, 1, 1], [], []>} : vector<64x64xbf16>, vector<64x64xbf16>, vector<64x64xf32> -> vector<64x64xf32>
    %9 = arith.addf %2, %8 : vector<64x64xf32>
    %10 = vector.extract_strided_slice %1 {offsets = [0, 1, 0], sizes = [8, 8, 64], strides = [1, 1, 1]} : vector<10x10x64xf32> to vector<8x8x64xf32>
    %11 = vector.shape_cast %10 : vector<8x8x64xf32> to vector<64x64xf32>
    %12 = arith.truncf %11 : vector<64x64xf32> to vector<64x64xbf16>
    %c1 = arith.constant 1 : index
    %c0_7 = arith.constant 0 : index
    %c0_8 = arith.constant 0 : index
    %13 = vector.load %arg2[%c1, %c0_7, %c0_8] : memref<9x64x64xbf16, #tpu.memory_space<vmem>>, vector<1x64x64xbf16>
    %14 = vector.shape_cast %13 : vector<1x64x64xbf16> to vector<64x64xbf16>
    %cst_9 = arith.constant dense<0.000000e+00> : vector<64x64xf32>
    %15 = tpu.matmul %12, %14, %cst_9 {dimension_numbers = #tpu.dot_dimension_numbers<[1], [0], [0], [1], [0, 0, 1, 1], [], []>} : vector<64x64xbf16>, vector<64x64xbf16>, vector<64x64xf32> -> vector<64x64xf32>
    %16 = arith.addf %9, %15 : vector<64x64xf32>
    %17 = vector.extract_strided_slice %1 {offsets = [0, 2, 0], sizes = [8, 8, 64], strides = [1, 1, 1]} : vector<10x10x64xf32> to vector<8x8x64xf32>
    %18 = vector.shape_cast %17 : vector<8x8x64xf32> to vector<64x64xf32>
    %19 = arith.truncf %18 : vector<64x64xf32> to vector<64x64xbf16>
    %c2 = arith.constant 2 : index
    %c0_10 = arith.constant 0 : index
    %c0_11 = arith.constant 0 : index
    %20 = vector.load %arg2[%c2, %c0_10, %c0_11] : memref<9x64x64xbf16, #tpu.memory_space<vmem>>, vector<1x64x64xbf16>
    %21 = vector.shape_cast %20 : vector<1x64x64xbf16> to vector<64x64xbf16>
    %cst_12 = arith.constant dense<0.000000e+00> : vector<64x64xf32>
    %22 = tpu.matmul %19, %21, %cst_12 {dimension_numbers = #tpu.dot_dimension_numbers<[1], [0], [0], [1], [0, 0, 1, 1], [], []>} : vector<64x64xbf16>, vector<64x64xbf16>, vector<64x64xf32> -> vector<64x64xf32>
    %23 = arith.addf %16, %22 : vector<64x64xf32>
    %24 = vector.extract_strided_slice %1 {offsets = [1, 0, 0], sizes = [8, 8, 64], strides = [1, 1, 1]} : vector<10x10x64xf32> to vector<8x8x64xf32>
    %25 = vector.shape_cast %24 : vector<8x8x64xf32> to vector<64x64xf32>
    %26 = arith.truncf %25 : vector<64x64xf32> to vector<64x64xbf16>
    %c3 = arith.constant 3 : index
    %c0_13 = arith.constant 0 : index
    %c0_14 = arith.constant 0 : index
    %27 = vector.load %arg2[%c3, %c0_13, %c0_14] : memref<9x64x64xbf16, #tpu.memory_space<vmem>>, vector<1x64x64xbf16>
    %28 = vector.shape_cast %27 : vector<1x64x64xbf16> to vector<64x64xbf16>
    %cst_15 = arith.constant dense<0.000000e+00> : vector<64x64xf32>
    %29 = tpu.matmul %26, %28, %cst_15 {dimension_numbers = #tpu.dot_dimension_numbers<[1], [0], [0], [1], [0, 0, 1, 1], [], []>} : vector<64x64xbf16>, vector<64x64xbf16>, vector<64x64xf32> -> vector<64x64xf32>
    %30 = arith.addf %23, %29 : vector<64x64xf32>
    %31 = vector.extract_strided_slice %1 {offsets = [1, 1, 0], sizes = [8, 8, 64], strides = [1, 1, 1]} : vector<10x10x64xf32> to vector<8x8x64xf32>
    %32 = vector.shape_cast %31 : vector<8x8x64xf32> to vector<64x64xf32>
    %33 = arith.truncf %32 : vector<64x64xf32> to vector<64x64xbf16>
    %c4 = arith.constant 4 : index
    %c0_16 = arith.constant 0 : index
    %c0_17 = arith.constant 0 : index
    %34 = vector.load %arg2[%c4, %c0_16, %c0_17] : memref<9x64x64xbf16, #tpu.memory_space<vmem>>, vector<1x64x64xbf16>
    %35 = vector.shape_cast %34 : vector<1x64x64xbf16> to vector<64x64xbf16>
    %cst_18 = arith.constant dense<0.000000e+00> : vector<64x64xf32>
    %36 = tpu.matmul %33, %35, %cst_18 {dimension_numbers = #tpu.dot_dimension_numbers<[1], [0], [0], [1], [0, 0, 1, 1], [], []>} : vector<64x64xbf16>, vector<64x64xbf16>, vector<64x64xf32> -> vector<64x64xf32>
    %37 = arith.addf %30, %36 : vector<64x64xf32>
    %38 = vector.extract_strided_slice %1 {offsets = [1, 2, 0], sizes = [8, 8, 64], strides = [1, 1, 1]} : vector<10x10x64xf32> to vector<8x8x64xf32>
    %39 = vector.shape_cast %38 : vector<8x8x64xf32> to vector<64x64xf32>
    %40 = arith.truncf %39 : vector<64x64xf32> to vector<64x64xbf16>
    %c5 = arith.constant 5 : index
    %c0_19 = arith.constant 0 : index
    %c0_20 = arith.constant 0 : index
    %41 = vector.load %arg2[%c5, %c0_19, %c0_20] : memref<9x64x64xbf16, #tpu.memory_space<vmem>>, vector<1x64x64xbf16>
    %42 = vector.shape_cast %41 : vector<1x64x64xbf16> to vector<64x64xbf16>
    %cst_21 = arith.constant dense<0.000000e+00> : vector<64x64xf32>
    %43 = tpu.matmul %40, %42, %cst_21 {dimension_numbers = #tpu.dot_dimension_numbers<[1], [0], [0], [1], [0, 0, 1, 1], [], []>} : vector<64x64xbf16>, vector<64x64xbf16>, vector<64x64xf32> -> vector<64x64xf32>
    %44 = arith.addf %37, %43 : vector<64x64xf32>
    %45 = vector.extract_strided_slice %1 {offsets = [2, 0, 0], sizes = [8, 8, 64], strides = [1, 1, 1]} : vector<10x10x64xf32> to vector<8x8x64xf32>
    %46 = vector.shape_cast %45 : vector<8x8x64xf32> to vector<64x64xf32>
    %47 = arith.truncf %46 : vector<64x64xf32> to vector<64x64xbf16>
    %c6 = arith.constant 6 : index
    %c0_22 = arith.constant 0 : index
    %c0_23 = arith.constant 0 : index
    %48 = vector.load %arg2[%c6, %c0_22, %c0_23] : memref<9x64x64xbf16, #tpu.memory_space<vmem>>, vector<1x64x64xbf16>
    %49 = vector.shape_cast %48 : vector<1x64x64xbf16> to vector<64x64xbf16>
    %cst_24 = arith.constant dense<0.000000e+00> : vector<64x64xf32>
    %50 = tpu.matmul %47, %49, %cst_24 {dimension_numbers = #tpu.dot_dimension_numbers<[1], [0], [0], [1], [0, 0, 1, 1], [], []>} : vector<64x64xbf16>, vector<64x64xbf16>, vector<64x64xf32> -> vector<64x64xf32>
    %51 = arith.addf %44, %50 : vector<64x64xf32>
    %52 = vector.extract_strided_slice %1 {offsets = [2, 1, 0], sizes = [8, 8, 64], strides = [1, 1, 1]} : vector<10x10x64xf32> to vector<8x8x64xf32>
    %53 = vector.shape_cast %52 : vector<8x8x64xf32> to vector<64x64xf32>
    %54 = arith.truncf %53 : vector<64x64xf32> to vector<64x64xbf16>
    %c7 = arith.constant 7 : index
    %c0_25 = arith.constant 0 : index
    %c0_26 = arith.constant 0 : index
    %55 = vector.load %arg2[%c7, %c0_25, %c0_26] : memref<9x64x64xbf16, #tpu.memory_space<vmem>>, vector<1x64x64xbf16>
    %56 = vector.shape_cast %55 : vector<1x64x64xbf16> to vector<64x64xbf16>
    %cst_27 = arith.constant dense<0.000000e+00> : vector<64x64xf32>
    %57 = tpu.matmul %54, %56, %cst_27 {dimension_numbers = #tpu.dot_dimension_numbers<[1], [0], [0], [1], [0, 0, 1, 1], [], []>} : vector<64x64xbf16>, vector<64x64xbf16>, vector<64x64xf32> -> vector<64x64xf32>
    %58 = arith.addf %51, %57 : vector<64x64xf32>
    %59 = vector.extract_strided_slice %1 {offsets = [2, 2, 0], sizes = [8, 8, 64], strides = [1, 1, 1]} : vector<10x10x64xf32> to vector<8x8x64xf32>
    %60 = vector.shape_cast %59 : vector<8x8x64xf32> to vector<64x64xf32>
    %61 = arith.truncf %60 : vector<64x64xf32> to vector<64x64xbf16>
    %c8 = arith.constant 8 : index
    %c0_28 = arith.constant 0 : index
    %c0_29 = arith.constant 0 : index
    %62 = vector.load %arg2[%c8, %c0_28, %c0_29] : memref<9x64x64xbf16, #tpu.memory_space<vmem>>, vector<1x64x64xbf16>
    %63 = vector.shape_cast %62 : vector<1x64x64xbf16> to vector<64x64xbf16>
    %cst_30 = arith.constant dense<0.000000e+00> : vector<64x64xf32>
    %64 = tpu.matmul %61, %63, %cst_30 {dimension_numbers = #tpu.dot_dimension_numbers<[1], [0], [0], [1], [0, 0, 1, 1], [], []>} : vector<64x64xbf16>, vector<64x64xbf16>, vector<64x64xf32> -> vector<64x64xf32>
    %65 = arith.addf %58, %64 : vector<64x64xf32>
    %c0_31 = arith.constant 0 : index
    %c0_32 = arith.constant 0 : index
    %66 = vector.load %arg3[%c0_31, %c0_32] : memref<1x64xf32, #tpu.memory_space<vmem>>, vector<1x64xf32>
    %67 = vector.broadcast %66 : vector<1x64xf32> to vector<64x64xf32>
    %68 = arith.mulf %65, %67 : vector<64x64xf32>
    %c0_33 = arith.constant 0 : index
    %c0_34 = arith.constant 0 : index
    %69 = vector.load %arg4[%c0_33, %c0_34] : memref<1x64xf32, #tpu.memory_space<vmem>>, vector<1x64xf32>
    %70 = vector.broadcast %69 : vector<1x64xf32> to vector<64x64xf32>
    %71 = arith.addf %68, %70 : vector<64x64xf32>
    %cst_35 = arith.constant 0.000000e+00 : f32
    %72 = vector.broadcast %cst_35 : f32 to vector<64x64xf32>
    %73 = arith.maximumf %71, %72 : vector<64x64xf32>
    %74 = vector.shape_cast %73 : vector<64x64xf32> to vector<8x8x64xf32>
    %c0_36 = arith.constant 0 : index
    %c0_37 = arith.constant 0 : index
    %c0_38 = arith.constant 0 : index
    %c0_39 = arith.constant 0 : index
    %75 = vector.load %arg5[%c0_36, %c0_37, %c0_38, %c0_39] : memref<1x8x8x64xf32, #tpu.memory_space<vmem>>, vector<1x8x8x64xf32>
    %76 = vector.shape_cast %75 : vector<1x8x8x64xf32> to vector<8x8x64xf32>
    %77 = vector.shape_cast %74 : vector<8x8x64xf32> to vector<1x8x8x64xf32>
    tpu.vector_store %arg5[%c0_36, %c0_37, %c0_38, %c0_39], %77 {strides = array<i32>} : memref<1x8x8x64xf32, #tpu.memory_space<vmem>>, vector<1x8x8x64xf32>,
    return
  }
  func.func @transform_0(%arg0: i32) -> (i32, i32, i32, i32) {
    %c0_i32 = arith.constant 0 : i32
    %c0_i32_0 = arith.constant 0 : i32
    %c0_i32_1 = arith.constant 0 : i32
    %c0_i32_2 = arith.constant 0 : i32
    return %arg0, %c0_i32, %c0_i32_0, %c0_i32_1 : i32, i32, i32, i32
  }
  func.func @transform_1(%arg0: i32) -> (i32, i32, i32) {
    %c0_i32 = arith.constant 0 : i32
    %c0_i32_0 = arith.constant 0 : i32
    %c0_i32_1 = arith.constant 0 : i32
    %c0_i32_2 = arith.constant 0 : i32
    return %c0_i32, %c0_i32_0, %c0_i32_1 : i32, i32, i32
  }
  func.func @transform_2(%arg0: i32) -> (i32, i32) {
    %c0_i32 = arith.constant 0 : i32
    %c0_i32_0 = arith.constant 0 : i32
    %c0_i32_1 = arith.constant 0 : i32
    return %c0_i32, %c0_i32_0 : i32, i32
  }
  func.func @transform_3(%arg0: i32) -> (i32, i32) {
    %c0_i32 = arith.constant 0 : i32
    %c0_i32_0 = arith.constant 0 : i32
    %c0_i32_1 = arith.constant 0 : i32
    return %c0_i32, %c0_i32_0 : i32, i32
  }
  func.func @transform_4(%arg0: i32) -> (i32, i32, i32, i32) {
    %c0_i32 = arith.constant 0 : i32
    %c0_i32_0 = arith.constant 0 : i32
    %c0_i32_1 = arith.constant 0 : i32
    %c0_i32_2 = arith.constant 0 : i32
    return %arg0, %c0_i32, %c0_i32_0, %c0_i32_1 : i32, i32, i32, i32
  }
}

module attributes {stable_mosaic.version = 11 : i64} {
  func.func @_conv3x3_kernel(%arg0: i32, %arg1: memref<1x9x9x32xf32, #tpu.memory_space<vmem>>, %arg2: memref<1x9x9x32xf32, #tpu.memory_space<vmem>>, %arg3: memref<1x9x9x32xf32, #tpu.memory_space<vmem>>, %arg4: memref<1x9x9x32xf32, #tpu.memory_space<vmem>>, %arg5: memref<9x32x64xbf16, #tpu.memory_space<vmem>>, %arg6: memref<1x64xf32, #tpu.memory_space<vmem>>, %arg7: memref<1x64xf32, #tpu.memory_space<vmem>>, %arg8: memref<1x8x8x64xf32, #tpu.memory_space<vmem>>) attributes {dimension_semantics = [#tpu.dimension_semantics<parallel>], iteration_bounds = array<i64: 2>, scalar_prefetch = 0 : i64, scratch_operands = 0 : i64, tpu.core_type = #tpu.core_type<tc>, window_params = [{transform_indices = @transform_0, window_bounds = array<i64: 1, 9, 9, 32>}, {transform_indices = @transform_1, window_bounds = array<i64: 1, 9, 9, 32>}, {transform_indices = @transform_2, window_bounds = array<i64: 1, 9, 9, 32>}, {transform_indices = @transform_3, window_bounds = array<i64: 1, 9, 9, 32>}, {pipeline_mode = #tpu.pipeline_mode<synchronous>, transform_indices = @transform_4, window_bounds = array<i64: 9, 32, 64>}, {pipeline_mode = #tpu.pipeline_mode<synchronous>, transform_indices = @transform_5, window_bounds = array<i64: 1, 64>}, {pipeline_mode = #tpu.pipeline_mode<synchronous>, transform_indices = @transform_6, window_bounds = array<i64: 1, 64>}, {transform_indices = @transform_7, window_bounds = array<i64: 1, 8, 8, 64>}]} {
    %c0 = arith.constant 0 : index
    %c0_0 = arith.constant 0 : index
    %c0_1 = arith.constant 0 : index
    %c0_2 = arith.constant 0 : index
    %0 = vector.load %arg1[%c0, %c0_0, %c0_1, %c0_2] : memref<1x9x9x32xf32, #tpu.memory_space<vmem>>, vector<1x9x9x32xf32>
    %1 = vector.shape_cast %0 : vector<1x9x9x32xf32> to vector<9x9x32xf32>
    %c0_3 = arith.constant 0 : index
    %c0_4 = arith.constant 0 : index
    %c0_5 = arith.constant 0 : index
    %c0_6 = arith.constant 0 : index
    %2 = vector.load %arg2[%c0_3, %c0_4, %c0_5, %c0_6] : memref<1x9x9x32xf32, #tpu.memory_space<vmem>>, vector<1x9x9x32xf32>
    %3 = vector.shape_cast %2 : vector<1x9x9x32xf32> to vector<9x9x32xf32>
    %c0_7 = arith.constant 0 : index
    %c0_8 = arith.constant 0 : index
    %c0_9 = arith.constant 0 : index
    %c0_10 = arith.constant 0 : index
    %4 = vector.load %arg3[%c0_7, %c0_8, %c0_9, %c0_10] : memref<1x9x9x32xf32, #tpu.memory_space<vmem>>, vector<1x9x9x32xf32>
    %5 = vector.shape_cast %4 : vector<1x9x9x32xf32> to vector<9x9x32xf32>
    %c0_11 = arith.constant 0 : index
    %c0_12 = arith.constant 0 : index
    %c0_13 = arith.constant 0 : index
    %c0_14 = arith.constant 0 : index
    %6 = vector.load %arg4[%c0_11, %c0_12, %c0_13, %c0_14] : memref<1x9x9x32xf32, #tpu.memory_space<vmem>>, vector<1x9x9x32xf32>
    %7 = vector.shape_cast %6 : vector<1x9x9x32xf32> to vector<9x9x32xf32>
    %cst = arith.constant 0.000000e+00 : f32
    %8 = vector.broadcast %cst : f32 to vector<64x64xf32>
    %9 = vector.extract_strided_slice %1 {offsets = [0, 0, 0], sizes = [8, 8, 32], strides = [1, 1, 1]} : vector<9x9x32xf32> to vector<8x8x32xf32>
    %10 = vector.shape_cast %9 : vector<8x8x32xf32> to vector<64x32xf32>
    %11 = arith.truncf %10 : vector<64x32xf32> to vector<64x32xbf16>
    %c0_15 = arith.constant 0 : index
    %c0_16 = arith.constant 0 : index
    %c0_17 = arith.constant 0 : index
    %12 = vector.load %arg5[%c0_15, %c0_16, %c0_17] : memref<9x32x64xbf16, #tpu.memory_space<vmem>>, vector<1x32x64xbf16>
    %13 = vector.shape_cast %12 : vector<1x32x64xbf16> to vector<32x64xbf16>
    %cst_18 = arith.constant dense<0.000000e+00> : vector<64x64xf32>
    %14 = tpu.matmul %11, %13, %cst_18 {dimension_numbers = #tpu.dot_dimension_numbers<[1], [0], [0], [1], [0, 0, 1, 1], [], []>} : vector<64x32xbf16>, vector<32x64xbf16>, vector<64x64xf32> -> vector<64x64xf32>
    %15 = arith.addf %8, %14 : vector<64x64xf32>
    %16 = vector.extract_strided_slice %3 {offsets = [0, 0, 0], sizes = [8, 8, 32], strides = [1, 1, 1]} : vector<9x9x32xf32> to vector<8x8x32xf32>
    %17 = vector.shape_cast %16 : vector<8x8x32xf32> to vector<64x32xf32>
    %18 = arith.truncf %17 : vector<64x32xf32> to vector<64x32xbf16>
    %c1 = arith.constant 1 : index
    %c0_19 = arith.constant 0 : index
    %c0_20 = arith.constant 0 : index
    %19 = vector.load %arg5[%c1, %c0_19, %c0_20] : memref<9x32x64xbf16, #tpu.memory_space<vmem>>, vector<1x32x64xbf16>
    %20 = vector.shape_cast %19 : vector<1x32x64xbf16> to vector<32x64xbf16>
    %cst_21 = arith.constant dense<0.000000e+00> : vector<64x64xf32>
    %21 = tpu.matmul %18, %20, %cst_21 {dimension_numbers = #tpu.dot_dimension_numbers<[1], [0], [0], [1], [0, 0, 1, 1], [], []>} : vector<64x32xbf16>, vector<32x64xbf16>, vector<64x64xf32> -> vector<64x64xf32>
    %22 = arith.addf %15, %21 : vector<64x64xf32>
    %23 = vector.extract_strided_slice %1 {offsets = [0, 1, 0], sizes = [8, 8, 32], strides = [1, 1, 1]} : vector<9x9x32xf32> to vector<8x8x32xf32>
    %24 = vector.shape_cast %23 : vector<8x8x32xf32> to vector<64x32xf32>
    %25 = arith.truncf %24 : vector<64x32xf32> to vector<64x32xbf16>
    %c2 = arith.constant 2 : index
    %c0_22 = arith.constant 0 : index
    %c0_23 = arith.constant 0 : index
    %26 = vector.load %arg5[%c2, %c0_22, %c0_23] : memref<9x32x64xbf16, #tpu.memory_space<vmem>>, vector<1x32x64xbf16>
    %27 = vector.shape_cast %26 : vector<1x32x64xbf16> to vector<32x64xbf16>
    %cst_24 = arith.constant dense<0.000000e+00> : vector<64x64xf32>
    %28 = tpu.matmul %25, %27, %cst_24 {dimension_numbers = #tpu.dot_dimension_numbers<[1], [0], [0], [1], [0, 0, 1, 1], [], []>} : vector<64x32xbf16>, vector<32x64xbf16>, vector<64x64xf32> -> vector<64x64xf32>
    %29 = arith.addf %22, %28 : vector<64x64xf32>
    %30 = vector.extract_strided_slice %5 {offsets = [0, 0, 0], sizes = [8, 8, 32], strides = [1, 1, 1]} : vector<9x9x32xf32> to vector<8x8x32xf32>
    %31 = vector.shape_cast %30 : vector<8x8x32xf32> to vector<64x32xf32>
    %32 = arith.truncf %31 : vector<64x32xf32> to vector<64x32xbf16>
    %c3 = arith.constant 3 : index
    %c0_25 = arith.constant 0 : index
    %c0_26 = arith.constant 0 : index
    %33 = vector.load %arg5[%c3, %c0_25, %c0_26] : memref<9x32x64xbf16, #tpu.memory_space<vmem>>, vector<1x32x64xbf16>
    %34 = vector.shape_cast %33 : vector<1x32x64xbf16> to vector<32x64xbf16>
    %cst_27 = arith.constant dense<0.000000e+00> : vector<64x64xf32>
    %35 = tpu.matmul %32, %34, %cst_27 {dimension_numbers = #tpu.dot_dimension_numbers<[1], [0], [0], [1], [0, 0, 1, 1], [], []>} : vector<64x32xbf16>, vector<32x64xbf16>, vector<64x64xf32> -> vector<64x64xf32>
    %36 = arith.addf %29, %35 : vector<64x64xf32>
    %37 = vector.extract_strided_slice %7 {offsets = [0, 0, 0], sizes = [8, 8, 32], strides = [1, 1, 1]} : vector<9x9x32xf32> to vector<8x8x32xf32>
    %38 = vector.shape_cast %37 : vector<8x8x32xf32> to vector<64x32xf32>
    %39 = arith.truncf %38 : vector<64x32xf32> to vector<64x32xbf16>
    %c4 = arith.constant 4 : index
    %c0_28 = arith.constant 0 : index
    %c0_29 = arith.constant 0 : index
    %40 = vector.load %arg5[%c4, %c0_28, %c0_29] : memref<9x32x64xbf16, #tpu.memory_space<vmem>>, vector<1x32x64xbf16>
    %41 = vector.shape_cast %40 : vector<1x32x64xbf16> to vector<32x64xbf16>
    %cst_30 = arith.constant dense<0.000000e+00> : vector<64x64xf32>
    %42 = tpu.matmul %39, %41, %cst_30 {dimension_numbers = #tpu.dot_dimension_numbers<[1], [0], [0], [1], [0, 0, 1, 1], [], []>} : vector<64x32xbf16>, vector<32x64xbf16>, vector<64x64xf32> -> vector<64x64xf32>
    %43 = arith.addf %36, %42 : vector<64x64xf32>
    %44 = vector.extract_strided_slice %5 {offsets = [0, 1, 0], sizes = [8, 8, 32], strides = [1, 1, 1]} : vector<9x9x32xf32> to vector<8x8x32xf32>
    %45 = vector.shape_cast %44 : vector<8x8x32xf32> to vector<64x32xf32>
    %46 = arith.truncf %45 : vector<64x32xf32> to vector<64x32xbf16>
    %c5 = arith.constant 5 : index
    %c0_31 = arith.constant 0 : index
    %c0_32 = arith.constant 0 : index
    %47 = vector.load %arg5[%c5, %c0_31, %c0_32] : memref<9x32x64xbf16, #tpu.memory_space<vmem>>, vector<1x32x64xbf16>
    %48 = vector.shape_cast %47 : vector<1x32x64xbf16> to vector<32x64xbf16>
    %cst_33 = arith.constant dense<0.000000e+00> : vector<64x64xf32>
    %49 = tpu.matmul %46, %48, %cst_33 {dimension_numbers = #tpu.dot_dimension_numbers<[1], [0], [0], [1], [0, 0, 1, 1], [], []>} : vector<64x32xbf16>, vector<32x64xbf16>, vector<64x64xf32> -> vector<64x64xf32>
    %50 = arith.addf %43, %49 : vector<64x64xf32>
    %51 = vector.extract_strided_slice %1 {offsets = [1, 0, 0], sizes = [8, 8, 32], strides = [1, 1, 1]} : vector<9x9x32xf32> to vector<8x8x32xf32>
    %52 = vector.shape_cast %51 : vector<8x8x32xf32> to vector<64x32xf32>
    %53 = arith.truncf %52 : vector<64x32xf32> to vector<64x32xbf16>
    %c6 = arith.constant 6 : index
    %c0_34 = arith.constant 0 : index
    %c0_35 = arith.constant 0 : index
    %54 = vector.load %arg5[%c6, %c0_34, %c0_35] : memref<9x32x64xbf16, #tpu.memory_space<vmem>>, vector<1x32x64xbf16>
    %55 = vector.shape_cast %54 : vector<1x32x64xbf16> to vector<32x64xbf16>
    %cst_36 = arith.constant dense<0.000000e+00> : vector<64x64xf32>
    %56 = tpu.matmul %53, %55, %cst_36 {dimension_numbers = #tpu.dot_dimension_numbers<[1], [0], [0], [1], [0, 0, 1, 1], [], []>} : vector<64x32xbf16>, vector<32x64xbf16>, vector<64x64xf32> -> vector<64x64xf32>
    %57 = arith.addf %50, %56 : vector<64x64xf32>
    %58 = vector.extract_strided_slice %3 {offsets = [1, 0, 0], sizes = [8, 8, 32], strides = [1, 1, 1]} : vector<9x9x32xf32> to vector<8x8x32xf32>
    %59 = vector.shape_cast %58 : vector<8x8x32xf32> to vector<64x32xf32>
    %60 = arith.truncf %59 : vector<64x32xf32> to vector<64x32xbf16>
    %c7 = arith.constant 7 : index
    %c0_37 = arith.constant 0 : index
    %c0_38 = arith.constant 0 : index
    %61 = vector.load %arg5[%c7, %c0_37, %c0_38] : memref<9x32x64xbf16, #tpu.memory_space<vmem>>, vector<1x32x64xbf16>
    %62 = vector.shape_cast %61 : vector<1x32x64xbf16> to vector<32x64xbf16>
    %cst_39 = arith.constant dense<0.000000e+00> : vector<64x64xf32>
    %63 = tpu.matmul %60, %62, %cst_39 {dimension_numbers = #tpu.dot_dimension_numbers<[1], [0], [0], [1], [0, 0, 1, 1], [], []>} : vector<64x32xbf16>, vector<32x64xbf16>, vector<64x64xf32> -> vector<64x64xf32>
    %64 = arith.addf %57, %63 : vector<64x64xf32>
    %65 = vector.extract_strided_slice %1 {offsets = [1, 1, 0], sizes = [8, 8, 32], strides = [1, 1, 1]} : vector<9x9x32xf32> to vector<8x8x32xf32>
    %66 = vector.shape_cast %65 : vector<8x8x32xf32> to vector<64x32xf32>
    %67 = arith.truncf %66 : vector<64x32xf32> to vector<64x32xbf16>
    %c8 = arith.constant 8 : index
    %c0_40 = arith.constant 0 : index
    %c0_41 = arith.constant 0 : index
    %68 = vector.load %arg5[%c8, %c0_40, %c0_41] : memref<9x32x64xbf16, #tpu.memory_space<vmem>>, vector<1x32x64xbf16>
    %69 = vector.shape_cast %68 : vector<1x32x64xbf16> to vector<32x64xbf16>
    %cst_42 = arith.constant dense<0.000000e+00> : vector<64x64xf32>
    %70 = tpu.matmul %67, %69, %cst_42 {dimension_numbers = #tpu.dot_dimension_numbers<[1], [0], [0], [1], [0, 0, 1, 1], [], []>} : vector<64x32xbf16>, vector<32x64xbf16>, vector<64x64xf32> -> vector<64x64xf32>
    %71 = arith.addf %64, %70 : vector<64x64xf32>
    %c0_43 = arith.constant 0 : index
    %c0_44 = arith.constant 0 : index
    %72 = vector.load %arg6[%c0_43, %c0_44] : memref<1x64xf32, #tpu.memory_space<vmem>>, vector<1x64xf32>
    %73 = vector.broadcast %72 : vector<1x64xf32> to vector<64x64xf32>
    %74 = arith.mulf %71, %73 : vector<64x64xf32>
    %c0_45 = arith.constant 0 : index
    %c0_46 = arith.constant 0 : index
    %75 = vector.load %arg7[%c0_45, %c0_46] : memref<1x64xf32, #tpu.memory_space<vmem>>, vector<1x64xf32>
    %76 = vector.broadcast %75 : vector<1x64xf32> to vector<64x64xf32>
    %77 = arith.addf %74, %76 : vector<64x64xf32>
    %cst_47 = arith.constant 0.000000e+00 : f32
    %78 = vector.broadcast %cst_47 : f32 to vector<64x64xf32>
    %79 = arith.maximumf %77, %78 : vector<64x64xf32>
    %80 = vector.shape_cast %79 : vector<64x64xf32> to vector<8x8x64xf32>
    %c0_48 = arith.constant 0 : index
    %c0_49 = arith.constant 0 : index
    %c0_50 = arith.constant 0 : index
    %c0_51 = arith.constant 0 : index
    %81 = vector.load %arg8[%c0_48, %c0_49, %c0_50, %c0_51] : memref<1x8x8x64xf32, #tpu.memory_space<vmem>>, vector<1x8x8x64xf32>
    %82 = vector.shape_cast %81 : vector<1x8x8x64xf32> to vector<8x8x64xf32>
    %83 = vector.shape_cast %80 : vector<8x8x64xf32> to vector<1x8x8x64xf32>
    tpu.vector_store %arg8[%c0_48, %c0_49, %c0_50, %c0_51], %83 {strides = array<i32>} : memref<1x8x8x64xf32, #tpu.memory_space<vmem>>, vector<1x8x8x64xf32>,
    return
  }
  func.func @transform_0(%arg0: i32) -> (i32, i32, i32, i32) {
    %c0_i32 = arith.constant 0 : i32
    %c0_i32_0 = arith.constant 0 : i32
    %c0_i32_1 = arith.constant 0 : i32
    %c0_i32_2 = arith.constant 0 : i32
    return %arg0, %c0_i32, %c0_i32_0, %c0_i32_1 : i32, i32, i32, i32
  }
  func.func @transform_1(%arg0: i32) -> (i32, i32, i32, i32) {
    %c0_i32 = arith.constant 0 : i32
    %c0_i32_0 = arith.constant 0 : i32
    %c0_i32_1 = arith.constant 0 : i32
    %c0_i32_2 = arith.constant 0 : i32
    return %arg0, %c0_i32, %c0_i32_0, %c0_i32_1 : i32, i32, i32, i32
  }
  func.func @transform_2(%arg0: i32) -> (i32, i32, i32, i32) {
    %c0_i32 = arith.constant 0 : i32
    %c0_i32_0 = arith.constant 0 : i32
    %c0_i32_1 = arith.constant 0 : i32
    %c0_i32_2 = arith.constant 0 : i32
    return %arg0, %c0_i32, %c0_i32_0, %c0_i32_1 : i32, i32, i32, i32
  }
  func.func @transform_3(%arg0: i32) -> (i32, i32, i32, i32) {
    %c0_i32 = arith.constant 0 : i32
    %c0_i32_0 = arith.constant 0 : i32
    %c0_i32_1 = arith.constant 0 : i32
    %c0_i32_2 = arith.constant 0 : i32
    return %arg0, %c0_i32, %c0_i32_0, %c0_i32_1 : i32, i32, i32, i32
  }
  func.func @transform_4(%arg0: i32) -> (i32, i32, i32) {
    %c0_i32 = arith.constant 0 : i32
    %c0_i32_0 = arith.constant 0 : i32
    %c0_i32_1 = arith.constant 0 : i32
    %c0_i32_2 = arith.constant 0 : i32
    return %c0_i32, %c0_i32_0, %c0_i32_1 : i32, i32, i32
  }
  func.func @transform_5(%arg0: i32) -> (i32, i32) {
    %c0_i32 = arith.constant 0 : i32
    %c0_i32_0 = arith.constant 0 : i32
    %c0_i32_1 = arith.constant 0 : i32
    return %c0_i32, %c0_i32_0 : i32, i32
  }
  func.func @transform_6(%arg0: i32) -> (i32, i32) {
    %c0_i32 = arith.constant 0 : i32
    %c0_i32_0 = arith.constant 0 : i32
    %c0_i32_1 = arith.constant 0 : i32
    return %c0_i32, %c0_i32_0 : i32, i32
  }
  func.func @transform_7(%arg0: i32) -> (i32, i32, i32, i32) {
    %c0_i32 = arith.constant 0 : i32
    %c0_i32_0 = arith.constant 0 : i32
    %c0_i32_1 = arith.constant 0 : i32
    %c0_i32_2 = arith.constant 0 : i32
    return %arg0, %c0_i32, %c0_i32_0, %c0_i32_1 : i32, i32, i32, i32
  }
}

module attributes {stable_mosaic.version = 11 : i64} {
  func.func @_deblock_head_kernel(%arg0: i32, %arg1: memref<1x4x64x32xbf16, #tpu.memory_space<vmem>>, %arg2: memref<1x64x64xbf16, #tpu.memory_space<vmem>>, %arg3: memref<32x64xbf16, #tpu.memory_space<vmem>>, %arg4: memref<1x64xf32, #tpu.memory_space<vmem>>, %arg5: memref<1x64xf32, #tpu.memory_space<vmem>>, %arg6: memref<4x64x64xbf16, #tpu.memory_space<vmem>>, %arg7: memref<1x64xf32, #tpu.memory_space<vmem>>, %arg8: memref<1x64xf32, #tpu.memory_space<vmem>>, %arg9: memref<64x128xbf16, #tpu.memory_space<vmem>>, %arg10: memref<64x128xbf16, #tpu.memory_space<vmem>>, %arg11: memref<1x128xf32, #tpu.memory_space<vmem>>, %arg12: memref<1x4x64x128xf32, #tpu.memory_space<vmem>>) attributes {dimension_semantics = [#tpu.dimension_semantics<parallel>], iteration_bounds = array<i64: 2>, scalar_prefetch = 0 : i64, scratch_operands = 0 : i64, tpu.core_type = #tpu.core_type<tc>, window_params = [{transform_indices = @transform_0, window_bounds = array<i64: 1, 4, 64, 32>}, {transform_indices = @transform_1, window_bounds = array<i64: 1, 64, 64>}, {pipeline_mode = #tpu.pipeline_mode<synchronous>, transform_indices = @transform_2, window_bounds = array<i64: 32, 64>}, {pipeline_mode = #tpu.pipeline_mode<synchronous>, transform_indices = @transform_3, window_bounds = array<i64: 1, 64>}, {pipeline_mode = #tpu.pipeline_mode<synchronous>, transform_indices = @transform_4, window_bounds = array<i64: 1, 64>}, {pipeline_mode = #tpu.pipeline_mode<synchronous>, transform_indices = @transform_5, window_bounds = array<i64: 4, 64, 64>}, {pipeline_mode = #tpu.pipeline_mode<synchronous>, transform_indices = @transform_6, window_bounds = array<i64: 1, 64>}, {pipeline_mode = #tpu.pipeline_mode<synchronous>, transform_indices = @transform_7, window_bounds = array<i64: 1, 64>}, {pipeline_mode = #tpu.pipeline_mode<synchronous>, transform_indices = @transform_8, window_bounds = array<i64: 64, 128>}, {pipeline_mode = #tpu.pipeline_mode<synchronous>, transform_indices = @transform_9, window_bounds = array<i64: 64, 128>}, {pipeline_mode = #tpu.pipeline_mode<synchronous>, transform_indices = @transform_10, window_bounds = array<i64: 1, 128>}, {transform_indices = @transform_11, window_bounds = array<i64: 1, 4, 64, 128>}]} {
    %c0 = arith.constant 0 : index
    %c0_0 = arith.constant 0 : index
    %c0_1 = arith.constant 0 : index
    %0 = vector.load %arg2[%c0, %c0_0, %c0_1] : memref<1x64x64xbf16, #tpu.memory_space<vmem>>, vector<1x64x64xbf16>
    %1 = vector.shape_cast %0 : vector<1x64x64xbf16> to vector<64x64xbf16>
    %c0_2 = arith.constant 0 : index
    %c0_3 = arith.constant 0 : index
    %2 = vector.load %arg3[%c0_2, %c0_3] : memref<32x64xbf16, #tpu.memory_space<vmem>>, vector<32x64xbf16>
    %c0_4 = arith.constant 0 : index
    %c0_5 = arith.constant 0 : index
    %3 = vector.load %arg9[%c0_4, %c0_5] : memref<64x128xbf16, #tpu.memory_space<vmem>>, vector<64x128xbf16>
    %c0_6 = arith.constant 0 : index
    %c0_7 = arith.constant 0 : index
    %4 = vector.load %arg10[%c0_6, %c0_7] : memref<64x128xbf16, #tpu.memory_space<vmem>>, vector<64x128xbf16>
    %c0_8 = arith.constant 0 : index
    %c0_9 = arith.constant 0 : index
    %c0_10 = arith.constant 0 : index
    %c0_11 = arith.constant 0 : index
    %5 = vector.load %arg1[%c0_8, %c0_9, %c0_10, %c0_11] : memref<1x4x64x32xbf16, #tpu.memory_space<vmem>>, vector<1x1x64x32xbf16>
    %6 = vector.shape_cast %5 : vector<1x1x64x32xbf16> to vector<64x32xbf16>
    %cst = arith.constant dense<0.000000e+00> : vector<64x64xf32>
    %7 = tpu.matmul %6, %2, %cst {dimension_numbers = #tpu.dot_dimension_numbers<[1], [0], [0], [1], [0, 0, 1, 1], [], []>} : vector<64x32xbf16>, vector<32x64xbf16>, vector<64x64xf32> -> vector<64x64xf32>
    %c0_12 = arith.constant 0 : index
    %c0_13 = arith.constant 0 : index
    %8 = vector.load %arg4[%c0_12, %c0_13] : memref<1x64xf32, #tpu.memory_space<vmem>>, vector<1x64xf32>
    %9 = vector.broadcast %8 : vector<1x64xf32> to vector<64x64xf32>
    %10 = arith.mulf %7, %9 : vector<64x64xf32>
    %c0_14 = arith.constant 0 : index
    %c0_15 = arith.constant 0 : index
    %11 = vector.load %arg5[%c0_14, %c0_15] : memref<1x64xf32, #tpu.memory_space<vmem>>, vector<1x64xf32>
    %12 = vector.broadcast %11 : vector<1x64xf32> to vector<64x64xf32>
    %13 = arith.addf %10, %12 : vector<64x64xf32>
    %cst_16 = arith.constant 0.000000e+00 : f32
    %14 = vector.broadcast %cst_16 : f32 to vector<64x64xf32>
    %15 = arith.maximumf %13, %14 : vector<64x64xf32>
    %c0_17 = arith.constant 0 : index
    %c0_18 = arith.constant 0 : index
    %c0_19 = arith.constant 0 : index
    %16 = vector.load %arg6[%c0_17, %c0_18, %c0_19] : memref<4x64x64xbf16, #tpu.memory_space<vmem>>, vector<1x64x64xbf16>
    %17 = vector.shape_cast %16 : vector<1x64x64xbf16> to vector<64x64xbf16>
    %cst_20 = arith.constant dense<0.000000e+00> : vector<64x64xf32>
    %18 = tpu.matmul %1, %17, %cst_20 {dimension_numbers = #tpu.dot_dimension_numbers<[1], [0], [0], [1], [0, 0, 1, 1], [], []>} : vector<64x64xbf16>, vector<64x64xbf16>, vector<64x64xf32> -> vector<64x64xf32>
    %c0_21 = arith.constant 0 : index
    %c0_22 = arith.constant 0 : index
    %19 = vector.load %arg7[%c0_21, %c0_22] : memref<1x64xf32, #tpu.memory_space<vmem>>, vector<1x64xf32>
    %20 = vector.broadcast %19 : vector<1x64xf32> to vector<64x64xf32>
    %21 = arith.mulf %18, %20 : vector<64x64xf32>
    %c0_23 = arith.constant 0 : index
    %c0_24 = arith.constant 0 : index
    %22 = vector.load %arg8[%c0_23, %c0_24] : memref<1x64xf32, #tpu.memory_space<vmem>>, vector<1x64xf32>
    %23 = vector.broadcast %22 : vector<1x64xf32> to vector<64x64xf32>
    %24 = arith.addf %21, %23 : vector<64x64xf32>
    %cst_25 = arith.constant 0.000000e+00 : f32
    %25 = vector.broadcast %cst_25 : f32 to vector<64x64xf32>
    %26 = arith.maximumf %24, %25 : vector<64x64xf32>
    %27 = arith.truncf %15 : vector<64x64xf32> to vector<64x64xbf16>
    %cst_26 = arith.constant dense<0.000000e+00> : vector<64x128xf32>
    %28 = tpu.matmul %27, %3, %cst_26 {dimension_numbers = #tpu.dot_dimension_numbers<[1], [0], [0], [1], [0, 0, 1, 1], [], []>} : vector<64x64xbf16>, vector<64x128xbf16>, vector<64x128xf32> -> vector<64x128xf32>
    %29 = arith.truncf %26 : vector<64x64xf32> to vector<64x64xbf16>
    %cst_27 = arith.constant dense<0.000000e+00> : vector<64x128xf32>
    %30 = tpu.matmul %29, %4, %cst_27 {dimension_numbers = #tpu.dot_dimension_numbers<[1], [0], [0], [1], [0, 0, 1, 1], [], []>} : vector<64x64xbf16>, vector<64x128xbf16>, vector<64x128xf32> -> vector<64x128xf32>
    %31 = arith.addf %28, %30 : vector<64x128xf32>
    %c0_28 = arith.constant 0 : index
    %c0_29 = arith.constant 0 : index
    %32 = vector.load %arg11[%c0_28, %c0_29] : memref<1x128xf32, #tpu.memory_space<vmem>>, vector<1x128xf32>
    %33 = vector.broadcast %32 : vector<1x128xf32> to vector<64x128xf32>
    %34 = arith.addf %31, %33 : vector<64x128xf32>
    %c0_30 = arith.constant 0 : index
    %c0_31 = arith.constant 0 : index
    %c0_32 = arith.constant 0 : index
    %c0_33 = arith.constant 0 : index
    %35 = vector.load %arg12[%c0_30, %c0_31, %c0_32, %c0_33] : memref<1x4x64x128xf32, #tpu.memory_space<vmem>>, vector<1x1x64x128xf32>
    %36 = vector.shape_cast %35 : vector<1x1x64x128xf32> to vector<64x128xf32>
    %37 = vector.shape_cast %34 : vector<64x128xf32> to vector<1x1x64x128xf32>
    tpu.vector_store %arg12[%c0_30, %c0_31, %c0_32, %c0_33], %37 {strides = array<i32>} : memref<1x4x64x128xf32, #tpu.memory_space<vmem>>, vector<1x1x64x128xf32>,
    %c0_34 = arith.constant 0 : index
    %c1 = arith.constant 1 : index
    %c0_35 = arith.constant 0 : index
    %c0_36 = arith.constant 0 : index
    %38 = vector.load %arg1[%c0_34, %c1, %c0_35, %c0_36] : memref<1x4x64x32xbf16, #tpu.memory_space<vmem>>, vector<1x1x64x32xbf16>
    %39 = vector.shape_cast %38 : vector<1x1x64x32xbf16> to vector<64x32xbf16>
    %cst_37 = arith.constant dense<0.000000e+00> : vector<64x64xf32>
    %40 = tpu.matmul %39, %2, %cst_37 {dimension_numbers = #tpu.dot_dimension_numbers<[1], [0], [0], [1], [0, 0, 1, 1], [], []>} : vector<64x32xbf16>, vector<32x64xbf16>, vector<64x64xf32> -> vector<64x64xf32>
    %c0_38 = arith.constant 0 : index
    %c0_39 = arith.constant 0 : index
    %41 = vector.load %arg4[%c0_38, %c0_39] : memref<1x64xf32, #tpu.memory_space<vmem>>, vector<1x64xf32>
    %42 = vector.broadcast %41 : vector<1x64xf32> to vector<64x64xf32>
    %43 = arith.mulf %40, %42 : vector<64x64xf32>
    %c0_40 = arith.constant 0 : index
    %c0_41 = arith.constant 0 : index
    %44 = vector.load %arg5[%c0_40, %c0_41] : memref<1x64xf32, #tpu.memory_space<vmem>>, vector<1x64xf32>
    %45 = vector.broadcast %44 : vector<1x64xf32> to vector<64x64xf32>
    %46 = arith.addf %43, %45 : vector<64x64xf32>
    %cst_42 = arith.constant 0.000000e+00 : f32
    %47 = vector.broadcast %cst_42 : f32 to vector<64x64xf32>
    %48 = arith.maximumf %46, %47 : vector<64x64xf32>
    %c1_43 = arith.constant 1 : index
    %c0_44 = arith.constant 0 : index
    %c0_45 = arith.constant 0 : index
    %49 = vector.load %arg6[%c1_43, %c0_44, %c0_45] : memref<4x64x64xbf16, #tpu.memory_space<vmem>>, vector<1x64x64xbf16>
    %50 = vector.shape_cast %49 : vector<1x64x64xbf16> to vector<64x64xbf16>
    %cst_46 = arith.constant dense<0.000000e+00> : vector<64x64xf32>
    %51 = tpu.matmul %1, %50, %cst_46 {dimension_numbers = #tpu.dot_dimension_numbers<[1], [0], [0], [1], [0, 0, 1, 1], [], []>} : vector<64x64xbf16>, vector<64x64xbf16>, vector<64x64xf32> -> vector<64x64xf32>
    %c0_47 = arith.constant 0 : index
    %c0_48 = arith.constant 0 : index
    %52 = vector.load %arg7[%c0_47, %c0_48] : memref<1x64xf32, #tpu.memory_space<vmem>>, vector<1x64xf32>
    %53 = vector.broadcast %52 : vector<1x64xf32> to vector<64x64xf32>
    %54 = arith.mulf %51, %53 : vector<64x64xf32>
    %c0_49 = arith.constant 0 : index
    %c0_50 = arith.constant 0 : index
    %55 = vector.load %arg8[%c0_49, %c0_50] : memref<1x64xf32, #tpu.memory_space<vmem>>, vector<1x64xf32>
    %56 = vector.broadcast %55 : vector<1x64xf32> to vector<64x64xf32>
    %57 = arith.addf %54, %56 : vector<64x64xf32>
    %cst_51 = arith.constant 0.000000e+00 : f32
    %58 = vector.broadcast %cst_51 : f32 to vector<64x64xf32>
    %59 = arith.maximumf %57, %58 : vector<64x64xf32>
    %60 = arith.truncf %48 : vector<64x64xf32> to vector<64x64xbf16>
    %cst_52 = arith.constant dense<0.000000e+00> : vector<64x128xf32>
    %61 = tpu.matmul %60, %3, %cst_52 {dimension_numbers = #tpu.dot_dimension_numbers<[1], [0], [0], [1], [0, 0, 1, 1], [], []>} : vector<64x64xbf16>, vector<64x128xbf16>, vector<64x128xf32> -> vector<64x128xf32>
    %62 = arith.truncf %59 : vector<64x64xf32> to vector<64x64xbf16>
    %cst_53 = arith.constant dense<0.000000e+00> : vector<64x128xf32>
    %63 = tpu.matmul %62, %4, %cst_53 {dimension_numbers = #tpu.dot_dimension_numbers<[1], [0], [0], [1], [0, 0, 1, 1], [], []>} : vector<64x64xbf16>, vector<64x128xbf16>, vector<64x128xf32> -> vector<64x128xf32>
    %64 = arith.addf %61, %63 : vector<64x128xf32>
    %c0_54 = arith.constant 0 : index
    %c0_55 = arith.constant 0 : index
    %65 = vector.load %arg11[%c0_54, %c0_55] : memref<1x128xf32, #tpu.memory_space<vmem>>, vector<1x128xf32>
    %66 = vector.broadcast %65 : vector<1x128xf32> to vector<64x128xf32>
    %67 = arith.addf %64, %66 : vector<64x128xf32>
    %c0_56 = arith.constant 0 : index
    %c1_57 = arith.constant 1 : index
    %c0_58 = arith.constant 0 : index
    %c0_59 = arith.constant 0 : index
    %68 = vector.load %arg12[%c0_56, %c1_57, %c0_58, %c0_59] : memref<1x4x64x128xf32, #tpu.memory_space<vmem>>, vector<1x1x64x128xf32>
    %69 = vector.shape_cast %68 : vector<1x1x64x128xf32> to vector<64x128xf32>
    %70 = vector.shape_cast %67 : vector<64x128xf32> to vector<1x1x64x128xf32>
    tpu.vector_store %arg12[%c0_56, %c1_57, %c0_58, %c0_59], %70 {strides = array<i32>} : memref<1x4x64x128xf32, #tpu.memory_space<vmem>>, vector<1x1x64x128xf32>,
    %c0_60 = arith.constant 0 : index
    %c2 = arith.constant 2 : index
    %c0_61 = arith.constant 0 : index
    %c0_62 = arith.constant 0 : index
    %71 = vector.load %arg1[%c0_60, %c2, %c0_61, %c0_62] : memref<1x4x64x32xbf16, #tpu.memory_space<vmem>>, vector<1x1x64x32xbf16>
    %72 = vector.shape_cast %71 : vector<1x1x64x32xbf16> to vector<64x32xbf16>
    %cst_63 = arith.constant dense<0.000000e+00> : vector<64x64xf32>
    %73 = tpu.matmul %72, %2, %cst_63 {dimension_numbers = #tpu.dot_dimension_numbers<[1], [0], [0], [1], [0, 0, 1, 1], [], []>} : vector<64x32xbf16>, vector<32x64xbf16>, vector<64x64xf32> -> vector<64x64xf32>
    %c0_64 = arith.constant 0 : index
    %c0_65 = arith.constant 0 : index
    %74 = vector.load %arg4[%c0_64, %c0_65] : memref<1x64xf32, #tpu.memory_space<vmem>>, vector<1x64xf32>
    %75 = vector.broadcast %74 : vector<1x64xf32> to vector<64x64xf32>
    %76 = arith.mulf %73, %75 : vector<64x64xf32>
    %c0_66 = arith.constant 0 : index
    %c0_67 = arith.constant 0 : index
    %77 = vector.load %arg5[%c0_66, %c0_67] : memref<1x64xf32, #tpu.memory_space<vmem>>, vector<1x64xf32>
    %78 = vector.broadcast %77 : vector<1x64xf32> to vector<64x64xf32>
    %79 = arith.addf %76, %78 : vector<64x64xf32>
    %cst_68 = arith.constant 0.000000e+00 : f32
    %80 = vector.broadcast %cst_68 : f32 to vector<64x64xf32>
    %81 = arith.maximumf %79, %80 : vector<64x64xf32>
    %c2_69 = arith.constant 2 : index
    %c0_70 = arith.constant 0 : index
    %c0_71 = arith.constant 0 : index
    %82 = vector.load %arg6[%c2_69, %c0_70, %c0_71] : memref<4x64x64xbf16, #tpu.memory_space<vmem>>, vector<1x64x64xbf16>
    %83 = vector.shape_cast %82 : vector<1x64x64xbf16> to vector<64x64xbf16>
    %cst_72 = arith.constant dense<0.000000e+00> : vector<64x64xf32>
    %84 = tpu.matmul %1, %83, %cst_72 {dimension_numbers = #tpu.dot_dimension_numbers<[1], [0], [0], [1], [0, 0, 1, 1], [], []>} : vector<64x64xbf16>, vector<64x64xbf16>, vector<64x64xf32> -> vector<64x64xf32>
    %c0_73 = arith.constant 0 : index
    %c0_74 = arith.constant 0 : index
    %85 = vector.load %arg7[%c0_73, %c0_74] : memref<1x64xf32, #tpu.memory_space<vmem>>, vector<1x64xf32>
    %86 = vector.broadcast %85 : vector<1x64xf32> to vector<64x64xf32>
    %87 = arith.mulf %84, %86 : vector<64x64xf32>
    %c0_75 = arith.constant 0 : index
    %c0_76 = arith.constant 0 : index
    %88 = vector.load %arg8[%c0_75, %c0_76] : memref<1x64xf32, #tpu.memory_space<vmem>>, vector<1x64xf32>
    %89 = vector.broadcast %88 : vector<1x64xf32> to vector<64x64xf32>
    %90 = arith.addf %87, %89 : vector<64x64xf32>
    %cst_77 = arith.constant 0.000000e+00 : f32
    %91 = vector.broadcast %cst_77 : f32 to vector<64x64xf32>
    %92 = arith.maximumf %90, %91 : vector<64x64xf32>
    %93 = arith.truncf %81 : vector<64x64xf32> to vector<64x64xbf16>
    %cst_78 = arith.constant dense<0.000000e+00> : vector<64x128xf32>
    %94 = tpu.matmul %93, %3, %cst_78 {dimension_numbers = #tpu.dot_dimension_numbers<[1], [0], [0], [1], [0, 0, 1, 1], [], []>} : vector<64x64xbf16>, vector<64x128xbf16>, vector<64x128xf32> -> vector<64x128xf32>
    %95 = arith.truncf %92 : vector<64x64xf32> to vector<64x64xbf16>
    %cst_79 = arith.constant dense<0.000000e+00> : vector<64x128xf32>
    %96 = tpu.matmul %95, %4, %cst_79 {dimension_numbers = #tpu.dot_dimension_numbers<[1], [0], [0], [1], [0, 0, 1, 1], [], []>} : vector<64x64xbf16>, vector<64x128xbf16>, vector<64x128xf32> -> vector<64x128xf32>
    %97 = arith.addf %94, %96 : vector<64x128xf32>
    %c0_80 = arith.constant 0 : index
    %c0_81 = arith.constant 0 : index
    %98 = vector.load %arg11[%c0_80, %c0_81] : memref<1x128xf32, #tpu.memory_space<vmem>>, vector<1x128xf32>
    %99 = vector.broadcast %98 : vector<1x128xf32> to vector<64x128xf32>
    %100 = arith.addf %97, %99 : vector<64x128xf32>
    %c0_82 = arith.constant 0 : index
    %c2_83 = arith.constant 2 : index
    %c0_84 = arith.constant 0 : index
    %c0_85 = arith.constant 0 : index
    %101 = vector.load %arg12[%c0_82, %c2_83, %c0_84, %c0_85] : memref<1x4x64x128xf32, #tpu.memory_space<vmem>>, vector<1x1x64x128xf32>
    %102 = vector.shape_cast %101 : vector<1x1x64x128xf32> to vector<64x128xf32>
    %103 = vector.shape_cast %100 : vector<64x128xf32> to vector<1x1x64x128xf32>
    tpu.vector_store %arg12[%c0_82, %c2_83, %c0_84, %c0_85], %103 {strides = array<i32>} : memref<1x4x64x128xf32, #tpu.memory_space<vmem>>, vector<1x1x64x128xf32>,
    %c0_86 = arith.constant 0 : index
    %c3 = arith.constant 3 : index
    %c0_87 = arith.constant 0 : index
    %c0_88 = arith.constant 0 : index
    %104 = vector.load %arg1[%c0_86, %c3, %c0_87, %c0_88] : memref<1x4x64x32xbf16, #tpu.memory_space<vmem>>, vector<1x1x64x32xbf16>
    %105 = vector.shape_cast %104 : vector<1x1x64x32xbf16> to vector<64x32xbf16>
    %cst_89 = arith.constant dense<0.000000e+00> : vector<64x64xf32>
    %106 = tpu.matmul %105, %2, %cst_89 {dimension_numbers = #tpu.dot_dimension_numbers<[1], [0], [0], [1], [0, 0, 1, 1], [], []>} : vector<64x32xbf16>, vector<32x64xbf16>, vector<64x64xf32> -> vector<64x64xf32>
    %c0_90 = arith.constant 0 : index
    %c0_91 = arith.constant 0 : index
    %107 = vector.load %arg4[%c0_90, %c0_91] : memref<1x64xf32, #tpu.memory_space<vmem>>, vector<1x64xf32>
    %108 = vector.broadcast %107 : vector<1x64xf32> to vector<64x64xf32>
    %109 = arith.mulf %106, %108 : vector<64x64xf32>
    %c0_92 = arith.constant 0 : index
    %c0_93 = arith.constant 0 : index
    %110 = vector.load %arg5[%c0_92, %c0_93] : memref<1x64xf32, #tpu.memory_space<vmem>>, vector<1x64xf32>
    %111 = vector.broadcast %110 : vector<1x64xf32> to vector<64x64xf32>
    %112 = arith.addf %109, %111 : vector<64x64xf32>
    %cst_94 = arith.constant 0.000000e+00 : f32
    %113 = vector.broadcast %cst_94 : f32 to vector<64x64xf32>
    %114 = arith.maximumf %112, %113 : vector<64x64xf32>
    %c3_95 = arith.constant 3 : index
    %c0_96 = arith.constant 0 : index
    %c0_97 = arith.constant 0 : index
    %115 = vector.load %arg6[%c3_95, %c0_96, %c0_97] : memref<4x64x64xbf16, #tpu.memory_space<vmem>>, vector<1x64x64xbf16>
    %116 = vector.shape_cast %115 : vector<1x64x64xbf16> to vector<64x64xbf16>
    %cst_98 = arith.constant dense<0.000000e+00> : vector<64x64xf32>
    %117 = tpu.matmul %1, %116, %cst_98 {dimension_numbers = #tpu.dot_dimension_numbers<[1], [0], [0], [1], [0, 0, 1, 1], [], []>} : vector<64x64xbf16>, vector<64x64xbf16>, vector<64x64xf32> -> vector<64x64xf32>
    %c0_99 = arith.constant 0 : index
    %c0_100 = arith.constant 0 : index
    %118 = vector.load %arg7[%c0_99, %c0_100] : memref<1x64xf32, #tpu.memory_space<vmem>>, vector<1x64xf32>
    %119 = vector.broadcast %118 : vector<1x64xf32> to vector<64x64xf32>
    %120 = arith.mulf %117, %119 : vector<64x64xf32>
    %c0_101 = arith.constant 0 : index
    %c0_102 = arith.constant 0 : index
    %121 = vector.load %arg8[%c0_101, %c0_102] : memref<1x64xf32, #tpu.memory_space<vmem>>, vector<1x64xf32>
    %122 = vector.broadcast %121 : vector<1x64xf32> to vector<64x64xf32>
    %123 = arith.addf %120, %122 : vector<64x64xf32>
    %cst_103 = arith.constant 0.000000e+00 : f32
    %124 = vector.broadcast %cst_103 : f32 to vector<64x64xf32>
    %125 = arith.maximumf %123, %124 : vector<64x64xf32>
    %126 = arith.truncf %114 : vector<64x64xf32> to vector<64x64xbf16>
    %cst_104 = arith.constant dense<0.000000e+00> : vector<64x128xf32>
    %127 = tpu.matmul %126, %3, %cst_104 {dimension_numbers = #tpu.dot_dimension_numbers<[1], [0], [0], [1], [0, 0, 1, 1], [], []>} : vector<64x64xbf16>, vector<64x128xbf16>, vector<64x128xf32> -> vector<64x128xf32>
    %128 = arith.truncf %125 : vector<64x64xf32> to vector<64x64xbf16>
    %cst_105 = arith.constant dense<0.000000e+00> : vector<64x128xf32>
    %129 = tpu.matmul %128, %4, %cst_105 {dimension_numbers = #tpu.dot_dimension_numbers<[1], [0], [0], [1], [0, 0, 1, 1], [], []>} : vector<64x64xbf16>, vector<64x128xbf16>, vector<64x128xf32> -> vector<64x128xf32>
    %130 = arith.addf %127, %129 : vector<64x128xf32>
    %c0_106 = arith.constant 0 : index
    %c0_107 = arith.constant 0 : index
    %131 = vector.load %arg11[%c0_106, %c0_107] : memref<1x128xf32, #tpu.memory_space<vmem>>, vector<1x128xf32>
    %132 = vector.broadcast %131 : vector<1x128xf32> to vector<64x128xf32>
    %133 = arith.addf %130, %132 : vector<64x128xf32>
    %c0_108 = arith.constant 0 : index
    %c3_109 = arith.constant 3 : index
    %c0_110 = arith.constant 0 : index
    %c0_111 = arith.constant 0 : index
    %134 = vector.load %arg12[%c0_108, %c3_109, %c0_110, %c0_111] : memref<1x4x64x128xf32, #tpu.memory_space<vmem>>, vector<1x1x64x128xf32>
    %135 = vector.shape_cast %134 : vector<1x1x64x128xf32> to vector<64x128xf32>
    %136 = vector.shape_cast %133 : vector<64x128xf32> to vector<1x1x64x128xf32>
    tpu.vector_store %arg12[%c0_108, %c3_109, %c0_110, %c0_111], %136 {strides = array<i32>} : memref<1x4x64x128xf32, #tpu.memory_space<vmem>>, vector<1x1x64x128xf32>,
    return
  }
  func.func @transform_0(%arg0: i32) -> (i32, i32, i32, i32) {
    %c0_i32 = arith.constant 0 : i32
    %c0_i32_0 = arith.constant 0 : i32
    %c0_i32_1 = arith.constant 0 : i32
    %c0_i32_2 = arith.constant 0 : i32
    return %arg0, %c0_i32, %c0_i32_0, %c0_i32_1 : i32, i32, i32, i32
  }
  func.func @transform_1(%arg0: i32) -> (i32, i32, i32) {
    %c0_i32 = arith.constant 0 : i32
    %c0_i32_0 = arith.constant 0 : i32
    %c0_i32_1 = arith.constant 0 : i32
    return %arg0, %c0_i32, %c0_i32_0 : i32, i32, i32
  }
  func.func @transform_2(%arg0: i32) -> (i32, i32) {
    %c0_i32 = arith.constant 0 : i32
    %c0_i32_0 = arith.constant 0 : i32
    %c0_i32_1 = arith.constant 0 : i32
    return %c0_i32, %c0_i32_0 : i32, i32
  }
  func.func @transform_3(%arg0: i32) -> (i32, i32) {
    %c0_i32 = arith.constant 0 : i32
    %c0_i32_0 = arith.constant 0 : i32
    %c0_i32_1 = arith.constant 0 : i32
    return %c0_i32, %c0_i32_0 : i32, i32
  }
  func.func @transform_4(%arg0: i32) -> (i32, i32) {
    %c0_i32 = arith.constant 0 : i32
    %c0_i32_0 = arith.constant 0 : i32
    %c0_i32_1 = arith.constant 0 : i32
    return %c0_i32, %c0_i32_0 : i32, i32
  }
  func.func @transform_5(%arg0: i32) -> (i32, i32, i32) {
    %c0_i32 = arith.constant 0 : i32
    %c0_i32_0 = arith.constant 0 : i32
    %c0_i32_1 = arith.constant 0 : i32
    %c0_i32_2 = arith.constant 0 : i32
    return %c0_i32, %c0_i32_0, %c0_i32_1 : i32, i32, i32
  }
  func.func @transform_6(%arg0: i32) -> (i32, i32) {
    %c0_i32 = arith.constant 0 : i32
    %c0_i32_0 = arith.constant 0 : i32
    %c0_i32_1 = arith.constant 0 : i32
    return %c0_i32, %c0_i32_0 : i32, i32
  }
  func.func @transform_7(%arg0: i32) -> (i32, i32) {
    %c0_i32 = arith.constant 0 : i32
    %c0_i32_0 = arith.constant 0 : i32
    %c0_i32_1 = arith.constant 0 : i32
    return %c0_i32, %c0_i32_0 : i32, i32
  }
  func.func @transform_8(%arg0: i32) -> (i32, i32) {
    %c0_i32 = arith.constant 0 : i32
    %c0_i32_0 = arith.constant 0 : i32
    %c0_i32_1 = arith.constant 0 : i32
    return %c0_i32, %c0_i32_0 : i32, i32
  }
  func.func @transform_9(%arg0: i32) -> (i32, i32) {
    %c0_i32 = arith.constant 0 : i32
    %c0_i32_0 = arith.constant 0 : i32
    %c0_i32_1 = arith.constant 0 : i32
    return %c0_i32, %c0_i32_0 : i32, i32
  }
  func.func @transform_10(%arg0: i32) -> (i32, i32) {
    %c0_i32 = arith.constant 0 : i32
    %c0_i32_0 = arith.constant 0 : i32
    %c0_i32_1 = arith.constant 0 : i32
    return %c0_i32, %c0_i32_0 : i32, i32
  }
  func.func @transform_11(%arg0: i32) -> (i32, i32, i32, i32) {
    %c0_i32 = arith.constant 0 : i32
    %c0_i32_0 = arith.constant 0 : i32
    %c0_i32_1 = arith.constant 0 : i32
    %c0_i32_2 = arith.constant 0 : i32
    return %arg0, %c0_i32, %c0_i32_0, %c0_i32_1 : i32, i32, i32, i32
  }
}

module attributes {stable_mosaic.version = 11 : i64} {
  func.func @_decode_kernel(%arg0: i32, %arg1: memref<8x512xf32, #tpu.memory_space<vmem>>, %arg2: memref<8x512xf32, #tpu.memory_space<vmem>>, %arg3: memref<1x512xf32, #tpu.memory_space<vmem>>, %arg4: memref<8x512xf32, #tpu.memory_space<vmem>>) attributes {dimension_semantics = [#tpu.dimension_semantics<parallel>], iteration_bounds = array<i64: 2>, scalar_prefetch = 0 : i64, scratch_operands = 0 : i64, tpu.core_type = #tpu.core_type<tc>, window_params = [{transform_indices = @transform_0, window_bounds = array<i64: 8, 512>}, {transform_indices = @transform_1, window_bounds = array<i64: 8, 512>}, {transform_indices = @transform_2, window_bounds = array<i64: 1, 512>}, {transform_indices = @transform_3, window_bounds = array<i64: 8, 512>}]} {
    %c0 = arith.constant 0 : index
    %c0_0 = arith.constant 0 : index
    %0 = vector.load %arg1[%c0, %c0_0] : memref<8x512xf32, #tpu.memory_space<vmem>>, vector<8x512xf32>
    %c0_1 = arith.constant 0 : index
    %c0_2 = arith.constant 0 : index
    %1 = vector.load %arg2[%c0_1, %c0_2] : memref<8x512xf32, #tpu.memory_space<vmem>>, vector<8x512xf32>
    %2 = tpu.iota {dimensions = array<i32: 0>} : vector<8x512xi32>
    %3 = vector.extract_strided_slice %1 {offsets = [3, 0], sizes = [1, 512], strides = [1, 1]} : vector<8x512xf32> to vector<1x512xf32>
    %4 = vector.extract_strided_slice %1 {offsets = [4, 0], sizes = [1, 512], strides = [1, 1]} : vector<8x512xf32> to vector<1x512xf32>
    %5 = vector.extract_strided_slice %1 {offsets = [5, 0], sizes = [1, 512], strides = [1, 1]} : vector<8x512xf32> to vector<1x512xf32>
    %6 = arith.mulf %3, %3 : vector<1x512xf32>
    %7 = arith.mulf %4, %4 : vector<1x512xf32>
    %8 = arith.addf %6, %7 : vector<1x512xf32>
    %9 = math.sqrt %8 : vector<1x512xf32>
    %c2_i32 = arith.constant 2 : i32
    %10 = vector.broadcast %c2_i32 : i32 to vector<8x512xi32>
    %11 = arith.cmpi slt, %2, %10 : vector<8x512xi32>
    %c2_i32_3 = arith.constant 2 : i32
    %12 = vector.broadcast %c2_i32_3 : i32 to vector<8x512xi32>
    %13 = arith.cmpi eq, %2, %12 : vector<8x512xi32>
    %cst = arith.constant 1.000000e+00 : f32
    %14 = vector.shape_cast %5 : vector<1x512xf32> to vector<1x512xf32>
    %15 = vector.broadcast %14 : vector<1x512xf32> to vector<8x512xf32>
    %16 = vector.broadcast %cst : f32 to vector<8x512xf32>
    %17 = arith.select %13, %15, %16 : vector<8x512xi1>, vector<8x512xf32>
    %18 = vector.shape_cast %9 : vector<1x512xf32> to vector<1x512xf32>
    %19 = vector.broadcast %18 : vector<1x512xf32> to vector<8x512xf32>
    %20 = arith.select %11, %19, %17 : vector<8x512xi1>, vector<8x512xf32>
    %21 = arith.mulf %0, %20 : vector<8x512xf32>
    %22 = arith.addf %21, %1 : vector<8x512xf32>
    %23 = math.exp %0 : vector<8x512xf32>
    %24 = arith.mulf %23, %1 : vector<8x512xf32>
    %c3_i32 = arith.constant 3 : i32
    %25 = vector.broadcast %c3_i32 : i32 to vector<8x512xi32>
    %26 = arith.cmpi sge, %2, %25 : vector<8x512xi32>
    %c5_i32 = arith.constant 5 : i32
    %27 = vector.broadcast %c5_i32 : i32 to vector<8x512xi32>
    %28 = arith.cmpi sle, %2, %27 : vector<8x512xi32>
    %29 = arith.andi %26, %28 : vector<8x512xi1>
    %30 = arith.select %29, %24, %22 : vector<8x512xi1>, vector<8x512xf32>
    %cst_4 = arith.constant 7.853900e-01 : f32
    %31 = vector.broadcast %cst_4 : f32 to vector<8x512xf32>
    %32 = arith.subf %30, %31 : vector<8x512xf32>
    %cst_5 = arith.constant 3.14159274 : f32
    %33 = vector.broadcast %cst_5 : f32 to vector<8x512xf32>
    %34 = arith.divf %32, %33 : vector<8x512xf32>
    %cst_6 = arith.constant 0.000000e+00 : f32
    %35 = vector.broadcast %cst_6 : f32 to vector<8x512xf32>
    %36 = arith.addf %34, %35 : vector<8x512xf32>
    %37 = math.floor %36 : vector<8x512xf32>
    %cst_7 = arith.constant 3.14159274 : f32
    %38 = vector.broadcast %cst_7 : f32 to vector<8x512xf32>
    %39 = arith.mulf %37, %38 : vector<8x512xf32>
    %40 = arith.subf %32, %39 : vector<8x512xf32>
    %c6_i32 = arith.constant 6 : i32
    %41 = vector.broadcast %c6_i32 : i32 to vector<8x512xi32>
    %42 = arith.cmpi eq, %2, %41 : vector<8x512xi32>
    %cst_8 = arith.constant 7.853900e-01 : f32
    %43 = vector.broadcast %cst_8 : f32 to vector<8x512xf32>
    %44 = arith.addf %40, %43 : vector<8x512xf32>
    %c0_9 = arith.constant 0 : index
    %c0_10 = arith.constant 0 : index
    %45 = vector.load %arg3[%c0_9, %c0_10] : memref<1x512xf32, #tpu.memory_space<vmem>>, vector<1x512xf32>
    %cst_11 = arith.constant 3.14159274 : f32
    %46 = vector.broadcast %cst_11 : f32 to vector<1x512xf32>
    %47 = arith.mulf %46, %45 : vector<1x512xf32>
    %48 = vector.broadcast %47 : vector<1x512xf32> to vector<8x512xf32>
    %49 = arith.addf %44, %48 : vector<8x512xf32>
    %50 = arith.select %42, %49, %30 : vector<8x512xi1>, vector<8x512xf32>
    %c0_12 = arith.constant 0 : index
    %c0_13 = arith.constant 0 : index
    %51 = vector.load %arg4[%c0_12, %c0_13] : memref<8x512xf32, #tpu.memory_space<vmem>>, vector<8x512xf32>
    tpu.vector_store %arg4[%c0_12, %c0_13], %50 {strides = array<i32>} : memref<8x512xf32, #tpu.memory_space<vmem>>, vector<8x512xf32>,
    return
  }
  func.func @transform_0(%arg0: i32) -> (i32, i32) {
    %c0_i32 = arith.constant 0 : i32
    %c0_i32_0 = arith.constant 0 : i32
    return %c0_i32, %arg0 : i32, i32
  }
  func.func @transform_1(%arg0: i32) -> (i32, i32) {
    %c0_i32 = arith.constant 0 : i32
    %c0_i32_0 = arith.constant 0 : i32
    return %c0_i32, %arg0 : i32, i32
  }
  func.func @transform_2(%arg0: i32) -> (i32, i32) {
    %c0_i32 = arith.constant 0 : i32
    %c0_i32_0 = arith.constant 0 : i32
    return %c0_i32, %arg0 : i32, i32
  }
  func.func @transform_3(%arg0: i32) -> (i32, i32) {
    %c0_i32 = arith.constant 0 : i32
    %c0_i32_0 = arith.constant 0 : i32
    return %c0_i32, %arg0 : i32, i32
  }
}

</mosaic_0001>

<llo_original>
// kernel: pointpillar_forward.9
$region0: #{pointpillar_forward.9}
  #allocation0 [shape = 'u32[]', space=smem, size = 0x4, offset = 0x4, fixed_abs, tag = 'smem constant byte address 0x4 - core index']
  #allocation1 [shape = 'u32[144,128]{1,0:T(1,128)}', space=vmem, size = 0x12000, scoped, tag = 'internal scratch']
  #allocation2 [shape = 's32[1]{0}', space=sflag, size = 0x4, scoped, tag = 'scoped memory for pointpillar_forward.9']
  #allocation3 [shape = 'u8[512]{0}', space=smem, size = 0x200, scoped, tag = 'prefetched SMEM operand 0']
  %s0 = inlined_call_operand.vmem [shape: s32[64], index: 0, kind: input, shape index: {}]
  %s1 = inlined_call_operand.vmem [shape: f32[64,32], index: 1, kind: input, shape index: {}]
  %s2 = inlined_call_operand.vmem [shape: f32[512,32], index: 2, kind: output, shape index: {}]
  %s3 = sld [smem:[#allocation0]]
  $region21: #{pointpillar_forward.9} parent=0
    _
  %s5 = ssub.s32 1, %s3
  %s6 = scalar_select 0, %s5, %s3
  %s7 = sshll.u32 %s0, 4
  %s8 = int_to_ptr.vmem [resolvable:$true] %s7
  %10 = dma.vmem_to_smem %s8, 16, [#allocation3], [#allocation2]
  %11 = dma.done [#allocation2], 16
  %12 = sfence
  // Predicated region
  $region2: #{pointpillar_forward.9} parent=0 // pred_check
    _
  $region3: #{pointpillar_forward.9} parent=0 // pred_check_branch
    %14 = sbr.rel (0) target = $region5
  $region4: #{pointpillar_forward.9} parent=0 // pred_region
    _
  $region5: #{pointpillar_forward.9} parent=0 // pred_fallthru
    _
  %vm15 = vcmask 261120
  %16 = vst.msk [vmem:[%s2] sm:$0xff] %vm15, 0.0
  %17 = vst.msk [vmem:[%s2 + $0x8] sm:$0xff] %vm15, 0.0
  %18 = vst.msk [vmem:[%s2 + $0x10] sm:$0xff] %vm15, 0.0
  %19 = vst.msk [vmem:[%s2 + $0x18] sm:$0xff] %vm15, 0.0
  %20 = vst.msk [vmem:[%s2 + $0x20] sm:$0xff] %vm15, 0.0
  %21 = vst.msk [vmem:[%s2 + $0x28] sm:$0xff] %vm15, 0.0
  %22 = vst.msk [vmem:[%s2 + $0x30] sm:$0xff] %vm15, 0.0
  %23 = vst.msk [vmem:[%s2 + $0x38] sm:$0xff] %vm15, 0.0
  %24 = vst.msk [vmem:[%s2 + $0x40] sm:$0xff] %vm15, 0.0
  %25 = vst.msk [vmem:[%s2 + $0x48] sm:$0xff] %vm15, 0.0
  %26 = vst.msk [vmem:[%s2 + $0x50] sm:$0xff] %vm15, 0.0
  %27 = vst.msk [vmem:[%s2 + $0x58] sm:$0xff] %vm15, 0.0
  %28 = vst.msk [vmem:[%s2 + $0x60] sm:$0xff] %vm15, 0.0
  %29 = vst.msk [vmem:[%s2 + $0x68] sm:$0xff] %vm15, 0.0
  %30 = vst.msk [vmem:[%s2 + $0x70] sm:$0xff] %vm15, 0.0
  %31 = vst.msk [vmem:[%s2 + $0x78] sm:$0xff] %vm15, 0.0
  %32 = vst.msk [vmem:[%s2 + $0x80] sm:$0xff] %vm15, 0.0
  %33 = vst.msk [vmem:[%s2 + $0x88] sm:$0xff] %vm15, 0.0
  %34 = vst.msk [vmem:[%s2 + $0x90] sm:$0xff] %vm15, 0.0
  %35 = vst.msk [vmem:[%s2 + $0x98] sm:$0xff] %vm15, 0.0
  %36 = vst.msk [vmem:[%s2 + $0xa0] sm:$0xff] %vm15, 0.0
  %37 = vst.msk [vmem:[%s2 + $0xa8] sm:$0xff] %vm15, 0.0
  %38 = vst.msk [vmem:[%s2 + $0xb0] sm:$0xff] %vm15, 0.0
  %39 = vst.msk [vmem:[%s2 + $0xb8] sm:$0xff] %vm15, 0.0
  %40 = vst.msk [vmem:[%s2 + $0xc0] sm:$0xff] %vm15, 0.0
  %41 = vst.msk [vmem:[%s2 + $0xc8] sm:$0xff] %vm15, 0.0
  %42 = vst.msk [vmem:[%s2 + $0xd0] sm:$0xff] %vm15, 0.0
  %43 = vst.msk [vmem:[%s2 + $0xd8] sm:$0xff] %vm15, 0.0
  %44 = vst.msk [vmem:[%s2 + $0xe0] sm:$0xff] %vm15, 0.0
  %45 = vst.msk [vmem:[%s2 + $0xe8] sm:$0xff] %vm15, 0.0
  %46 = vst.msk [vmem:[%s2 + $0xf0] sm:$0xff] %vm15, 0.0
  %47 = vst.msk [vmem:[%s2 + $0xf8] sm:$0xff] %vm15, 0.0
  %48 = vst.msk [vmem:[%s2 + $0x100] sm:$0xff] %vm15, 0.0
  %49 = vst.msk [vmem:[%s2 + $0x108] sm:$0xff] %vm15, 0.0
  %50 = vst.msk [vmem:[%s2 + $0x110] sm:$0xff] %vm15, 0.0
  %51 = vst.msk [vmem:[%s2 + $0x118] sm:$0xff] %vm15, 0.0
  %52 = vst.msk [vmem:[%s2 + $0x120] sm:$0xff] %vm15, 0.0
  %53 = vst.msk [vmem:[%s2 + $0x128] sm:$0xff] %vm15, 0.0
  %54 = vst.msk [vmem:[%s2 + $0x130] sm:$0xff] %vm15, 0.0
  %55 = vst.msk [vmem:[%s2 + $0x138] sm:$0xff] %vm15, 0.0
  %56 = vst.msk [vmem:[%s2 + $0x140] sm:$0xff] %vm15, 0.0
  %57 = vst.msk [vmem:[%s2 + $0x148] sm:$0xff] %vm15, 0.0
  %58 = vst.msk [vmem:[%s2 + $0x150] sm:$0xff] %vm15, 0.0
  %59 = vst.msk [vmem:[%s2 + $0x158] sm:$0xff] %vm15, 0.0
  %60 = vst.msk [vmem:[%s2 + $0x160] sm:$0xff] %vm15, 0.0
  %61 = vst.msk [vmem:[%s2 + $0x168] sm:$0xff] %vm15, 0.0
  %62 = vst.msk [vmem:[%s2 + $0x170] sm:$0xff] %vm15, 0.0
  %63 = vst.msk [vmem:[%s2 + $0x178] sm:$0xff] %vm15, 0.0
  %64 = vst.msk [vmem:[%s2 + $0x180] sm:$0xff] %vm15, 0.0
  %65 = vst.msk [vmem:[%s2 + $0x188] sm:$0xff] %vm15, 0.0
  %66 = vst.msk [vmem:[%s2 + $0x190] sm:$0xff] %vm15, 0.0
  %67 = vst.msk [vmem:[%s2 + $0x198] sm:$0xff] %vm15, 0.0
  %68 = vst.msk [vmem:[%s2 + $0x1a0] sm:$0xff] %vm15, 0.0
  %69 = vst.msk [vmem:[%s2 + $0x1a8] sm:$0xff] %vm15, 0.0
  %70 = vst.msk [vmem:[%s2 + $0x1b0] sm:$0xff] %vm15, 0.0
  %71 = vst.msk [vmem:[%s2 + $0x1b8] sm:$0xff] %vm15, 0.0
  %72 = vst.msk [vmem:[%s2 + $0x1c0] sm:$0xff] %vm15, 0.0
  %73 = vst.msk [vmem:[%s2 + $0x1c8] sm:$0xff] %vm15, 0.0
  %74 = vst.msk [vmem:[%s2 + $0x1d0] sm:$0xff] %vm15, 0.0
  %75 = vst.msk [vmem:[%s2 + $0x1d8] sm:$0xff] %vm15, 0.0
  %76 = vst.msk [vmem:[%s2 + $0x1e0] sm:$0xff] %vm15, 0.0
  %77 = vst.msk [vmem:[%s2 + $0x1e8] sm:$0xff] %vm15, 0.0
  %78 = vst.msk [vmem:[%s2 + $0x1f0] sm:$0xff] %vm15, 0.0
  %79 = vst.msk [vmem:[%s2 + $0x1f8] sm:$0xff] %vm15, 0.0
  loop: start=0, step=1, limit=64
  $region6: #{pointpillar_forward.9} parent=0 // loop_pre_header
    _
  $region7: #{pointpillar_forward.9} parent=0 // loop_header
    %s81 = sphi 0, %s85
    %p82 = scmp.ge.s32.totalorder %s81, 64
  $region8: #{pointpillar_forward.9} parent=0 // loop_header_branch
    %84 = sbr.rel (%p82) target = $region12
  $region9: #{pointpillar_forward.9} parent=0 // loop_body
    %s86 = scalar_lea.vmem %s1, %s81
    %v87 = vld [vmem:[%s86] sm:$0x1]
    %s88 = sld [smem:[#allocation3 + %s81]]
    %s89 = scalar_lea.vmem %s2, %s88
    %vm90 = vcmask 253952
    %91 = vst.msk [vmem:[%s89] sm:$0x1] %vm90, %v87
  $region10: #{pointpillar_forward.9} parent=0 // loop_footer
    %s85 = sadd.s32 1, %s81
  $region11: #{pointpillar_forward.9} parent=0 // loop_footer_branch
    %80 = sbr.rel target = $region7
  $region12: #{pointpillar_forward.9} parent=0 // loop_exit
    _
  // Predicated region
  $region13: #{pointpillar_forward.9} parent=0 // pred_check
    _
  $region14: #{pointpillar_forward.9} parent=0 // pred_check_branch
    %93 = sbr.rel (0) target = $region16
  $region15: #{pointpillar_forward.9} parent=0 // pred_region
    _
  $region16: #{pointpillar_forward.9} parent=0 // pred_fallthru
    _
  // Predicated region
  $region17: #{pointpillar_forward.9} parent=0 // pred_check
    _
  $region18: #{pointpillar_forward.9} parent=0 // pred_check_branch
    %95 = sbr.rel (0) target = $region20
  $region19: #{pointpillar_forward.9} parent=0 // pred_region
    _
  $region20: #{pointpillar_forward.9} parent=0 // pred_fallthru
    _

// kernel: pointpillar_forward.8
$region0: #{pointpillar_forward.8}
  #allocation0 [shape = 'u32[]', space=smem, size = 0x4, offset = 0x4, fixed_abs, tag = 'smem constant byte address 0x4 - core index']
  #allocation1 [shape = 'u32[144,128]{1,0:T(1,128)}', space=vmem, size = 0x12000, scoped, tag = 'internal scratch']
  %s0 = inlined_call_operand.vmem [shape: bf16[16,64,16], index: 0, kind: input, shape index: {}]
  %s1 = inlined_call_operand.vmem [shape: bf16[16,32], index: 1, kind: input, shape index: {}]
  %s2 = inlined_call_operand.vmem [shape: f32[1,32], index: 2, kind: input, shape index: {}]
  %s3 = inlined_call_operand.vmem [shape: f32[1,32], index: 3, kind: input, shape index: {}]
  %s4 = inlined_call_operand.vmem [shape: f32[64,32], index: 4, kind: output, shape index: {}]
  %s5 = sld [smem:[#allocation0]]
  $region90: #{pointpillar_forward.8} parent=0
    _
  %s7 = ssub.s32 1, %s5
  %s8 = scalar_select 0, %s7, %s5
  $region1: #{pointpillar_forward.8} parent=0
    #allocation2 [shape = 'u8[262144]{0}', space=vmem, size = 0x40000, scoped, tag = 'input window, operand 0']
    loop: start=0, step=1, limit=4
    $region2: #{pointpillar_forward.8} parent=1 // loop_pre_header
      _
    $region3: #{pointpillar_forward.8} parent=1 // loop_header
      %s10 = sphi 0, %s14
      %p11 = scmp.ge.s32.totalorder %s10, 4
      %s20 = sphi 0, %s22
      %s23 = sphi 0, %s20
      %s24 = sphi 0, %s23
      %s40 = sphi 0, %s24
      %s44 = sphi 0, %s44
      %s46 = sphi 0, %s44
      %s47 = sphi 0, %s46
      %s61 = sphi 0, %s47
      %s65 = sphi 0, %s65
      %s67 = sphi 0, %s65
      %s68 = sphi 0, %s67
      %s82 = sphi 0, %s68
      %s86 = sphi 0, %s86
      %s88 = sphi 0, %s86
      %s89 = sphi 0, %s88
      %s103 = sphi 0, %s89
      %s109 = sphi 0, %s111
      %s112 = sphi 0, %s109
      %s113 = sphi 0, %s112
      %s129 = sphi 0, %s113
    $region4: #{pointpillar_forward.8} parent=1 // loop_header_branch
      %13 = sbr.rel (%p11) target = $region8
    $region5: #{pointpillar_forward.8} parent=1 // loop_body
      %s15 = ssub.s32 %s10, 1
      %s16 = ssub.s32 %s10, 2
      %s17 = sadd.s32 %s10, 1
      %s18 = ssub.s32 %s10, %s17
      %p19 = scmp.eq.s32.totalorder %s18, 0
      %s21 = sadd.s32 %s20, 1
      %s22 = scalar_select %p19, %s20, %s21
      %p25 = pneg %p19
      %p26 = scmp.eq.s32.totalorder %s10, 1
      %p27 = por %p25, %p26
      %p28 = scmp.ne.s32.totalorder %s20, %s23
      %p29 = scmp.eq.s32.totalorder %s10, 0
      %p30 = por %p28, %p29
      %p31 = scmp.ne.s32.totalorder %s20, %s23
      %p32 = scmp.eq.s32.totalorder %s15, 1
      %p33 = por %p31, %p32
      %p34 = scmp.ne.s32.totalorder %s23, %s24
      %p35 = scmp.eq.s32.totalorder %s15, 0
      %p36 = por %p34, %p35
      %p37 = scmp.ne.s32.totalorder %s23, %s24
      %p38 = scmp.eq.s32.totalorder %s16, 1
      %p39 = por %p37, %p38
      %p41 = scmp.ne.s32.totalorder %s24, %s40
      %p42 = scmp.eq.s32.totalorder %s16, 0
      %p43 = por %p41, %p42
      %s45 = sadd.s32 %s44, 1
      %p48 = scmp.eq.s32.totalorder %s10, 1
      %p49 = scmp.ne.s32.totalorder %s44, %s46
      %p50 = scmp.eq.s32.totalorder %s10, 0
      %p51 = por %p49, %p50
      %p52 = scmp.ne.s32.totalorder %s44, %s46
      %p53 = scmp.eq.s32.totalorder %s15, 1
      %p54 = por %p52, %p53
      %p55 = scmp.ne.s32.totalorder %s46, %s47
      %p56 = scmp.eq.s32.totalorder %s15, 0
      %p57 = por %p55, %p56
      %p58 = scmp.ne.s32.totalorder %s46, %s47
      %p59 = scmp.eq.s32.totalorder %s16, 1
      %p60 = por %p58, %p59
      %p62 = scmp.ne.s32.totalorder %s47, %s61
      %p63 = scmp.eq.s32.totalorder %s16, 0
      %p64 = por %p62, %p63
      %s66 = sadd.s32 %s65, 1
      %p69 = scmp.eq.s32.totalorder %s10, 1
      %p70 = scmp.ne.s32.totalorder %s65, %s67
      %p71 = scmp.eq.s32.totalorder %s10, 0
      %p72 = por %p70, %p71
      %p73 = scmp.ne.s32.totalorder %s65, %s67
      %p74 = scmp.eq.s32.totalorder %s15, 1
      %p75 = por %p73, %p74
      %p76 = scmp.ne.s32.totalorder %s67, %s68
      %p77 = scmp.eq.s32.totalorder %s15, 0
      %p78 = por %p76, %p77
      %p79 = scmp.ne.s32.totalorder %s67, %s68
      %p80 = scmp.eq.s32.totalorder %s16, 1
      %p81 = por %p79, %p80
      %p83 = scmp.ne.s32.totalorder %s68, %s82
      %p84 = scmp.eq.s32.totalorder %s16, 0
      %p85 = por %p83, %p84
      %s87 = sadd.s32 %s86, 1
      %p90 = scmp.eq.s32.totalorder %s10, 1
      %p91 = scmp.ne.s32.totalorder %s86, %s88
      %p92 = scmp.eq.s32.totalorder %s10, 0
      %p93 = por %p91, %p92
      %p94 = scmp.ne.s32.totalorder %s86, %s88
      %p95 = scmp.eq.s32.totalorder %s15, 1
      %p96 = por %p94, %p95
      %p97 = scmp.ne.s32.totalorder %s88, %s89
      %p98 = scmp.eq.s32.totalorder %s15, 0
      %p99 = por %p97, %p98
      %p100 = scmp.ne.s32.totalorder %s88, %s89
      %p101 = scmp.eq.s32.totalorder %s16, 1
      %p102 = por %p100, %p101
      %p104 = scmp.ne.s32.totalorder %s89, %s103
      %p105 = scmp.eq.s32.totalorder %s16, 0
      %p106 = por %p104, %p105
      %s107 = ssub.s32 %s10, %s17
      %p108 = scmp.eq.s32.totalorder %s107, 0
      %s110 = sadd.s32 %s109, 1
      %s111 = scalar_select %p108, %s109, %s110
      %p114 = pneg %p108
      %p115 = scmp.eq.s32.totalorder %s10, 1
      %p116 = por %p114, %p115
      %p117 = scmp.ne.s32.totalorder %s109, %s112
      %p118 = scmp.eq.s32.totalorder %s10, 0
      %p119 = por %p117, %p118
      %p120 = scmp.ne.s32.totalorder %s109, %s112
      %p121 = scmp.eq.s32.totalorder %s15, 1
      %p122 = por %p120, %p121
      %p123 = scmp.ne.s32.totalorder %s112, %s113
      %p124 = scmp.eq.s32.totalorder %s15, 0
      %p125 = por %p123, %p124
      %p126 = scmp.ne.s32.totalorder %s112, %s113
      %p127 = scmp.eq.s32.totalorder %s16, 1
      %p128 = por %p126, %p127
      %p130 = scmp.ne.s32.totalorder %s113, %s129
      %p131 = scmp.eq.s32.totalorder %s16, 0
      %p132 = por %p130, %p131
      %p133 = scmp.le.s32.totalorder 1, %s10
      %p134 = scmp.lt.s32.totalorder %s10, 3
      %p135 = pnand %p133, %p134
      %p136 = pneg %p135
      // Predicated region
      $region9: #{pointpillar_forward.8} parent=5 // pred_check
        _
      $region10: #{pointpillar_forward.8} parent=5 // pred_check_branch
        %138 = sbr.rel (%p135) target = $region12
      $region11: #{pointpillar_forward.8} parent=5 // pred_region
        %s139 = ssub.s32 %s10, 1
        // Predicated region
        $region13: #{pointpillar_forward.8} parent=11 // pred_check
          %p140 = pneg %p57
        $region14: #{pointpillar_forward.8} parent=11 // pred_check_branch
          %142 = sbr.rel (%p140) target = $region16
        $region15: #{pointpillar_forward.8} parent=11 // pred_region
          _
        $region16: #{pointpillar_forward.8} parent=11 // pred_fallthru
          _
        // Predicated region
        $region17: #{pointpillar_forward.8} parent=11 // pred_check
          %p143 = pneg %p78
        $region18: #{pointpillar_forward.8} parent=11 // pred_check_branch
          %145 = sbr.rel (%p143) target = $region20
        $region19: #{pointpillar_forward.8} parent=11 // pred_region
          _
        $region20: #{pointpillar_forward.8} parent=11 // pred_fallthru
          _
        // Predicated region
        $region21: #{pointpillar_forward.8} parent=11 // pred_check
          %p146 = pneg %p99
        $region22: #{pointpillar_forward.8} parent=11 // pred_check_branch
          %148 = sbr.rel (%p146) target = $region24
        $region23: #{pointpillar_forward.8} parent=11 // pred_region
          _
        $region24: #{pointpillar_forward.8} parent=11 // pred_fallthru
          _
      $region12: #{pointpillar_forward.8} parent=5 // pred_fallthru
        _
      %p149 = scmp.lt.s32.totalorder %s10, 2
      // Predicated region
      $region25: #{pointpillar_forward.8} parent=5 // pred_check
        %p150 = pneg %p149
      $region26: #{pointpillar_forward.8} parent=5 // pred_check_branch
        %152 = sbr.rel (%p150) target = $region28
      $region27: #{pointpillar_forward.8} parent=5 // pred_region
        // Predicated region
        $region29: #{pointpillar_forward.8} parent=27 // pred_check
          %p153 = pneg %p30
        $region30: #{pointpillar_forward.8} parent=27 // pred_check_branch
          %155 = sbr.rel (%p153) target = $region32
        $region31: #{pointpillar_forward.8} parent=27 // pred_region
          %s156 = sand.u32 %s20, 1
          %s157 = sand.u32 %s20, 1
          %s158 = smul.addr %s157, 256
          %s159 = scalar_lea.vmem [#allocation2], %s158
          %s160 = smul.u32 4, %s10
          %s161 = smul.addr %s160, 4
          %s162 = scalar_lea.vmem %s0, %s161
          // Predicated region
          $region33: #{pointpillar_forward.8} parent=31 // pred_check
            _
          $region34: #{pointpillar_forward.8} parent=31 // pred_check_branch
            %164 = sbr.rel (0) target = $region36
          $region35: #{pointpillar_forward.8} parent=31 // pred_region
            // Predicated region
            $region37: #{pointpillar_forward.8} parent=35 // pred_check
              _
            $region38: #{pointpillar_forward.8} parent=35 // pred_check_branch
              %166 = sbr.rel target = $region40
            $region39: #{pointpillar_forward.8} parent=35 // pred_region
              // Predicated region
              $region52: #{pointpillar_forward.8} parent=39 // pred_check
                _
              $region53: #{pointpillar_forward.8} parent=39 // pred_check_branch
                %308 = sbr.rel (0) target = $region55
              $region54: #{pointpillar_forward.8} parent=39 // pred_region
                loop: start=0, step=1, limit=1
                $region56: #{pointpillar_forward.8} parent=54 // loop_pre_header
                  _
                $region57: #{pointpillar_forward.8} parent=54 // loop_header
                  %s310 = sphi 0, %s314
                  %p311 = scmp.ge.s32.totalorder %s310, 1
                  %s315 = sphi %s162, %s162
                  %s316 = sphi %s159, %s159
                $region58: #{pointpillar_forward.8} parent=54 // loop_header_branch
                  %313 = sbr.rel (%p311) target = $region62
                $region59: #{pointpillar_forward.8} parent=54 // loop_body
                  _
                $region60: #{pointpillar_forward.8} parent=54 // loop_footer
                  %s314 = sadd.s32 1, %s310
                $region61: #{pointpillar_forward.8} parent=54 // loop_footer_branch
                  %309 = sbr.rel target = $region57
                $region62: #{pointpillar_forward.8} parent=54 // loop_exit
                  _
                %s318 = ssub.s32 16, 1
                loop: start=0, step=1, limit=1
                $region63: #{pointpillar_forward.8} parent=54 // loop_pre_header
                  _
                $region64: #{pointpillar_forward.8} parent=54 // loop_header
                  %s320 = sphi 0, %s324
                  %p321 = scmp.ge.s32.totalorder %s320, 1
                  %s325 = sphi %s162, %s162
                  %s326 = sphi %s159, %s159
                $region65: #{pointpillar_forward.8} parent=54 // loop_header_branch
                  %323 = sbr.rel (%p321) target = $region69
                $region66: #{pointpillar_forward.8} parent=54 // loop_body
                  %v327 = vld [vmem:[%s325] sm:%s318]
                  %328 = vst [vmem:[%s326] sm:%s318] %v327
                  %v329 = vld [vmem:[%s325 + $0x4] sm:%s318]
                  %330 = vst [vmem:[%s326 + $0x4] sm:%s318] %v329
                  %v331 = vld [vmem:[%s325 + $0x8] sm:%s318]
                  %332 = vst [vmem:[%s326 + $0x8] sm:%s318] %v331
                  %v333 = vld [vmem:[%s325 + $0xc] sm:%s318]
                  %334 = vst [vmem:[%s326 + $0xc] sm:%s318] %v333
                  %v335 = vld [vmem:[%s325 + $0x20] sm:%s318]
                  %336 = vst [vmem:[%s326 + $0x10] sm:%s318] %v335
                  %v337 = vld [vmem:[%s325 + $0x24] sm:%s318]
                  %338 = vst [vmem:[%s326 + $0x14] sm:%s318] %v337
                  %v339 = vld [vmem:[%s325 + $0x28] sm:%s318]
                  %340 = vst [vmem:[%s326 + $0x18] sm:%s318] %v339
                  %v341 = vld [vmem:[%s325 + $0x2c] sm:%s318]
                  %342 = vst [vmem:[%s326 + $0x1c] sm:%s318] %v341
                  %v343 = vld [vmem:[%s325 + $0x40] sm:%s318]
                  %344 = vst [vmem:[%s326 + $0x20] sm:%s318] %v343
                  %v345 = vld [vmem:[%s325 + $0x44] sm:%s318]
                  %346 = vst [vmem:[%s326 + $0x24] sm:%s318] %v345
                  %v347 = vld [vmem:[%s325 + $0x48] sm:%s318]
                  %348 = vst [vmem:[%s326 + $0x28] sm:%s318] %v347
                  %v349 = vld [vmem:[%s325 + $0x4c] sm:%s318]
                  %350 = vst [vmem:[%s326 + $0x2c] sm:%s318] %v349
                  %v351 = vld [vmem:[%s325 + $0x60] sm:%s318]
                  %352 = vst [vmem:[%s326 + $0x30] sm:%s318] %v351
                  %v353 = vld [vmem:[%s325 + $0x64] sm:%s318]
                  %354 = vst [vmem:[%s326 + $0x34] sm:%s318] %v353
                  %v355 = vld [vmem:[%s325 + $0x68] sm:%s318]
                  %356 = vst [vmem:[%s326 + $0x38] sm:%s318] %v355
                  %v357 = vld [vmem:[%s325 + $0x6c] sm:%s318]
                  %358 = vst [vmem:[%s326 + $0x3c] sm:%s318] %v357
                  %v359 = vld [vmem:[%s325 + $0x80] sm:%s318]
                  %360 = vst [vmem:[%s326 + $0x40] sm:%s318] %v359
                  %v361 = vld [vmem:[%s325 + $0x84] sm:%s318]
                  %362 = vst [vmem:[%s326 + $0x44] sm:%s318] %v361
                  %v363 = vld [vmem:[%s325 + $0x88] sm:%s318]
                  %364 = vst [vmem:[%s326 + $0x48] sm:%s318] %v363
                  %v365 = vld [vmem:[%s325 + $0x8c] sm:%s318]
                  %366 = vst [vmem:[%s326 + $0x4c] sm:%s318] %v365
                  %v367 = vld [vmem:[%s325 + $0xa0] sm:%s318]
                  %368 = vst [vmem:[%s326 + $0x50] sm:%s318] %v367
                  %v369 = vld [vmem:[%s325 + $0xa4] sm:%s318]
                  %370 = vst [vmem:[%s326 + $0x54] sm:%s318] %v369
                  %v371 = vld [vmem:[%s325 + $0xa8] sm:%s318]
                  %372 = vst [vmem:[%s326 + $0x58] sm:%s318] %v371
                  %v373 = vld [vmem:[%s325 + $0xac] sm:%s318]
                  %374 = vst [vmem:[%s326 + $0x5c] sm:%s318] %v373
                  %v375 = vld [vmem:[%s325 + $0xc0] sm:%s318]
                  %376 = vst [vmem:[%s326 + $0x60] sm:%s318] %v375
                  %v377 = vld [vmem:[%s325 + $0xc4] sm:%s318]
                  %378 = vst [vmem:[%s326 + $0x64] sm:%s318] %v377
                  %v379 = vld [vmem:[%s325 + $0xc8] sm:%s318]
                  %380 = vst [vmem:[%s326 + $0x68] sm:%s318] %v379
                  %v381 = vld [vmem:[%s325 + $0xcc] sm:%s318]
                  %382 = vst [vmem:[%s326 + $0x6c] sm:%s318] %v381
                  %v383 = vld [vmem:[%s325 + $0xe0] sm:%s318]
                  %384 = vst [vmem:[%s326 + $0x70] sm:%s318] %v383
                  %v385 = vld [vmem:[%s325 + $0xe4] sm:%s318]
                  %386 = vst [vmem:[%s326 + $0x74] sm:%s318] %v385
                  %v387 = vld [vmem:[%s325 + $0xe8] sm:%s318]
                  %388 = vst [vmem:[%s326 + $0x78] sm:%s318] %v387
                  %v389 = vld [vmem:[%s325 + $0xec] sm:%s318]
                  %390 = vst [vmem:[%s326 + $0x7c] sm:%s318] %v389
                  %v391 = vld [vmem:[%s325 + $0x100] sm:%s318]
                  %392 = vst [vmem:[%s326 + $0x80] sm:%s318] %v391
                  %v393 = vld [vmem:[%s325 + $0x104] sm:%s318]
                  %394 = vst [vmem:[%s326 + $0x84] sm:%s318] %v393
                  %v395 = vld [vmem:[%s325 + $0x108] sm:%s318]
                  %396 = vst [vmem:[%s326 + $0x88] sm:%s318] %v395
                  %v397 = vld [vmem:[%s325 + $0x10c] sm:%s318]
                  %398 = vst [vmem:[%s326 + $0x8c] sm:%s318] %v397
                  %v399 = vld [vmem:[%s325 + $0x120] sm:%s318]
                  %400 = vst [vmem:[%s326 + $0x90] sm:%s318] %v399
                  %v401 = vld [vmem:[%s325 + $0x124] sm:%s318]
                  %402 = vst [vmem:[%s326 + $0x94] sm:%s318] %v401
                  %v403 = vld [vmem:[%s325 + $0x128] sm:%s318]
                  %404 = vst [vmem:[%s326 + $0x98] sm:%s318] %v403
                  %v405 = vld [vmem:[%s325 + $0x12c] sm:%s318]
                  %406 = vst [vmem:[%s326 + $0x9c] sm:%s318] %v405
                  %v407 = vld [vmem:[%s325 + $0x140] sm:%s318]
                  %408 = vst [vmem:[%s326 + $0xa0] sm:%s318] %v407
                  %v409 = vld [vmem:[%s325 + $0x144] sm:%s318]
                  %410 = vst [vmem:[%s326 + $0xa4] sm:%s318] %v409
                  %v411 = vld [vmem:[%s325 + $0x148] sm:%s318]
                  %412 = vst [vmem:[%s326 + $0xa8] sm:%s318] %v411
                  %v413 = vld [vmem:[%s325 + $0x14c] sm:%s318]
                  %414 = vst [vmem:[%s326 + $0xac] sm:%s318] %v413
                  %v415 = vld [vmem:[%s325 + $0x160] sm:%s318]
                  %416 = vst [vmem:[%s326 + $0xb0] sm:%s318] %v415
                  %v417 = vld [vmem:[%s325 + $0x164] sm:%s318]
                  %418 = vst [vmem:[%s326 + $0xb4] sm:%s318] %v417
                  %v419 = vld [vmem:[%s325 + $0x168] sm:%s318]
                  %420 = vst [vmem:[%s326 + $0xb8] sm:%s318] %v419
                  %v421 = vld [vmem:[%s325 + $0x16c] sm:%s318]
                  %422 = vst [vmem:[%s326 + $0xbc] sm:%s318] %v421
                  %v423 = vld [vmem:[%s325 + $0x180] sm:%s318]
                  %424 = vst [vmem:[%s326 + $0xc0] sm:%s318] %v423
                  %v425 = vld [vmem:[%s325 + $0x184] sm:%s318]
                  %426 = vst [vmem:[%s326 + $0xc4] sm:%s318] %v425
                  %v427 = vld [vmem:[%s325 + $0x188] sm:%s318]
                  %428 = vst [vmem:[%s326 + $0xc8] sm:%s318] %v427
                  %v429 = vld [vmem:[%s325 + $0x18c] sm:%s318]
                  %430 = vst [vmem:[%s326 + $0xcc] sm:%s318] %v429
                  %v431 = vld [vmem:[%s325 + $0x1a0] sm:%s318]
                  %432 = vst [vmem:[%s326 + $0xd0] sm:%s318] %v431
                  %v433 = vld [vmem:[%s325 + $0x1a4] sm:%s318]
                  %434 = vst [vmem:[%s326 + $0xd4] sm:%s318] %v433
                  %v435 = vld [vmem:[%s325 + $0x1a8] sm:%s318]
                  %436 = vst [vmem:[%s326 + $0xd8] sm:%s318] %v435
                  %v437 = vld [vmem:[%s325 + $0x1ac] sm:%s318]
                  %438 = vst [vmem:[%s326 + $0xdc] sm:%s318] %v437
                  %v439 = vld [vmem:[%s325 + $0x1c0] sm:%s318]
                  %440 = vst [vmem:[%s326 + $0xe0] sm:%s318] %v439
                  %v441 = vld [vmem:[%s325 + $0x1c4] sm:%s318]
                  %442 = vst [vmem:[%s326 + $0xe4] sm:%s318] %v441
                  %v443 = vld [vmem:[%s325 + $0x1c8] sm:%s318]
                  %444 = vst [vmem:[%s326 + $0xe8] sm:%s318] %v443
                  %v445 = vld [vmem:[%s325 + $0x1cc] sm:%s318]
                  %446 = vst [vmem:[%s326 + $0xec] sm:%s318] %v445
                  %v447 = vld [vmem:[%s325 + $0x1e0] sm:%s318]
                  %448 = vst [vmem:[%s326 + $0xf0] sm:%s318] %v447
                  %v449 = vld [vmem:[%s325 + $0x1e4] sm:%s318]
                  %450 = vst [vmem:[%s326 + $0xf4] sm:%s318] %v449
                  %v451 = vld [vmem:[%s325 + $0x1e8] sm:%s318]
                  %452 = vst [vmem:[%s326 + $0xf8] sm:%s318] %v451
                  %v453 = vld [vmem:[%s325 + $0x1ec] sm:%s318]
                  %454 = vst [vmem:[%s326 + $0xfc] sm:%s318] %v453
                $region67: #{pointpillar_forward.8} parent=54 // loop_footer
                  %s324 = sadd.s32 1, %s320
                $region68: #{pointpillar_forward.8} parent=54 // loop_footer_branch
                  %319 = sbr.rel target = $region64
                $region69: #{pointpillar_forward.8} parent=54 // loop_exit
                  _
              $region55: #{pointpillar_forward.8} parent=39 // pred_fallthru
                _
            $region40: #{pointpillar_forward.8} parent=35 // pred_fallthru
              _
            // Predicated region
            $region41: #{pointpillar_forward.8} parent=35 // pred_check
              _
            $region42: #{pointpillar_forward.8} parent=35 // pred_check_branch
              %168 = sbr.rel (0) target = $region44
            $region43: #{pointpillar_forward.8} parent=35 // pred_region
              %s170 = ssub.s32 16, 1
              loop: start=0, step=1, limit=1
              $region45: #{pointpillar_forward.8} parent=43 // loop_pre_header
                _
              $region46: #{pointpillar_forward.8} parent=43 // loop_header
                %s172 = sphi 0, %s176
                %p173 = scmp.ge.s32.totalorder %s172, 1
                %s177 = sphi %s162, %s162
                %s178 = sphi %s159, %s159
              $region47: #{pointpillar_forward.8} parent=43 // loop_header_branch
                %175 = sbr.rel (%p173) target = $region51
              $region48: #{pointpillar_forward.8} parent=43 // loop_body
                %v179 = vld [vmem:[%s177] sm:%s170]
                %180 = vst [vmem:[%s178] sm:%s170] %v179
                %v181 = vld [vmem:[%s177 + $0x4] sm:%s170]
                %182 = vst [vmem:[%s178 + $0x4] sm:%s170] %v181
                %v183 = vld [vmem:[%s177 + $0x8] sm:%s170]
                %184 = vst [vmem:[%s178 + $0x8] sm:%s170] %v183
                %v185 = vld [vmem:[%s177 + $0xc] sm:%s170]
                %186 = vst [vmem:[%s178 + $0xc] sm:%s170] %v185
                %v187 = vld [vmem:[%s177 + $0x20] sm:%s170]
                %188 = vst [vmem:[%s178 + $0x10] sm:%s170] %v187
                %v189 = vld [vmem:[%s177 + $0x24] sm:%s170]
                %190 = vst [vmem:[%s178 + $0x14] sm:%s170] %v189
                %v191 = vld [vmem:[%s177 + $0x28] sm:%s170]
                %192 = vst [vmem:[%s178 + $0x18] sm:%s170] %v191
                %v193 = vld [vmem:[%s177 + $0x2c] sm:%s170]
                %194 = vst [vmem:[%s178 + $0x1c] sm:%s170] %v193
                %v195 = vld [vmem:[%s177 + $0x40] sm:%s170]
                %196 = vst [vmem:[%s178 + $0x20] sm:%s170] %v195
                %v197 = vld [vmem:[%s177 + $0x44] sm:%s170]
                %198 = vst [vmem:[%s178 + $0x24] sm:%s170] %v197
                %v199 = vld [vmem:[%s177 + $0x48] sm:%s170]
                %200 = vst [vmem:[%s178 + $0x28] sm:%s170] %v199
                %v201 = vld [vmem:[%s177 + $0x4c] sm:%s170]
                %202 = vst [vmem:[%s178 + $0x2c] sm:%s170] %v201
                %v203 = vld [vmem:[%s177 + $0x60] sm:%s170]
                %204 = vst [vmem:[%s178 + $0x30] sm:%s170] %v203
                %v205 = vld [vmem:[%s177 + $0x64] sm:%s170]
                %206 = vst [vmem:[%s178 + $0x34] sm:%s170] %v205
                %v207 = vld [vmem:[%s177 + $0x68] sm:%s170]
                %208 = vst [vmem:[%s178 + $0x38] sm:%s170] %v207
                %v209 = vld [vmem:[%s177 + $0x6c] sm:%s170]
                %210 = vst [vmem:[%s178 + $0x3c] sm:%s170] %v209
                %v211 = vld [vmem:[%s177 + $0x80] sm:%s170]
                %212 = vst [vmem:[%s178 + $0x40] sm:%s170] %v211
                %v213 = vld [vmem:[%s177 + $0x84] sm:%s170]
                %214 = vst [vmem:[%s178 + $0x44] sm:%s170] %v213
                %v215 = vld [vmem:[%s177 + $0x88] sm:%s170]
                %216 = vst [vmem:[%s178 + $0x48] sm:%s170] %v215
                %v217 = vld [vmem:[%s177 + $0x8c] sm:%s170]
                %218 = vst [vmem:[%s178 + $0x4c] sm:%s170] %v217
                %v219 = vld [vmem:[%s177 + $0xa0] sm:%s170]
                %220 = vst [vmem:[%s178 + $0x50] sm:%s170] %v219
                %v221 = vld [vmem:[%s177 + $0xa4] sm:%s170]
                %222 = vst [vmem:[%s178 + $0x54] sm:%s170] %v221
                %v223 = vld [vmem:[%s177 + $0xa8] sm:%s170]
                %224 = vst [vmem:[%s178 + $0x58] sm:%s170] %v223
                %v225 = vld [vmem:[%s177 + $0xac] sm:%s170]
                %226 = vst [vmem:[%s178 + $0x5c] sm:%s170] %v225
                %v227 = vld [vmem:[%s177 + $0xc0] sm:%s170]
                %228 = vst [vmem:[%s178 + $0x60] sm:%s170] %v227
                %v229 = vld [vmem:[%s177 + $0xc4] sm:%s170]
                %230 = vst [vmem:[%s178 + $0x64] sm:%s170] %v229
                %v231 = vld [vmem:[%s177 + $0xc8] sm:%s170]
                %232 = vst [vmem:[%s178 + $0x68] sm:%s170] %v231
                %v233 = vld [vmem:[%s177 + $0xcc] sm:%s170]
                %234 = vst [vmem:[%s178 + $0x6c] sm:%s170] %v233
                %v235 = vld [vmem:[%s177 + $0xe0] sm:%s170]
                %236 = vst [vmem:[%s178 + $0x70] sm:%s170] %v235
                %v237 = vld [vmem:[%s177 + $0xe4] sm:%s170]
                %238 = vst [vmem:[%s178 + $0x74] sm:%s170] %v237
                %v239 = vld [vmem:[%s177 + $0xe8] sm:%s170]
                %240 = vst [vmem:[%s178 + $0x78] sm:%s170] %v239
                %v241 = vld [vmem:[%s177 + $0xec] sm:%s170]
                %242 = vst [vmem:[%s178 + $0x7c] sm:%s170] %v241
                %v243 = vld [vmem:[%s177 + $0x100] sm:%s170]
                %244 = vst [vmem:[%s178 + $0x80] sm:%s170] %v243
                %v245 = vld [vmem:[%s177 + $0x104] sm:%s170]
                %246 = vst [vmem:[%s178 + $0x84] sm:%s170] %v245
                %v247 = vld [vmem:[%s177 + $0x108] sm:%s170]
                %248 = vst [vmem:[%s178 + $0x88] sm:%s170] %v247
                %v249 = vld [vmem:[%s177 + $0x10c] sm:%s170]
                %250 = vst [vmem:[%s178 + $0x8c] sm:%s170] %v249
                %v251 = vld [vmem:[%s177 + $0x120] sm:%s170]
                %252 = vst [vmem:[%s178 + $0x90] sm:%s170] %v251
                %v253 = vld [vmem:[%s177 + $0x124] sm:%s170]
                %254 = vst [vmem:[%s178 + $0x94] sm:%s170] %v253
                %v255 = vld [vmem:[%s177 + $0x128] sm:%s170]
                %256 = vst [vmem:[%s178 + $0x98] sm:%s170] %v255
                %v257 = vld [vmem:[%s177 + $0x12c] sm:%s170]
                %258 = vst [vmem:[%s178 + $0x9c] sm:%s170] %v257
                %v259 = vld [vmem:[%s177 + $0x140] sm:%s170]
                %260 = vst [vmem:[%s178 + $0xa0] sm:%s170] %v259
                %v261 = vld [vmem:[%s177 + $0x144] sm:%s170]
                %262 = vst [vmem:[%s178 + $0xa4] sm:%s170] %v261
                %v263 = vld [vmem:[%s177 + $0x148] sm:%s170]
                %264 = vst [vmem:[%s178 + $0xa8] sm:%s170] %v263
                %v265 = vld [vmem:[%s177 + $0x14c] sm:%s170]
                %266 = vst [vmem:[%s178 + $0xac] sm:%s170] %v265
                %v267 = vld [vmem:[%s177 + $0x160] sm:%s170]
                %268 = vst [vmem:[%s178 + $0xb0] sm:%s170] %v267
                %v269 = vld [vmem:[%s177 + $0x164] sm:%s170]
                %270 = vst [vmem:[%s178 + $0xb4] sm:%s170] %v269
                %v271 = vld [vmem:[%s177 + $0x168] sm:%s170]
                %272 = vst [vmem:[%s178 + $0xb8] sm:%s170] %v271
                %v273 = vld [vmem:[%s177 + $0x16c] sm:%s170]
                %274 = vst [vmem:[%s178 + $0xbc] sm:%s170] %v273
                %v275 = vld [vmem:[%s177 + $0x180] sm:%s170]
                %276 = vst [vmem:[%s178 + $0xc0] sm:%s170] %v275
                %v277 = vld [vmem:[%s177 + $0x184] sm:%s170]
                %278 = vst [vmem:[%s178 + $0xc4] sm:%s170] %v277
                %v279 = vld [vmem:[%s177 + $0x188] sm:%s170]
                %280 = vst [vmem:[%s178 + $0xc8] sm:%s170] %v279
                %v281 = vld [vmem:[%s177 + $0x18c] sm:%s170]
                %282 = vst [vmem:[%s178 + $0xcc] sm:%s170] %v281
                %v283 = vld [vmem:[%s177 + $0x1a0] sm:%s170]
                %284 = vst [vmem:[%s178 + $0xd0] sm:%s170] %v283
                %v285 = vld [vmem:[%s177 + $0x1a4] sm:%s170]
                %286 = vst [vmem:[%s178 + $0xd4] sm:%s170] %v285
                %v287 = vld [vmem:[%s177 + $0x1a8] sm:%s170]
                %288 = vst [vmem:[%s178 + $0xd8] sm:%s170] %v287
                %v289 = vld [vmem:[%s177 + $0x1ac] sm:%s170]
                %290 = vst [vmem:[%s178 + $0xdc] sm:%s170] %v289
                %v291 = vld [vmem:[%s177 + $0x1c0] sm:%s170]
                %292 = vst [vmem:[%s178 + $0xe0] sm:%s170] %v291
                %v293 = vld [vmem:[%s177 + $0x1c4] sm:%s170]
                %294 = vst [vmem:[%s178 + $0xe4] sm:%s170] %v293
                %v295 = vld [vmem:[%s177 + $0x1c8] sm:%s170]
                %296 = vst [vmem:[%s178 + $0xe8] sm:%s170] %v295
                %v297 = vld [vmem:[%s177 + $0x1cc] sm:%s170]
                %298 = vst [vmem:[%s178 + $0xec] sm:%s170] %v297
                %v299 = vld [vmem:[%s177 + $0x1e0] sm:%s170]
                %300 = vst [vmem:[%s178 + $0xf0] sm:%s170] %v299
                %v301 = vld [vmem:[%s177 + $0x1e4] sm:%s170]
                %302 = vst [vmem:[%s178 + $0xf4] sm:%s170] %v301
                %v303 = vld [vmem:[%s177 + $0x1e8] sm:%s170]
                %304 = vst [vmem:[%s178 + $0xf8] sm:%s170] %v303
                %v305 = vld [vmem:[%s177 + $0x1ec] sm:%s170]
                %306 = vst [vmem:[%s178 + $0xfc] sm:%s170] %v305
              $region49: #{pointpillar_forward.8} parent=43 // loop_footer
                %s176 = sadd.s32 1, %s172
              $region50: #{pointpillar_forward.8} parent=43 // loop_footer_branch
                %171 = sbr.rel target = $region46
              $region51: #{pointpillar_forward.8} parent=43 // loop_exit
                _
            $region44: #{pointpillar_forward.8} parent=35 // pred_fallthru
              _
          $region36: #{pointpillar_forward.8} parent=31 // pred_fallthru
            _
          %455 = vnop
        $region32: #{pointpillar_forward.8} parent=27 // pred_fallthru
          _
      $region28: #{pointpillar_forward.8} parent=5 // pred_fallthru
        _
      %p456 = scmp.le.s32.totalorder 1, %s10
      %p457 = scmp.lt.s32.totalorder %s10, 3
      %p458 = pnand %p456, %p457
      %p459 = pneg %p458
      // Predicated region
      $region70: #{pointpillar_forward.8} parent=5 // pred_check
        _
      $region71: #{pointpillar_forward.8} parent=5 // pred_check_branch
        %461 = sbr.rel (%p458) target = $region73
      $region72: #{pointpillar_forward.8} parent=5 // pred_region
        %s462 = ssub.s32 %s10, 1
        %s463 = sand.u32 %s23, 1
        %s464 = sand.u32 %s23, 1
        %s465 = smul.addr %s464, 256
        %s466 = scalar_lea.vmem [#allocation2], %s465
        // Predicated region
        $region74: #{pointpillar_forward.8} parent=72 // pred_check
          %p467 = pneg %p36
        $region75: #{pointpillar_forward.8} parent=72 // pred_check_branch
          %469 = sbr.rel (%p467) target = $region77
        $region76: #{pointpillar_forward.8} parent=72 // pred_region
          _
        $region77: #{pointpillar_forward.8} parent=72 // pred_fallthru
          _
        %s470 = sand.u32 %s23, 1
        %s471 = sand.u32 %s23, 1
        %s472 = smul.addr %s471, 256
        %s473 = scalar_lea.vmem [#allocation2], %s472
        %p474 = pneg %p36
        %p475 = pneg %p33
        %p476 = pneg %p57
        %p477 = pneg %p54
        %p478 = pneg %p78
        %p479 = pneg %p75
        %p480 = pneg %p99
        %p481 = pneg %p96
        %p482 = pneg %p125
        %p483 = pneg %p122
        %s484 = smul.u32 4, %s15
        %p485 = scmp.lt.s32.totalorder %s484, 7
        %s486 = scalar_select %p485, %s484, 7
        %s487 = smul.addr %s486, 8
        %s488 = scalar_lea.vmem %s4, %s487
        %s489 = smul.u32 4, %s15
        %s490 = smul.u32 4, %s15
        %p491 = scmp.lt.s32.totalorder %s490, 7
        %s492 = scalar_select %p491, %s490, 7
        %s493 = smul.addr %s492, 8
        %s494 = scalar_lea.vmem %s4, %s493
        %s495 = smul.u32 4, %s15
        %v497 = vld [vmem:[%s466] sm:$0xf]
        %v498 = vld [vmem:[%s466 + $0x4] sm:$0xf]
        %v499 = vld [vmem:[%s466 + $0x8] sm:$0xf]
        %v500 = vld [vmem:[%s466 + $0xc] sm:$0xf]
        %v501 = vld [vmem:[%s466 + $0x10] sm:$0xf]
        %v502 = vld [vmem:[%s466 + $0x14] sm:$0xf]
        %v503 = vld [vmem:[%s466 + $0x18] sm:$0xf]
        %v504 = vld [vmem:[%s466 + $0x1c] sm:$0xf]
        %v505 = vld [vmem:[%s466 + $0x20] sm:$0xf]
        %v506 = vld [vmem:[%s466 + $0x24] sm:$0xf]
        %v507 = vld [vmem:[%s466 + $0x28] sm:$0xf]
        %v508 = vld [vmem:[%s466 + $0x2c] sm:$0xf]
        %v509 = vld [vmem:[%s466 + $0x30] sm:$0xf]
        %v510 = vld [vmem:[%s466 + $0x34] sm:$0xf]
        %v511 = vld [vmem:[%s466 + $0x38] sm:$0xf]
        %v512 = vld [vmem:[%s466 + $0x3c] sm:$0xf]
        %v513 = vld [vmem:[%s466 + $0x40] sm:$0xf]
        %v514 = vld [vmem:[%s466 + $0x44] sm:$0xf]
        %v515 = vld [vmem:[%s466 + $0x48] sm:$0xf]
        %v516 = vld [vmem:[%s466 + $0x4c] sm:$0xf]
        %v517 = vld [vmem:[%s466 + $0x50] sm:$0xf]
        %v518 = vld [vmem:[%s466 + $0x54] sm:$0xf]
        %v519 = vld [vmem:[%s466 + $0x58] sm:$0xf]
        %v520 = vld [vmem:[%s466 + $0x5c] sm:$0xf]
        %v521 = vld [vmem:[%s466 + $0x60] sm:$0xf]
        %v522 = vld [vmem:[%s466 + $0x64] sm:$0xf]
        %v523 = vld [vmem:[%s466 + $0x68] sm:$0xf]
        %v524 = vld [vmem:[%s466 + $0x6c] sm:$0xf]
        %v525 = vld [vmem:[%s466 + $0x70] sm:$0xf]
        %v526 = vld [vmem:[%s466 + $0x74] sm:$0xf]
        %v527 = vld [vmem:[%s466 + $0x78] sm:$0xf]
        %v528 = vld [vmem:[%s466 + $0x7c] sm:$0xf]
        %v529 = vld [vmem:[%s466 + $0x80] sm:$0xf]
        %v530 = vld [vmem:[%s466 + $0x84] sm:$0xf]
        %v531 = vld [vmem:[%s466 + $0x88] sm:$0xf]
        %v532 = vld [vmem:[%s466 + $0x8c] sm:$0xf]
        %v533 = vld [vmem:[%s466 + $0x90] sm:$0xf]
        %v534 = vld [vmem:[%s466 + $0x94] sm:$0xf]
        %v535 = vld [vmem:[%s466 + $0x98] sm:$0xf]
        %v536 = vld [vmem:[%s466 + $0x9c] sm:$0xf]
        %v537 = vld [vmem:[%s466 + $0xa0] sm:$0xf]
        %v538 = vld [vmem:[%s466 + $0xa4] sm:$0xf]
        %v539 = vld [vmem:[%s466 + $0xa8] sm:$0xf]
        %v540 = vld [vmem:[%s466 + $0xac] sm:$0xf]
        %v541 = vld [vmem:[%s466 + $0xb0] sm:$0xf]
        %v542 = vld [vmem:[%s466 + $0xb4] sm:$0xf]
        %v543 = vld [vmem:[%s466 + $0xb8] sm:$0xf]
        %v544 = vld [vmem:[%s466 + $0xbc] sm:$0xf]
        %v545 = vld [vmem:[%s466 + $0xc0] sm:$0xf]
        %v546 = vld [vmem:[%s466 + $0xc4] sm:$0xf]
        %v547 = vld [vmem:[%s466 + $0xc8] sm:$0xf]
        %v548 = vld [vmem:[%s466 + $0xcc] sm:$0xf]
        %v549 = vld [vmem:[%s466 + $0xd0] sm:$0xf]
        %v550 = vld [vmem:[%s466 + $0xd4] sm:$0xf]
        %v551 = vld [vmem:[%s466 + $0xd8] sm:$0xf]
        %v552 = vld [vmem:[%s466 + $0xdc] sm:$0xf]
        %v553 = vld [vmem:[%s466 + $0xe0] sm:$0xf]
        %v554 = vld [vmem:[%s466 + $0xe4] sm:$0xf]
        %v555 = vld [vmem:[%s466 + $0xe8] sm:$0xf]
        %v556 = vld [vmem:[%s466 + $0xec] sm:$0xf]
        %v557 = vld [vmem:[%s466 + $0xf0] sm:$0xf]
        %v558 = vld [vmem:[%s466 + $0xf4] sm:$0xf]
        %v559 = vld [vmem:[%s466 + $0xf8] sm:$0xf]
        %v560 = vld [vmem:[%s466 + $0xfc] sm:$0xf]
        %v561 = vld [vmem:[%s1] sm:$0xf]
        %v562 = vld [vmem:[%s1 + $0x4] sm:$0xf]
        %v627 = vunpack.c.l.b16 %v497
        %v628 = vunpack.c.l.b16 %v498
        %v629 = vunpack.c.l.b16 %v499
        %v630 = vunpack.c.l.b16 %v500
        %v631 = vunpack.c.l.b16 %v501
        %v632 = vunpack.c.l.b16 %v502
        %v633 = vunpack.c.l.b16 %v503
        %v634 = vunpack.c.l.b16 %v504
        %v635 = vunpack.c.l.b16 %v505
        %v636 = vunpack.c.l.b16 %v506
        %v637 = vunpack.c.l.b16 %v507
        %v638 = vunpack.c.l.b16 %v508
        %v639 = vunpack.c.l.b16 %v509
        %v640 = vunpack.c.l.b16 %v510
        %v641 = vunpack.c.l.b16 %v511
        %v642 = vunpack.c.l.b16 %v512
        %v643 = vunpack.c.l.b16 %v513
        %v644 = vunpack.c.l.b16 %v514
        %v645 = vunpack.c.l.b16 %v515
        %v646 = vunpack.c.l.b16 %v516
        %v647 = vunpack.c.l.b16 %v517
        %v648 = vunpack.c.l.b16 %v518
        %v649 = vunpack.c.l.b16 %v519
        %v650 = vunpack.c.l.b16 %v520
        %v651 = vunpack.c.l.b16 %v521
        %v652 = vunpack.c.l.b16 %v522
        %v653 = vunpack.c.l.b16 %v523
        %v654 = vunpack.c.l.b16 %v524
        %v655 = vunpack.c.l.b16 %v525
        %v656 = vunpack.c.l.b16 %v526
        %v657 = vunpack.c.l.b16 %v527
        %v658 = vunpack.c.l.b16 %v528
        %v659 = vunpack.c.l.b16 %v529
        %v660 = vunpack.c.l.b16 %v530
        %v661 = vunpack.c.l.b16 %v531
        %v662 = vunpack.c.l.b16 %v532
        %v663 = vunpack.c.l.b16 %v533
        %v664 = vunpack.c.l.b16 %v534
        %v665 = vunpack.c.l.b16 %v535
        %v666 = vunpack.c.l.b16 %v536
        %v667 = vunpack.c.l.b16 %v537
        %v668 = vunpack.c.l.b16 %v538
        %v669 = vunpack.c.l.b16 %v539
        %v670 = vunpack.c.l.b16 %v540
        %v671 = vunpack.c.l.b16 %v541
        %v672 = vunpack.c.l.b16 %v542
        %v673 = vunpack.c.l.b16 %v543
        %v674 = vunpack.c.l.b16 %v544
        %v675 = vunpack.c.l.b16 %v545
        %v676 = vunpack.c.l.b16 %v546
        %v677 = vunpack.c.l.b16 %v547
        %v678 = vunpack.c.l.b16 %v548
        %v679 = vunpack.c.l.b16 %v549
        %v680 = vunpack.c.l.b16 %v550
        %v681 = vunpack.c.l.b16 %v551
        %v682 = vunpack.c.l.b16 %v552
        %v683 = vunpack.c.l.b16 %v553
        %v684 = vunpack.c.l.b16 %v554
        %v685 = vunpack.c.l.b16 %v555
        %v686 = vunpack.c.l.b16 %v556
        %v687 = vunpack.c.l.b16 %v557
        %v688 = vunpack.c.l.b16 %v558
        %v689 = vunpack.c.l.b16 %v559
        %v690 = vunpack.c.l.b16 %v560
        %v691 = vpack.c.b16 %v628, %v627
        %v692 = vpack.c.b16 %v630, %v629
        %v693 = vpack.c.b16 %v632, %v631
        %v694 = vpack.c.b16 %v634, %v633
        %v695 = vpack.c.b16 %v636, %v635
        %v696 = vpack.c.b16 %v638, %v637
        %v697 = vpack.c.b16 %v640, %v639
        %v698 = vpack.c.b16 %v642, %v641
        %v699 = vpack.c.b16 %v644, %v643
        %v700 = vpack.c.b16 %v646, %v645
        %v701 = vpack.c.b16 %v648, %v647
        %v702 = vpack.c.b16 %v650, %v649
        %v703 = vpack.c.b16 %v652, %v651
        %v704 = vpack.c.b16 %v654, %v653
        %v705 = vpack.c.b16 %v656, %v655
        %v706 = vpack.c.b16 %v658, %v657
        %v707 = vpack.c.b16 %v660, %v659
        %v708 = vpack.c.b16 %v662, %v661
        %v709 = vpack.c.b16 %v664, %v663
        %v710 = vpack.c.b16 %v666, %v665
        %v711 = vpack.c.b16 %v668, %v667
        %v712 = vpack.c.b16 %v670, %v669
        %v713 = vpack.c.b16 %v672, %v671
        %v714 = vpack.c.b16 %v674, %v673
        %v715 = vpack.c.b16 %v676, %v675
        %v716 = vpack.c.b16 %v678, %v677
        %v717 = vpack.c.b16 %v680, %v679
        %v718 = vpack.c.b16 %v682, %v681
        %v719 = vpack.c.b16 %v684, %v683
        %v720 = vpack.c.b16 %v686, %v685
        %v721 = vpack.c.b16 %v688, %v687
        %v722 = vpack.c.b16 %v690, %v689
        %v725 = vunpack.c.l.b16 %v561
        %v726 = vunpack.c.l.b16 %v562
        %v727 = vpack.c.b16 %v726, %v725
        %vm729 = vcmask 130048
        %v731 = vsel %vm729, %v691, 0
        %v734 = vsel %vm729, %v692, 0
        %v737 = vsel %vm729, %v693, 0
        %v740 = vsel %vm729, %v694, 0
        %v743 = vsel %vm729, %v695, 0
        %v746 = vsel %vm729, %v696, 0
        %v749 = vsel %vm729, %v697, 0
        %v752 = vsel %vm729, %v698, 0
        %v755 = vsel %vm729, %v699, 0
        %v758 = vsel %vm729, %v700, 0
        %v761 = vsel %vm729, %v701, 0
        %v764 = vsel %vm729, %v702, 0
        %v767 = vsel %vm729, %v703, 0
        %v770 = vsel %vm729, %v704, 0
        %v773 = vsel %vm729, %v705, 0
        %v776 = vsel %vm729, %v706, 0
        %v779 = vsel %vm729, %v707, 0
        %v782 = vsel %vm729, %v708, 0
        %v785 = vsel %vm729, %v709, 0
        %v788 = vsel %vm729, %v710, 0
        %v791 = vsel %vm729, %v711, 0
        %v794 = vsel %vm729, %v712, 0
        %v797 = vsel %vm729, %v713, 0
        %v800 = vsel %vm729, %v714, 0
        %v803 = vsel %vm729, %v715, 0
        %v806 = vsel %vm729, %v716, 0
        %v809 = vsel %vm729, %v717, 0
        %v812 = vsel %vm729, %v718, 0
        %v815 = vsel %vm729, %v719, 0
        %v818 = vsel %vm729, %v720, 0
        %v821 = vsel %vm729, %v721, 0
        %v824 = vsel %vm729, %v722, 0
        %826 = vmatprep.subr.bf16.mxu0 0
        %827 = vmatpush1.bf16.msra.mxu0 0
        %828 = vmatprep.subr.bf16.mxu0 0
        %829 = vmatpush1.bf16.msra.mxu0 0
        %830 = vmatprep.subr.bf16.mxu0 0
        %831 = vmatpush1.bf16.msra.mxu0 0
        %832 = vmatprep.subr.bf16.mxu0 0
        %833 = vmatpush1.bf16.msra.mxu0 0
        %834 = vmatprep.subr.bf16.mxu0 0
        %835 = vmatpush1.bf16.msra.mxu0 0
        %836 = vmatprep.subr.bf16.mxu0 0
        %837 = vmatpush1.bf16.msra.mxu0 0
        %838 = vmatprep.subr.bf16.mxu0 0
        %839 = vmatpush1.bf16.msra.mxu0 0
        %840 = vmatprep.subr.bf16.mxu0 0
        %841 = vmatpush1.bf16.msra.mxu0 %v727
        %842 = vmatprep.subr.bf16.mxu0 0
        %843 = vmatpush2.bf16.msra.mxu0 0
        %844 = vmatprep.subr.bf16.mxu0 0
        %845 = vmatpush2.bf16.msra.mxu0 0
        %846 = vmatprep.subr.bf16.mxu0 0
        %847 = vmatpush2.bf16.msra.mxu0 0
        %848 = vmatprep.subr.bf16.mxu0 0
        %849 = vmatpush2.bf16.msra.mxu0 0
        %850 = vmatprep.subr.bf16.mxu0 0
        %851 = vmatpush2.bf16.msra.mxu0 0
        %852 = vmatprep.subr.bf16.mxu0 0
        %853 = vmatpush2.bf16.msra.mxu0 0
        %854 = vmatprep.subr.bf16.mxu0 0
        %855 = vmatpush2.bf16.msra.mxu0 0
        %856 = vmatprep.subr.bf16.mxu0 0
        %857 = vmatpush2.bf16.msra.mxu0 0
        %858 = vmatprep.mubr.bf16.mxu0 0
        %859 = vmatmul.mubr.bf16.gmra.mxu0 %v731
        %v860 = vpop.f32.mrf.mxu0
        %v861 = vadd.f32 0.0, %v860
        %v862 = vpop.f32.mrf.mxu0
        %v863 = vpop.f32.mrf.mxu0
        %v864 = vadd.f32 0.0, %v863
        %v865 = vpop.f32.mrf.mxu0
        %866 = vmatprep.mubr.bf16.mxu0 0
        %867 = vmatmul.mubr.bf16.gmra.mxu0 %v734
        %v868 = vpop.f32.mrf.mxu0
        %v869 = vadd.f32 0.0, %v868
        %v870 = vpop.f32.mrf.mxu0
        %v871 = vpop.f32.mrf.mxu0
        %v872 = vadd.f32 0.0, %v871
        %v873 = vpop.f32.mrf.mxu0
        %874 = vmatprep.mubr.bf16.mxu0 0
        %875 = vmatmul.mubr.bf16.gmra.mxu0 %v737
        %v876 = vpop.f32.mrf.mxu0
        %v877 = vadd.f32 0.0, %v876
        %v878 = vpop.f32.mrf.mxu0
        %v879 = vpop.f32.mrf.mxu0
        %v880 = vadd.f32 0.0, %v879
        %v881 = vpop.f32.mrf.mxu0
        %882 = vmatprep.mubr.bf16.mxu0 0
        %883 = vmatmul.mubr.bf16.gmra.mxu0 %v740
        %v884 = vpop.f32.mrf.mxu0
        %v885 = vadd.f32 0.0, %v884
        %v886 = vpop.f32.mrf.mxu0
        %v887 = vpop.f32.mrf.mxu0
        %v888 = vadd.f32 0.0, %v887
        %v889 = vpop.f32.mrf.mxu0
        %890 = vmatprep.mubr.bf16.mxu0 0
        %891 = vmatmul.mubr.bf16.gmra.mxu0 %v743
        %v892 = vpop.f32.mrf.mxu0
        %v893 = vadd.f32 0.0, %v892
        %v894 = vpop.f32.mrf.mxu0
        %v895 = vpop.f32.mrf.mxu0
        %v896 = vadd.f32 0.0, %v895
        %v897 = vpop.f32.mrf.mxu0
        %898 = vmatprep.mubr.bf16.mxu0 0
        %899 = vmatmul.mubr.bf16.gmra.mxu0 %v746
        %v900 = vpop.f32.mrf.mxu0
        %v901 = vadd.f32 0.0, %v900
        %v902 = vpop.f32.mrf.mxu0
        %v903 = vpop.f32.mrf.mxu0
        %v904 = vadd.f32 0.0, %v903
        %v905 = vpop.f32.mrf.mxu0
        %906 = vmatprep.mubr.bf16.mxu0 0
        %907 = vmatmul.mubr.bf16.gmra.mxu0 %v749
        %v908 = vpop.f32.mrf.mxu0
        %v909 = vadd.f32 0.0, %v908
        %v910 = vpop.f32.mrf.mxu0
        %v911 = vpop.f32.mrf.mxu0
        %v912 = vadd.f32 0.0, %v911
        %v913 = vpop.f32.mrf.mxu0
        %914 = vmatprep.mubr.bf16.mxu0 0
        %915 = vmatmul.mubr.bf16.gmra.mxu0 %v752
        %v916 = vpop.f32.mrf.mxu0
        %v917 = vadd.f32 0.0, %v916
        %v918 = vpop.f32.mrf.mxu0
        %v919 = vpop.f32.mrf.mxu0
        %v920 = vadd.f32 0.0, %v919
        %v921 = vpop.f32.mrf.mxu0
        %922 = vmatprep.mubr.bf16.mxu0 0
        %923 = vmatmul.mubr.bf16.gmra.mxu0 %v755
        %v924 = vpop.f32.mrf.mxu0
        %v925 = vadd.f32 0.0, %v924
        %v926 = vpop.f32.mrf.mxu0
        %v927 = vpop.f32.mrf.mxu0
        %v928 = vadd.f32 0.0, %v927
        %v929 = vpop.f32.mrf.mxu0
        %930 = vmatprep.mubr.bf16.mxu0 0
        %931 = vmatmul.mubr.bf16.gmra.mxu0 %v758
        %v932 = vpop.f32.mrf.mxu0
        %v933 = vadd.f32 0.0, %v932
        %v934 = vpop.f32.mrf.mxu0
        %v935 = vpop.f32.mrf.mxu0
        %v936 = vadd.f32 0.0, %v935
        %v937 = vpop.f32.mrf.mxu0
        %938 = vmatprep.mubr.bf16.mxu0 0
        %939 = vmatmul.mubr.bf16.gmra.mxu0 %v761
        %v940 = vpop.f32.mrf.mxu0
        %v941 = vadd.f32 0.0, %v940
        %v942 = vpop.f32.mrf.mxu0
        %v943 = vpop.f32.mrf.mxu0
        %v944 = vadd.f32 0.0, %v943
        %v945 = vpop.f32.mrf.mxu0
        %946 = vmatprep.mubr.bf16.mxu0 0
        %947 = vmatmul.mubr.bf16.gmra.mxu0 %v764
        %v948 = vpop.f32.mrf.mxu0
        %v949 = vadd.f32 0.0, %v948
        %v950 = vpop.f32.mrf.mxu0
        %v951 = vpop.f32.mrf.mxu0
        %v952 = vadd.f32 0.0, %v951
        %v953 = vpop.f32.mrf.mxu0
        %954 = vmatprep.mubr.bf16.mxu0 0
        %955 = vmatmul.mubr.bf16.gmra.mxu0 %v767
        %v956 = vpop.f32.mrf.mxu0
        %v957 = vadd.f32 0.0, %v956
        %v958 = vpop.f32.mrf.mxu0
        %v959 = vpop.f32.mrf.mxu0
        %v960 = vadd.f32 0.0, %v959
        %v961 = vpop.f32.mrf.mxu0
        %962 = vmatprep.mubr.bf16.mxu0 0
        %963 = vmatmul.mubr.bf16.gmra.mxu0 %v770
        %v964 = vpop.f32.mrf.mxu0
        %v965 = vadd.f32 0.0, %v964
        %v966 = vpop.f32.mrf.mxu0
        %v967 = vpop.f32.mrf.mxu0
        %v968 = vadd.f32 0.0, %v967
        %v969 = vpop.f32.mrf.mxu0
        %970 = vmatprep.mubr.bf16.mxu0 0
        %971 = vmatmul.mubr.bf16.gmra.mxu0 %v773
        %v972 = vpop.f32.mrf.mxu0
        %v973 = vadd.f32 0.0, %v972
        %v974 = vpop.f32.mrf.mxu0
        %v975 = vpop.f32.mrf.mxu0
        %v976 = vadd.f32 0.0, %v975
        %v977 = vpop.f32.mrf.mxu0
        %978 = vmatprep.mubr.bf16.mxu0 0
        %979 = vmatmul.mubr.bf16.gmra.mxu0 %v776
        %v980 = vpop.f32.mrf.mxu0
        %v981 = vadd.f32 0.0, %v980
        %v982 = vpop.f32.mrf.mxu0
        %v983 = vpop.f32.mrf.mxu0
        %v984 = vadd.f32 0.0, %v983
        %v985 = vpop.f32.mrf.mxu0
        %986 = vmatprep.mubr.bf16.mxu0 0
        %987 = vmatmul.mubr.bf16.gmra.mxu0 %v779
        %v988 = vpop.f32.mrf.mxu0
        %v989 = vadd.f32 0.0, %v988
        %v990 = vpop.f32.mrf.mxu0
        %v991 = vpop.f32.mrf.mxu0
        %v992 = vadd.f32 0.0, %v991
        %v993 = vpop.f32.mrf.mxu0
        %994 = vmatprep.mubr.bf16.mxu0 0
        %995 = vmatmul.mubr.bf16.gmra.mxu0 %v782
        %v996 = vpop.f32.mrf.mxu0
        %v997 = vadd.f32 0.0, %v996
        %v998 = vpop.f32.mrf.mxu0
        %v999 = vpop.f32.mrf.mxu0
        %v1000 = vadd.f32 0.0, %v999
        %v1001 = vpop.f32.mrf.mxu0
        %1002 = vmatprep.mubr.bf16.mxu0 0
        %1003 = vmatmul.mubr.bf16.gmra.mxu0 %v785
        %v1004 = vpop.f32.mrf.mxu0
        %v1005 = vadd.f32 0.0, %v1004
        %v1006 = vpop.f32.mrf.mxu0
        %v1007 = vpop.f32.mrf.mxu0
        %v1008 = vadd.f32 0.0, %v1007
        %v1009 = vpop.f32.mrf.mxu0
        %1010 = vmatprep.mubr.bf16.mxu0 0
        %1011 = vmatmul.mubr.bf16.gmra.mxu0 %v788
        %v1012 = vpop.f32.mrf.mxu0
        %v1013 = vadd.f32 0.0, %v1012
        %v1014 = vpop.f32.mrf.mxu0
        %v1015 = vpop.f32.mrf.mxu0
        %v1016 = vadd.f32 0.0, %v1015
        %v1017 = vpop.f32.mrf.mxu0
        %1018 = vmatprep.mubr.bf16.mxu0 0
        %1019 = vmatmul.mubr.bf16.gmra.mxu0 %v791
        %v1020 = vpop.f32.mrf.mxu0
        %v1021 = vadd.f32 0.0, %v1020
        %v1022 = vpop.f32.mrf.mxu0
        %v1023 = vpop.f32.mrf.mxu0
        %v1024 = vadd.f32 0.0, %v1023
        %v1025 = vpop.f32.mrf.mxu0
        %1026 = vmatprep.mubr.bf16.mxu0 0
        %1027 = vmatmul.mubr.bf16.gmra.mxu0 %v794
        %v1028 = vpop.f32.mrf.mxu0
        %v1029 = vadd.f32 0.0, %v1028
        %v1030 = vpop.f32.mrf.mxu0
        %v1031 = vpop.f32.mrf.mxu0
        %v1032 = vadd.f32 0.0, %v1031
        %v1033 = vpop.f32.mrf.mxu0
        %1034 = vmatprep.mubr.bf16.mxu0 0
        %1035 = vmatmul.mubr.bf16.gmra.mxu0 %v797
        %v1036 = vpop.f32.mrf.mxu0
        %v1037 = vadd.f32 0.0, %v1036
        %v1038 = vpop.f32.mrf.mxu0
        %v1039 = vpop.f32.mrf.mxu0
        %v1040 = vadd.f32 0.0, %v1039
        %v1041 = vpop.f32.mrf.mxu0
        %1042 = vmatprep.mubr.bf16.mxu0 0
        %1043 = vmatmul.mubr.bf16.gmra.mxu0 %v800
        %v1044 = vpop.f32.mrf.mxu0
        %v1045 = vadd.f32 0.0, %v1044
        %v1046 = vpop.f32.mrf.mxu0
        %v1047 = vpop.f32.mrf.mxu0
        %v1048 = vadd.f32 0.0, %v1047
        %v1049 = vpop.f32.mrf.mxu0
        %1050 = vmatprep.mubr.bf16.mxu0 0
        %1051 = vmatmul.mubr.bf16.gmra.mxu0 %v803
        %v1052 = vpop.f32.mrf.mxu0
        %v1053 = vadd.f32 0.0, %v1052
        %v1054 = vpop.f32.mrf.mxu0
        %v1055 = vpop.f32.mrf.mxu0
        %v1056 = vadd.f32 0.0, %v1055
        %v1057 = vpop.f32.mrf.mxu0
        %1058 = vmatprep.mubr.bf16.mxu0 0
        %1059 = vmatmul.mubr.bf16.gmra.mxu0 %v806
        %v1060 = vpop.f32.mrf.mxu0
        %v1061 = vadd.f32 0.0, %v1060
        %v1062 = vpop.f32.mrf.mxu0
        %v1063 = vpop.f32.mrf.mxu0
        %v1064 = vadd.f32 0.0, %v1063
        %v1065 = vpop.f32.mrf.mxu0
        %1066 = vmatprep.mubr.bf16.mxu0 0
        %1067 = vmatmul.mubr.bf16.gmra.mxu0 %v809
        %v1068 = vpop.f32.mrf.mxu0
        %v1069 = vadd.f32 0.0, %v1068
        %v1070 = vpop.f32.mrf.mxu0
        %v1071 = vpop.f32.mrf.mxu0
        %v1072 = vadd.f32 0.0, %v1071
        %v1073 = vpop.f32.mrf.mxu0
        %1074 = vmatprep.mubr.bf16.mxu0 0
        %1075 = vmatmul.mubr.bf16.gmra.mxu0 %v812
        %v1076 = vpop.f32.mrf.mxu0
        %v1077 = vadd.f32 0.0, %v1076
        %v1078 = vpop.f32.mrf.mxu0
        %v1079 = vpop.f32.mrf.mxu0
        %v1080 = vadd.f32 0.0, %v1079
        %v1081 = vpop.f32.mrf.mxu0
        %1082 = vmatprep.mubr.bf16.mxu0 0
        %1083 = vmatmul.mubr.bf16.gmra.mxu0 %v815
        %v1084 = vpop.f32.mrf.mxu0
        %v1085 = vadd.f32 0.0, %v1084
        %v1086 = vpop.f32.mrf.mxu0
        %v1087 = vpop.f32.mrf.mxu0
        %v1088 = vadd.f32 0.0, %v1087
        %v1089 = vpop.f32.mrf.mxu0
        %1090 = vmatprep.mubr.bf16.mxu0 0
        %1091 = vmatmul.mubr.bf16.gmra.mxu0 %v818
        %v1092 = vpop.f32.mrf.mxu0
        %v1093 = vadd.f32 0.0, %v1092
        %v1094 = vpop.f32.mrf.mxu0
        %v1095 = vpop.f32.mrf.mxu0
        %v1096 = vadd.f32 0.0, %v1095
        %v1097 = vpop.f32.mrf.mxu0
        %1098 = vmatprep.mubr.bf16.mxu0 0
        %1099 = vmatmul.mubr.bf16.gmra.mxu0 %v821
        %v1100 = vpop.f32.mrf.mxu0
        %v1101 = vadd.f32 0.0, %v1100
        %v1102 = vpop.f32.mrf.mxu0
        %v1103 = vpop.f32.mrf.mxu0
        %v1104 = vadd.f32 0.0, %v1103
        %v1105 = vpop.f32.mrf.mxu0
        %1106 = vmatprep.mubr.bf16.mxu0 0
        %1107 = vmatmul.mubr.bf16.gmra.mxu0 %v824
        %v1108 = vpop.f32.mrf.mxu0
        %v1109 = vadd.f32 0.0, %v1108
        %v1110 = vpop.f32.mrf.mxu0
        %v1111 = vpop.f32.mrf.mxu0
        %v1112 = vadd.f32 0.0, %v1111
        %v1113 = vpop.f32.mrf.mxu0
        %1114 = vdwg.mxu0
        %v1115 = vld [vmem:[%s2] sm:$0x1]
        %v1117 = vlaneseq
        %v1118 = vshrl.u32 %v1117, 7
        %v1119 = vsub.s32 0, %v1118
        %v1120 = vrot.slane %v1115, %v1119
        %v1122 = vmul.f32 %v861, %v1120
        %v1123 = vmul.f32 %v864, %v1120
        %v1124 = vmul.f32 %v869, %v1120
        %v1125 = vmul.f32 %v872, %v1120
        %v1126 = vmul.f32 %v877, %v1120
        %v1127 = vmul.f32 %v880, %v1120
        %v1128 = vmul.f32 %v885, %v1120
        %v1129 = vmul.f32 %v888, %v1120
        %v1130 = vmul.f32 %v893, %v1120
        %v1131 = vmul.f32 %v896, %v1120
        %v1132 = vmul.f32 %v901, %v1120
        %v1133 = vmul.f32 %v904, %v1120
        %v1134 = vmul.f32 %v909, %v1120
        %v1135 = vmul.f32 %v912, %v1120
        %v1136 = vmul.f32 %v917, %v1120
        %v1137 = vmul.f32 %v920, %v1120
        %v1138 = vmul.f32 %v925, %v1120
        %v1139 = vmul.f32 %v928, %v1120
        %v1140 = vmul.f32 %v933, %v1120
        %v1141 = vmul.f32 %v936, %v1120
        %v1142 = vmul.f32 %v941, %v1120
        %v1143 = vmul.f32 %v944, %v1120
        %v1144 = vmul.f32 %v949, %v1120
        %v1145 = vmul.f32 %v952, %v1120
        %v1146 = vmul.f32 %v957, %v1120
        %v1147 = vmul.f32 %v960, %v1120
        %v1148 = vmul.f32 %v965, %v1120
        %v1149 = vmul.f32 %v968, %v1120
        %v1150 = vmul.f32 %v973, %v1120
        %v1151 = vmul.f32 %v976, %v1120
        %v1152 = vmul.f32 %v981, %v1120
        %v1153 = vmul.f32 %v984, %v1120
        %v1154 = vmul.f32 %v989, %v1120
        %v1155 = vmul.f32 %v992, %v1120
        %v1156 = vmul.f32 %v997, %v1120
        %v1157 = vmul.f32 %v1000, %v1120
        %v1158 = vmul.f32 %v1005, %v1120
        %v1159 = vmul.f32 %v1008, %v1120
        %v1160 = vmul.f32 %v1013, %v1120
        %v1161 = vmul.f32 %v1016, %v1120
        %v1162 = vmul.f32 %v1021, %v1120
        %v1163 = vmul.f32 %v1024, %v1120
        %v1164 = vmul.f32 %v1029, %v1120
        %v1165 = vmul.f32 %v1032, %v1120
        %v1166 = vmul.f32 %v1037, %v1120
        %v1167 = vmul.f32 %v1040, %v1120
        %v1168 = vmul.f32 %v1045, %v1120
        %v1169 = vmul.f32 %v1048, %v1120
        %v1170 = vmul.f32 %v1053, %v1120
        %v1171 = vmul.f32 %v1056, %v1120
        %v1172 = vmul.f32 %v1061, %v1120
        %v1173 = vmul.f32 %v1064, %v1120
        %v1174 = vmul.f32 %v1069, %v1120
        %v1175 = vmul.f32 %v1072, %v1120
        %v1176 = vmul.f32 %v1077, %v1120
        %v1177 = vmul.f32 %v1080, %v1120
        %v1178 = vmul.f32 %v1085, %v1120
        %v1179 = vmul.f32 %v1088, %v1120
        %v1180 = vmul.f32 %v1093, %v1120
        %v1181 = vmul.f32 %v1096, %v1120
        %v1182 = vmul.f32 %v1101, %v1120
        %v1183 = vmul.f32 %v1104, %v1120
        %v1184 = vmul.f32 %v1109, %v1120
        %v1185 = vmul.f32 %v1112, %v1120
        %v1186 = vld [vmem:[%s3] sm:$0x1]
        %v1188 = vlaneseq
        %v1189 = vshrl.u32 %v1188, 7
        %v1190 = vsub.s32 0, %v1189
        %v1191 = vrot.slane %v1186, %v1190
        %v1193 = vadd.f32 %v1122, %v1191
        %v1194 = vadd.f32 %v1123, %v1191
        %v1195 = vadd.f32 %v1124, %v1191
        %v1196 = vadd.f32 %v1125, %v1191
        %v1197 = vadd.f32 %v1126, %v1191
        %v1198 = vadd.f32 %v1127, %v1191
        %v1199 = vadd.f32 %v1128, %v1191
        %v1200 = vadd.f32 %v1129, %v1191
        %v1201 = vadd.f32 %v1130, %v1191
        %v1202 = vadd.f32 %v1131, %v1191
        %v1203 = vadd.f32 %v1132, %v1191
        %v1204 = vadd.f32 %v1133, %v1191
        %v1205 = vadd.f32 %v1134, %v1191
        %v1206 = vadd.f32 %v1135, %v1191
        %v1207 = vadd.f32 %v1136, %v1191
        %v1208 = vadd.f32 %v1137, %v1191
        %v1209 = vadd.f32 %v1138, %v1191
        %v1210 = vadd.f32 %v1139, %v1191
        %v1211 = vadd.f32 %v1140, %v1191
        %v1212 = vadd.f32 %v1141, %v1191
        %v1213 = vadd.f32 %v1142, %v1191
        %v1214 = vadd.f32 %v1143, %v1191
        %v1215 = vadd.f32 %v1144, %v1191
        %v1216 = vadd.f32 %v1145, %v1191
        %v1217 = vadd.f32 %v1146, %v1191
        %v1218 = vadd.f32 %v1147, %v1191
        %v1219 = vadd.f32 %v1148, %v1191
        %v1220 = vadd.f32 %v1149, %v1191
        %v1221 = vadd.f32 %v1150, %v1191
        %v1222 = vadd.f32 %v1151, %v1191
        %v1223 = vadd.f32 %v1152, %v1191
        %v1224 = vadd.f32 %v1153, %v1191
        %v1225 = vadd.f32 %v1154, %v1191
        %v1226 = vadd.f32 %v1155, %v1191
        %v1227 = vadd.f32 %v1156, %v1191
        %v1228 = vadd.f32 %v1157, %v1191
        %v1229 = vadd.f32 %v1158, %v1191
        %v1230 = vadd.f32 %v1159, %v1191
        %v1231 = vadd.f32 %v1160, %v1191
        %v1232 = vadd.f32 %v1161, %v1191
        %v1233 = vadd.f32 %v1162, %v1191
        %v1234 = vadd.f32 %v1163, %v1191
        %v1235 = vadd.f32 %v1164, %v1191
        %v1236 = vadd.f32 %v1165, %v1191
        %v1237 = vadd.f32 %v1166, %v1191
        %v1238 = vadd.f32 %v1167, %v1191
        %v1239 = vadd.f32 %v1168, %v1191
        %v1240 = vadd.f32 %v1169, %v1191
        %v1241 = vadd.f32 %v1170, %v1191
        %v1242 = vadd.f32 %v1171, %v1191
        %v1243 = vadd.f32 %v1172, %v1191
        %v1244 = vadd.f32 %v1173, %v1191
        %v1245 = vadd.f32 %v1174, %v1191
        %v1246 = vadd.f32 %v1175, %v1191
        %v1247 = vadd.f32 %v1176, %v1191
        %v1248 = vadd.f32 %v1177, %v1191
        %v1249 = vadd.f32 %v1178, %v1191
        %v1250 = vadd.f32 %v1179, %v1191
        %v1251 = vadd.f32 %v1180, %v1191
        %v1252 = vadd.f32 %v1181, %v1191
        %v1253 = vadd.f32 %v1182, %v1191
        %v1254 = vadd.f32 %v1183, %v1191
        %v1255 = vadd.f32 %v1184, %v1191
        %v1256 = vadd.f32 %v1185, %v1191
        %v1257 = vmax.f32 %v1193, 0.0
        %v1258 = vmax.f32 %v1194, 0.0
        %v1259 = vmax.f32 %v1195, 0.0
        %v1260 = vmax.f32 %v1196, 0.0
        %v1261 = vmax.f32 %v1197, 0.0
        %v1262 = vmax.f32 %v1198, 0.0
        %v1263 = vmax.f32 %v1199, 0.0
        %v1264 = vmax.f32 %v1200, 0.0
        %v1265 = vmax.f32 %v1201, 0.0
        %v1266 = vmax.f32 %v1202, 0.0
        %v1267 = vmax.f32 %v1203, 0.0
        %v1268 = vmax.f32 %v1204, 0.0
        %v1269 = vmax.f32 %v1205, 0.0
        %v1270 = vmax.f32 %v1206, 0.0
        %v1271 = vmax.f32 %v1207, 0.0
        %v1272 = vmax.f32 %v1208, 0.0
        %v1273 = vmax.f32 %v1209, 0.0
        %v1274 = vmax.f32 %v1210, 0.0
        %v1275 = vmax.f32 %v1211, 0.0
        %v1276 = vmax.f32 %v1212, 0.0
        %v1277 = vmax.f32 %v1213, 0.0
        %v1278 = vmax.f32 %v1214, 0.0
        %v1279 = vmax.f32 %v1215, 0.0
        %v1280 = vmax.f32 %v1216, 0.0
        %v1281 = vmax.f32 %v1217, 0.0
        %v1282 = vmax.f32 %v1218, 0.0
        %v1283 = vmax.f32 %v1219, 0.0
        %v1284 = vmax.f32 %v1220, 0.0
        %v1285 = vmax.f32 %v1221, 0.0
        %v1286 = vmax.f32 %v1222, 0.0
        %v1287 = vmax.f32 %v1223, 0.0
        %v1288 = vmax.f32 %v1224, 0.0
        %v1289 = vmax.f32 %v1225, 0.0
        %v1290 = vmax.f32 %v1226, 0.0
        %v1291 = vmax.f32 %v1227, 0.0
        %v1292 = vmax.f32 %v1228, 0.0
        %v1293 = vmax.f32 %v1229, 0.0
        %v1294 = vmax.f32 %v1230, 0.0
        %v1295 = vmax.f32 %v1231, 0.0
        %v1296 = vmax.f32 %v1232, 0.0
        %v1297 = vmax.f32 %v1233, 0.0
        %v1298 = vmax.f32 %v1234, 0.0
        %v1299 = vmax.f32 %v1235, 0.0
        %v1300 = vmax.f32 %v1236, 0.0
        %v1301 = vmax.f32 %v1237, 0.0
        %v1302 = vmax.f32 %v1238, 0.0
        %v1303 = vmax.f32 %v1239, 0.0
        %v1304 = vmax.f32 %v1240, 0.0
        %v1305 = vmax.f32 %v1241, 0.0
        %v1306 = vmax.f32 %v1242, 0.0
        %v1307 = vmax.f32 %v1243, 0.0
        %v1308 = vmax.f32 %v1244, 0.0
        %v1309 = vmax.f32 %v1245, 0.0
        %v1310 = vmax.f32 %v1246, 0.0
        %v1311 = vmax.f32 %v1247, 0.0
        %v1312 = vmax.f32 %v1248, 0.0
        %v1313 = vmax.f32 %v1249, 0.0
        %v1314 = vmax.f32 %v1250, 0.0
        %v1315 = vmax.f32 %v1251, 0.0
        %v1316 = vmax.f32 %v1252, 0.0
        %v1317 = vmax.f32 %v1253, 0.0
        %v1318 = vmax.f32 %v1254, 0.0
        %v1319 = vmax.f32 %v1255, 0.0
        %v1320 = vmax.f32 %v1256, 0.0
        %v1321 = vmax.f32 %v1257, %v1261
        %v1322 = vmax.f32 %v1258, %v1262
        %v1323 = vmax.f32 %v1259, %v1263
        %v1324 = vmax.f32 %v1260, %v1264
        %v1325 = vmax.f32 %v1321, %v1265
        %v1326 = vmax.f32 %v1322, %v1266
        %v1327 = vmax.f32 %v1323, %v1267
        %v1328 = vmax.f32 %v1324, %v1268
        %v1329 = vmax.f32 %v1325, %v1269
        %v1330 = vmax.f32 %v1326, %v1270
        %v1331 = vmax.f32 %v1327, %v1271
        %v1332 = vmax.f32 %v1328, %v1272
        %v1333 = vmax.f32 %v1329, %v1273
        %v1334 = vmax.f32 %v1330, %v1274
        %v1335 = vmax.f32 %v1331, %v1275
        %v1336 = vmax.f32 %v1332, %v1276
        %v1337 = vmax.f32 %v1333, %v1277
        %v1338 = vmax.f32 %v1334, %v1278
        %v1339 = vmax.f32 %v1335, %v1279
        %v1340 = vmax.f32 %v1336, %v1280
        %v1341 = vmax.f32 %v1337, %v1281
        %v1342 = vmax.f32 %v1338, %v1282
        %v1343 = vmax.f32 %v1339, %v1283
        %v1344 = vmax.f32 %v1340, %v1284
        %v1345 = vmax.f32 %v1341, %v1285
        %v1346 = vmax.f32 %v1342, %v1286
        %v1347 = vmax.f32 %v1343, %v1287
        %v1348 = vmax.f32 %v1344, %v1288
        %v1349 = vmax.f32 %v1345, %v1289
        %v1350 = vmax.f32 %v1346, %v1290
        %v1351 = vmax.f32 %v1347, %v1291
        %v1352 = vmax.f32 %v1348, %v1292
        %v1353 = vmax.f32 %v1349, %v1293
        %v1354 = vmax.f32 %v1350, %v1294
        %v1355 = vmax.f32 %v1351, %v1295
        %v1356 = vmax.f32 %v1352, %v1296
        %v1357 = vmax.f32 %v1353, %v1297
        %v1358 = vmax.f32 %v1354, %v1298
        %v1359 = vmax.f32 %v1355, %v1299
        %v1360 = vmax.f32 %v1356, %v1300
        %v1361 = vmax.f32 %v1357, %v1301
        %v1362 = vmax.f32 %v1358, %v1302
        %v1363 = vmax.f32 %v1359, %v1303
        %v1364 = vmax.f32 %v1360, %v1304
        %v1365 = vmax.f32 %v1361, %v1305
        %v1366 = vmax.f32 %v1362, %v1306
        %v1367 = vmax.f32 %v1363, %v1307
        %v1368 = vmax.f32 %v1364, %v1308
        %v1369 = vmax.f32 %v1365, %v1309
        %v1370 = vmax.f32 %v1366, %v1310
        %v1371 = vmax.f32 %v1367, %v1311
        %v1372 = vmax.f32 %v1368, %v1312
        %v1373 = vmax.f32 %v1369, %v1313
        %v1374 = vmax.f32 %v1370, %v1314
        %v1375 = vmax.f32 %v1371, %v1315
        %v1376 = vmax.f32 %v1372, %v1316
        %v1377 = vmax.f32 %v1373, %v1317
        %v1378 = vmax.f32 %v1374, %v1318
        %v1379 = vmax.f32 %v1375, %v1319
        %v1380 = vmax.f32 %v1376, %v1320
        %vm1381 = vcmask 261120
        %1382 = vst.msk [vmem:[%s494] sm:$0xff] %vm1381, %v1377
        %1383 = vst.msk [vmem:[%s494 + $0x8] sm:$0xff] %vm1381, %v1378
        %1384 = vst.msk [vmem:[%s494 + $0x10] sm:$0xff] %vm1381, %v1379
        %1385 = vst.msk [vmem:[%s494 + $0x18] sm:$0xff] %vm1381, %v1380
        %s1386 = smul.u32 4, %s15
        %p1387 = scmp.lt.s32.totalorder %s1386, 7
        %s1388 = scalar_select %p1387, %s1386, 7
        %s1389 = smul.addr %s1388, 8
        %s1390 = scalar_lea.vmem %s4, %s1389
        // Predicated region
        $region78: #{pointpillar_forward.8} parent=72 // pred_check
          %p1391 = pneg %p122
        $region79: #{pointpillar_forward.8} parent=72 // pred_check_branch
          %1393 = sbr.rel (%p1391) target = $region81
        $region80: #{pointpillar_forward.8} parent=72 // pred_region
          %s1394 = smul.u32 4, %s15
        $region81: #{pointpillar_forward.8} parent=72 // pred_fallthru
          _
      $region73: #{pointpillar_forward.8} parent=5 // pred_fallthru
        _
      %p1395 = scmp.le.s32.totalorder 2, %s10
      // Predicated region
      $region82: #{pointpillar_forward.8} parent=5 // pred_check
        %p1396 = pneg %p1395
      $region83: #{pointpillar_forward.8} parent=5 // pred_check_branch
        %1398 = sbr.rel (%p1396) target = $region85
      $region84: #{pointpillar_forward.8} parent=5 // pred_region
        %s1399 = ssub.s32 %s10, 2
        // Predicated region
        $region86: #{pointpillar_forward.8} parent=84 // pred_check
          %p1400 = pneg %p128
        $region87: #{pointpillar_forward.8} parent=84 // pred_check_branch
          %1402 = sbr.rel (%p1400) target = $region89
        $region88: #{pointpillar_forward.8} parent=84 // pred_region
          %s1403 = smul.u32 4, %s16
          %p1404 = scmp.lt.s32.totalorder %s1403, 7
          %s1405 = scalar_select %p1404, %s1403, 7
          %s1406 = smul.addr %s1405, 8
          %s1407 = scalar_lea.vmem %s4, %s1406
        $region89: #{pointpillar_forward.8} parent=84 // pred_fallthru
          _
      $region85: #{pointpillar_forward.8} parent=5 // pred_fallthru
        _
    $region6: #{pointpillar_forward.8} parent=1 // loop_footer
      %s14 = sadd.s32 1, %s10
    $region7: #{pointpillar_forward.8} parent=1 // loop_footer_branch
      %9 = sbr.rel target = $region3
    $region8: #{pointpillar_forward.8} parent=1 // loop_exit
      _

// kernel: pointpillar_forward.10
$region0: #{pointpillar_forward.10}
  #allocation0 [shape = 'u32[]', space=smem, size = 0x4, offset = 0x4, fixed_abs, tag = 'smem constant byte address 0x4 - core index']
  #allocation1 [shape = 'u32[144,128]{1,0:T(1,128)}', space=vmem, size = 0x12000, scoped, tag = 'internal scratch']
  %s0 = inlined_call_operand.vmem [shape: f32[2,18,18,32], index: 0, kind: input, shape index: {}]
  %s1 = inlined_call_operand.vmem [shape: bf16[9,32,32], index: 1, kind: input, shape index: {}]
  %s2 = inlined_call_operand.vmem [shape: f32[1,32], index: 2, kind: input, shape index: {}]
  %s3 = inlined_call_operand.vmem [shape: f32[1,32], index: 3, kind: input, shape index: {}]
  %s4 = inlined_call_operand.vmem [shape: f32[2,16,16,32], index: 4, kind: output, shape index: {}]
  %s5 = sld [smem:[#allocation0]]
  $region49: #{pointpillar_forward.10} parent=0
    _
  %s7 = ssub.s32 1, %s5
  %s8 = scalar_select 0, %s7, %s5
  loop: start=0, step=1, limit=4
  $region2: #{pointpillar_forward.10} parent=0 // loop_pre_header
    _
  $region3: #{pointpillar_forward.10} parent=0 // loop_header
    %s10 = sphi 0, %s14
    %p11 = scmp.ge.s32.totalorder %s10, 4
    %s20 = sphi 0, %s22
    %s23 = sphi 0, %s20
    %s24 = sphi 0, %s23
    %s40 = sphi 0, %s24
    %s44 = sphi 0, %s44
    %s46 = sphi 0, %s44
    %s47 = sphi 0, %s46
    %s61 = sphi 0, %s47
    %s65 = sphi 0, %s65
    %s67 = sphi 0, %s65
    %s68 = sphi 0, %s67
    %s82 = sphi 0, %s68
    %s86 = sphi 0, %s86
    %s88 = sphi 0, %s86
    %s89 = sphi 0, %s88
    %s103 = sphi 0, %s89
    %s109 = sphi 0, %s111
    %s112 = sphi 0, %s109
    %s113 = sphi 0, %s112
    %s129 = sphi 0, %s113
  $region4: #{pointpillar_forward.10} parent=0 // loop_header_branch
    %13 = sbr.rel (%p11) target = $region8
  $region5: #{pointpillar_forward.10} parent=0 // loop_body
    %s15 = ssub.s32 %s10, 1
    %s16 = ssub.s32 %s10, 2
    %s17 = sadd.s32 %s10, 1
    %s18 = ssub.s32 %s10, %s17
    %p19 = scmp.eq.s32.totalorder %s18, 0
    %s21 = sadd.s32 %s20, 1
    %s22 = scalar_select %p19, %s20, %s21
    %p25 = pneg %p19
    %p26 = scmp.eq.s32.totalorder %s10, 1
    %p27 = por %p25, %p26
    %p28 = scmp.ne.s32.totalorder %s20, %s23
    %p29 = scmp.eq.s32.totalorder %s10, 0
    %p30 = por %p28, %p29
    %p31 = scmp.ne.s32.totalorder %s20, %s23
    %p32 = scmp.eq.s32.totalorder %s15, 1
    %p33 = por %p31, %p32
    %p34 = scmp.ne.s32.totalorder %s23, %s24
    %p35 = scmp.eq.s32.totalorder %s15, 0
    %p36 = por %p34, %p35
    %p37 = scmp.ne.s32.totalorder %s23, %s24
    %p38 = scmp.eq.s32.totalorder %s16, 1
    %p39 = por %p37, %p38
    %p41 = scmp.ne.s32.totalorder %s24, %s40
    %p42 = scmp.eq.s32.totalorder %s16, 0
    %p43 = por %p41, %p42
    %s45 = sadd.s32 %s44, 1
    %p48 = scmp.eq.s32.totalorder %s10, 1
    %p49 = scmp.ne.s32.totalorder %s44, %s46
    %p50 = scmp.eq.s32.totalorder %s10, 0
    %p51 = por %p49, %p50
    %p52 = scmp.ne.s32.totalorder %s44, %s46
    %p53 = scmp.eq.s32.totalorder %s15, 1
    %p54 = por %p52, %p53
    %p55 = scmp.ne.s32.totalorder %s46, %s47
    %p56 = scmp.eq.s32.totalorder %s15, 0
    %p57 = por %p55, %p56
    %p58 = scmp.ne.s32.totalorder %s46, %s47
    %p59 = scmp.eq.s32.totalorder %s16, 1
    %p60 = por %p58, %p59
    %p62 = scmp.ne.s32.totalorder %s47, %s61
    %p63 = scmp.eq.s32.totalorder %s16, 0
    %p64 = por %p62, %p63
    %s66 = sadd.s32 %s65, 1
    %p69 = scmp.eq.s32.totalorder %s10, 1
    %p70 = scmp.ne.s32.totalorder %s65, %s67
    %p71 = scmp.eq.s32.totalorder %s10, 0
    %p72 = por %p70, %p71
    %p73 = scmp.ne.s32.totalorder %s65, %s67
    %p74 = scmp.eq.s32.totalorder %s15, 1
    %p75 = por %p73, %p74
    %p76 = scmp.ne.s32.totalorder %s67, %s68
    %p77 = scmp.eq.s32.totalorder %s15, 0
    %p78 = por %p76, %p77
    %p79 = scmp.ne.s32.totalorder %s67, %s68
    %p80 = scmp.eq.s32.totalorder %s16, 1
    %p81 = por %p79, %p80
    %p83 = scmp.ne.s32.totalorder %s68, %s82
    %p84 = scmp.eq.s32.totalorder %s16, 0
    %p85 = por %p83, %p84
    %s87 = sadd.s32 %s86, 1
    %p90 = scmp.eq.s32.totalorder %s10, 1
    %p91 = scmp.ne.s32.totalorder %s86, %s88
    %p92 = scmp.eq.s32.totalorder %s10, 0
    %p93 = por %p91, %p92
    %p94 = scmp.ne.s32.totalorder %s86, %s88
    %p95 = scmp.eq.s32.totalorder %s15, 1
    %p96 = por %p94, %p95
    %p97 = scmp.ne.s32.totalorder %s88, %s89
    %p98 = scmp.eq.s32.totalorder %s15, 0
    %p99 = por %p97, %p98
    %p100 = scmp.ne.s32.totalorder %s88, %s89
    %p101 = scmp.eq.s32.totalorder %s16, 1
    %p102 = por %p100, %p101
    %p104 = scmp.ne.s32.totalorder %s89, %s103
    %p105 = scmp.eq.s32.totalorder %s16, 0
    %p106 = por %p104, %p105
    %s107 = ssub.s32 %s10, %s17
    %p108 = scmp.eq.s32.totalorder %s107, 0
    %s110 = sadd.s32 %s109, 1
    %s111 = scalar_select %p108, %s109, %s110
    %p114 = pneg %p108
    %p115 = scmp.eq.s32.totalorder %s10, 1
    %p116 = por %p114, %p115
    %p117 = scmp.ne.s32.totalorder %s109, %s112
    %p118 = scmp.eq.s32.totalorder %s10, 0
    %p119 = por %p117, %p118
    %p120 = scmp.ne.s32.totalorder %s109, %s112
    %p121 = scmp.eq.s32.totalorder %s15, 1
    %p122 = por %p120, %p121
    %p123 = scmp.ne.s32.totalorder %s112, %s113
    %p124 = scmp.eq.s32.totalorder %s15, 0
    %p125 = por %p123, %p124
    %p126 = scmp.ne.s32.totalorder %s112, %s113
    %p127 = scmp.eq.s32.totalorder %s16, 1
    %p128 = por %p126, %p127
    %p130 = scmp.ne.s32.totalorder %s113, %s129
    %p131 = scmp.eq.s32.totalorder %s16, 0
    %p132 = por %p130, %p131
    %p133 = scmp.le.s32.totalorder 1, %s10
    %p134 = scmp.lt.s32.totalorder %s10, 3
    %p135 = pnand %p133, %p134
    %p136 = pneg %p135
    // Predicated region
    $region9: #{pointpillar_forward.10} parent=5 // pred_check
      _
    $region10: #{pointpillar_forward.10} parent=5 // pred_check_branch
      %138 = sbr.rel (%p135) target = $region12
    $region11: #{pointpillar_forward.10} parent=5 // pred_region
      %s139 = ssub.s32 %s10, 1
      // Predicated region
      $region13: #{pointpillar_forward.10} parent=11 // pred_check
        %p140 = pneg %p57
      $region14: #{pointpillar_forward.10} parent=11 // pred_check_branch
        %142 = sbr.rel (%p140) target = $region16
      $region15: #{pointpillar_forward.10} parent=11 // pred_region
        _
      $region16: #{pointpillar_forward.10} parent=11 // pred_fallthru
        _
      // Predicated region
      $region17: #{pointpillar_forward.10} parent=11 // pred_check
        %p143 = pneg %p78
      $region18: #{pointpillar_forward.10} parent=11 // pred_check_branch
        %145 = sbr.rel (%p143) target = $region20
      $region19: #{pointpillar_forward.10} parent=11 // pred_region
        _
      $region20: #{pointpillar_forward.10} parent=11 // pred_fallthru
        _
      // Predicated region
      $region21: #{pointpillar_forward.10} parent=11 // pred_check
        %p146 = pneg %p99
      $region22: #{pointpillar_forward.10} parent=11 // pred_check_branch
        %148 = sbr.rel (%p146) target = $region24
      $region23: #{pointpillar_forward.10} parent=11 // pred_region
        _
      $region24: #{pointpillar_forward.10} parent=11 // pred_fallthru
        _
    $region12: #{pointpillar_forward.10} parent=5 // pred_fallthru
      _
    %p149 = scmp.lt.s32.totalorder %s10, 2
    // Predicated region
    $region25: #{pointpillar_forward.10} parent=5 // pred_check
      %p150 = pneg %p149
    $region26: #{pointpillar_forward.10} parent=5 // pred_check_branch
      %152 = sbr.rel (%p150) target = $region28
    $region27: #{pointpillar_forward.10} parent=5 // pred_region
      // Predicated region
      $region29: #{pointpillar_forward.10} parent=27 // pred_check
        %p153 = pneg %p30
      $region30: #{pointpillar_forward.10} parent=27 // pred_check_branch
        %155 = sbr.rel (%p153) target = $region32
      $region31: #{pointpillar_forward.10} parent=27 // pred_region
        %p156 = scmp.lt.s32.totalorder %s10, 1
        %s157 = scalar_select %p156, %s10, 1
        %s158 = smul.addr %s157, 54
        %s159 = smul.addr %s158, 8
        %s160 = scalar_lea.vmem %s0, %s159
      $region32: #{pointpillar_forward.10} parent=27 // pred_fallthru
        _
    $region28: #{pointpillar_forward.10} parent=5 // pred_fallthru
      _
    %p161 = scmp.le.s32.totalorder 1, %s10
    %p162 = scmp.lt.s32.totalorder %s10, 3
    %p163 = pnand %p161, %p162
    %p164 = pneg %p163
    // Predicated region
    $region33: #{pointpillar_forward.10} parent=5 // pred_check
      _
    $region34: #{pointpillar_forward.10} parent=5 // pred_check_branch
      %166 = sbr.rel (%p163) target = $region36
    $region35: #{pointpillar_forward.10} parent=5 // pred_region
      %s167 = ssub.s32 %s10, 1
      %p168 = scmp.lt.s32.totalorder %s15, 1
      %s169 = scalar_select %p168, %s15, 1
      %s170 = smul.addr %s169, 54
      %s171 = smul.addr %s170, 8
      %s172 = scalar_lea.vmem %s0, %s171
      %p173 = pneg %p36
      %p174 = pneg %p33
      %p175 = pneg %p57
      %p176 = pneg %p54
      %p177 = pneg %p78
      %p178 = pneg %p75
      %p179 = pneg %p99
      %p180 = pneg %p96
      %p181 = pneg %p125
      %p182 = pneg %p122
      %p183 = scmp.lt.s32.totalorder %s15, 1
      %s184 = scalar_select %p183, %s15, 1
      %s185 = smul.addr %s184, 32
      %s186 = smul.addr %s185, 8
      %s187 = scalar_lea.vmem %s4, %s186
      %p188 = scmp.lt.s32.totalorder %s15, 1
      %s189 = scalar_select %p188, %s15, 1
      %s190 = smul.addr %s189, 54
      %s191 = smul.addr %s190, 8
      %s192 = scalar_lea.vmem %s0, %s191
      %p193 = scmp.lt.s32.totalorder %s15, 1
      %s194 = scalar_select %p193, %s15, 1
      %s195 = smul.addr %s194, 32
      %s196 = smul.addr %s195, 8
      %s197 = scalar_lea.vmem %s4, %s196
      %v199 = vld [vmem:[%s192] sm:$0xff]
      %v200 = vld [vmem:[%s192 + $0x8] sm:$0xff]
      %v201 = vld [vmem:[%s192 + $0x10] sm:$0x3]
      %v202 = vld [vmem:[%s192 + $0x18] sm:$0xff]
      %v203 = vld [vmem:[%s192 + $0x20] sm:$0xff]
      %v204 = vld [vmem:[%s192 + $0x28] sm:$0x3]
      %v205 = vld [vmem:[%s192 + $0x30] sm:$0xff]
      %v206 = vld [vmem:[%s192 + $0x38] sm:$0xff]
      %v207 = vld [vmem:[%s192 + $0x40] sm:$0x3]
      %v208 = vld [vmem:[%s192 + $0x48] sm:$0xff]
      %v209 = vld [vmem:[%s192 + $0x50] sm:$0xff]
      %v210 = vld [vmem:[%s192 + $0x58] sm:$0x3]
      %v211 = vld [vmem:[%s192 + $0x60] sm:$0xff]
      %v212 = vld [vmem:[%s192 + $0x68] sm:$0xff]
      %v213 = vld [vmem:[%s192 + $0x70] sm:$0x3]
      %v214 = vld [vmem:[%s192 + $0x78] sm:$0xff]
      %v215 = vld [vmem:[%s192 + $0x80] sm:$0xff]
      %v216 = vld [vmem:[%s192 + $0x88] sm:$0x3]
      %v217 = vld [vmem:[%s192 + $0x90] sm:$0xff]
      %v218 = vld [vmem:[%s192 + $0x98] sm:$0xff]
      %v219 = vld [vmem:[%s192 + $0xa0] sm:$0x3]
      %v220 = vld [vmem:[%s192 + $0xa8] sm:$0xff]
      %v221 = vld [vmem:[%s192 + $0xb0] sm:$0xff]
      %v222 = vld [vmem:[%s192 + $0xb8] sm:$0x3]
      %v223 = vld [vmem:[%s192 + $0xc0] sm:$0xff]
      %v224 = vld [vmem:[%s192 + $0xc8] sm:$0xff]
      %v225 = vld [vmem:[%s192 + $0xd0] sm:$0x3]
      %v226 = vld [vmem:[%s192 + $0xd8] sm:$0xff]
      %v227 = vld [vmem:[%s192 + $0xe0] sm:$0xff]
      %v228 = vld [vmem:[%s192 + $0xe8] sm:$0x3]
      %v229 = vld [vmem:[%s192 + $0xf0] sm:$0xff]
      %v230 = vld [vmem:[%s192 + $0xf8] sm:$0xff]
      %v231 = vld [vmem:[%s192 + $0x100] sm:$0x3]
      %v232 = vld [vmem:[%s192 + $0x108] sm:$0xff]
      %v233 = vld [vmem:[%s192 + $0x110] sm:$0xff]
      %v234 = vld [vmem:[%s192 + $0x118] sm:$0x3]
      %v235 = vld [vmem:[%s192 + $0x120] sm:$0xff]
      %v236 = vld [vmem:[%s192 + $0x128] sm:$0xff]
      %v237 = vld [vmem:[%s192 + $0x130] sm:$0x3]
      %v238 = vld [vmem:[%s192 + $0x138] sm:$0xff]
      %v239 = vld [vmem:[%s192 + $0x140] sm:$0xff]
      %v240 = vld [vmem:[%s192 + $0x148] sm:$0x3]
      %v241 = vld [vmem:[%s192 + $0x150] sm:$0xff]
      %v242 = vld [vmem:[%s192 + $0x158] sm:$0xff]
      %v243 = vld [vmem:[%s192 + $0x160] sm:$0x3]
      %v244 = vld [vmem:[%s192 + $0x168] sm:$0xff]
      %v245 = vld [vmem:[%s192 + $0x170] sm:$0xff]
      %v246 = vld [vmem:[%s192 + $0x178] sm:$0x3]
      %v247 = vld [vmem:[%s192 + $0x180] sm:$0xff]
      %v248 = vld [vmem:[%s192 + $0x188] sm:$0xff]
      %v249 = vld [vmem:[%s192 + $0x190] sm:$0x3]
      %v250 = vld [vmem:[%s192 + $0x198] sm:$0xff]
      %v251 = vld [vmem:[%s192 + $0x1a0] sm:$0xff]
      %v252 = vld [vmem:[%s192 + $0x1a8] sm:$0x3]
      %v253 = vpack.c.bf16 %v200, %v199
      %v254 = vpack.c.bf16 %v203, %v202
      %v255 = vpack.c.bf16 %v206, %v205
      %v256 = vpack.c.bf16 %v209, %v208
      %v257 = vpack.c.bf16 %v212, %v211
      %v258 = vpack.c.bf16 %v215, %v214
      %v259 = vpack.c.bf16 %v218, %v217
      %v260 = vpack.c.bf16 %v221, %v220
      %v261 = vpack.c.bf16 %v224, %v223
      %v262 = vpack.c.bf16 %v227, %v226
      %v263 = vpack.c.bf16 %v230, %v229
      %v264 = vpack.c.bf16 %v233, %v232
      %v265 = vpack.c.bf16 %v236, %v235
      %v266 = vpack.c.bf16 %v239, %v238
      %v267 = vpack.c.bf16 %v242, %v241
      %v268 = vpack.c.bf16 %v245, %v244
      %v269 = vld [vmem:[%s1] sm:$0xf]
      %v270 = vld [vmem:[%s1 + $0x4] sm:$0xf]
      %v271 = vld [vmem:[%s1 + $0x8] sm:$0xf]
      %v272 = vld [vmem:[%s1 + $0xc] sm:$0xf]
      %vm321 = vcmask 1046528
      %v322 = vrot.slane %v199, 1
      %v323 = vrot.slane %v200, 1
      %v324 = vsel %vm321, %v322, %v323
      %v325 = vrot.slane %v201, 1
      %v326 = vsel %vm321, %v323, %v325
      %v327 = vrot.slane %v202, 1
      %v328 = vrot.slane %v203, 1
      %v329 = vsel %vm321, %v327, %v328
      %v330 = vrot.slane %v204, 1
      %v331 = vsel %vm321, %v328, %v330
      %v332 = vrot.slane %v205, 1
      %v333 = vrot.slane %v206, 1
      %v334 = vsel %vm321, %v332, %v333
      %v335 = vrot.slane %v207, 1
      %v336 = vsel %vm321, %v333, %v335
      %v337 = vrot.slane %v208, 1
      %v338 = vrot.slane %v209, 1
      %v339 = vsel %vm321, %v337, %v338
      %v340 = vrot.slane %v210, 1
      %v341 = vsel %vm321, %v338, %v340
      %v342 = vrot.slane %v211, 1
      %v343 = vrot.slane %v212, 1
      %v344 = vsel %vm321, %v342, %v343
      %v345 = vrot.slane %v213, 1
      %v346 = vsel %vm321, %v343, %v345
      %v347 = vrot.slane %v214, 1
      %v348 = vrot.slane %v215, 1
      %v349 = vsel %vm321, %v347, %v348
      %v350 = vrot.slane %v216, 1
      %v351 = vsel %vm321, %v348, %v350
      %v352 = vrot.slane %v217, 1
      %v353 = vrot.slane %v218, 1
      %v354 = vsel %vm321, %v352, %v353
      %v355 = vrot.slane %v219, 1
      %v356 = vsel %vm321, %v353, %v355
      %v357 = vrot.slane %v220, 1
      %v358 = vrot.slane %v221, 1
      %v359 = vsel %vm321, %v357, %v358
      %v360 = vrot.slane %v222, 1
      %v361 = vsel %vm321, %v358, %v360
      %v362 = vrot.slane %v223, 1
      %v363 = vrot.slane %v224, 1
      %v364 = vsel %vm321, %v362, %v363
      %v365 = vrot.slane %v225, 1
      %v366 = vsel %vm321, %v363, %v365
      %v367 = vrot.slane %v226, 1
      %v368 = vrot.slane %v227, 1
      %v369 = vsel %vm321, %v367, %v368
      %v370 = vrot.slane %v228, 1
      %v371 = vsel %vm321, %v368, %v370
      %v372 = vrot.slane %v229, 1
      %v373 = vrot.slane %v230, 1
      %v374 = vsel %vm321, %v372, %v373
      %v375 = vrot.slane %v231, 1
      %v376 = vsel %vm321, %v373, %v375
      %v377 = vrot.slane %v232, 1
      %v378 = vrot.slane %v233, 1
      %v379 = vsel %vm321, %v377, %v378
      %v380 = vrot.slane %v234, 1
      %v381 = vsel %vm321, %v378, %v380
      %v382 = vrot.slane %v235, 1
      %v383 = vrot.slane %v236, 1
      %v384 = vsel %vm321, %v382, %v383
      %v385 = vrot.slane %v237, 1
      %v386 = vsel %vm321, %v383, %v385
      %v387 = vrot.slane %v238, 1
      %v388 = vrot.slane %v239, 1
      %v389 = vsel %vm321, %v387, %v388
      %v390 = vrot.slane %v240, 1
      %v391 = vsel %vm321, %v388, %v390
      %v392 = vrot.slane %v241, 1
      %v393 = vrot.slane %v242, 1
      %v394 = vsel %vm321, %v392, %v393
      %v395 = vrot.slane %v243, 1
      %v396 = vsel %vm321, %v393, %v395
      %v397 = vrot.slane %v244, 1
      %v398 = vrot.slane %v245, 1
      %v399 = vsel %vm321, %v397, %v398
      %v400 = vrot.slane %v246, 1
      %v401 = vsel %vm321, %v398, %v400
      %v434 = vpack.c.bf16 %v326, %v324
      %v435 = vpack.c.bf16 %v331, %v329
      %v436 = vpack.c.bf16 %v336, %v334
      %v437 = vpack.c.bf16 %v341, %v339
      %v438 = vpack.c.bf16 %v346, %v344
      %v439 = vpack.c.bf16 %v351, %v349
      %v440 = vpack.c.bf16 %v356, %v354
      %v441 = vpack.c.bf16 %v361, %v359
      %v442 = vpack.c.bf16 %v366, %v364
      %v443 = vpack.c.bf16 %v371, %v369
      %v444 = vpack.c.bf16 %v376, %v374
      %v445 = vpack.c.bf16 %v381, %v379
      %v446 = vpack.c.bf16 %v386, %v384
      %v447 = vpack.c.bf16 %v391, %v389
      %v448 = vpack.c.bf16 %v396, %v394
      %v449 = vpack.c.bf16 %v401, %v399
      %s450 = scalar_lea.vmem %s1, 16
      %v451 = vld [vmem:[%s450] sm:$0xf]
      %v452 = vld [vmem:[%s450 + $0x4] sm:$0xf]
      %v453 = vld [vmem:[%s450 + $0x8] sm:$0xf]
      %v454 = vld [vmem:[%s450 + $0xc] sm:$0xf]
      %v459 = vunpack.c.l.b16 %v451
      %v460 = vunpack.c.l.b16 %v452
      %v461 = vunpack.c.l.b16 %v453
      %v462 = vunpack.c.l.b16 %v454
      %v463 = vpack.c.b16 %v460, %v459
      %v464 = vpack.c.b16 %v462, %v461
      %vm467 = vcmask 261120
      %v469 = vsel %vm467, %v434, 0
      %v472 = vsel %vm467, %v435, 0
      %v475 = vsel %vm467, %v436, 0
      %v478 = vsel %vm467, %v437, 0
      %v481 = vsel %vm467, %v438, 0
      %v484 = vsel %vm467, %v439, 0
      %v487 = vsel %vm467, %v440, 0
      %v490 = vsel %vm467, %v441, 0
      %v493 = vsel %vm467, %v442, 0
      %v496 = vsel %vm467, %v443, 0
      %v499 = vsel %vm467, %v444, 0
      %v502 = vsel %vm467, %v445, 0
      %v505 = vsel %vm467, %v446, 0
      %v508 = vsel %vm467, %v447, 0
      %v511 = vsel %vm467, %v448, 0
      %v514 = vsel %vm467, %v449, 0
      %516 = vmatprep.subr.bf16.mxu0 0
      %517 = vmatpush1.bf16.msra.mxu0 0
      %518 = vmatprep.subr.bf16.mxu0 0
      %519 = vmatpush1.bf16.msra.mxu0 0
      %520 = vmatprep.subr.bf16.mxu0 0
      %521 = vmatpush1.bf16.msra.mxu0 0
      %522 = vmatprep.subr.bf16.mxu0 0
      %523 = vmatpush1.bf16.msra.mxu0 0
      %524 = vmatprep.subr.bf16.mxu0 0
      %525 = vmatpush1.bf16.msra.mxu0 0
      %526 = vmatprep.subr.bf16.mxu0 0
      %527 = vmatpush1.bf16.msra.mxu0 0
      %528 = vmatprep.subr.bf16.mxu0 0
      %529 = vmatpush1.bf16.msra.mxu0 %v464
      %530 = vmatprep.subr.bf16.mxu0 0
      %531 = vmatpush1.bf16.msra.mxu0 %v463
      %532 = vmatprep.subr.bf16.mxu0 0
      %533 = vmatpush2.bf16.msra.mxu0 0
      %534 = vmatprep.subr.bf16.mxu0 0
      %535 = vmatpush2.bf16.msra.mxu0 0
      %536 = vmatprep.subr.bf16.mxu0 0
      %537 = vmatpush2.bf16.msra.mxu0 0
      %538 = vmatprep.subr.bf16.mxu0 0
      %539 = vmatpush2.bf16.msra.mxu0 0
      %540 = vmatprep.subr.bf16.mxu0 0
      %541 = vmatpush2.bf16.msra.mxu0 0
      %542 = vmatprep.subr.bf16.mxu0 0
      %543 = vmatpush2.bf16.msra.mxu0 0
      %544 = vmatprep.subr.bf16.mxu0 0
      %545 = vmatpush2.bf16.msra.mxu0 0
      %546 = vmatprep.subr.bf16.mxu0 0
      %547 = vmatpush2.bf16.msra.mxu0 0
      %548 = vmatprep.mubr.bf16.mxu0 0
      %549 = vmatmul.mubr.bf16.gmra.mxu0 %v469
      %v550 = vpop.f32.mrf.mxu0
      %v551 = vadd.f32 0.0, %v550
      %v552 = vpop.f32.mrf.mxu0
      %v553 = vpop.f32.mrf.mxu0
      %v554 = vadd.f32 0.0, %v553
      %v555 = vpop.f32.mrf.mxu0
      %556 = vmatprep.mubr.bf16.mxu0 0
      %557 = vmatmul.mubr.bf16.gmra.mxu0 %v472
      %v558 = vpop.f32.mrf.mxu0
      %v559 = vadd.f32 0.0, %v558
      %v560 = vpop.f32.mrf.mxu0
      %v561 = vpop.f32.mrf.mxu0
      %v562 = vadd.f32 0.0, %v561
      %v563 = vpop.f32.mrf.mxu0
      %564 = vmatprep.mubr.bf16.mxu0 0
      %565 = vmatmul.mubr.bf16.gmra.mxu0 %v475
      %v566 = vpop.f32.mrf.mxu0
      %v567 = vadd.f32 0.0, %v566
      %v568 = vpop.f32.mrf.mxu0
      %v569 = vpop.f32.mrf.mxu0
      %v570 = vadd.f32 0.0, %v569
      %v571 = vpop.f32.mrf.mxu0
      %572 = vmatprep.mubr.bf16.mxu0 0
      %573 = vmatmul.mubr.bf16.gmra.mxu0 %v478
      %v574 = vpop.f32.mrf.mxu0
      %v575 = vadd.f32 0.0, %v574
      %v576 = vpop.f32.mrf.mxu0
      %v577 = vpop.f32.mrf.mxu0
      %v578 = vadd.f32 0.0, %v577
      %v579 = vpop.f32.mrf.mxu0
      %580 = vmatprep.mubr.bf16.mxu0 0
      %581 = vmatmul.mubr.bf16.gmra.mxu0 %v481
      %v582 = vpop.f32.mrf.mxu0
      %v583 = vadd.f32 0.0, %v582
      %v584 = vpop.f32.mrf.mxu0
      %v585 = vpop.f32.mrf.mxu0
      %v586 = vadd.f32 0.0, %v585
      %v587 = vpop.f32.mrf.mxu0
      %588 = vmatprep.mubr.bf16.mxu0 0
      %589 = vmatmul.mubr.bf16.gmra.mxu0 %v484
      %v590 = vpop.f32.mrf.mxu0
      %v591 = vadd.f32 0.0, %v590
      %v592 = vpop.f32.mrf.mxu0
      %v593 = vpop.f32.mrf.mxu0
      %v594 = vadd.f32 0.0, %v593
      %v595 = vpop.f32.mrf.mxu0
      %596 = vmatprep.mubr.bf16.mxu0 0
      %597 = vmatmul.mubr.bf16.gmra.mxu0 %v487
      %v598 = vpop.f32.mrf.mxu0
      %v599 = vadd.f32 0.0, %v598
      %v600 = vpop.f32.mrf.mxu0
      %v601 = vpop.f32.mrf.mxu0
      %v602 = vadd.f32 0.0, %v601
      %v603 = vpop.f32.mrf.mxu0
      %604 = vmatprep.mubr.bf16.mxu0 0
      %605 = vmatmul.mubr.bf16.gmra.mxu0 %v490
      %v606 = vpop.f32.mrf.mxu0
      %v607 = vadd.f32 0.0, %v606
      %v608 = vpop.f32.mrf.mxu0
      %v609 = vpop.f32.mrf.mxu0
      %v610 = vadd.f32 0.0, %v609
      %v611 = vpop.f32.mrf.mxu0
      %612 = vmatprep.mubr.bf16.mxu0 0
      %613 = vmatmul.mubr.bf16.gmra.mxu0 %v493
      %v614 = vpop.f32.mrf.mxu0
      %v615 = vadd.f32 0.0, %v614
      %v616 = vpop.f32.mrf.mxu0
      %v617 = vpop.f32.mrf.mxu0
      %v618 = vadd.f32 0.0, %v617
      %v619 = vpop.f32.mrf.mxu0
      %620 = vmatprep.mubr.bf16.mxu0 0
      %621 = vmatmul.mubr.bf16.gmra.mxu0 %v496
      %v622 = vpop.f32.mrf.mxu0
      %v623 = vadd.f32 0.0, %v622
      %v624 = vpop.f32.mrf.mxu0
      %v625 = vpop.f32.mrf.mxu0
      %v626 = vadd.f32 0.0, %v625
      %v627 = vpop.f32.mrf.mxu0
      %628 = vmatprep.mubr.bf16.mxu0 0
      %629 = vmatmul.mubr.bf16.gmra.mxu0 %v499
      %v630 = vpop.f32.mrf.mxu0
      %v631 = vadd.f32 0.0, %v630
      %v632 = vpop.f32.mrf.mxu0
      %v633 = vpop.f32.mrf.mxu0
      %v634 = vadd.f32 0.0, %v633
      %v635 = vpop.f32.mrf.mxu0
      %636 = vmatprep.mubr.bf16.mxu0 0
      %637 = vmatmul.mubr.bf16.gmra.mxu0 %v502
      %v638 = vpop.f32.mrf.mxu0
      %v639 = vadd.f32 0.0, %v638
      %v640 = vpop.f32.mrf.mxu0
      %v641 = vpop.f32.mrf.mxu0
      %v642 = vadd.f32 0.0, %v641
      %v643 = vpop.f32.mrf.mxu0
      %644 = vmatprep.mubr.bf16.mxu0 0
      %645 = vmatmul.mubr.bf16.gmra.mxu0 %v505
      %v646 = vpop.f32.mrf.mxu0
      %v647 = vadd.f32 0.0, %v646
      %v648 = vpop.f32.mrf.mxu0
      %v649 = vpop.f32.mrf.mxu0
      %v650 = vadd.f32 0.0, %v649
      %v651 = vpop.f32.mrf.mxu0
      %652 = vmatprep.mubr.bf16.mxu0 0
      %653 = vmatmul.mubr.bf16.gmra.mxu0 %v508
      %v654 = vpop.f32.mrf.mxu0
      %v655 = vadd.f32 0.0, %v654
      %v656 = vpop.f32.mrf.mxu0
      %v657 = vpop.f32.mrf.mxu0
      %v658 = vadd.f32 0.0, %v657
      %v659 = vpop.f32.mrf.mxu0
      %660 = vmatprep.mubr.bf16.mxu0 0
      %661 = vmatmul.mubr.bf16.gmra.mxu0 %v511
      %v662 = vpop.f32.mrf.mxu0
      %v663 = vadd.f32 0.0, %v662
      %v664 = vpop.f32.mrf.mxu0
      %v665 = vpop.f32.mrf.mxu0
      %v666 = vadd.f32 0.0, %v665
      %v667 = vpop.f32.mrf.mxu0
      %668 = vmatprep.mubr.bf16.mxu0 0
      %669 = vmatmul.mubr.bf16.gmra.mxu0 %v514
      %v670 = vpop.f32.mrf.mxu0
      %v671 = vadd.f32 0.0, %v670
      %v672 = vpop.f32.mrf.mxu0
      %v673 = vpop.f32.mrf.mxu0
      %v674 = vadd.f32 0.0, %v673
      %v675 = vpop.f32.mrf.mxu0
      %676 = vdwg.mxu0
      %v681 = vunpack.c.l.b16 %v269
      %v682 = vunpack.c.l.b16 %v270
      %v683 = vunpack.c.l.b16 %v271
      %v684 = vunpack.c.l.b16 %v272
      %v685 = vpack.c.b16 %v682, %v681
      %v686 = vpack.c.b16 %v684, %v683
      %v690 = vsel %vm467, %v253, 0
      %v693 = vsel %vm467, %v254, 0
      %v696 = vsel %vm467, %v255, 0
      %v699 = vsel %vm467, %v256, 0
      %v702 = vsel %vm467, %v257, 0
      %v705 = vsel %vm467, %v258, 0
      %v708 = vsel %vm467, %v259, 0
      %v711 = vsel %vm467, %v260, 0
      %v714 = vsel %vm467, %v261, 0
      %v717 = vsel %vm467, %v262, 0
      %v720 = vsel %vm467, %v263, 0
      %v723 = vsel %vm467, %v264, 0
      %v726 = vsel %vm467, %v265, 0
      %v729 = vsel %vm467, %v266, 0
      %v732 = vsel %vm467, %v267, 0
      %v735 = vsel %vm467, %v268, 0
      %737 = vmatprep.subr.bf16.mxu0 0
      %738 = vmatpush1.bf16.msra.mxu0 0
      %739 = vmatprep.subr.bf16.mxu0 0
      %740 = vmatpush1.bf16.msra.mxu0 0
      %741 = vmatprep.subr.bf16.mxu0 0
      %742 = vmatpush1.bf16.msra.mxu0 0
      %743 = vmatprep.subr.bf16.mxu0 0
      %744 = vmatpush1.bf16.msra.mxu0 0
      %745 = vmatprep.subr.bf16.mxu0 0
      %746 = vmatpush1.bf16.msra.mxu0 0
      %747 = vmatprep.subr.bf16.mxu0 0
      %748 = vmatpush1.bf16.msra.mxu0 0
      %749 = vmatprep.subr.bf16.mxu0 0
      %750 = vmatpush1.bf16.msra.mxu0 %v686
      %751 = vmatprep.subr.bf16.mxu0 0
      %752 = vmatpush1.bf16.msra.mxu0 %v685
      %753 = vmatprep.subr.bf16.mxu0 0
      %754 = vmatpush2.bf16.msra.mxu0 0
      %755 = vmatprep.subr.bf16.mxu0 0
      %756 = vmatpush2.bf16.msra.mxu0 0
      %757 = vmatprep.subr.bf16.mxu0 0
      %758 = vmatpush2.bf16.msra.mxu0 0
      %759 = vmatprep.subr.bf16.mxu0 0
      %760 = vmatpush2.bf16.msra.mxu0 0
      %761 = vmatprep.subr.bf16.mxu0 0
      %762 = vmatpush2.bf16.msra.mxu0 0
      %763 = vmatprep.subr.bf16.mxu0 0
      %764 = vmatpush2.bf16.msra.mxu0 0
      %765 = vmatprep.subr.bf16.mxu0 0
      %766 = vmatpush2.bf16.msra.mxu0 0
      %767 = vmatprep.subr.bf16.mxu0 0
      %768 = vmatpush2.bf16.msra.mxu0 0
      %769 = vmatprep.mubr.bf16.mxu0 0
      %770 = vmatmul.mubr.bf16.gmra.mxu0 %v690
      %v771 = vpop.f32.mrf.mxu0
      %v772 = vadd.f32 %v551, %v771
      %v773 = vpop.f32.mrf.mxu0
      %v774 = vpop.f32.mrf.mxu0
      %v775 = vadd.f32 %v554, %v774
      %v776 = vpop.f32.mrf.mxu0
      %777 = vmatprep.mubr.bf16.mxu0 0
      %778 = vmatmul.mubr.bf16.gmra.mxu0 %v693
      %v779 = vpop.f32.mrf.mxu0
      %v780 = vadd.f32 %v559, %v779
      %v781 = vpop.f32.mrf.mxu0
      %v782 = vpop.f32.mrf.mxu0
      %v783 = vadd.f32 %v562, %v782
      %v784 = vpop.f32.mrf.mxu0
      %785 = vmatprep.mubr.bf16.mxu0 0
      %786 = vmatmul.mubr.bf16.gmra.mxu0 %v696
      %v787 = vpop.f32.mrf.mxu0
      %v788 = vadd.f32 %v567, %v787
      %v789 = vpop.f32.mrf.mxu0
      %v790 = vpop.f32.mrf.mxu0
      %v791 = vadd.f32 %v570, %v790
      %v792 = vpop.f32.mrf.mxu0
      %793 = vmatprep.mubr.bf16.mxu0 0
      %794 = vmatmul.mubr.bf16.gmra.mxu0 %v699
      %v795 = vpop.f32.mrf.mxu0
      %v796 = vadd.f32 %v575, %v795
      %v797 = vpop.f32.mrf.mxu0
      %v798 = vpop.f32.mrf.mxu0
      %v799 = vadd.f32 %v578, %v798
      %v800 = vpop.f32.mrf.mxu0
      %801 = vmatprep.mubr.bf16.mxu0 0
      %802 = vmatmul.mubr.bf16.gmra.mxu0 %v702
      %v803 = vpop.f32.mrf.mxu0
      %v804 = vadd.f32 %v583, %v803
      %v805 = vpop.f32.mrf.mxu0
      %v806 = vpop.f32.mrf.mxu0
      %v807 = vadd.f32 %v586, %v806
      %v808 = vpop.f32.mrf.mxu0
      %809 = vmatprep.mubr.bf16.mxu0 0
      %810 = vmatmul.mubr.bf16.gmra.mxu0 %v705
      %v811 = vpop.f32.mrf.mxu0
      %v812 = vadd.f32 %v591, %v811
      %v813 = vpop.f32.mrf.mxu0
      %v814 = vpop.f32.mrf.mxu0
      %v815 = vadd.f32 %v594, %v814
      %v816 = vpop.f32.mrf.mxu0
      %817 = vmatprep.mubr.bf16.mxu0 0
      %818 = vmatmul.mubr.bf16.gmra.mxu0 %v708
      %v819 = vpop.f32.mrf.mxu0
      %v820 = vadd.f32 %v599, %v819
      %v821 = vpop.f32.mrf.mxu0
      %v822 = vpop.f32.mrf.mxu0
      %v823 = vadd.f32 %v602, %v822
      %v824 = vpop.f32.mrf.mxu0
      %825 = vmatprep.mubr.bf16.mxu0 0
      %826 = vmatmul.mubr.bf16.gmra.mxu0 %v711
      %v827 = vpop.f32.mrf.mxu0
      %v828 = vadd.f32 %v607, %v827
      %v829 = vpop.f32.mrf.mxu0
      %v830 = vpop.f32.mrf.mxu0
      %v831 = vadd.f32 %v610, %v830
      %v832 = vpop.f32.mrf.mxu0
      %833 = vmatprep.mubr.bf16.mxu0 0
      %834 = vmatmul.mubr.bf16.gmra.mxu0 %v714
      %v835 = vpop.f32.mrf.mxu0
      %v836 = vadd.f32 %v615, %v835
      %v837 = vpop.f32.mrf.mxu0
      %v838 = vpop.f32.mrf.mxu0
      %v839 = vadd.f32 %v618, %v838
      %v840 = vpop.f32.mrf.mxu0
      %841 = vmatprep.mubr.bf16.mxu0 0
      %842 = vmatmul.mubr.bf16.gmra.mxu0 %v717
      %v843 = vpop.f32.mrf.mxu0
      %v844 = vadd.f32 %v623, %v843
      %v845 = vpop.f32.mrf.mxu0
      %v846 = vpop.f32.mrf.mxu0
      %v847 = vadd.f32 %v626, %v846
      %v848 = vpop.f32.mrf.mxu0
      %849 = vmatprep.mubr.bf16.mxu0 0
      %850 = vmatmul.mubr.bf16.gmra.mxu0 %v720
      %v851 = vpop.f32.mrf.mxu0
      %v852 = vadd.f32 %v631, %v851
      %v853 = vpop.f32.mrf.mxu0
      %v854 = vpop.f32.mrf.mxu0
      %v855 = vadd.f32 %v634, %v854
      %v856 = vpop.f32.mrf.mxu0
      %857 = vmatprep.mubr.bf16.mxu0 0
      %858 = vmatmul.mubr.bf16.gmra.mxu0 %v723
      %v859 = vpop.f32.mrf.mxu0
      %v860 = vadd.f32 %v639, %v859
      %v861 = vpop.f32.mrf.mxu0
      %v862 = vpop.f32.mrf.mxu0
      %v863 = vadd.f32 %v642, %v862
      %v864 = vpop.f32.mrf.mxu0
      %865 = vmatprep.mubr.bf16.mxu0 0
      %866 = vmatmul.mubr.bf16.gmra.mxu0 %v726
      %v867 = vpop.f32.mrf.mxu0
      %v868 = vadd.f32 %v647, %v867
      %v869 = vpop.f32.mrf.mxu0
      %v870 = vpop.f32.mrf.mxu0
      %v871 = vadd.f32 %v650, %v870
      %v872 = vpop.f32.mrf.mxu0
      %873 = vmatprep.mubr.bf16.mxu0 0
      %874 = vmatmul.mubr.bf16.gmra.mxu0 %v729
      %v875 = vpop.f32.mrf.mxu0
      %v876 = vadd.f32 %v655, %v875
      %v877 = vpop.f32.mrf.mxu0
      %v878 = vpop.f32.mrf.mxu0
      %v879 = vadd.f32 %v658, %v878
      %v880 = vpop.f32.mrf.mxu0
      %881 = vmatprep.mubr.bf16.mxu0 0
      %882 = vmatmul.mubr.bf16.gmra.mxu0 %v732
      %v883 = vpop.f32.mrf.mxu0
      %v884 = vadd.f32 %v663, %v883
      %v885 = vpop.f32.mrf.mxu0
      %v886 = vpop.f32.mrf.mxu0
      %v887 = vadd.f32 %v666, %v886
      %v888 = vpop.f32.mrf.mxu0
      %889 = vmatprep.mubr.bf16.mxu0 0
      %890 = vmatmul.mubr.bf16.gmra.mxu0 %v735
      %v891 = vpop.f32.mrf.mxu0
      %v892 = vadd.f32 %v671, %v891
      %v893 = vpop.f32.mrf.mxu0
      %v894 = vpop.f32.mrf.mxu0
      %v895 = vadd.f32 %v674, %v894
      %v896 = vpop.f32.mrf.mxu0
      %897 = vdwg.mxu0
      %vm898 = vcmask 1045504
      %v899 = vrot.slane %v199, 2
      %v900 = vrot.slane %v200, 2
      %v901 = vsel %vm898, %v899, %v900
      %v902 = vrot.slane %v201, 2
      %v903 = vsel %vm898, %v900, %v902
      %v904 = vrot.slane %v202, 2
      %v905 = vrot.slane %v203, 2
      %v906 = vsel %vm898, %v904, %v905
      %v907 = vrot.slane %v204, 2
      %v908 = vsel %vm898, %v905, %v907
      %v909 = vrot.slane %v205, 2
      %v910 = vrot.slane %v206, 2
      %v911 = vsel %vm898, %v909, %v910
      %v912 = vrot.slane %v207, 2
      %v913 = vsel %vm898, %v910, %v912
      %v914 = vrot.slane %v208, 2
      %v915 = vrot.slane %v209, 2
      %v916 = vsel %vm898, %v914, %v915
      %v917 = vrot.slane %v210, 2
      %v918 = vsel %vm898, %v915, %v917
      %v919 = vrot.slane %v211, 2
      %v920 = vrot.slane %v212, 2
      %v921 = vsel %vm898, %v919, %v920
      %v922 = vrot.slane %v213, 2
      %v923 = vsel %vm898, %v920, %v922
      %v924 = vrot.slane %v214, 2
      %v925 = vrot.slane %v215, 2
      %v926 = vsel %vm898, %v924, %v925
      %v927 = vrot.slane %v216, 2
      %v928 = vsel %vm898, %v925, %v927
      %v929 = vrot.slane %v217, 2
      %v930 = vrot.slane %v218, 2
      %v931 = vsel %vm898, %v929, %v930
      %v932 = vrot.slane %v219, 2
      %v933 = vsel %vm898, %v930, %v932
      %v934 = vrot.slane %v220, 2
      %v935 = vrot.slane %v221, 2
      %v936 = vsel %vm898, %v934, %v935
      %v937 = vrot.slane %v222, 2
      %v938 = vsel %vm898, %v935, %v937
      %v939 = vrot.slane %v223, 2
      %v940 = vrot.slane %v224, 2
      %v941 = vsel %vm898, %v939, %v940
      %v942 = vrot.slane %v225, 2
      %v943 = vsel %vm898, %v940, %v942
      %v944 = vrot.slane %v226, 2
      %v945 = vrot.slane %v227, 2
      %v946 = vsel %vm898, %v944, %v945
      %v947 = vrot.slane %v228, 2
      %v948 = vsel %vm898, %v945, %v947
      %v949 = vrot.slane %v229, 2
      %v950 = vrot.slane %v230, 2
      %v951 = vsel %vm898, %v949, %v950
      %v952 = vrot.slane %v231, 2
      %v953 = vsel %vm898, %v950, %v952
      %v954 = vrot.slane %v232, 2
      %v955 = vrot.slane %v233, 2
      %v956 = vsel %vm898, %v954, %v955
      %v957 = vrot.slane %v234, 2
      %v958 = vsel %vm898, %v955, %v957
      %v959 = vrot.slane %v235, 2
      %v960 = vrot.slane %v236, 2
      %v961 = vsel %vm898, %v959, %v960
      %v962 = vrot.slane %v237, 2
      %v963 = vsel %vm898, %v960, %v962
      %v964 = vrot.slane %v238, 2
      %v965 = vrot.slane %v239, 2
      %v966 = vsel %vm898, %v964, %v965
      %v967 = vrot.slane %v240, 2
      %v968 = vsel %vm898, %v965, %v967
      %v969 = vrot.slane %v241, 2
      %v970 = vrot.slane %v242, 2
      %v971 = vsel %vm898, %v969, %v970
      %v972 = vrot.slane %v243, 2
      %v973 = vsel %vm898, %v970, %v972
      %v974 = vrot.slane %v244, 2
      %v975 = vrot.slane %v245, 2
      %v976 = vsel %vm898, %v974, %v975
      %v977 = vrot.slane %v246, 2
      %v978 = vsel %vm898, %v975, %v977
      %v1011 = vpack.c.bf16 %v903, %v901
      %v1012 = vpack.c.bf16 %v908, %v906
      %v1013 = vpack.c.bf16 %v913, %v911
      %v1014 = vpack.c.bf16 %v918, %v916
      %v1015 = vpack.c.bf16 %v923, %v921
      %v1016 = vpack.c.bf16 %v928, %v926
      %v1017 = vpack.c.bf16 %v933, %v931
      %v1018 = vpack.c.bf16 %v938, %v936
      %v1019 = vpack.c.bf16 %v943, %v941
      %v1020 = vpack.c.bf16 %v948, %v946
      %v1021 = vpack.c.bf16 %v953, %v951
      %v1022 = vpack.c.bf16 %v958, %v956
      %v1023 = vpack.c.bf16 %v963, %v961
      %v1024 = vpack.c.bf16 %v968, %v966
      %v1025 = vpack.c.bf16 %v973, %v971
      %v1026 = vpack.c.bf16 %v978, %v976
      %s1027 = scalar_lea.vmem %s1, 32
      %v1028 = vld [vmem:[%s1027] sm:$0xf]
      %v1029 = vld [vmem:[%s1027 + $0x4] sm:$0xf]
      %v1030 = vld [vmem:[%s1027 + $0x8] sm:$0xf]
      %v1031 = vld [vmem:[%s1027 + $0xc] sm:$0xf]
      %v1036 = vunpack.c.l.b16 %v1028
      %v1037 = vunpack.c.l.b16 %v1029
      %v1038 = vunpack.c.l.b16 %v1030
      %v1039 = vunpack.c.l.b16 %v1031
      %v1040 = vpack.c.b16 %v1037, %v1036
      %v1041 = vpack.c.b16 %v1039, %v1038
      %v1045 = vsel %vm467, %v1011, 0
      %v1048 = vsel %vm467, %v1012, 0
      %v1051 = vsel %vm467, %v1013, 0
      %v1054 = vsel %vm467, %v1014, 0
      %v1057 = vsel %vm467, %v1015, 0
      %v1060 = vsel %vm467, %v1016, 0
      %v1063 = vsel %vm467, %v1017, 0
      %v1066 = vsel %vm467, %v1018, 0
      %v1069 = vsel %vm467, %v1019, 0
      %v1072 = vsel %vm467, %v1020, 0
      %v1075 = vsel %vm467, %v1021, 0
      %v1078 = vsel %vm467, %v1022, 0
      %v1081 = vsel %vm467, %v1023, 0
      %v1084 = vsel %vm467, %v1024, 0
      %v1087 = vsel %vm467, %v1025, 0
      %v1090 = vsel %vm467, %v1026, 0
      %1092 = vmatprep.subr.bf16.mxu0 0
      %1093 = vmatpush1.bf16.msra.mxu0 0
      %1094 = vmatprep.subr.bf16.mxu0 0
      %1095 = vmatpush1.bf16.msra.mxu0 0
      %1096 = vmatprep.subr.bf16.mxu0 0
      %1097 = vmatpush1.bf16.msra.mxu0 0
      %1098 = vmatprep.subr.bf16.mxu0 0
      %1099 = vmatpush1.bf16.msra.mxu0 0
      %1100 = vmatprep.subr.bf16.mxu0 0
      %1101 = vmatpush1.bf16.msra.mxu0 0
      %1102 = vmatprep.subr.bf16.mxu0 0
      %1103 = vmatpush1.bf16.msra.mxu0 0
      %1104 = vmatprep.subr.bf16.mxu0 0
      %1105 = vmatpush1.bf16.msra.mxu0 %v1041
      %1106 = vmatprep.subr.bf16.mxu0 0
      %1107 = vmatpush1.bf16.msra.mxu0 %v1040
      %1108 = vmatprep.subr.bf16.mxu0 0
      %1109 = vmatpush2.bf16.msra.mxu0 0
      %1110 = vmatprep.subr.bf16.mxu0 0
      %1111 = vmatpush2.bf16.msra.mxu0 0
      %1112 = vmatprep.subr.bf16.mxu0 0
      %1113 = vmatpush2.bf16.msra.mxu0 0
      %1114 = vmatprep.subr.bf16.mxu0 0
      %1115 = vmatpush2.bf16.msra.mxu0 0
      %1116 = vmatprep.subr.bf16.mxu0 0
      %1117 = vmatpush2.bf16.msra.mxu0 0
      %1118 = vmatprep.subr.bf16.mxu0 0
      %1119 = vmatpush2.bf16.msra.mxu0 0
      %1120 = vmatprep.subr.bf16.mxu0 0
      %1121 = vmatpush2.bf16.msra.mxu0 0
      %1122 = vmatprep.subr.bf16.mxu0 0
      %1123 = vmatpush2.bf16.msra.mxu0 0
      %1124 = vmatprep.mubr.bf16.mxu0 0
      %1125 = vmatmul.mubr.bf16.gmra.mxu0 %v1045
      %v1126 = vpop.f32.mrf.mxu0
      %v1127 = vadd.f32 0.0, %v1126
      %v1128 = vpop.f32.mrf.mxu0
      %v1129 = vpop.f32.mrf.mxu0
      %v1130 = vadd.f32 0.0, %v1129
      %v1131 = vpop.f32.mrf.mxu0
      %1132 = vmatprep.mubr.bf16.mxu0 0
      %1133 = vmatmul.mubr.bf16.gmra.mxu0 %v1048
      %v1134 = vpop.f32.mrf.mxu0
      %v1135 = vadd.f32 0.0, %v1134
      %v1136 = vpop.f32.mrf.mxu0
      %v1137 = vpop.f32.mrf.mxu0
      %v1138 = vadd.f32 0.0, %v1137
      %v1139 = vpop.f32.mrf.mxu0
      %1140 = vmatprep.mubr.bf16.mxu0 0
      %1141 = vmatmul.mubr.bf16.gmra.mxu0 %v1051
      %v1142 = vpop.f32.mrf.mxu0
      %v1143 = vadd.f32 0.0, %v1142
      %v1144 = vpop.f32.mrf.mxu0
      %v1145 = vpop.f32.mrf.mxu0
      %v1146 = vadd.f32 0.0, %v1145
      %v1147 = vpop.f32.mrf.mxu0
      %1148 = vmatprep.mubr.bf16.mxu0 0
      %1149 = vmatmul.mubr.bf16.gmra.mxu0 %v1054
      %v1150 = vpop.f32.mrf.mxu0
      %v1151 = vadd.f32 0.0, %v1150
      %v1152 = vpop.f32.mrf.mxu0
      %v1153 = vpop.f32.mrf.mxu0
      %v1154 = vadd.f32 0.0, %v1153
      %v1155 = vpop.f32.mrf.mxu0
      %1156 = vmatprep.mubr.bf16.mxu0 0
      %1157 = vmatmul.mubr.bf16.gmra.mxu0 %v1057
      %v1158 = vpop.f32.mrf.mxu0
      %v1159 = vadd.f32 0.0, %v1158
      %v1160 = vpop.f32.mrf.mxu0
      %v1161 = vpop.f32.mrf.mxu0
      %v1162 = vadd.f32 0.0, %v1161
      %v1163 = vpop.f32.mrf.mxu0
      %1164 = vmatprep.mubr.bf16.mxu0 0
      %1165 = vmatmul.mubr.bf16.gmra.mxu0 %v1060
      %v1166 = vpop.f32.mrf.mxu0
      %v1167 = vadd.f32 0.0, %v1166
      %v1168 = vpop.f32.mrf.mxu0
      %v1169 = vpop.f32.mrf.mxu0
      %v1170 = vadd.f32 0.0, %v1169
      %v1171 = vpop.f32.mrf.mxu0
      %1172 = vmatprep.mubr.bf16.mxu0 0
      %1173 = vmatmul.mubr.bf16.gmra.mxu0 %v1063
      %v1174 = vpop.f32.mrf.mxu0
      %v1175 = vadd.f32 0.0, %v1174
      %v1176 = vpop.f32.mrf.mxu0
      %v1177 = vpop.f32.mrf.mxu0
      %v1178 = vadd.f32 0.0, %v1177
      %v1179 = vpop.f32.mrf.mxu0
      %1180 = vmatprep.mubr.bf16.mxu0 0
      %1181 = vmatmul.mubr.bf16.gmra.mxu0 %v1066
      %v1182 = vpop.f32.mrf.mxu0
      %v1183 = vadd.f32 0.0, %v1182
      %v1184 = vpop.f32.mrf.mxu0
      %v1185 = vpop.f32.mrf.mxu0
      %v1186 = vadd.f32 0.0, %v1185
      %v1187 = vpop.f32.mrf.mxu0
      %1188 = vmatprep.mubr.bf16.mxu0 0
      %1189 = vmatmul.mubr.bf16.gmra.mxu0 %v1069
      %v1190 = vpop.f32.mrf.mxu0
      %v1191 = vadd.f32 0.0, %v1190
      %v1192 = vpop.f32.mrf.mxu0
      %v1193 = vpop.f32.mrf.mxu0
      %v1194 = vadd.f32 0.0, %v1193
      %v1195 = vpop.f32.mrf.mxu0
      %1196 = vmatprep.mubr.bf16.mxu0 0
      %1197 = vmatmul.mubr.bf16.gmra.mxu0 %v1072
      %v1198 = vpop.f32.mrf.mxu0
      %v1199 = vadd.f32 0.0, %v1198
      %v1200 = vpop.f32.mrf.mxu0
      %v1201 = vpop.f32.mrf.mxu0
      %v1202 = vadd.f32 0.0, %v1201
      %v1203 = vpop.f32.mrf.mxu0
      %1204 = vmatprep.mubr.bf16.mxu0 0
      %1205 = vmatmul.mubr.bf16.gmra.mxu0 %v1075
      %v1206 = vpop.f32.mrf.mxu0
      %v1207 = vadd.f32 0.0, %v1206
      %v1208 = vpop.f32.mrf.mxu0
      %v1209 = vpop.f32.mrf.mxu0
      %v1210 = vadd.f32 0.0, %v1209
      %v1211 = vpop.f32.mrf.mxu0
      %1212 = vmatprep.mubr.bf16.mxu0 0
      %1213 = vmatmul.mubr.bf16.gmra.mxu0 %v1078
      %v1214 = vpop.f32.mrf.mxu0
      %v1215 = vadd.f32 0.0, %v1214
      %v1216 = vpop.f32.mrf.mxu0
      %v1217 = vpop.f32.mrf.mxu0
      %v1218 = vadd.f32 0.0, %v1217
      %v1219 = vpop.f32.mrf.mxu0
      %1220 = vmatprep.mubr.bf16.mxu0 0
      %1221 = vmatmul.mubr.bf16.gmra.mxu0 %v1081
      %v1222 = vpop.f32.mrf.mxu0
      %v1223 = vadd.f32 0.0, %v1222
      %v1224 = vpop.f32.mrf.mxu0
      %v1225 = vpop.f32.mrf.mxu0
      %v1226 = vadd.f32 0.0, %v1225
      %v1227 = vpop.f32.mrf.mxu0
      %1228 = vmatprep.mubr.bf16.mxu0 0
      %1229 = vmatmul.mubr.bf16.gmra.mxu0 %v1084
      %v1230 = vpop.f32.mrf.mxu0
      %v1231 = vadd.f32 0.0, %v1230
      %v1232 = vpop.f32.mrf.mxu0
      %v1233 = vpop.f32.mrf.mxu0
      %v1234 = vadd.f32 0.0, %v1233
      %v1235 = vpop.f32.mrf.mxu0
      %1236 = vmatprep.mubr.bf16.mxu0 0
      %1237 = vmatmul.mubr.bf16.gmra.mxu0 %v1087
      %v1238 = vpop.f32.mrf.mxu0
      %v1239 = vadd.f32 0.0, %v1238
      %v1240 = vpop.f32.mrf.mxu0
      %v1241 = vpop.f32.mrf.mxu0
      %v1242 = vadd.f32 0.0, %v1241
      %v1243 = vpop.f32.mrf.mxu0
      %1244 = vmatprep.mubr.bf16.mxu0 0
      %1245 = vmatmul.mubr.bf16.gmra.mxu0 %v1090
      %v1246 = vpop.f32.mrf.mxu0
      %v1247 = vadd.f32 0.0, %v1246
      %v1248 = vpop.f32.mrf.mxu0
      %v1249 = vpop.f32.mrf.mxu0
      %v1250 = vadd.f32 0.0, %v1249
      %v1251 = vpop.f32.mrf.mxu0
      %1252 = vdwg.mxu0
      %v1253 = vadd.f32 %v772, %v1127
      %v1254 = vadd.f32 %v775, %v1130
      %v1255 = vadd.f32 %v780, %v1135
      %v1256 = vadd.f32 %v783, %v1138
      %v1257 = vadd.f32 %v788, %v1143
      %v1258 = vadd.f32 %v791, %v1146
      %v1259 = vadd.f32 %v796, %v1151
      %v1260 = vadd.f32 %v799, %v1154
      %v1261 = vadd.f32 %v804, %v1159
      %v1262 = vadd.f32 %v807, %v1162
      %v1263 = vadd.f32 %v812, %v1167
      %v1264 = vadd.f32 %v815, %v1170
      %v1265 = vadd.f32 %v820, %v1175
      %v1266 = vadd.f32 %v823, %v1178
      %v1267 = vadd.f32 %v828, %v1183
      %v1268 = vadd.f32 %v831, %v1186
      %v1269 = vadd.f32 %v836, %v1191
      %v1270 = vadd.f32 %v839, %v1194
      %v1271 = vadd.f32 %v844, %v1199
      %v1272 = vadd.f32 %v847, %v1202
      %v1273 = vadd.f32 %v852, %v1207
      %v1274 = vadd.f32 %v855, %v1210
      %v1275 = vadd.f32 %v860, %v1215
      %v1276 = vadd.f32 %v863, %v1218
      %v1277 = vadd.f32 %v868, %v1223
      %v1278 = vadd.f32 %v871, %v1226
      %v1279 = vadd.f32 %v876, %v1231
      %v1280 = vadd.f32 %v879, %v1234
      %v1281 = vadd.f32 %v884, %v1239
      %v1282 = vadd.f32 %v887, %v1242
      %v1283 = vadd.f32 %v892, %v1247
      %v1284 = vadd.f32 %v895, %v1250
      %v1285 = vpack.c.bf16 %v248, %v247
      %s1286 = scalar_lea.vmem %s1, 48
      %v1287 = vld [vmem:[%s1286] sm:$0xf]
      %v1288 = vld [vmem:[%s1286 + $0x4] sm:$0xf]
      %v1289 = vld [vmem:[%s1286 + $0x8] sm:$0xf]
      %v1290 = vld [vmem:[%s1286 + $0xc] sm:$0xf]
      %v1295 = vunpack.c.l.b16 %v1287
      %v1296 = vunpack.c.l.b16 %v1288
      %v1297 = vunpack.c.l.b16 %v1289
      %v1298 = vunpack.c.l.b16 %v1290
      %v1299 = vpack.c.b16 %v1296, %v1295
      %v1300 = vpack.c.b16 %v1298, %v1297
      %v1304 = vsel %vm467, %v1285, 0
      %1306 = vmatprep.subr.bf16.mxu0 0
      %1307 = vmatpush1.bf16.msra.mxu0 0
      %1308 = vmatprep.subr.bf16.mxu0 0
      %1309 = vmatpush1.bf16.msra.mxu0 0
      %1310 = vmatprep.subr.bf16.mxu0 0
      %1311 = vmatpush1.bf16.msra.mxu0 0
      %1312 = vmatprep.subr.bf16.mxu0 0
      %1313 = vmatpush1.bf16.msra.mxu0 0
      %1314 = vmatprep.subr.bf16.mxu0 0
      %1315 = vmatpush1.bf16.msra.mxu0 0
      %1316 = vmatprep.subr.bf16.mxu0 0
      %1317 = vmatpush1.bf16.msra.mxu0 0
      %1318 = vmatprep.subr.bf16.mxu0 0
      %1319 = vmatpush1.bf16.msra.mxu0 %v1300
      %1320 = vmatprep.subr.bf16.mxu0 0
      %1321 = vmatpush1.bf16.msra.mxu0 %v1299
      %1322 = vmatprep.subr.bf16.mxu0 0
      %1323 = vmatpush2.bf16.msra.mxu0 0
      %1324 = vmatprep.subr.bf16.mxu0 0
      %1325 = vmatpush2.bf16.msra.mxu0 0
      %1326 = vmatprep.subr.bf16.mxu0 0
      %1327 = vmatpush2.bf16.msra.mxu0 0
      %1328 = vmatprep.subr.bf16.mxu0 0
      %1329 = vmatpush2.bf16.msra.mxu0 0
      %1330 = vmatprep.subr.bf16.mxu0 0
      %1331 = vmatpush2.bf16.msra.mxu0 0
      %1332 = vmatprep.subr.bf16.mxu0 0
      %1333 = vmatpush2.bf16.msra.mxu0 0
      %1334 = vmatprep.subr.bf16.mxu0 0
      %1335 = vmatpush2.bf16.msra.mxu0 0
      %1336 = vmatprep.subr.bf16.mxu0 0
      %1337 = vmatpush2.bf16.msra.mxu0 0
      %1338 = vmatprep.mubr.bf16.mxu0 0
      %1339 = vmatmul.mubr.bf16.gmra.mxu0 %v693
      %v1340 = vpop.f32.mrf.mxu0
      %v1341 = vadd.f32 0.0, %v1340
      %v1342 = vpop.f32.mrf.mxu0
      %v1343 = vpop.f32.mrf.mxu0
      %v1344 = vadd.f32 0.0, %v1343
      %v1345 = vpop.f32.mrf.mxu0
      %1346 = vmatprep.mubr.bf16.mxu0 0
      %1347 = vmatmul.mubr.bf16.gmra.mxu0 %v696
      %v1348 = vpop.f32.mrf.mxu0
      %v1349 = vadd.f32 0.0, %v1348
      %v1350 = vpop.f32.mrf.mxu0
      %v1351 = vpop.f32.mrf.mxu0
      %v1352 = vadd.f32 0.0, %v1351
      %v1353 = vpop.f32.mrf.mxu0
      %1354 = vmatprep.mubr.bf16.mxu0 0
      %1355 = vmatmul.mubr.bf16.gmra.mxu0 %v699
      %v1356 = vpop.f32.mrf.mxu0
      %v1357 = vadd.f32 0.0, %v1356
      %v1358 = vpop.f32.mrf.mxu0
      %v1359 = vpop.f32.mrf.mxu0
      %v1360 = vadd.f32 0.0, %v1359
      %v1361 = vpop.f32.mrf.mxu0
      %1362 = vmatprep.mubr.bf16.mxu0 0
      %1363 = vmatmul.mubr.bf16.gmra.mxu0 %v702
      %v1364 = vpop.f32.mrf.mxu0
      %v1365 = vadd.f32 0.0, %v1364
      %v1366 = vpop.f32.mrf.mxu0
      %v1367 = vpop.f32.mrf.mxu0
      %v1368 = vadd.f32 0.0, %v1367
      %v1369 = vpop.f32.mrf.mxu0
      %1370 = vmatprep.mubr.bf16.mxu0 0
      %1371 = vmatmul.mubr.bf16.gmra.mxu0 %v705
      %v1372 = vpop.f32.mrf.mxu0
      %v1373 = vadd.f32 0.0, %v1372
      %v1374 = vpop.f32.mrf.mxu0
      %v1375 = vpop.f32.mrf.mxu0
      %v1376 = vadd.f32 0.0, %v1375
      %v1377 = vpop.f32.mrf.mxu0
      %1378 = vmatprep.mubr.bf16.mxu0 0
      %1379 = vmatmul.mubr.bf16.gmra.mxu0 %v708
      %v1380 = vpop.f32.mrf.mxu0
      %v1381 = vadd.f32 0.0, %v1380
      %v1382 = vpop.f32.mrf.mxu0
      %v1383 = vpop.f32.mrf.mxu0
      %v1384 = vadd.f32 0.0, %v1383
      %v1385 = vpop.f32.mrf.mxu0
      %1386 = vmatprep.mubr.bf16.mxu0 0
      %1387 = vmatmul.mubr.bf16.gmra.mxu0 %v711
      %v1388 = vpop.f32.mrf.mxu0
      %v1389 = vadd.f32 0.0, %v1388
      %v1390 = vpop.f32.mrf.mxu0
      %v1391 = vpop.f32.mrf.mxu0
      %v1392 = vadd.f32 0.0, %v1391
      %v1393 = vpop.f32.mrf.mxu0
      %1394 = vmatprep.mubr.bf16.mxu0 0
      %1395 = vmatmul.mubr.bf16.gmra.mxu0 %v714
      %v1396 = vpop.f32.mrf.mxu0
      %v1397 = vadd.f32 0.0, %v1396
      %v1398 = vpop.f32.mrf.mxu0
      %v1399 = vpop.f32.mrf.mxu0
      %v1400 = vadd.f32 0.0, %v1399
      %v1401 = vpop.f32.mrf.mxu0
      %1402 = vmatprep.mubr.bf16.mxu0 0
      %1403 = vmatmul.mubr.bf16.gmra.mxu0 %v717
      %v1404 = vpop.f32.mrf.mxu0
      %v1405 = vadd.f32 0.0, %v1404
      %v1406 = vpop.f32.mrf.mxu0
      %v1407 = vpop.f32.mrf.mxu0
      %v1408 = vadd.f32 0.0, %v1407
      %v1409 = vpop.f32.mrf.mxu0
      %1410 = vmatprep.mubr.bf16.mxu0 0
      %1411 = vmatmul.mubr.bf16.gmra.mxu0 %v720
      %v1412 = vpop.f32.mrf.mxu0
      %v1413 = vadd.f32 0.0, %v1412
      %v1414 = vpop.f32.mrf.mxu0
      %v1415 = vpop.f32.mrf.mxu0
      %v1416 = vadd.f32 0.0, %v1415
      %v1417 = vpop.f32.mrf.mxu0
      %1418 = vmatprep.mubr.bf16.mxu0 0
      %1419 = vmatmul.mubr.bf16.gmra.mxu0 %v723
      %v1420 = vpop.f32.mrf.mxu0
      %v1421 = vadd.f32 0.0, %v1420
      %v1422 = vpop.f32.mrf.mxu0
      %v1423 = vpop.f32.mrf.mxu0
      %v1424 = vadd.f32 0.0, %v1423
      %v1425 = vpop.f32.mrf.mxu0
      %1426 = vmatprep.mubr.bf16.mxu0 0
      %1427 = vmatmul.mubr.bf16.gmra.mxu0 %v726
      %v1428 = vpop.f32.mrf.mxu0
      %v1429 = vadd.f32 0.0, %v1428
      %v1430 = vpop.f32.mrf.mxu0
      %v1431 = vpop.f32.mrf.mxu0
      %v1432 = vadd.f32 0.0, %v1431
      %v1433 = vpop.f32.mrf.mxu0
      %1434 = vmatprep.mubr.bf16.mxu0 0
      %1435 = vmatmul.mubr.bf16.gmra.mxu0 %v729
      %v1436 = vpop.f32.mrf.mxu0
      %v1437 = vadd.f32 0.0, %v1436
      %v1438 = vpop.f32.mrf.mxu0
      %v1439 = vpop.f32.mrf.mxu0
      %v1440 = vadd.f32 0.0, %v1439
      %v1441 = vpop.f32.mrf.mxu0
      %1442 = vmatprep.mubr.bf16.mxu0 0
      %1443 = vmatmul.mubr.bf16.gmra.mxu0 %v732
      %v1444 = vpop.f32.mrf.mxu0
      %v1445 = vadd.f32 0.0, %v1444
      %v1446 = vpop.f32.mrf.mxu0
      %v1447 = vpop.f32.mrf.mxu0
      %v1448 = vadd.f32 0.0, %v1447
      %v1449 = vpop.f32.mrf.mxu0
      %1450 = vmatprep.mubr.bf16.mxu0 0
      %1451 = vmatmul.mubr.bf16.gmra.mxu0 %v735
      %v1452 = vpop.f32.mrf.mxu0
      %v1453 = vadd.f32 0.0, %v1452
      %v1454 = vpop.f32.mrf.mxu0
      %v1455 = vpop.f32.mrf.mxu0
      %v1456 = vadd.f32 0.0, %v1455
      %v1457 = vpop.f32.mrf.mxu0
      %1458 = vmatprep.mubr.bf16.mxu0 0
      %1459 = vmatmul.mubr.bf16.gmra.mxu0 %v1304
      %v1460 = vpop.f32.mrf.mxu0
      %v1461 = vadd.f32 0.0, %v1460
      %v1462 = vpop.f32.mrf.mxu0
      %v1463 = vpop.f32.mrf.mxu0
      %v1464 = vadd.f32 0.0, %v1463
      %v1465 = vpop.f32.mrf.mxu0
      %1466 = vdwg.mxu0
      %v1467 = vadd.f32 %v1253, %v1341
      %v1468 = vadd.f32 %v1254, %v1344
      %v1469 = vadd.f32 %v1255, %v1349
      %v1470 = vadd.f32 %v1256, %v1352
      %v1471 = vadd.f32 %v1257, %v1357
      %v1472 = vadd.f32 %v1258, %v1360
      %v1473 = vadd.f32 %v1259, %v1365
      %v1474 = vadd.f32 %v1260, %v1368
      %v1475 = vadd.f32 %v1261, %v1373
      %v1476 = vadd.f32 %v1262, %v1376
      %v1477 = vadd.f32 %v1263, %v1381
      %v1478 = vadd.f32 %v1264, %v1384
      %v1479 = vadd.f32 %v1265, %v1389
      %v1480 = vadd.f32 %v1266, %v1392
      %v1481 = vadd.f32 %v1267, %v1397
      %v1482 = vadd.f32 %v1268, %v1400
      %v1483 = vadd.f32 %v1269, %v1405
      %v1484 = vadd.f32 %v1270, %v1408
      %v1485 = vadd.f32 %v1271, %v1413
      %v1486 = vadd.f32 %v1272, %v1416
      %v1487 = vadd.f32 %v1273, %v1421
      %v1488 = vadd.f32 %v1274, %v1424
      %v1489 = vadd.f32 %v1275, %v1429
      %v1490 = vadd.f32 %v1276, %v1432
      %v1491 = vadd.f32 %v1277, %v1437
      %v1492 = vadd.f32 %v1278, %v1440
      %v1493 = vadd.f32 %v1279, %v1445
      %v1494 = vadd.f32 %v1280, %v1448
      %v1495 = vadd.f32 %v1281, %v1453
      %v1496 = vadd.f32 %v1282, %v1456
      %v1497 = vadd.f32 %v1283, %v1461
      %v1498 = vadd.f32 %v1284, %v1464
      %v1502 = vrot.slane %v247, 1
      %v1503 = vrot.slane %v248, 1
      %v1504 = vsel %vm321, %v1502, %v1503
      %v1505 = vrot.slane %v249, 1
      %v1506 = vsel %vm321, %v1503, %v1505
      %v1509 = vpack.c.bf16 %v1506, %v1504
      %s1510 = scalar_lea.vmem %s1, 64
      %v1511 = vld [vmem:[%s1510] sm:$0xf]
      %v1512 = vld [vmem:[%s1510 + $0x4] sm:$0xf]
      %v1513 = vld [vmem:[%s1510 + $0x8] sm:$0xf]
      %v1514 = vld [vmem:[%s1510 + $0xc] sm:$0xf]
      %v1519 = vunpack.c.l.b16 %v1511
      %v1520 = vunpack.c.l.b16 %v1512
      %v1521 = vunpack.c.l.b16 %v1513
      %v1522 = vunpack.c.l.b16 %v1514
      %v1523 = vpack.c.b16 %v1520, %v1519
      %v1524 = vpack.c.b16 %v1522, %v1521
      %v1528 = vsel %vm467, %v1509, 0
      %1530 = vmatprep.subr.bf16.mxu0 0
      %1531 = vmatpush1.bf16.msra.mxu0 0
      %1532 = vmatprep.subr.bf16.mxu0 0
      %1533 = vmatpush1.bf16.msra.mxu0 0
      %1534 = vmatprep.subr.bf16.mxu0 0
      %1535 = vmatpush1.bf16.msra.mxu0 0
      %1536 = vmatprep.subr.bf16.mxu0 0
      %1537 = vmatpush1.bf16.msra.mxu0 0
      %1538 = vmatprep.subr.bf16.mxu0 0
      %1539 = vmatpush1.bf16.msra.mxu0 0
      %1540 = vmatprep.subr.bf16.mxu0 0
      %1541 = vmatpush1.bf16.msra.mxu0 0
      %1542 = vmatprep.subr.bf16.mxu0 0
      %1543 = vmatpush1.bf16.msra.mxu0 %v1524
      %1544 = vmatprep.subr.bf16.mxu0 0
      %1545 = vmatpush1.bf16.msra.mxu0 %v1523
      %1546 = vmatprep.subr.bf16.mxu0 0
      %1547 = vmatpush2.bf16.msra.mxu0 0
      %1548 = vmatprep.subr.bf16.mxu0 0
      %1549 = vmatpush2.bf16.msra.mxu0 0
      %1550 = vmatprep.subr.bf16.mxu0 0
      %1551 = vmatpush2.bf16.msra.mxu0 0
      %1552 = vmatprep.subr.bf16.mxu0 0
      %1553 = vmatpush2.bf16.msra.mxu0 0
      %1554 = vmatprep.subr.bf16.mxu0 0
      %1555 = vmatpush2.bf16.msra.mxu0 0
      %1556 = vmatprep.subr.bf16.mxu0 0
      %1557 = vmatpush2.bf16.msra.mxu0 0
      %1558 = vmatprep.subr.bf16.mxu0 0
      %1559 = vmatpush2.bf16.msra.mxu0 0
      %1560 = vmatprep.subr.bf16.mxu0 0
      %1561 = vmatpush2.bf16.msra.mxu0 0
      %1562 = vmatprep.mubr.bf16.mxu0 0
      %1563 = vmatmul.mubr.bf16.gmra.mxu0 %v472
      %v1564 = vpop.f32.mrf.mxu0
      %v1565 = vadd.f32 0.0, %v1564
      %v1566 = vpop.f32.mrf.mxu0
      %v1567 = vpop.f32.mrf.mxu0
      %v1568 = vadd.f32 0.0, %v1567
      %v1569 = vpop.f32.mrf.mxu0
      %1570 = vmatprep.mubr.bf16.mxu0 0
      %1571 = vmatmul.mubr.bf16.gmra.mxu0 %v475
      %v1572 = vpop.f32.mrf.mxu0
      %v1573 = vadd.f32 0.0, %v1572
      %v1574 = vpop.f32.mrf.mxu0
      %v1575 = vpop.f32.mrf.mxu0
      %v1576 = vadd.f32 0.0, %v1575
      %v1577 = vpop.f32.mrf.mxu0
      %1578 = vmatprep.mubr.bf16.mxu0 0
      %1579 = vmatmul.mubr.bf16.gmra.mxu0 %v478
      %v1580 = vpop.f32.mrf.mxu0
      %v1581 = vadd.f32 0.0, %v1580
      %v1582 = vpop.f32.mrf.mxu0
      %v1583 = vpop.f32.mrf.mxu0
      %v1584 = vadd.f32 0.0, %v1583
      %v1585 = vpop.f32.mrf.mxu0
      %1586 = vmatprep.mubr.bf16.mxu0 0
      %1587 = vmatmul.mubr.bf16.gmra.mxu0 %v481
      %v1588 = vpop.f32.mrf.mxu0
      %v1589 = vadd.f32 0.0, %v1588
      %v1590 = vpop.f32.mrf.mxu0
      %v1591 = vpop.f32.mrf.mxu0
      %v1592 = vadd.f32 0.0, %v1591
      %v1593 = vpop.f32.mrf.mxu0
      %1594 = vmatprep.mubr.bf16.mxu0 0
      %1595 = vmatmul.mubr.bf16.gmra.mxu0 %v484
      %v1596 = vpop.f32.mrf.mxu0
      %v1597 = vadd.f32 0.0, %v1596
      %v1598 = vpop.f32.mrf.mxu0
      %v1599 = vpop.f32.mrf.mxu0
      %v1600 = vadd.f32 0.0, %v1599
      %v1601 = vpop.f32.mrf.mxu0
      %1602 = vmatprep.mubr.bf16.mxu0 0
      %1603 = vmatmul.mubr.bf16.gmra.mxu0 %v487
      %v1604 = vpop.f32.mrf.mxu0
      %v1605 = vadd.f32 0.0, %v1604
      %v1606 = vpop.f32.mrf.mxu0
      %v1607 = vpop.f32.mrf.mxu0
      %v1608 = vadd.f32 0.0, %v1607
      %v1609 = vpop.f32.mrf.mxu0
      %1610 = vmatprep.mubr.bf16.mxu0 0
      %1611 = vmatmul.mubr.bf16.gmra.mxu0 %v490
      %v1612 = vpop.f32.mrf.mxu0
      %v1613 = vadd.f32 0.0, %v1612
      %v1614 = vpop.f32.mrf.mxu0
      %v1615 = vpop.f32.mrf.mxu0
      %v1616 = vadd.f32 0.0, %v1615
      %v1617 = vpop.f32.mrf.mxu0
      %1618 = vmatprep.mubr.bf16.mxu0 0
      %1619 = vmatmul.mubr.bf16.gmra.mxu0 %v493
      %v1620 = vpop.f32.mrf.mxu0
      %v1621 = vadd.f32 0.0, %v1620
      %v1622 = vpop.f32.mrf.mxu0
      %v1623 = vpop.f32.mrf.mxu0
      %v1624 = vadd.f32 0.0, %v1623
      %v1625 = vpop.f32.mrf.mxu0
      %1626 = vmatprep.mubr.bf16.mxu0 0
      %1627 = vmatmul.mubr.bf16.gmra.mxu0 %v496
      %v1628 = vpop.f32.mrf.mxu0
      %v1629 = vadd.f32 0.0, %v1628
      %v1630 = vpop.f32.mrf.mxu0
      %v1631 = vpop.f32.mrf.mxu0
      %v1632 = vadd.f32 0.0, %v1631
      %v1633 = vpop.f32.mrf.mxu0
      %1634 = vmatprep.mubr.bf16.mxu0 0
      %1635 = vmatmul.mubr.bf16.gmra.mxu0 %v499
      %v1636 = vpop.f32.mrf.mxu0
      %v1637 = vadd.f32 0.0, %v1636
      %v1638 = vpop.f32.mrf.mxu0
      %v1639 = vpop.f32.mrf.mxu0
      %v1640 = vadd.f32 0.0, %v1639
      %v1641 = vpop.f32.mrf.mxu0
      %1642 = vmatprep.mubr.bf16.mxu0 0
      %1643 = vmatmul.mubr.bf16.gmra.mxu0 %v502
      %v1644 = vpop.f32.mrf.mxu0
      %v1645 = vadd.f32 0.0, %v1644
      %v1646 = vpop.f32.mrf.mxu0
      %v1647 = vpop.f32.mrf.mxu0
      %v1648 = vadd.f32 0.0, %v1647
      %v1649 = vpop.f32.mrf.mxu0
      %1650 = vmatprep.mubr.bf16.mxu0 0
      %1651 = vmatmul.mubr.bf16.gmra.mxu0 %v505
      %v1652 = vpop.f32.mrf.mxu0
      %v1653 = vadd.f32 0.0, %v1652
      %v1654 = vpop.f32.mrf.mxu0
      %v1655 = vpop.f32.mrf.mxu0
      %v1656 = vadd.f32 0.0, %v1655
      %v1657 = vpop.f32.mrf.mxu0
      %1658 = vmatprep.mubr.bf16.mxu0 0
      %1659 = vmatmul.mubr.bf16.gmra.mxu0 %v508
      %v1660 = vpop.f32.mrf.mxu0
      %v1661 = vadd.f32 0.0, %v1660
      %v1662 = vpop.f32.mrf.mxu0
      %v1663 = vpop.f32.mrf.mxu0
      %v1664 = vadd.f32 0.0, %v1663
      %v1665 = vpop.f32.mrf.mxu0
      %1666 = vmatprep.mubr.bf16.mxu0 0
      %1667 = vmatmul.mubr.bf16.gmra.mxu0 %v511
      %v1668 = vpop.f32.mrf.mxu0
      %v1669 = vadd.f32 0.0, %v1668
      %v1670 = vpop.f32.mrf.mxu0
      %v1671 = vpop.f32.mrf.mxu0
      %v1672 = vadd.f32 0.0, %v1671
      %v1673 = vpop.f32.mrf.mxu0
      %1674 = vmatprep.mubr.bf16.mxu0 0
      %1675 = vmatmul.mubr.bf16.gmra.mxu0 %v514
      %v1676 = vpop.f32.mrf.mxu0
      %v1677 = vadd.f32 0.0, %v1676
      %v1678 = vpop.f32.mrf.mxu0
      %v1679 = vpop.f32.mrf.mxu0
      %v1680 = vadd.f32 0.0, %v1679
      %v1681 = vpop.f32.mrf.mxu0
      %1682 = vmatprep.mubr.bf16.mxu0 0
      %1683 = vmatmul.mubr.bf16.gmra.mxu0 %v1528
      %v1684 = vpop.f32.mrf.mxu0
      %v1685 = vadd.f32 0.0, %v1684
      %v1686 = vpop.f32.mrf.mxu0
      %v1687 = vpop.f32.mrf.mxu0
      %v1688 = vadd.f32 0.0, %v1687
      %v1689 = vpop.f32.mrf.mxu0
      %1690 = vdwg.mxu0
      %v1691 = vadd.f32 %v1467, %v1565
      %v1692 = vadd.f32 %v1468, %v1568
      %v1693 = vadd.f32 %v1469, %v1573
      %v1694 = vadd.f32 %v1470, %v1576
      %v1695 = vadd.f32 %v1471, %v1581
      %v1696 = vadd.f32 %v1472, %v1584
      %v1697 = vadd.f32 %v1473, %v1589
      %v1698 = vadd.f32 %v1474, %v1592
      %v1699 = vadd.f32 %v1475, %v1597
      %v1700 = vadd.f32 %v1476, %v1600
      %v1701 = vadd.f32 %v1477, %v1605
      %v1702 = vadd.f32 %v1478, %v1608
      %v1703 = vadd.f32 %v1479, %v1613
      %v1704 = vadd.f32 %v1480, %v1616
      %v1705 = vadd.f32 %v1481, %v1621
      %v1706 = vadd.f32 %v1482, %v1624
      %v1707 = vadd.f32 %v1483, %v1629
      %v1708 = vadd.f32 %v1484, %v1632
      %v1709 = vadd.f32 %v1485, %v1637
      %v1710 = vadd.f32 %v1486, %v1640
      %v1711 = vadd.f32 %v1487, %v1645
      %v1712 = vadd.f32 %v1488, %v1648
      %v1713 = vadd.f32 %v1489, %v1653
      %v1714 = vadd.f32 %v1490, %v1656
      %v1715 = vadd.f32 %v1491, %v1661
      %v1716 = vadd.f32 %v1492, %v1664
      %v1717 = vadd.f32 %v1493, %v1669
      %v1718 = vadd.f32 %v1494, %v1672
      %v1719 = vadd.f32 %v1495, %v1677
      %v1720 = vadd.f32 %v1496, %v1680
      %v1721 = vadd.f32 %v1497, %v1685
      %v1722 = vadd.f32 %v1498, %v1688
      %v1723 = vrot.slane %v247, 2
      %v1724 = vrot.slane %v248, 2
      %v1725 = vsel %vm898, %v1723, %v1724
      %v1726 = vrot.slane %v249, 2
      %v1727 = vsel %vm898, %v1724, %v1726
      %v1730 = vpack.c.bf16 %v1727, %v1725
      %s1731 = scalar_lea.vmem %s1, 80
      %v1732 = vld [vmem:[%s1731] sm:$0xf]
      %v1733 = vld [vmem:[%s1731 + $0x4] sm:$0xf]
      %v1734 = vld [vmem:[%s1731 + $0x8] sm:$0xf]
      %v1735 = vld [vmem:[%s1731 + $0xc] sm:$0xf]
      %v1740 = vunpack.c.l.b16 %v1732
      %v1741 = vunpack.c.l.b16 %v1733
      %v1742 = vunpack.c.l.b16 %v1734
      %v1743 = vunpack.c.l.b16 %v1735
      %v1744 = vpack.c.b16 %v1741, %v1740
      %v1745 = vpack.c.b16 %v1743, %v1742
      %v1749 = vsel %vm467, %v1730, 0
      %1751 = vmatprep.subr.bf16.mxu0 0
      %1752 = vmatpush1.bf16.msra.mxu0 0
      %1753 = vmatprep.subr.bf16.mxu0 0
      %1754 = vmatpush1.bf16.msra.mxu0 0
      %1755 = vmatprep.subr.bf16.mxu0 0
      %1756 = vmatpush1.bf16.msra.mxu0 0
      %1757 = vmatprep.subr.bf16.mxu0 0
      %1758 = vmatpush1.bf16.msra.mxu0 0
      %1759 = vmatprep.subr.bf16.mxu0 0
      %1760 = vmatpush1.bf16.msra.mxu0 0
      %1761 = vmatprep.subr.bf16.mxu0 0
      %1762 = vmatpush1.bf16.msra.mxu0 0
      %1763 = vmatprep.subr.bf16.mxu0 0
      %1764 = vmatpush1.bf16.msra.mxu0 %v1745
      %1765 = vmatprep.subr.bf16.mxu0 0
      %1766 = vmatpush1.bf16.msra.mxu0 %v1744
      %1767 = vmatprep.subr.bf16.mxu0 0
      %1768 = vmatpush2.bf16.msra.mxu0 0
      %1769 = vmatprep.subr.bf16.mxu0 0
      %1770 = vmatpush2.bf16.msra.mxu0 0
      %1771 = vmatprep.subr.bf16.mxu0 0
      %1772 = vmatpush2.bf16.msra.mxu0 0
      %1773 = vmatprep.subr.bf16.mxu0 0
      %1774 = vmatpush2.bf16.msra.mxu0 0
      %1775 = vmatprep.subr.bf16.mxu0 0
      %1776 = vmatpush2.bf16.msra.mxu0 0
      %1777 = vmatprep.subr.bf16.mxu0 0
      %1778 = vmatpush2.bf16.msra.mxu0 0
      %1779 = vmatprep.subr.bf16.mxu0 0
      %1780 = vmatpush2.bf16.msra.mxu0 0
      %1781 = vmatprep.subr.bf16.mxu0 0
      %1782 = vmatpush2.bf16.msra.mxu0 0
      %1783 = vmatprep.mubr.bf16.mxu0 0
      %1784 = vmatmul.mubr.bf16.gmra.mxu0 %v1048
      %v1785 = vpop.f32.mrf.mxu0
      %v1786 = vadd.f32 0.0, %v1785
      %v1787 = vpop.f32.mrf.mxu0
      %v1788 = vpop.f32.mrf.mxu0
      %v1789 = vadd.f32 0.0, %v1788
      %v1790 = vpop.f32.mrf.mxu0
      %1791 = vmatprep.mubr.bf16.mxu0 0
      %1792 = vmatmul.mubr.bf16.gmra.mxu0 %v1051
      %v1793 = vpop.f32.mrf.mxu0
      %v1794 = vadd.f32 0.0, %v1793
      %v1795 = vpop.f32.mrf.mxu0
      %v1796 = vpop.f32.mrf.mxu0
      %v1797 = vadd.f32 0.0, %v1796
      %v1798 = vpop.f32.mrf.mxu0
      %1799 = vmatprep.mubr.bf16.mxu0 0
      %1800 = vmatmul.mubr.bf16.gmra.mxu0 %v1054
      %v1801 = vpop.f32.mrf.mxu0
      %v1802 = vadd.f32 0.0, %v1801
      %v1803 = vpop.f32.mrf.mxu0
      %v1804 = vpop.f32.mrf.mxu0
      %v1805 = vadd.f32 0.0, %v1804
      %v1806 = vpop.f32.mrf.mxu0
      %1807 = vmatprep.mubr.bf16.mxu0 0
      %1808 = vmatmul.mubr.bf16.gmra.mxu0 %v1057
      %v1809 = vpop.f32.mrf.mxu0
      %v1810 = vadd.f32 0.0, %v1809
      %v1811 = vpop.f32.mrf.mxu0
      %v1812 = vpop.f32.mrf.mxu0
      %v1813 = vadd.f32 0.0, %v1812
      %v1814 = vpop.f32.mrf.mxu0
      %1815 = vmatprep.mubr.bf16.mxu0 0
      %1816 = vmatmul.mubr.bf16.gmra.mxu0 %v1060
      %v1817 = vpop.f32.mrf.mxu0
      %v1818 = vadd.f32 0.0, %v1817
      %v1819 = vpop.f32.mrf.mxu0
      %v1820 = vpop.f32.mrf.mxu0
      %v1821 = vadd.f32 0.0, %v1820
      %v1822 = vpop.f32.mrf.mxu0
      %1823 = vmatprep.mubr.bf16.mxu0 0
      %1824 = vmatmul.mubr.bf16.gmra.mxu0 %v1063
      %v1825 = vpop.f32.mrf.mxu0
      %v1826 = vadd.f32 0.0, %v1825
      %v1827 = vpop.f32.mrf.mxu0
      %v1828 = vpop.f32.mrf.mxu0
      %v1829 = vadd.f32 0.0, %v1828
      %v1830 = vpop.f32.mrf.mxu0
      %1831 = vmatprep.mubr.bf16.mxu0 0
      %1832 = vmatmul.mubr.bf16.gmra.mxu0 %v1066
      %v1833 = vpop.f32.mrf.mxu0
      %v1834 = vadd.f32 0.0, %v1833
      %v1835 = vpop.f32.mrf.mxu0
      %v1836 = vpop.f32.mrf.mxu0
      %v1837 = vadd.f32 0.0, %v1836
      %v1838 = vpop.f32.mrf.mxu0
      %1839 = vmatprep.mubr.bf16.mxu0 0
      %1840 = vmatmul.mubr.bf16.gmra.mxu0 %v1069
      %v1841 = vpop.f32.mrf.mxu0
      %v1842 = vadd.f32 0.0, %v1841
      %v1843 = vpop.f32.mrf.mxu0
      %v1844 = vpop.f32.mrf.mxu0
      %v1845 = vadd.f32 0.0, %v1844
      %v1846 = vpop.f32.mrf.mxu0
      %1847 = vmatprep.mubr.bf16.mxu0 0
      %1848 = vmatmul.mubr.bf16.gmra.mxu0 %v1072
      %v1849 = vpop.f32.mrf.mxu0
      %v1850 = vadd.f32 0.0, %v1849
      %v1851 = vpop.f32.mrf.mxu0
      %v1852 = vpop.f32.mrf.mxu0
      %v1853 = vadd.f32 0.0, %v1852
      %v1854 = vpop.f32.mrf.mxu0
      %1855 = vmatprep.mubr.bf16.mxu0 0
      %1856 = vmatmul.mubr.bf16.gmra.mxu0 %v1075
      %v1857 = vpop.f32.mrf.mxu0
      %v1858 = vadd.f32 0.0, %v1857
      %v1859 = vpop.f32.mrf.mxu0
      %v1860 = vpop.f32.mrf.mxu0
      %v1861 = vadd.f32 0.0, %v1860
      %v1862 = vpop.f32.mrf.mxu0
      %1863 = vmatprep.mubr.bf16.mxu0 0
      %1864 = vmatmul.mubr.bf16.gmra.mxu0 %v1078
      %v1865 = vpop.f32.mrf.mxu0
      %v1866 = vadd.f32 0.0, %v1865
      %v1867 = vpop.f32.mrf.mxu0
      %v1868 = vpop.f32.mrf.mxu0
      %v1869 = vadd.f32 0.0, %v1868
      %v1870 = vpop.f32.mrf.mxu0
      %1871 = vmatprep.mubr.bf16.mxu0 0
      %1872 = vmatmul.mubr.bf16.gmra.mxu0 %v1081
      %v1873 = vpop.f32.mrf.mxu0
      %v1874 = vadd.f32 0.0, %v1873
      %v1875 = vpop.f32.mrf.mxu0
      %v1876 = vpop.f32.mrf.mxu0
      %v1877 = vadd.f32 0.0, %v1876
      %v1878 = vpop.f32.mrf.mxu0
      %1879 = vmatprep.mubr.bf16.mxu0 0
      %1880 = vmatmul.mubr.bf16.gmra.mxu0 %v1084
      %v1881 = vpop.f32.mrf.mxu0
      %v1882 = vadd.f32 0.0, %v1881
      %v1883 = vpop.f32.mrf.mxu0
      %v1884 = vpop.f32.mrf.mxu0
      %v1885 = vadd.f32 0.0, %v1884
      %v1886 = vpop.f32.mrf.mxu0
      %1887 = vmatprep.mubr.bf16.mxu0 0
      %1888 = vmatmul.mubr.bf16.gmra.mxu0 %v1087
      %v1889 = vpop.f32.mrf.mxu0
      %v1890 = vadd.f32 0.0, %v1889
      %v1891 = vpop.f32.mrf.mxu0
      %v1892 = vpop.f32.mrf.mxu0
      %v1893 = vadd.f32 0.0, %v1892
      %v1894 = vpop.f32.mrf.mxu0
      %1895 = vmatprep.mubr.bf16.mxu0 0
      %1896 = vmatmul.mubr.bf16.gmra.mxu0 %v1090
      %v1897 = vpop.f32.mrf.mxu0
      %v1898 = vadd.f32 0.0, %v1897
      %v1899 = vpop.f32.mrf.mxu0
      %v1900 = vpop.f32.mrf.mxu0
      %v1901 = vadd.f32 0.0, %v1900
      %v1902 = vpop.f32.mrf.mxu0
      %1903 = vmatprep.mubr.bf16.mxu0 0
      %1904 = vmatmul.mubr.bf16.gmra.mxu0 %v1749
      %v1905 = vpop.f32.mrf.mxu0
      %v1906 = vadd.f32 0.0, %v1905
      %v1907 = vpop.f32.mrf.mxu0
      %v1908 = vpop.f32.mrf.mxu0
      %v1909 = vadd.f32 0.0, %v1908
      %v1910 = vpop.f32.mrf.mxu0
      %1911 = vdwg.mxu0
      %v1912 = vadd.f32 %v1691, %v1786
      %v1913 = vadd.f32 %v1692, %v1789
      %v1914 = vadd.f32 %v1693, %v1794
      %v1915 = vadd.f32 %v1694, %v1797
      %v1916 = vadd.f32 %v1695, %v1802
      %v1917 = vadd.f32 %v1696, %v1805
      %v1918 = vadd.f32 %v1697, %v1810
      %v1919 = vadd.f32 %v1698, %v1813
      %v1920 = vadd.f32 %v1699, %v1818
      %v1921 = vadd.f32 %v1700, %v1821
      %v1922 = vadd.f32 %v1701, %v1826
      %v1923 = vadd.f32 %v1702, %v1829
      %v1924 = vadd.f32 %v1703, %v1834
      %v1925 = vadd.f32 %v1704, %v1837
      %v1926 = vadd.f32 %v1705, %v1842
      %v1927 = vadd.f32 %v1706, %v1845
      %v1928 = vadd.f32 %v1707, %v1850
      %v1929 = vadd.f32 %v1708, %v1853
      %v1930 = vadd.f32 %v1709, %v1858
      %v1931 = vadd.f32 %v1710, %v1861
      %v1932 = vadd.f32 %v1711, %v1866
      %v1933 = vadd.f32 %v1712, %v1869
      %v1934 = vadd.f32 %v1713, %v1874
      %v1935 = vadd.f32 %v1714, %v1877
      %v1936 = vadd.f32 %v1715, %v1882
      %v1937 = vadd.f32 %v1716, %v1885
      %v1938 = vadd.f32 %v1717, %v1890
      %v1939 = vadd.f32 %v1718, %v1893
      %v1940 = vadd.f32 %v1719, %v1898
      %v1941 = vadd.f32 %v1720, %v1901
      %v1942 = vadd.f32 %v1721, %v1906
      %v1943 = vadd.f32 %v1722, %v1909
      %v1944 = vpack.c.bf16 %v251, %v250
      %s1945 = scalar_lea.vmem %s1, 96
      %v1946 = vld [vmem:[%s1945] sm:$0xf]
      %v1947 = vld [vmem:[%s1945 + $0x4] sm:$0xf]
      %v1948 = vld [vmem:[%s1945 + $0x8] sm:$0xf]
      %v1949 = vld [vmem:[%s1945 + $0xc] sm:$0xf]
      %v1954 = vunpack.c.l.b16 %v1946
      %v1955 = vunpack.c.l.b16 %v1947
      %v1956 = vunpack.c.l.b16 %v1948
      %v1957 = vunpack.c.l.b16 %v1949
      %v1958 = vpack.c.b16 %v1955, %v1954
      %v1959 = vpack.c.b16 %v1957, %v1956
      %v1963 = vsel %vm467, %v1944, 0
      %1965 = vmatprep.subr.bf16.mxu0 0
      %1966 = vmatpush1.bf16.msra.mxu0 0
      %1967 = vmatprep.subr.bf16.mxu0 0
      %1968 = vmatpush1.bf16.msra.mxu0 0
      %1969 = vmatprep.subr.bf16.mxu0 0
      %1970 = vmatpush1.bf16.msra.mxu0 0
      %1971 = vmatprep.subr.bf16.mxu0 0
      %1972 = vmatpush1.bf16.msra.mxu0 0
      %1973 = vmatprep.subr.bf16.mxu0 0
      %1974 = vmatpush1.bf16.msra.mxu0 0
      %1975 = vmatprep.subr.bf16.mxu0 0
      %1976 = vmatpush1.bf16.msra.mxu0 0
      %1977 = vmatprep.subr.bf16.mxu0 0
      %1978 = vmatpush1.bf16.msra.mxu0 %v1959
      %1979 = vmatprep.subr.bf16.mxu0 0
      %1980 = vmatpush1.bf16.msra.mxu0 %v1958
      %1981 = vmatprep.subr.bf16.mxu0 0
      %1982 = vmatpush2.bf16.msra.mxu0 0
      %1983 = vmatprep.subr.bf16.mxu0 0
      %1984 = vmatpush2.bf16.msra.mxu0 0
      %1985 = vmatprep.subr.bf16.mxu0 0
      %1986 = vmatpush2.bf16.msra.mxu0 0
      %1987 = vmatprep.subr.bf16.mxu0 0
      %1988 = vmatpush2.bf16.msra.mxu0 0
      %1989 = vmatprep.subr.bf16.mxu0 0
      %1990 = vmatpush2.bf16.msra.mxu0 0
      %1991 = vmatprep.subr.bf16.mxu0 0
      %1992 = vmatpush2.bf16.msra.mxu0 0
      %1993 = vmatprep.subr.bf16.mxu0 0
      %1994 = vmatpush2.bf16.msra.mxu0 0
      %1995 = vmatprep.subr.bf16.mxu0 0
      %1996 = vmatpush2.bf16.msra.mxu0 0
      %1997 = vmatprep.mubr.bf16.mxu0 0
      %1998 = vmatmul.mubr.bf16.gmra.mxu0 %v696
      %v1999 = vpop.f32.mrf.mxu0
      %v2000 = vadd.f32 0.0, %v1999
      %v2001 = vpop.f32.mrf.mxu0
      %v2002 = vpop.f32.mrf.mxu0
      %v2003 = vadd.f32 0.0, %v2002
      %v2004 = vpop.f32.mrf.mxu0
      %2005 = vmatprep.mubr.bf16.mxu0 0
      %2006 = vmatmul.mubr.bf16.gmra.mxu0 %v699
      %v2007 = vpop.f32.mrf.mxu0
      %v2008 = vadd.f32 0.0, %v2007
      %v2009 = vpop.f32.mrf.mxu0
      %v2010 = vpop.f32.mrf.mxu0
      %v2011 = vadd.f32 0.0, %v2010
      %v2012 = vpop.f32.mrf.mxu0
      %2013 = vmatprep.mubr.bf16.mxu0 0
      %2014 = vmatmul.mubr.bf16.gmra.mxu0 %v702
      %v2015 = vpop.f32.mrf.mxu0
      %v2016 = vadd.f32 0.0, %v2015
      %v2017 = vpop.f32.mrf.mxu0
      %v2018 = vpop.f32.mrf.mxu0
      %v2019 = vadd.f32 0.0, %v2018
      %v2020 = vpop.f32.mrf.mxu0
      %2021 = vmatprep.mubr.bf16.mxu0 0
      %2022 = vmatmul.mubr.bf16.gmra.mxu0 %v705
      %v2023 = vpop.f32.mrf.mxu0
      %v2024 = vadd.f32 0.0, %v2023
      %v2025 = vpop.f32.mrf.mxu0
      %v2026 = vpop.f32.mrf.mxu0
      %v2027 = vadd.f32 0.0, %v2026
      %v2028 = vpop.f32.mrf.mxu0
      %2029 = vmatprep.mubr.bf16.mxu0 0
      %2030 = vmatmul.mubr.bf16.gmra.mxu0 %v708
      %v2031 = vpop.f32.mrf.mxu0
      %v2032 = vadd.f32 0.0, %v2031
      %v2033 = vpop.f32.mrf.mxu0
      %v2034 = vpop.f32.mrf.mxu0
      %v2035 = vadd.f32 0.0, %v2034
      %v2036 = vpop.f32.mrf.mxu0
      %2037 = vmatprep.mubr.bf16.mxu0 0
      %2038 = vmatmul.mubr.bf16.gmra.mxu0 %v711
      %v2039 = vpop.f32.mrf.mxu0
      %v2040 = vadd.f32 0.0, %v2039
      %v2041 = vpop.f32.mrf.mxu0
      %v2042 = vpop.f32.mrf.mxu0
      %v2043 = vadd.f32 0.0, %v2042
      %v2044 = vpop.f32.mrf.mxu0
      %2045 = vmatprep.mubr.bf16.mxu0 0
      %2046 = vmatmul.mubr.bf16.gmra.mxu0 %v714
      %v2047 = vpop.f32.mrf.mxu0
      %v2048 = vadd.f32 0.0, %v2047
      %v2049 = vpop.f32.mrf.mxu0
      %v2050 = vpop.f32.mrf.mxu0
      %v2051 = vadd.f32 0.0, %v2050
      %v2052 = vpop.f32.mrf.mxu0
      %2053 = vmatprep.mubr.bf16.mxu0 0
      %2054 = vmatmul.mubr.bf16.gmra.mxu0 %v717
      %v2055 = vpop.f32.mrf.mxu0
      %v2056 = vadd.f32 0.0, %v2055
      %v2057 = vpop.f32.mrf.mxu0
      %v2058 = vpop.f32.mrf.mxu0
      %v2059 = vadd.f32 0.0, %v2058
      %v2060 = vpop.f32.mrf.mxu0
      %2061 = vmatprep.mubr.bf16.mxu0 0
      %2062 = vmatmul.mubr.bf16.gmra.mxu0 %v720
      %v2063 = vpop.f32.mrf.mxu0
      %v2064 = vadd.f32 0.0, %v2063
      %v2065 = vpop.f32.mrf.mxu0
      %v2066 = vpop.f32.mrf.mxu0
      %v2067 = vadd.f32 0.0, %v2066
      %v2068 = vpop.f32.mrf.mxu0
      %2069 = vmatprep.mubr.bf16.mxu0 0
      %2070 = vmatmul.mubr.bf16.gmra.mxu0 %v723
      %v2071 = vpop.f32.mrf.mxu0
      %v2072 = vadd.f32 0.0, %v2071
      %v2073 = vpop.f32.mrf.mxu0
      %v2074 = vpop.f32.mrf.mxu0
      %v2075 = vadd.f32 0.0, %v2074
      %v2076 = vpop.f32.mrf.mxu0
      %2077 = vmatprep.mubr.bf16.mxu0 0
      %2078 = vmatmul.mubr.bf16.gmra.mxu0 %v726
      %v2079 = vpop.f32.mrf.mxu0
      %v2080 = vadd.f32 0.0, %v2079
      %v2081 = vpop.f32.mrf.mxu0
      %v2082 = vpop.f32.mrf.mxu0
      %v2083 = vadd.f32 0.0, %v2082
      %v2084 = vpop.f32.mrf.mxu0
      %2085 = vmatprep.mubr.bf16.mxu0 0
      %2086 = vmatmul.mubr.bf16.gmra.mxu0 %v729
      %v2087 = vpop.f32.mrf.mxu0
      %v2088 = vadd.f32 0.0, %v2087
      %v2089 = vpop.f32.mrf.mxu0
      %v2090 = vpop.f32.mrf.mxu0
      %v2091 = vadd.f32 0.0, %v2090
      %v2092 = vpop.f32.mrf.mxu0
      %2093 = vmatprep.mubr.bf16.mxu0 0
      %2094 = vmatmul.mubr.bf16.gmra.mxu0 %v732
      %v2095 = vpop.f32.mrf.mxu0
      %v2096 = vadd.f32 0.0, %v2095
      %v2097 = vpop.f32.mrf.mxu0
      %v2098 = vpop.f32.mrf.mxu0
      %v2099 = vadd.f32 0.0, %v2098
      %v2100 = vpop.f32.mrf.mxu0
      %2101 = vmatprep.mubr.bf16.mxu0 0
      %2102 = vmatmul.mubr.bf16.gmra.mxu0 %v735
      %v2103 = vpop.f32.mrf.mxu0
      %v2104 = vadd.f32 0.0, %v2103
      %v2105 = vpop.f32.mrf.mxu0
      %v2106 = vpop.f32.mrf.mxu0
      %v2107 = vadd.f32 0.0, %v2106
      %v2108 = vpop.f32.mrf.mxu0
      %2109 = vmatprep.mubr.bf16.mxu0 0
      %2110 = vmatmul.mubr.bf16.gmra.mxu0 %v1304
      %v2111 = vpop.f32.mrf.mxu0
      %v2112 = vadd.f32 0.0, %v2111
      %v2113 = vpop.f32.mrf.mxu0
      %v2114 = vpop.f32.mrf.mxu0
      %v2115 = vadd.f32 0.0, %v2114
      %v2116 = vpop.f32.mrf.mxu0
      %2117 = vmatprep.mubr.bf16.mxu0 0
      %2118 = vmatmul.mubr.bf16.gmra.mxu0 %v1963
      %v2119 = vpop.f32.mrf.mxu0
      %v2120 = vadd.f32 0.0, %v2119
      %v2121 = vpop.f32.mrf.mxu0
      %v2122 = vpop.f32.mrf.mxu0
      %v2123 = vadd.f32 0.0, %v2122
      %v2124 = vpop.f32.mrf.mxu0
      %2125 = vdwg.mxu0
      %v2126 = vadd.f32 %v1912, %v2000
      %v2127 = vadd.f32 %v1913, %v2003
      %v2128 = vadd.f32 %v1914, %v2008
      %v2129 = vadd.f32 %v1915, %v2011
      %v2130 = vadd.f32 %v1916, %v2016
      %v2131 = vadd.f32 %v1917, %v2019
      %v2132 = vadd.f32 %v1918, %v2024
      %v2133 = vadd.f32 %v1919, %v2027
      %v2134 = vadd.f32 %v1920, %v2032
      %v2135 = vadd.f32 %v1921, %v2035
      %v2136 = vadd.f32 %v1922, %v2040
      %v2137 = vadd.f32 %v1923, %v2043
      %v2138 = vadd.f32 %v1924, %v2048
      %v2139 = vadd.f32 %v1925, %v2051
      %v2140 = vadd.f32 %v1926, %v2056
      %v2141 = vadd.f32 %v1927, %v2059
      %v2142 = vadd.f32 %v1928, %v2064
      %v2143 = vadd.f32 %v1929, %v2067
      %v2144 = vadd.f32 %v1930, %v2072
      %v2145 = vadd.f32 %v1931, %v2075
      %v2146 = vadd.f32 %v1932, %v2080
      %v2147 = vadd.f32 %v1933, %v2083
      %v2148 = vadd.f32 %v1934, %v2088
      %v2149 = vadd.f32 %v1935, %v2091
      %v2150 = vadd.f32 %v1936, %v2096
      %v2151 = vadd.f32 %v1937, %v2099
      %v2152 = vadd.f32 %v1938, %v2104
      %v2153 = vadd.f32 %v1939, %v2107
      %v2154 = vadd.f32 %v1940, %v2112
      %v2155 = vadd.f32 %v1941, %v2115
      %v2156 = vadd.f32 %v1942, %v2120
      %v2157 = vadd.f32 %v1943, %v2123
      %v2161 = vrot.slane %v250, 1
      %v2162 = vrot.slane %v251, 1
      %v2163 = vsel %vm321, %v2161, %v2162
      %v2164 = vrot.slane %v252, 1
      %v2165 = vsel %vm321, %v2162, %v2164
      %v2168 = vpack.c.bf16 %v2165, %v2163
      %s2169 = scalar_lea.vmem %s1, 112
      %v2170 = vld [vmem:[%s2169] sm:$0xf]
      %v2171 = vld [vmem:[%s2169 + $0x4] sm:$0xf]
      %v2172 = vld [vmem:[%s2169 + $0x8] sm:$0xf]
      %v2173 = vld [vmem:[%s2169 + $0xc] sm:$0xf]
      %v2178 = vunpack.c.l.b16 %v2170
      %v2179 = vunpack.c.l.b16 %v2171
      %v2180 = vunpack.c.l.b16 %v2172
      %v2181 = vunpack.c.l.b16 %v2173
      %v2182 = vpack.c.b16 %v2179, %v2178
      %v2183 = vpack.c.b16 %v2181, %v2180
      %v2187 = vsel %vm467, %v2168, 0
      %2189 = vmatprep.subr.bf16.mxu0 0
      %2190 = vmatpush1.bf16.msra.mxu0 0
      %2191 = vmatprep.subr.bf16.mxu0 0
      %2192 = vmatpush1.bf16.msra.mxu0 0
      %2193 = vmatprep.subr.bf16.mxu0 0
      %2194 = vmatpush1.bf16.msra.mxu0 0
      %2195 = vmatprep.subr.bf16.mxu0 0
      %2196 = vmatpush1.bf16.msra.mxu0 0
      %2197 = vmatprep.subr.bf16.mxu0 0
      %2198 = vmatpush1.bf16.msra.mxu0 0
      %2199 = vmatprep.subr.bf16.mxu0 0
      %2200 = vmatpush1.bf16.msra.mxu0 0
      %2201 = vmatprep.subr.bf16.mxu0 0
      %2202 = vmatpush1.bf16.msra.mxu0 %v2183
      %2203 = vmatprep.subr.bf16.mxu0 0
      %2204 = vmatpush1.bf16.msra.mxu0 %v2182
      %2205 = vmatprep.subr.bf16.mxu0 0
      %2206 = vmatpush2.bf16.msra.mxu0 0
      %2207 = vmatprep.subr.bf16.mxu0 0
      %2208 = vmatpush2.bf16.msra.mxu0 0
      %2209 = vmatprep.subr.bf16.mxu0 0
      %2210 = vmatpush2.bf16.msra.mxu0 0
      %2211 = vmatprep.subr.bf16.mxu0 0
      %2212 = vmatpush2.bf16.msra.mxu0 0
      %2213 = vmatprep.subr.bf16.mxu0 0
      %2214 = vmatpush2.bf16.msra.mxu0 0
      %2215 = vmatprep.subr.bf16.mxu0 0
      %2216 = vmatpush2.bf16.msra.mxu0 0
      %2217 = vmatprep.subr.bf16.mxu0 0
      %2218 = vmatpush2.bf16.msra.mxu0 0
      %2219 = vmatprep.subr.bf16.mxu0 0
      %2220 = vmatpush2.bf16.msra.mxu0 0
      %2221 = vmatprep.mubr.bf16.mxu0 0
      %2222 = vmatmul.mubr.bf16.gmra.mxu0 %v475
      %v2223 = vpop.f32.mrf.mxu0
      %v2224 = vadd.f32 0.0, %v2223
      %v2225 = vpop.f32.mrf.mxu0
      %v2226 = vpop.f32.mrf.mxu0
      %v2227 = vadd.f32 0.0, %v2226
      %v2228 = vpop.f32.mrf.mxu0
      %2229 = vmatprep.mubr.bf16.mxu0 0
      %2230 = vmatmul.mubr.bf16.gmra.mxu0 %v478
      %v2231 = vpop.f32.mrf.mxu0
      %v2232 = vadd.f32 0.0, %v2231
      %v2233 = vpop.f32.mrf.mxu0
      %v2234 = vpop.f32.mrf.mxu0
      %v2235 = vadd.f32 0.0, %v2234
      %v2236 = vpop.f32.mrf.mxu0
      %2237 = vmatprep.mubr.bf16.mxu0 0
      %2238 = vmatmul.mubr.bf16.gmra.mxu0 %v481
      %v2239 = vpop.f32.mrf.mxu0
      %v2240 = vadd.f32 0.0, %v2239
      %v2241 = vpop.f32.mrf.mxu0
      %v2242 = vpop.f32.mrf.mxu0
      %v2243 = vadd.f32 0.0, %v2242
      %v2244 = vpop.f32.mrf.mxu0
      %2245 = vmatprep.mubr.bf16.mxu0 0
      %2246 = vmatmul.mubr.bf16.gmra.mxu0 %v484
      %v2247 = vpop.f32.mrf.mxu0
      %v2248 = vadd.f32 0.0, %v2247
      %v2249 = vpop.f32.mrf.mxu0
      %v2250 = vpop.f32.mrf.mxu0
      %v2251 = vadd.f32 0.0, %v2250
      %v2252 = vpop.f32.mrf.mxu0
      %2253 = vmatprep.mubr.bf16.mxu0 0
      %2254 = vmatmul.mubr.bf16.gmra.mxu0 %v487
      %v2255 = vpop.f32.mrf.mxu0
      %v2256 = vadd.f32 0.0, %v2255
      %v2257 = vpop.f32.mrf.mxu0
      %v2258 = vpop.f32.mrf.mxu0
      %v2259 = vadd.f32 0.0, %v2258
      %v2260 = vpop.f32.mrf.mxu0
      %2261 = vmatprep.mubr.bf16.mxu0 0
      %2262 = vmatmul.mubr.bf16.gmra.mxu0 %v490
      %v2263 = vpop.f32.mrf.mxu0
      %v2264 = vadd.f32 0.0, %v2263
      %v2265 = vpop.f32.mrf.mxu0
      %v2266 = vpop.f32.mrf.mxu0
      %v2267 = vadd.f32 0.0, %v2266
      %v2268 = vpop.f32.mrf.mxu0
      %2269 = vmatprep.mubr.bf16.mxu0 0
      %2270 = vmatmul.mubr.bf16.gmra.mxu0 %v493
      %v2271 = vpop.f32.mrf.mxu0
      %v2272 = vadd.f32 0.0, %v2271
      %v2273 = vpop.f32.mrf.mxu0
      %v2274 = vpop.f32.mrf.mxu0
      %v2275 = vadd.f32 0.0, %v2274
      %v2276 = vpop.f32.mrf.mxu0
      %2277 = vmatprep.mubr.bf16.mxu0 0
      %2278 = vmatmul.mubr.bf16.gmra.mxu0 %v496
      %v2279 = vpop.f32.mrf.mxu0
      %v2280 = vadd.f32 0.0, %v2279
      %v2281 = vpop.f32.mrf.mxu0
      %v2282 = vpop.f32.mrf.mxu0
      %v2283 = vadd.f32 0.0, %v2282
      %v2284 = vpop.f32.mrf.mxu0
      %2285 = vmatprep.mubr.bf16.mxu0 0
      %2286 = vmatmul.mubr.bf16.gmra.mxu0 %v499
      %v2287 = vpop.f32.mrf.mxu0
      %v2288 = vadd.f32 0.0, %v2287
      %v2289 = vpop.f32.mrf.mxu0
      %v2290 = vpop.f32.mrf.mxu0
      %v2291 = vadd.f32 0.0, %v2290
      %v2292 = vpop.f32.mrf.mxu0
      %2293 = vmatprep.mubr.bf16.mxu0 0
      %2294 = vmatmul.mubr.bf16.gmra.mxu0 %v502
      %v2295 = vpop.f32.mrf.mxu0
      %v2296 = vadd.f32 0.0, %v2295
      %v2297 = vpop.f32.mrf.mxu0
      %v2298 = vpop.f32.mrf.mxu0
      %v2299 = vadd.f32 0.0, %v2298
      %v2300 = vpop.f32.mrf.mxu0
      %2301 = vmatprep.mubr.bf16.mxu0 0
      %2302 = vmatmul.mubr.bf16.gmra.mxu0 %v505
      %v2303 = vpop.f32.mrf.mxu0
      %v2304 = vadd.f32 0.0, %v2303
      %v2305 = vpop.f32.mrf.mxu0
      %v2306 = vpop.f32.mrf.mxu0
      %v2307 = vadd.f32 0.0, %v2306
      %v2308 = vpop.f32.mrf.mxu0
      %2309 = vmatprep.mubr.bf16.mxu0 0
      %2310 = vmatmul.mubr.bf16.gmra.mxu0 %v508
      %v2311 = vpop.f32.mrf.mxu0
      %v2312 = vadd.f32 0.0, %v2311
      %v2313 = vpop.f32.mrf.mxu0
      %v2314 = vpop.f32.mrf.mxu0
      %v2315 = vadd.f32 0.0, %v2314
      %v2316 = vpop.f32.mrf.mxu0
      %2317 = vmatprep.mubr.bf16.mxu0 0
      %2318 = vmatmul.mubr.bf16.gmra.mxu0 %v511
      %v2319 = vpop.f32.mrf.mxu0
      %v2320 = vadd.f32 0.0, %v2319
      %v2321 = vpop.f32.mrf.mxu0
      %v2322 = vpop.f32.mrf.mxu0
      %v2323 = vadd.f32 0.0, %v2322
      %v2324 = vpop.f32.mrf.mxu0
      %2325 = vmatprep.mubr.bf16.mxu0 0
      %2326 = vmatmul.mubr.bf16.gmra.mxu0 %v514
      %v2327 = vpop.f32.mrf.mxu0
      %v2328 = vadd.f32 0.0, %v2327
      %v2329 = vpop.f32.mrf.mxu0
      %v2330 = vpop.f32.mrf.mxu0
      %v2331 = vadd.f32 0.0, %v2330
      %v2332 = vpop.f32.mrf.mxu0
      %2333 = vmatprep.mubr.bf16.mxu0 0
      %2334 = vmatmul.mubr.bf16.gmra.mxu0 %v1528
      %v2335 = vpop.f32.mrf.mxu0
      %v2336 = vadd.f32 0.0, %v2335
      %v2337 = vpop.f32.mrf.mxu0
      %v2338 = vpop.f32.mrf.mxu0
      %v2339 = vadd.f32 0.0, %v2338
      %v2340 = vpop.f32.mrf.mxu0
      %2341 = vmatprep.mubr.bf16.mxu0 0
      %2342 = vmatmul.mubr.bf16.gmra.mxu0 %v2187
      %v2343 = vpop.f32.mrf.mxu0
      %v2344 = vadd.f32 0.0, %v2343
      %v2345 = vpop.f32.mrf.mxu0
      %v2346 = vpop.f32.mrf.mxu0
      %v2347 = vadd.f32 0.0, %v2346
      %v2348 = vpop.f32.mrf.mxu0
      %2349 = vdwg.mxu0
      %v2350 = vadd.f32 %v2126, %v2224
      %v2351 = vadd.f32 %v2127, %v2227
      %v2352 = vadd.f32 %v2128, %v2232
      %v2353 = vadd.f32 %v2129, %v2235
      %v2354 = vadd.f32 %v2130, %v2240
      %v2355 = vadd.f32 %v2131, %v2243
      %v2356 = vadd.f32 %v2132, %v2248
      %v2357 = vadd.f32 %v2133, %v2251
      %v2358 = vadd.f32 %v2134, %v2256
      %v2359 = vadd.f32 %v2135, %v2259
      %v2360 = vadd.f32 %v2136, %v2264
      %v2361 = vadd.f32 %v2137, %v2267
      %v2362 = vadd.f32 %v2138, %v2272
      %v2363 = vadd.f32 %v2139, %v2275
      %v2364 = vadd.f32 %v2140, %v2280
      %v2365 = vadd.f32 %v2141, %v2283
      %v2366 = vadd.f32 %v2142, %v2288
      %v2367 = vadd.f32 %v2143, %v2291
      %v2368 = vadd.f32 %v2144, %v2296
      %v2369 = vadd.f32 %v2145, %v2299
      %v2370 = vadd.f32 %v2146, %v2304
      %v2371 = vadd.f32 %v2147, %v2307
      %v2372 = vadd.f32 %v2148, %v2312
      %v2373 = vadd.f32 %v2149, %v2315
      %v2374 = vadd.f32 %v2150, %v2320
      %v2375 = vadd.f32 %v2151, %v2323
      %v2376 = vadd.f32 %v2152, %v2328
      %v2377 = vadd.f32 %v2153, %v2331
      %v2378 = vadd.f32 %v2154, %v2336
      %v2379 = vadd.f32 %v2155, %v2339
      %v2380 = vadd.f32 %v2156, %v2344
      %v2381 = vadd.f32 %v2157, %v2347
      %v2382 = vrot.slane %v250, 2
      %v2383 = vrot.slane %v251, 2
      %v2384 = vsel %vm898, %v2382, %v2383
      %v2385 = vrot.slane %v252, 2
      %v2386 = vsel %vm898, %v2383, %v2385
      %v2389 = vpack.c.bf16 %v2386, %v2384
      %s2390 = scalar_lea.vmem %s1, 128
      %v2391 = vld [vmem:[%s2390] sm:$0xf]
      %v2392 = vld [vmem:[%s2390 + $0x4] sm:$0xf]
      %v2393 = vld [vmem:[%s2390 + $0x8] sm:$0xf]
      %v2394 = vld [vmem:[%s2390 + $0xc] sm:$0xf]
      %v2399 = vunpack.c.l.b16 %v2391
      %v2400 = vunpack.c.l.b16 %v2392
      %v2401 = vunpack.c.l.b16 %v2393
      %v2402 = vunpack.c.l.b16 %v2394
      %v2403 = vpack.c.b16 %v2400, %v2399
      %v2404 = vpack.c.b16 %v2402, %v2401
      %v2408 = vsel %vm467, %v2389, 0
      %2410 = vmatprep.subr.bf16.mxu0 0
      %2411 = vmatpush1.bf16.msra.mxu0 0
      %2412 = vmatprep.subr.bf16.mxu0 0
      %2413 = vmatpush1.bf16.msra.mxu0 0
      %2414 = vmatprep.subr.bf16.mxu0 0
      %2415 = vmatpush1.bf16.msra.mxu0 0
      %2416 = vmatprep.subr.bf16.mxu0 0
      %2417 = vmatpush1.bf16.msra.mxu0 0
      %2418 = vmatprep.subr.bf16.mxu0 0
      %2419 = vmatpush1.bf16.msra.mxu0 0
      %2420 = vmatprep.subr.bf16.mxu0 0
      %2421 = vmatpush1.bf16.msra.mxu0 0
      %2422 = vmatprep.subr.bf16.mxu0 0
      %2423 = vmatpush1.bf16.msra.mxu0 %v2404
      %2424 = vmatprep.subr.bf16.mxu0 0
      %2425 = vmatpush1.bf16.msra.mxu0 %v2403
      %2426 = vmatprep.subr.bf16.mxu0 0
      %2427 = vmatpush2.bf16.msra.mxu0 0
      %2428 = vmatprep.subr.bf16.mxu0 0
      %2429 = vmatpush2.bf16.msra.mxu0 0
      %2430 = vmatprep.subr.bf16.mxu0 0
      %2431 = vmatpush2.bf16.msra.mxu0 0
      %2432 = vmatprep.subr.bf16.mxu0 0
      %2433 = vmatpush2.bf16.msra.mxu0 0
      %2434 = vmatprep.subr.bf16.mxu0 0
      %2435 = vmatpush2.bf16.msra.mxu0 0
      %2436 = vmatprep.subr.bf16.mxu0 0
      %2437 = vmatpush2.bf16.msra.mxu0 0
      %2438 = vmatprep.subr.bf16.mxu0 0
      %2439 = vmatpush2.bf16.msra.mxu0 0
      %2440 = vmatprep.subr.bf16.mxu0 0
      %2441 = vmatpush2.bf16.msra.mxu0 0
      %2442 = vmatprep.mubr.bf16.mxu0 0
      %2443 = vmatmul.mubr.bf16.gmra.mxu0 %v1051
      %v2444 = vpop.f32.mrf.mxu0
      %v2445 = vadd.f32 0.0, %v2444
      %v2446 = vpop.f32.mrf.mxu0
      %v2447 = vpop.f32.mrf.mxu0
      %v2448 = vadd.f32 0.0, %v2447
      %v2449 = vpop.f32.mrf.mxu0
      %2450 = vmatprep.mubr.bf16.mxu0 0
      %2451 = vmatmul.mubr.bf16.gmra.mxu0 %v1054
      %v2452 = vpop.f32.mrf.mxu0
      %v2453 = vadd.f32 0.0, %v2452
      %v2454 = vpop.f32.mrf.mxu0
      %v2455 = vpop.f32.mrf.mxu0
      %v2456 = vadd.f32 0.0, %v2455
      %v2457 = vpop.f32.mrf.mxu0
      %2458 = vmatprep.mubr.bf16.mxu0 0
      %2459 = vmatmul.mubr.bf16.gmra.mxu0 %v1057
      %v2460 = vpop.f32.mrf.mxu0
      %v2461 = vadd.f32 0.0, %v2460
      %v2462 = vpop.f32.mrf.mxu0
      %v2463 = vpop.f32.mrf.mxu0
      %v2464 = vadd.f32 0.0, %v2463
      %v2465 = vpop.f32.mrf.mxu0
      %2466 = vmatprep.mubr.bf16.mxu0 0
      %2467 = vmatmul.mubr.bf16.gmra.mxu0 %v1060
      %v2468 = vpop.f32.mrf.mxu0
      %v2469 = vadd.f32 0.0, %v2468
      %v2470 = vpop.f32.mrf.mxu0
      %v2471 = vpop.f32.mrf.mxu0
      %v2472 = vadd.f32 0.0, %v2471
      %v2473 = vpop.f32.mrf.mxu0
      %2474 = vmatprep.mubr.bf16.mxu0 0
      %2475 = vmatmul.mubr.bf16.gmra.mxu0 %v1063
      %v2476 = vpop.f32.mrf.mxu0
      %v2477 = vadd.f32 0.0, %v2476
      %v2478 = vpop.f32.mrf.mxu0
      %v2479 = vpop.f32.mrf.mxu0
      %v2480 = vadd.f32 0.0, %v2479
      %v2481 = vpop.f32.mrf.mxu0
      %2482 = vmatprep.mubr.bf16.mxu0 0
      %2483 = vmatmul.mubr.bf16.gmra.mxu0 %v1066
      %v2484 = vpop.f32.mrf.mxu0
      %v2485 = vadd.f32 0.0, %v2484
      %v2486 = vpop.f32.mrf.mxu0
      %v2487 = vpop.f32.mrf.mxu0
      %v2488 = vadd.f32 0.0, %v2487
      %v2489 = vpop.f32.mrf.mxu0
      %2490 = vmatprep.mubr.bf16.mxu0 0
      %2491 = vmatmul.mubr.bf16.gmra.mxu0 %v1069
      %v2492 = vpop.f32.mrf.mxu0
      %v2493 = vadd.f32 0.0, %v2492
      %v2494 = vpop.f32.mrf.mxu0
      %v2495 = vpop.f32.mrf.mxu0
      %v2496 = vadd.f32 0.0, %v2495
      %v2497 = vpop.f32.mrf.mxu0
      %2498 = vmatprep.mubr.bf16.mxu0 0
      %2499 = vmatmul.mubr.bf16.gmra.mxu0 %v1072
      %v2500 = vpop.f32.mrf.mxu0
      %v2501 = vadd.f32 0.0, %v2500
      %v2502 = vpop.f32.mrf.mxu0
      %v2503 = vpop.f32.mrf.mxu0
      %v2504 = vadd.f32 0.0, %v2503
      %v2505 = vpop.f32.mrf.mxu0
      %2506 = vmatprep.mubr.bf16.mxu0 0
      %2507 = vmatmul.mubr.bf16.gmra.mxu0 %v1075
      %v2508 = vpop.f32.mrf.mxu0
      %v2509 = vadd.f32 0.0, %v2508
      %v2510 = vpop.f32.mrf.mxu0
      %v2511 = vpop.f32.mrf.mxu0
      %v2512 = vadd.f32 0.0, %v2511
      %v2513 = vpop.f32.mrf.mxu0
      %2514 = vmatprep.mubr.bf16.mxu0 0
      %2515 = vmatmul.mubr.bf16.gmra.mxu0 %v1078
      %v2516 = vpop.f32.mrf.mxu0
      %v2517 = vadd.f32 0.0, %v2516
      %v2518 = vpop.f32.mrf.mxu0
      %v2519 = vpop.f32.mrf.mxu0
      %v2520 = vadd.f32 0.0, %v2519
      %v2521 = vpop.f32.mrf.mxu0
      %2522 = vmatprep.mubr.bf16.mxu0 0
      %2523 = vmatmul.mubr.bf16.gmra.mxu0 %v1081
      %v2524 = vpop.f32.mrf.mxu0
      %v2525 = vadd.f32 0.0, %v2524
      %v2526 = vpop.f32.mrf.mxu0
      %v2527 = vpop.f32.mrf.mxu0
      %v2528 = vadd.f32 0.0, %v2527
      %v2529 = vpop.f32.mrf.mxu0
      %2530 = vmatprep.mubr.bf16.mxu0 0
      %2531 = vmatmul.mubr.bf16.gmra.mxu0 %v1084
      %v2532 = vpop.f32.mrf.mxu0
      %v2533 = vadd.f32 0.0, %v2532
      %v2534 = vpop.f32.mrf.mxu0
      %v2535 = vpop.f32.mrf.mxu0
      %v2536 = vadd.f32 0.0, %v2535
      %v2537 = vpop.f32.mrf.mxu0
      %2538 = vmatprep.mubr.bf16.mxu0 0
      %2539 = vmatmul.mubr.bf16.gmra.mxu0 %v1087
      %v2540 = vpop.f32.mrf.mxu0
      %v2541 = vadd.f32 0.0, %v2540
      %v2542 = vpop.f32.mrf.mxu0
      %v2543 = vpop.f32.mrf.mxu0
      %v2544 = vadd.f32 0.0, %v2543
      %v2545 = vpop.f32.mrf.mxu0
      %2546 = vmatprep.mubr.bf16.mxu0 0
      %2547 = vmatmul.mubr.bf16.gmra.mxu0 %v1090
      %v2548 = vpop.f32.mrf.mxu0
      %v2549 = vadd.f32 0.0, %v2548
      %v2550 = vpop.f32.mrf.mxu0
      %v2551 = vpop.f32.mrf.mxu0
      %v2552 = vadd.f32 0.0, %v2551
      %v2553 = vpop.f32.mrf.mxu0
      %2554 = vmatprep.mubr.bf16.mxu0 0
      %2555 = vmatmul.mubr.bf16.gmra.mxu0 %v1749
      %v2556 = vpop.f32.mrf.mxu0
      %v2557 = vadd.f32 0.0, %v2556
      %v2558 = vpop.f32.mrf.mxu0
      %v2559 = vpop.f32.mrf.mxu0
      %v2560 = vadd.f32 0.0, %v2559
      %v2561 = vpop.f32.mrf.mxu0
      %2562 = vmatprep.mubr.bf16.mxu0 0
      %2563 = vmatmul.mubr.bf16.gmra.mxu0 %v2408
      %v2564 = vpop.f32.mrf.mxu0
      %v2565 = vadd.f32 0.0, %v2564
      %v2566 = vpop.f32.mrf.mxu0
      %v2567 = vpop.f32.mrf.mxu0
      %v2568 = vadd.f32 0.0, %v2567
      %v2569 = vpop.f32.mrf.mxu0
      %2570 = vdwg.mxu0
      %v2571 = vadd.f32 %v2350, %v2445
      %v2572 = vadd.f32 %v2351, %v2448
      %v2573 = vadd.f32 %v2352, %v2453
      %v2574 = vadd.f32 %v2353, %v2456
      %v2575 = vadd.f32 %v2354, %v2461
      %v2576 = vadd.f32 %v2355, %v2464
      %v2577 = vadd.f32 %v2356, %v2469
      %v2578 = vadd.f32 %v2357, %v2472
      %v2579 = vadd.f32 %v2358, %v2477
      %v2580 = vadd.f32 %v2359, %v2480
      %v2581 = vadd.f32 %v2360, %v2485
      %v2582 = vadd.f32 %v2361, %v2488
      %v2583 = vadd.f32 %v2362, %v2493
      %v2584 = vadd.f32 %v2363, %v2496
      %v2585 = vadd.f32 %v2364, %v2501
      %v2586 = vadd.f32 %v2365, %v2504
      %v2587 = vadd.f32 %v2366, %v2509
      %v2588 = vadd.f32 %v2367, %v2512
      %v2589 = vadd.f32 %v2368, %v2517
      %v2590 = vadd.f32 %v2369, %v2520
      %v2591 = vadd.f32 %v2370, %v2525
      %v2592 = vadd.f32 %v2371, %v2528
      %v2593 = vadd.f32 %v2372, %v2533
      %v2594 = vadd.f32 %v2373, %v2536
      %v2595 = vadd.f32 %v2374, %v2541
      %v2596 = vadd.f32 %v2375, %v2544
      %v2597 = vadd.f32 %v2376, %v2549
      %v2598 = vadd.f32 %v2377, %v2552
      %v2599 = vadd.f32 %v2378, %v2557
      %v2600 = vadd.f32 %v2379, %v2560
      %v2601 = vadd.f32 %v2380, %v2565
      %v2602 = vadd.f32 %v2381, %v2568
      %v2603 = vld [vmem:[%s2] sm:$0x1]
      %v2605 = vlaneseq
      %v2606 = vshrl.u32 %v2605, 7
      %v2607 = vsub.s32 0, %v2606
      %v2608 = vrot.slane %v2603, %v2607
      %v2610 = vmul.f32 %v2571, %v2608
      %v2611 = vmul.f32 %v2572, %v2608
      %v2612 = vmul.f32 %v2573, %v2608
      %v2613 = vmul.f32 %v2574, %v2608
      %v2614 = vmul.f32 %v2575, %v2608
      %v2615 = vmul.f32 %v2576, %v2608
      %v2616 = vmul.f32 %v2577, %v2608
      %v2617 = vmul.f32 %v2578, %v2608
      %v2618 = vmul.f32 %v2579, %v2608
      %v2619 = vmul.f32 %v2580, %v2608
      %v2620 = vmul.f32 %v2581, %v2608
      %v2621 = vmul.f32 %v2582, %v2608
      %v2622 = vmul.f32 %v2583, %v2608
      %v2623 = vmul.f32 %v2584, %v2608
      %v2624 = vmul.f32 %v2585, %v2608
      %v2625 = vmul.f32 %v2586, %v2608
      %v2626 = vmul.f32 %v2587, %v2608
      %v2627 = vmul.f32 %v2588, %v2608
      %v2628 = vmul.f32 %v2589, %v2608
      %v2629 = vmul.f32 %v2590, %v2608
      %v2630 = vmul.f32 %v2591, %v2608
      %v2631 = vmul.f32 %v2592, %v2608
      %v2632 = vmul.f32 %v2593, %v2608
      %v2633 = vmul.f32 %v2594, %v2608
      %v2634 = vmul.f32 %v2595, %v2608
      %v2635 = vmul.f32 %v2596, %v2608
      %v2636 = vmul.f32 %v2597, %v2608
      %v2637 = vmul.f32 %v2598, %v2608
      %v2638 = vmul.f32 %v2599, %v2608
      %v2639 = vmul.f32 %v2600, %v2608
      %v2640 = vmul.f32 %v2601, %v2608
      %v2641 = vmul.f32 %v2602, %v2608
      %v2642 = vld [vmem:[%s3] sm:$0x1]
      %v2644 = vlaneseq
      %v2645 = vshrl.u32 %v2644, 7
      %v2646 = vsub.s32 0, %v2645
      %v2647 = vrot.slane %v2642, %v2646
      %v2649 = vadd.f32 %v2610, %v2647
      %v2650 = vadd.f32 %v2611, %v2647
      %v2651 = vadd.f32 %v2612, %v2647
      %v2652 = vadd.f32 %v2613, %v2647
      %v2653 = vadd.f32 %v2614, %v2647
      %v2654 = vadd.f32 %v2615, %v2647
      %v2655 = vadd.f32 %v2616, %v2647
      %v2656 = vadd.f32 %v2617, %v2647
      %v2657 = vadd.f32 %v2618, %v2647
      %v2658 = vadd.f32 %v2619, %v2647
      %v2659 = vadd.f32 %v2620, %v2647
      %v2660 = vadd.f32 %v2621, %v2647
      %v2661 = vadd.f32 %v2622, %v2647
      %v2662 = vadd.f32 %v2623, %v2647
      %v2663 = vadd.f32 %v2624, %v2647
      %v2664 = vadd.f32 %v2625, %v2647
      %v2665 = vadd.f32 %v2626, %v2647
      %v2666 = vadd.f32 %v2627, %v2647
      %v2667 = vadd.f32 %v2628, %v2647
      %v2668 = vadd.f32 %v2629, %v2647
      %v2669 = vadd.f32 %v2630, %v2647
      %v2670 = vadd.f32 %v2631, %v2647
      %v2671 = vadd.f32 %v2632, %v2647
      %v2672 = vadd.f32 %v2633, %v2647
      %v2673 = vadd.f32 %v2634, %v2647
      %v2674 = vadd.f32 %v2635, %v2647
      %v2675 = vadd.f32 %v2636, %v2647
      %v2676 = vadd.f32 %v2637, %v2647
      %v2677 = vadd.f32 %v2638, %v2647
      %v2678 = vadd.f32 %v2639, %v2647
      %v2679 = vadd.f32 %v2640, %v2647
      %v2680 = vadd.f32 %v2641, %v2647
      %v2681 = vmax.f32 %v2649, 0.0
      %v2682 = vmax.f32 %v2650, 0.0
      %v2683 = vmax.f32 %v2651, 0.0
      %v2684 = vmax.f32 %v2652, 0.0
      %v2685 = vmax.f32 %v2653, 0.0
      %v2686 = vmax.f32 %v2654, 0.0
      %v2687 = vmax.f32 %v2655, 0.0
      %v2688 = vmax.f32 %v2656, 0.0
      %v2689 = vmax.f32 %v2657, 0.0
      %v2690 = vmax.f32 %v2658, 0.0
      %v2691 = vmax.f32 %v2659, 0.0
      %v2692 = vmax.f32 %v2660, 0.0
      %v2693 = vmax.f32 %v2661, 0.0
      %v2694 = vmax.f32 %v2662, 0.0
      %v2695 = vmax.f32 %v2663, 0.0
      %v2696 = vmax.f32 %v2664, 0.0
      %v2697 = vmax.f32 %v2665, 0.0
      %v2698 = vmax.f32 %v2666, 0.0
      %v2699 = vmax.f32 %v2667, 0.0
      %v2700 = vmax.f32 %v2668, 0.0
      %v2701 = vmax.f32 %v2669, 0.0
      %v2702 = vmax.f32 %v2670, 0.0
      %v2703 = vmax.f32 %v2671, 0.0
      %v2704 = vmax.f32 %v2672, 0.0
      %v2705 = vmax.f32 %v2673, 0.0
      %v2706 = vmax.f32 %v2674, 0.0
      %v2707 = vmax.f32 %v2675, 0.0
      %v2708 = vmax.f32 %v2676, 0.0
      %v2709 = vmax.f32 %v2677, 0.0
      %v2710 = vmax.f32 %v2678, 0.0
      %v2711 = vmax.f32 %v2679, 0.0
      %v2712 = vmax.f32 %v2680, 0.0
      %2713 = vst.msk [vmem:[%s197] sm:$0xff] %vm467, %v2681
      %2714 = vst.msk [vmem:[%s197 + $0x8] sm:$0xff] %vm467, %v2682
      %2715 = vst.msk [vmem:[%s197 + $0x10] sm:$0xff] %vm467, %v2683
      %2716 = vst.msk [vmem:[%s197 + $0x18] sm:$0xff] %vm467, %v2684
      %2717 = vst.msk [vmem:[%s197 + $0x20] sm:$0xff] %vm467, %v2685
      %2718 = vst.msk [vmem:[%s197 + $0x28] sm:$0xff] %vm467, %v2686
      %2719 = vst.msk [vmem:[%s197 + $0x30] sm:$0xff] %vm467, %v2687
      %2720 = vst.msk [vmem:[%s197 + $0x38] sm:$0xff] %vm467, %v2688
      %2721 = vst.msk [vmem:[%s197 + $0x40] sm:$0xff] %vm467, %v2689
      %2722 = vst.msk [vmem:[%s197 + $0x48] sm:$0xff] %vm467, %v2690
      %2723 = vst.msk [vmem:[%s197 + $0x50] sm:$0xff] %vm467, %v2691
      %2724 = vst.msk [vmem:[%s197 + $0x58] sm:$0xff] %vm467, %v2692
      %2725 = vst.msk [vmem:[%s197 + $0x60] sm:$0xff] %vm467, %v2693
      %2726 = vst.msk [vmem:[%s197 + $0x68] sm:$0xff] %vm467, %v2694
      %2727 = vst.msk [vmem:[%s197 + $0x70] sm:$0xff] %vm467, %v2695
      %2728 = vst.msk [vmem:[%s197 + $0x78] sm:$0xff] %vm467, %v2696
      %2729 = vst.msk [vmem:[%s197 + $0x80] sm:$0xff] %vm467, %v2697
      %2730 = vst.msk [vmem:[%s197 + $0x88] sm:$0xff] %vm467, %v2698
      %2731 = vst.msk [vmem:[%s197 + $0x90] sm:$0xff] %vm467, %v2699
      %2732 = vst.msk [vmem:[%s197 + $0x98] sm:$0xff] %vm467, %v2700
      %2733 = vst.msk [vmem:[%s197 + $0xa0] sm:$0xff] %vm467, %v2701
      %2734 = vst.msk [vmem:[%s197 + $0xa8] sm:$0xff] %vm467, %v2702
      %2735 = vst.msk [vmem:[%s197 + $0xb0] sm:$0xff] %vm467, %v2703
      %2736 = vst.msk [vmem:[%s197 + $0xb8] sm:$0xff] %vm467, %v2704
      %2737 = vst.msk [vmem:[%s197 + $0xc0] sm:$0xff] %vm467, %v2705
      %2738 = vst.msk [vmem:[%s197 + $0xc8] sm:$0xff] %vm467, %v2706
      %2739 = vst.msk [vmem:[%s197 + $0xd0] sm:$0xff] %vm467, %v2707
      %2740 = vst.msk [vmem:[%s197 + $0xd8] sm:$0xff] %vm467, %v2708
      %2741 = vst.msk [vmem:[%s197 + $0xe0] sm:$0xff] %vm467, %v2709
      %2742 = vst.msk [vmem:[%s197 + $0xe8] sm:$0xff] %vm467, %v2710
      %2743 = vst.msk [vmem:[%s197 + $0xf0] sm:$0xff] %vm467, %v2711
      %2744 = vst.msk [vmem:[%s197 + $0xf8] sm:$0xff] %vm467, %v2712
      %p2745 = scmp.lt.s32.totalorder %s15, 1
      %s2746 = scalar_select %p2745, %s15, 1
      %s2747 = smul.addr %s2746, 32
      %s2748 = smul.addr %s2747, 8
      %s2749 = scalar_lea.vmem %s4, %s2748
      // Predicated region
      $region37: #{pointpillar_forward.10} parent=35 // pred_check
        %p2750 = pneg %p122
      $region38: #{pointpillar_forward.10} parent=35 // pred_check_branch
        %2752 = sbr.rel (%p2750) target = $region40
      $region39: #{pointpillar_forward.10} parent=35 // pred_region
        _
      $region40: #{pointpillar_forward.10} parent=35 // pred_fallthru
        _
    $region36: #{pointpillar_forward.10} parent=5 // pred_fallthru
      _
    %p2753 = scmp.le.s32.totalorder 2, %s10
    // Predicated region
    $region41: #{pointpillar_forward.10} parent=5 // pred_check
      %p2754 = pneg %p2753
    $region42: #{pointpillar_forward.10} parent=5 // pred_check_branch
      %2756 = sbr.rel (%p2754) target = $region44
    $region43: #{pointpillar_forward.10} parent=5 // pred_region
      %s2757 = ssub.s32 %s10, 2
      // Predicated region
      $region45: #{pointpillar_forward.10} parent=43 // pred_check
        %p2758 = pneg %p128
      $region46: #{pointpillar_forward.10} parent=43 // pred_check_branch
        %2760 = sbr.rel (%p2758) target = $region48
      $region47: #{pointpillar_forward.10} parent=43 // pred_region
        %p2761 = scmp.lt.s32.totalorder %s16, 1
        %s2762 = scalar_select %p2761, %s16, 1
        %s2763 = smul.addr %s2762, 32
        %s2764 = smul.addr %s2763, 8
        %s2765 = scalar_lea.vmem %s4, %s2764
      $region48: #{pointpillar_forward.10} parent=43 // pred_fallthru
        _
    $region44: #{pointpillar_forward.10} parent=5 // pred_fallthru
      _
  $region6: #{pointpillar_forward.10} parent=0 // loop_footer
    %s14 = sadd.s32 1, %s10
  $region7: #{pointpillar_forward.10} parent=0 // loop_footer_branch
    %9 = sbr.rel target = $region3
  $region8: #{pointpillar_forward.10} parent=0 // loop_exit
    _

// kernel: pointpillar_forward.13
$region0: #{pointpillar_forward.13}
  #allocation0 [shape = 'u32[]', space=smem, size = 0x4, offset = 0x4, fixed_abs, tag = 'smem constant byte address 0x4 - core index']
  #allocation1 [shape = 'u32[144,128]{1,0:T(1,128)}', space=vmem, size = 0x12000, scoped, tag = 'internal scratch']
  %s0 = inlined_call_operand.vmem [shape: f32[2,10,10,64], index: 0, kind: input, shape index: {}]
  %s1 = inlined_call_operand.vmem [shape: bf16[9,64,64], index: 1, kind: input, shape index: {}]
  %s2 = inlined_call_operand.vmem [shape: f32[1,64], index: 2, kind: input, shape index: {}]
  %s3 = inlined_call_operand.vmem [shape: f32[1,64], index: 3, kind: input, shape index: {}]
  %s4 = inlined_call_operand.vmem [shape: f32[2,8,8,64], index: 4, kind: output, shape index: {}]
  %s5 = sld [smem:[#allocation0]]
  $region49: #{pointpillar_forward.13} parent=0
    _
  %s7 = ssub.s32 1, %s5
  %s8 = scalar_select 0, %s7, %s5
  loop: start=0, step=1, limit=4
  $region2: #{pointpillar_forward.13} parent=0 // loop_pre_header
    _
  $region3: #{pointpillar_forward.13} parent=0 // loop_header
    %s10 = sphi 0, %s14
    %p11 = scmp.ge.s32.totalorder %s10, 4
    %s20 = sphi 0, %s22
    %s23 = sphi 0, %s20
    %s24 = sphi 0, %s23
    %s40 = sphi 0, %s24
    %s44 = sphi 0, %s44
    %s46 = sphi 0, %s44
    %s47 = sphi 0, %s46
    %s61 = sphi 0, %s47
    %s65 = sphi 0, %s65
    %s67 = sphi 0, %s65
    %s68 = sphi 0, %s67
    %s82 = sphi 0, %s68
    %s86 = sphi 0, %s86
    %s88 = sphi 0, %s86
    %s89 = sphi 0, %s88
    %s103 = sphi 0, %s89
    %s109 = sphi 0, %s111
    %s112 = sphi 0, %s109
    %s113 = sphi 0, %s112
    %s129 = sphi 0, %s113
  $region4: #{pointpillar_forward.13} parent=0 // loop_header_branch
    %13 = sbr.rel (%p11) target = $region8
  $region5: #{pointpillar_forward.13} parent=0 // loop_body
    %s15 = ssub.s32 %s10, 1
    %s16 = ssub.s32 %s10, 2
    %s17 = sadd.s32 %s10, 1
    %s18 = ssub.s32 %s10, %s17
    %p19 = scmp.eq.s32.totalorder %s18, 0
    %s21 = sadd.s32 %s20, 1
    %s22 = scalar_select %p19, %s20, %s21
    %p25 = pneg %p19
    %p26 = scmp.eq.s32.totalorder %s10, 1
    %p27 = por %p25, %p26
    %p28 = scmp.ne.s32.totalorder %s20, %s23
    %p29 = scmp.eq.s32.totalorder %s10, 0
    %p30 = por %p28, %p29
    %p31 = scmp.ne.s32.totalorder %s20, %s23
    %p32 = scmp.eq.s32.totalorder %s15, 1
    %p33 = por %p31, %p32
    %p34 = scmp.ne.s32.totalorder %s23, %s24
    %p35 = scmp.eq.s32.totalorder %s15, 0
    %p36 = por %p34, %p35
    %p37 = scmp.ne.s32.totalorder %s23, %s24
    %p38 = scmp.eq.s32.totalorder %s16, 1
    %p39 = por %p37, %p38
    %p41 = scmp.ne.s32.totalorder %s24, %s40
    %p42 = scmp.eq.s32.totalorder %s16, 0
    %p43 = por %p41, %p42
    %s45 = sadd.s32 %s44, 1
    %p48 = scmp.eq.s32.totalorder %s10, 1
    %p49 = scmp.ne.s32.totalorder %s44, %s46
    %p50 = scmp.eq.s32.totalorder %s10, 0
    %p51 = por %p49, %p50
    %p52 = scmp.ne.s32.totalorder %s44, %s46
    %p53 = scmp.eq.s32.totalorder %s15, 1
    %p54 = por %p52, %p53
    %p55 = scmp.ne.s32.totalorder %s46, %s47
    %p56 = scmp.eq.s32.totalorder %s15, 0
    %p57 = por %p55, %p56
    %p58 = scmp.ne.s32.totalorder %s46, %s47
    %p59 = scmp.eq.s32.totalorder %s16, 1
    %p60 = por %p58, %p59
    %p62 = scmp.ne.s32.totalorder %s47, %s61
    %p63 = scmp.eq.s32.totalorder %s16, 0
    %p64 = por %p62, %p63
    %s66 = sadd.s32 %s65, 1
    %p69 = scmp.eq.s32.totalorder %s10, 1
    %p70 = scmp.ne.s32.totalorder %s65, %s67
    %p71 = scmp.eq.s32.totalorder %s10, 0
    %p72 = por %p70, %p71
    %p73 = scmp.ne.s32.totalorder %s65, %s67
    %p74 = scmp.eq.s32.totalorder %s15, 1
    %p75 = por %p73, %p74
    %p76 = scmp.ne.s32.totalorder %s67, %s68
    %p77 = scmp.eq.s32.totalorder %s15, 0
    %p78 = por %p76, %p77
    %p79 = scmp.ne.s32.totalorder %s67, %s68
    %p80 = scmp.eq.s32.totalorder %s16, 1
    %p81 = por %p79, %p80
    %p83 = scmp.ne.s32.totalorder %s68, %s82
    %p84 = scmp.eq.s32.totalorder %s16, 0
    %p85 = por %p83, %p84
    %s87 = sadd.s32 %s86, 1
    %p90 = scmp.eq.s32.totalorder %s10, 1
    %p91 = scmp.ne.s32.totalorder %s86, %s88
    %p92 = scmp.eq.s32.totalorder %s10, 0
    %p93 = por %p91, %p92
    %p94 = scmp.ne.s32.totalorder %s86, %s88
    %p95 = scmp.eq.s32.totalorder %s15, 1
    %p96 = por %p94, %p95
    %p97 = scmp.ne.s32.totalorder %s88, %s89
    %p98 = scmp.eq.s32.totalorder %s15, 0
    %p99 = por %p97, %p98
    %p100 = scmp.ne.s32.totalorder %s88, %s89
    %p101 = scmp.eq.s32.totalorder %s16, 1
    %p102 = por %p100, %p101
    %p104 = scmp.ne.s32.totalorder %s89, %s103
    %p105 = scmp.eq.s32.totalorder %s16, 0
    %p106 = por %p104, %p105
    %s107 = ssub.s32 %s10, %s17
    %p108 = scmp.eq.s32.totalorder %s107, 0
    %s110 = sadd.s32 %s109, 1
    %s111 = scalar_select %p108, %s109, %s110
    %p114 = pneg %p108
    %p115 = scmp.eq.s32.totalorder %s10, 1
    %p116 = por %p114, %p115
    %p117 = scmp.ne.s32.totalorder %s109, %s112
    %p118 = scmp.eq.s32.totalorder %s10, 0
    %p119 = por %p117, %p118
    %p120 = scmp.ne.s32.totalorder %s109, %s112
    %p121 = scmp.eq.s32.totalorder %s15, 1
    %p122 = por %p120, %p121
    %p123 = scmp.ne.s32.totalorder %s112, %s113
    %p124 = scmp.eq.s32.totalorder %s15, 0
    %p125 = por %p123, %p124
    %p126 = scmp.ne.s32.totalorder %s112, %s113
    %p127 = scmp.eq.s32.totalorder %s16, 1
    %p128 = por %p126, %p127
    %p130 = scmp.ne.s32.totalorder %s113, %s129
    %p131 = scmp.eq.s32.totalorder %s16, 0
    %p132 = por %p130, %p131
    %p133 = scmp.le.s32.totalorder 1, %s10
    %p134 = scmp.lt.s32.totalorder %s10, 3
    %p135 = pnand %p133, %p134
    %p136 = pneg %p135
    // Predicated region
    $region9: #{pointpillar_forward.13} parent=5 // pred_check
      _
    $region10: #{pointpillar_forward.13} parent=5 // pred_check_branch
      %138 = sbr.rel (%p135) target = $region12
    $region11: #{pointpillar_forward.13} parent=5 // pred_region
      %s139 = ssub.s32 %s10, 1
      // Predicated region
      $region13: #{pointpillar_forward.13} parent=11 // pred_check
        %p140 = pneg %p57
      $region14: #{pointpillar_forward.13} parent=11 // pred_check_branch
        %142 = sbr.rel (%p140) target = $region16
      $region15: #{pointpillar_forward.13} parent=11 // pred_region
        _
      $region16: #{pointpillar_forward.13} parent=11 // pred_fallthru
        _
      // Predicated region
      $region17: #{pointpillar_forward.13} parent=11 // pred_check
        %p143 = pneg %p78
      $region18: #{pointpillar_forward.13} parent=11 // pred_check_branch
        %145 = sbr.rel (%p143) target = $region20
      $region19: #{pointpillar_forward.13} parent=11 // pred_region
        _
      $region20: #{pointpillar_forward.13} parent=11 // pred_fallthru
        _
      // Predicated region
      $region21: #{pointpillar_forward.13} parent=11 // pred_check
        %p146 = pneg %p99
      $region22: #{pointpillar_forward.13} parent=11 // pred_check_branch
        %148 = sbr.rel (%p146) target = $region24
      $region23: #{pointpillar_forward.13} parent=11 // pred_region
        _
      $region24: #{pointpillar_forward.13} parent=11 // pred_fallthru
        _
    $region12: #{pointpillar_forward.13} parent=5 // pred_fallthru
      _
    %p149 = scmp.lt.s32.totalorder %s10, 2
    // Predicated region
    $region25: #{pointpillar_forward.13} parent=5 // pred_check
      %p150 = pneg %p149
    $region26: #{pointpillar_forward.13} parent=5 // pred_check_branch
      %152 = sbr.rel (%p150) target = $region28
    $region27: #{pointpillar_forward.13} parent=5 // pred_region
      // Predicated region
      $region29: #{pointpillar_forward.13} parent=27 // pred_check
        %p153 = pneg %p30
      $region30: #{pointpillar_forward.13} parent=27 // pred_check_branch
        %155 = sbr.rel (%p153) target = $region32
      $region31: #{pointpillar_forward.13} parent=27 // pred_region
        %p156 = scmp.lt.s32.totalorder %s10, 1
        %s157 = scalar_select %p156, %s10, 1
        %s158 = smul.addr %s157, 20
        %s159 = smul.addr %s158, 8
        %s160 = scalar_lea.vmem %s0, %s159
      $region32: #{pointpillar_forward.13} parent=27 // pred_fallthru
        _
    $region28: #{pointpillar_forward.13} parent=5 // pred_fallthru
      _
    %p161 = scmp.le.s32.totalorder 1, %s10
    %p162 = scmp.lt.s32.totalorder %s10, 3
    %p163 = pnand %p161, %p162
    %p164 = pneg %p163
    // Predicated region
    $region33: #{pointpillar_forward.13} parent=5 // pred_check
      _
    $region34: #{pointpillar_forward.13} parent=5 // pred_check_branch
      %166 = sbr.rel (%p163) target = $region36
    $region35: #{pointpillar_forward.13} parent=5 // pred_region
      %s167 = ssub.s32 %s10, 1
      %p168 = scmp.lt.s32.totalorder %s15, 1
      %s169 = scalar_select %p168, %s15, 1
      %s170 = smul.addr %s169, 20
      %s171 = smul.addr %s170, 8
      %s172 = scalar_lea.vmem %s0, %s171
      %p173 = pneg %p36
      %p174 = pneg %p33
      %p175 = pneg %p57
      %p176 = pneg %p54
      %p177 = pneg %p78
      %p178 = pneg %p75
      %p179 = pneg %p99
      %p180 = pneg %p96
      %p181 = pneg %p125
      %p182 = pneg %p122
      %p183 = scmp.lt.s32.totalorder %s15, 1
      %s184 = scalar_select %p183, %s15, 1
      %s185 = smul.addr %s184, 8
      %s186 = smul.addr %s185, 8
      %s187 = scalar_lea.vmem %s4, %s186
      %p188 = scmp.lt.s32.totalorder %s15, 1
      %s189 = scalar_select %p188, %s15, 1
      %s190 = smul.addr %s189, 20
      %s191 = smul.addr %s190, 8
      %s192 = scalar_lea.vmem %s0, %s191
      %p193 = scmp.lt.s32.totalorder %s15, 1
      %s194 = scalar_select %p193, %s15, 1
      %s195 = smul.addr %s194, 8
      %s196 = smul.addr %s195, 8
      %s197 = scalar_lea.vmem %s4, %s196
      %v199 = vld [vmem:[%s192] sm:$0xff]
      %v200 = vld [vmem:[%s192 + $0x8] sm:$0x3]
      %v201 = vld [vmem:[%s192 + $0x10] sm:$0xff]
      %v202 = vld [vmem:[%s192 + $0x18] sm:$0x3]
      %v203 = vld [vmem:[%s192 + $0x20] sm:$0xff]
      %v204 = vld [vmem:[%s192 + $0x28] sm:$0x3]
      %v205 = vld [vmem:[%s192 + $0x30] sm:$0xff]
      %v206 = vld [vmem:[%s192 + $0x38] sm:$0x3]
      %v207 = vld [vmem:[%s192 + $0x40] sm:$0xff]
      %v208 = vld [vmem:[%s192 + $0x48] sm:$0x3]
      %v209 = vld [vmem:[%s192 + $0x50] sm:$0xff]
      %v210 = vld [vmem:[%s192 + $0x58] sm:$0x3]
      %v211 = vld [vmem:[%s192 + $0x60] sm:$0xff]
      %v212 = vld [vmem:[%s192 + $0x68] sm:$0x3]
      %v213 = vld [vmem:[%s192 + $0x70] sm:$0xff]
      %v214 = vld [vmem:[%s192 + $0x78] sm:$0x3]
      %v215 = vld [vmem:[%s192 + $0x80] sm:$0xff]
      %v216 = vld [vmem:[%s192 + $0x88] sm:$0x3]
      %v217 = vld [vmem:[%s192 + $0x90] sm:$0xff]
      %v218 = vld [vmem:[%s192 + $0x98] sm:$0x3]
      %v219 = vpack.c.bf16 %v201, %v199
      %v220 = vpack.c.bf16 %v205, %v203
      %v221 = vpack.c.bf16 %v209, %v207
      %v222 = vpack.c.bf16 %v213, %v211
      %v223 = vld [vmem:[%s1] sm:$0xf]
      %v224 = vld [vmem:[%s1 + $0x4] sm:$0xf]
      %v225 = vld [vmem:[%s1 + $0x8] sm:$0xf]
      %v226 = vld [vmem:[%s1 + $0xc] sm:$0xf]
      %v227 = vld [vmem:[%s1 + $0x10] sm:$0xf]
      %v228 = vld [vmem:[%s1 + $0x14] sm:$0xf]
      %v229 = vld [vmem:[%s1 + $0x18] sm:$0xf]
      %v230 = vld [vmem:[%s1 + $0x1c] sm:$0xf]
      %vm247 = vcmask 1046528
      %v248 = vrot.slane %v199, 1
      %v249 = vrot.slane %v200, 1
      %v250 = vsel %vm247, %v248, %v249
      %v251 = vrot.slane %v201, 1
      %v252 = vrot.slane %v202, 1
      %v253 = vsel %vm247, %v251, %v252
      %v254 = vrot.slane %v203, 1
      %v255 = vrot.slane %v204, 1
      %v256 = vsel %vm247, %v254, %v255
      %v257 = vrot.slane %v205, 1
      %v258 = vrot.slane %v206, 1
      %v259 = vsel %vm247, %v257, %v258
      %v260 = vrot.slane %v207, 1
      %v261 = vrot.slane %v208, 1
      %v262 = vsel %vm247, %v260, %v261
      %v263 = vrot.slane %v209, 1
      %v264 = vrot.slane %v210, 1
      %v265 = vsel %vm247, %v263, %v264
      %v266 = vrot.slane %v211, 1
      %v267 = vrot.slane %v212, 1
      %v268 = vsel %vm247, %v266, %v267
      %v269 = vrot.slane %v213, 1
      %v270 = vrot.slane %v214, 1
      %v271 = vsel %vm247, %v269, %v270
      %v280 = vpack.c.bf16 %v253, %v250
      %v281 = vpack.c.bf16 %v259, %v256
      %v282 = vpack.c.bf16 %v265, %v262
      %v283 = vpack.c.bf16 %v271, %v268
      %s284 = scalar_lea.vmem %s1, 32
      %v285 = vld [vmem:[%s284] sm:$0xf]
      %v286 = vld [vmem:[%s284 + $0x4] sm:$0xf]
      %v287 = vld [vmem:[%s284 + $0x8] sm:$0xf]
      %v288 = vld [vmem:[%s284 + $0xc] sm:$0xf]
      %v289 = vld [vmem:[%s284 + $0x10] sm:$0xf]
      %v290 = vld [vmem:[%s284 + $0x14] sm:$0xf]
      %v291 = vld [vmem:[%s284 + $0x18] sm:$0xf]
      %v292 = vld [vmem:[%s284 + $0x1c] sm:$0xf]
      %v301 = vunpack.c.l.b16 %v285
      %v302 = vunpack.c.l.b16 %v286
      %v303 = vunpack.c.l.b16 %v287
      %v304 = vunpack.c.l.b16 %v288
      %v305 = vunpack.c.l.b16 %v289
      %v306 = vunpack.c.l.b16 %v290
      %v307 = vunpack.c.l.b16 %v291
      %v308 = vunpack.c.l.b16 %v292
      %v309 = vpack.c.b16 %v302, %v301
      %v310 = vpack.c.b16 %v304, %v303
      %v311 = vpack.c.b16 %v306, %v305
      %v312 = vpack.c.b16 %v308, %v307
      %vm317 = vcmask 523264
      %v319 = vsel %vm317, %v280, 0
      %v322 = vsel %vm317, %v281, 0
      %v325 = vsel %vm317, %v282, 0
      %v328 = vsel %vm317, %v283, 0
      %330 = vmatprep.subr.bf16.mxu0 0
      %331 = vmatpush1.bf16.msra.mxu0 0
      %332 = vmatprep.subr.bf16.mxu0 0
      %333 = vmatpush1.bf16.msra.mxu0 0
      %334 = vmatprep.subr.bf16.mxu0 0
      %335 = vmatpush1.bf16.msra.mxu0 0
      %336 = vmatprep.subr.bf16.mxu0 0
      %337 = vmatpush1.bf16.msra.mxu0 0
      %338 = vmatprep.subr.bf16.mxu0 0
      %339 = vmatpush1.bf16.msra.mxu0 %v312
      %340 = vmatprep.subr.bf16.mxu0 0
      %341 = vmatpush1.bf16.msra.mxu0 %v311
      %342 = vmatprep.subr.bf16.mxu0 0
      %343 = vmatpush1.bf16.msra.mxu0 %v310
      %344 = vmatprep.subr.bf16.mxu0 0
      %345 = vmatpush1.bf16.msra.mxu0 %v309
      %346 = vmatprep.subr.bf16.mxu0 0
      %347 = vmatpush2.bf16.msra.mxu0 0
      %348 = vmatprep.subr.bf16.mxu0 0
      %349 = vmatpush2.bf16.msra.mxu0 0
      %350 = vmatprep.subr.bf16.mxu0 0
      %351 = vmatpush2.bf16.msra.mxu0 0
      %352 = vmatprep.subr.bf16.mxu0 0
      %353 = vmatpush2.bf16.msra.mxu0 0
      %354 = vmatprep.subr.bf16.mxu0 0
      %355 = vmatpush2.bf16.msra.mxu0 0
      %356 = vmatprep.subr.bf16.mxu0 0
      %357 = vmatpush2.bf16.msra.mxu0 0
      %358 = vmatprep.subr.bf16.mxu0 0
      %359 = vmatpush2.bf16.msra.mxu0 0
      %360 = vmatprep.subr.bf16.mxu0 0
      %361 = vmatpush2.bf16.msra.mxu0 0
      %362 = vmatprep.mubr.bf16.mxu0 0
      %363 = vmatmul.mubr.bf16.gmra.mxu0 %v319
      %v364 = vpop.f32.mrf.mxu0
      %v365 = vadd.f32 0.0, %v364
      %v366 = vpop.f32.mrf.mxu0
      %v367 = vpop.f32.mrf.mxu0
      %v368 = vadd.f32 0.0, %v367
      %v369 = vpop.f32.mrf.mxu0
      %370 = vmatprep.mubr.bf16.mxu0 0
      %371 = vmatmul.mubr.bf16.gmra.mxu0 %v322
      %v372 = vpop.f32.mrf.mxu0
      %v373 = vadd.f32 0.0, %v372
      %v374 = vpop.f32.mrf.mxu0
      %v375 = vpop.f32.mrf.mxu0
      %v376 = vadd.f32 0.0, %v375
      %v377 = vpop.f32.mrf.mxu0
      %378 = vmatprep.mubr.bf16.mxu0 0
      %379 = vmatmul.mubr.bf16.gmra.mxu0 %v325
      %v380 = vpop.f32.mrf.mxu0
      %v381 = vadd.f32 0.0, %v380
      %v382 = vpop.f32.mrf.mxu0
      %v383 = vpop.f32.mrf.mxu0
      %v384 = vadd.f32 0.0, %v383
      %v385 = vpop.f32.mrf.mxu0
      %386 = vmatprep.mubr.bf16.mxu0 0
      %387 = vmatmul.mubr.bf16.gmra.mxu0 %v328
      %v388 = vpop.f32.mrf.mxu0
      %v389 = vadd.f32 0.0, %v388
      %v390 = vpop.f32.mrf.mxu0
      %v391 = vpop.f32.mrf.mxu0
      %v392 = vadd.f32 0.0, %v391
      %v393 = vpop.f32.mrf.mxu0
      %394 = vdwg.mxu0
      %v403 = vunpack.c.l.b16 %v223
      %v404 = vunpack.c.l.b16 %v224
      %v405 = vunpack.c.l.b16 %v225
      %v406 = vunpack.c.l.b16 %v226
      %v407 = vunpack.c.l.b16 %v227
      %v408 = vunpack.c.l.b16 %v228
      %v409 = vunpack.c.l.b16 %v229
      %v410 = vunpack.c.l.b16 %v230
      %v411 = vpack.c.b16 %v404, %v403
      %v412 = vpack.c.b16 %v406, %v405
      %v413 = vpack.c.b16 %v408, %v407
      %v414 = vpack.c.b16 %v410, %v409
      %v420 = vsel %vm317, %v219, 0
      %v423 = vsel %vm317, %v220, 0
      %v426 = vsel %vm317, %v221, 0
      %v429 = vsel %vm317, %v222, 0
      %431 = vmatprep.subr.bf16.mxu0 0
      %432 = vmatpush1.bf16.msra.mxu0 0
      %433 = vmatprep.subr.bf16.mxu0 0
      %434 = vmatpush1.bf16.msra.mxu0 0
      %435 = vmatprep.subr.bf16.mxu0 0
      %436 = vmatpush1.bf16.msra.mxu0 0
      %437 = vmatprep.subr.bf16.mxu0 0
      %438 = vmatpush1.bf16.msra.mxu0 0
      %439 = vmatprep.subr.bf16.mxu0 0
      %440 = vmatpush1.bf16.msra.mxu0 %v414
      %441 = vmatprep.subr.bf16.mxu0 0
      %442 = vmatpush1.bf16.msra.mxu0 %v413
      %443 = vmatprep.subr.bf16.mxu0 0
      %444 = vmatpush1.bf16.msra.mxu0 %v412
      %445 = vmatprep.subr.bf16.mxu0 0
      %446 = vmatpush1.bf16.msra.mxu0 %v411
      %447 = vmatprep.subr.bf16.mxu0 0
      %448 = vmatpush2.bf16.msra.mxu0 0
      %449 = vmatprep.subr.bf16.mxu0 0
      %450 = vmatpush2.bf16.msra.mxu0 0
      %451 = vmatprep.subr.bf16.mxu0 0
      %452 = vmatpush2.bf16.msra.mxu0 0
      %453 = vmatprep.subr.bf16.mxu0 0
      %454 = vmatpush2.bf16.msra.mxu0 0
      %455 = vmatprep.subr.bf16.mxu0 0
      %456 = vmatpush2.bf16.msra.mxu0 0
      %457 = vmatprep.subr.bf16.mxu0 0
      %458 = vmatpush2.bf16.msra.mxu0 0
      %459 = vmatprep.subr.bf16.mxu0 0
      %460 = vmatpush2.bf16.msra.mxu0 0
      %461 = vmatprep.subr.bf16.mxu0 0
      %462 = vmatpush2.bf16.msra.mxu0 0
      %463 = vmatprep.mubr.bf16.mxu0 0
      %464 = vmatmul.mubr.bf16.gmra.mxu0 %v420
      %v465 = vpop.f32.mrf.mxu0
      %v466 = vadd.f32 %v365, %v465
      %v467 = vpop.f32.mrf.mxu0
      %v468 = vpop.f32.mrf.mxu0
      %v469 = vadd.f32 %v368, %v468
      %v470 = vpop.f32.mrf.mxu0
      %471 = vmatprep.mubr.bf16.mxu0 0
      %472 = vmatmul.mubr.bf16.gmra.mxu0 %v423
      %v473 = vpop.f32.mrf.mxu0
      %v474 = vadd.f32 %v373, %v473
      %v475 = vpop.f32.mrf.mxu0
      %v476 = vpop.f32.mrf.mxu0
      %v477 = vadd.f32 %v376, %v476
      %v478 = vpop.f32.mrf.mxu0
      %479 = vmatprep.mubr.bf16.mxu0 0
      %480 = vmatmul.mubr.bf16.gmra.mxu0 %v426
      %v481 = vpop.f32.mrf.mxu0
      %v482 = vadd.f32 %v381, %v481
      %v483 = vpop.f32.mrf.mxu0
      %v484 = vpop.f32.mrf.mxu0
      %v485 = vadd.f32 %v384, %v484
      %v486 = vpop.f32.mrf.mxu0
      %487 = vmatprep.mubr.bf16.mxu0 0
      %488 = vmatmul.mubr.bf16.gmra.mxu0 %v429
      %v489 = vpop.f32.mrf.mxu0
      %v490 = vadd.f32 %v389, %v489
      %v491 = vpop.f32.mrf.mxu0
      %v492 = vpop.f32.mrf.mxu0
      %v493 = vadd.f32 %v392, %v492
      %v494 = vpop.f32.mrf.mxu0
      %495 = vdwg.mxu0
      %vm496 = vcmask 1045504
      %v497 = vrot.slane %v199, 2
      %v498 = vrot.slane %v200, 2
      %v499 = vsel %vm496, %v497, %v498
      %v500 = vrot.slane %v201, 2
      %v501 = vrot.slane %v202, 2
      %v502 = vsel %vm496, %v500, %v501
      %v503 = vrot.slane %v203, 2
      %v504 = vrot.slane %v204, 2
      %v505 = vsel %vm496, %v503, %v504
      %v506 = vrot.slane %v205, 2
      %v507 = vrot.slane %v206, 2
      %v508 = vsel %vm496, %v506, %v507
      %v509 = vrot.slane %v207, 2
      %v510 = vrot.slane %v208, 2
      %v511 = vsel %vm496, %v509, %v510
      %v512 = vrot.slane %v209, 2
      %v513 = vrot.slane %v210, 2
      %v514 = vsel %vm496, %v512, %v513
      %v515 = vrot.slane %v211, 2
      %v516 = vrot.slane %v212, 2
      %v517 = vsel %vm496, %v515, %v516
      %v518 = vrot.slane %v213, 2
      %v519 = vrot.slane %v214, 2
      %v520 = vsel %vm496, %v518, %v519
      %v529 = vpack.c.bf16 %v502, %v499
      %v530 = vpack.c.bf16 %v508, %v505
      %v531 = vpack.c.bf16 %v514, %v511
      %v532 = vpack.c.bf16 %v520, %v517
      %s533 = scalar_lea.vmem %s1, 64
      %v534 = vld [vmem:[%s533] sm:$0xf]
      %v535 = vld [vmem:[%s533 + $0x4] sm:$0xf]
      %v536 = vld [vmem:[%s533 + $0x8] sm:$0xf]
      %v537 = vld [vmem:[%s533 + $0xc] sm:$0xf]
      %v538 = vld [vmem:[%s533 + $0x10] sm:$0xf]
      %v539 = vld [vmem:[%s533 + $0x14] sm:$0xf]
      %v540 = vld [vmem:[%s533 + $0x18] sm:$0xf]
      %v541 = vld [vmem:[%s533 + $0x1c] sm:$0xf]
      %v550 = vunpack.c.l.b16 %v534
      %v551 = vunpack.c.l.b16 %v535
      %v552 = vunpack.c.l.b16 %v536
      %v553 = vunpack.c.l.b16 %v537
      %v554 = vunpack.c.l.b16 %v538
      %v555 = vunpack.c.l.b16 %v539
      %v556 = vunpack.c.l.b16 %v540
      %v557 = vunpack.c.l.b16 %v541
      %v558 = vpack.c.b16 %v551, %v550
      %v559 = vpack.c.b16 %v553, %v552
      %v560 = vpack.c.b16 %v555, %v554
      %v561 = vpack.c.b16 %v557, %v556
      %v567 = vsel %vm317, %v529, 0
      %v570 = vsel %vm317, %v530, 0
      %v573 = vsel %vm317, %v531, 0
      %v576 = vsel %vm317, %v532, 0
      %578 = vmatprep.subr.bf16.mxu0 0
      %579 = vmatpush1.bf16.msra.mxu0 0
      %580 = vmatprep.subr.bf16.mxu0 0
      %581 = vmatpush1.bf16.msra.mxu0 0
      %582 = vmatprep.subr.bf16.mxu0 0
      %583 = vmatpush1.bf16.msra.mxu0 0
      %584 = vmatprep.subr.bf16.mxu0 0
      %585 = vmatpush1.bf16.msra.mxu0 0
      %586 = vmatprep.subr.bf16.mxu0 0
      %587 = vmatpush1.bf16.msra.mxu0 %v561
      %588 = vmatprep.subr.bf16.mxu0 0
      %589 = vmatpush1.bf16.msra.mxu0 %v560
      %590 = vmatprep.subr.bf16.mxu0 0
      %591 = vmatpush1.bf16.msra.mxu0 %v559
      %592 = vmatprep.subr.bf16.mxu0 0
      %593 = vmatpush1.bf16.msra.mxu0 %v558
      %594 = vmatprep.subr.bf16.mxu0 0
      %595 = vmatpush2.bf16.msra.mxu0 0
      %596 = vmatprep.subr.bf16.mxu0 0
      %597 = vmatpush2.bf16.msra.mxu0 0
      %598 = vmatprep.subr.bf16.mxu0 0
      %599 = vmatpush2.bf16.msra.mxu0 0
      %600 = vmatprep.subr.bf16.mxu0 0
      %601 = vmatpush2.bf16.msra.mxu0 0
      %602 = vmatprep.subr.bf16.mxu0 0
      %603 = vmatpush2.bf16.msra.mxu0 0
      %604 = vmatprep.subr.bf16.mxu0 0
      %605 = vmatpush2.bf16.msra.mxu0 0
      %606 = vmatprep.subr.bf16.mxu0 0
      %607 = vmatpush2.bf16.msra.mxu0 0
      %608 = vmatprep.subr.bf16.mxu0 0
      %609 = vmatpush2.bf16.msra.mxu0 0
      %610 = vmatprep.mubr.bf16.mxu0 0
      %611 = vmatmul.mubr.bf16.gmra.mxu0 %v567
      %v612 = vpop.f32.mrf.mxu0
      %v613 = vadd.f32 0.0, %v612
      %v614 = vpop.f32.mrf.mxu0
      %v615 = vpop.f32.mrf.mxu0
      %v616 = vadd.f32 0.0, %v615
      %v617 = vpop.f32.mrf.mxu0
      %618 = vmatprep.mubr.bf16.mxu0 0
      %619 = vmatmul.mubr.bf16.gmra.mxu0 %v570
      %v620 = vpop.f32.mrf.mxu0
      %v621 = vadd.f32 0.0, %v620
      %v622 = vpop.f32.mrf.mxu0
      %v623 = vpop.f32.mrf.mxu0
      %v624 = vadd.f32 0.0, %v623
      %v625 = vpop.f32.mrf.mxu0
      %626 = vmatprep.mubr.bf16.mxu0 0
      %627 = vmatmul.mubr.bf16.gmra.mxu0 %v573
      %v628 = vpop.f32.mrf.mxu0
      %v629 = vadd.f32 0.0, %v628
      %v630 = vpop.f32.mrf.mxu0
      %v631 = vpop.f32.mrf.mxu0
      %v632 = vadd.f32 0.0, %v631
      %v633 = vpop.f32.mrf.mxu0
      %634 = vmatprep.mubr.bf16.mxu0 0
      %635 = vmatmul.mubr.bf16.gmra.mxu0 %v576
      %v636 = vpop.f32.mrf.mxu0
      %v637 = vadd.f32 0.0, %v636
      %v638 = vpop.f32.mrf.mxu0
      %v639 = vpop.f32.mrf.mxu0
      %v640 = vadd.f32 0.0, %v639
      %v641 = vpop.f32.mrf.mxu0
      %642 = vdwg.mxu0
      %v643 = vadd.f32 %v466, %v613
      %v644 = vadd.f32 %v469, %v616
      %v645 = vadd.f32 %v474, %v621
      %v646 = vadd.f32 %v477, %v624
      %v647 = vadd.f32 %v482, %v629
      %v648 = vadd.f32 %v485, %v632
      %v649 = vadd.f32 %v490, %v637
      %v650 = vadd.f32 %v493, %v640
      %v651 = vpack.c.bf16 %v203, %v201
      %v652 = vpack.c.bf16 %v207, %v205
      %v653 = vpack.c.bf16 %v211, %v209
      %v654 = vpack.c.bf16 %v215, %v213
      %s655 = scalar_lea.vmem %s1, 96
      %v656 = vld [vmem:[%s655] sm:$0xf]
      %v657 = vld [vmem:[%s655 + $0x4] sm:$0xf]
      %v658 = vld [vmem:[%s655 + $0x8] sm:$0xf]
      %v659 = vld [vmem:[%s655 + $0xc] sm:$0xf]
      %v660 = vld [vmem:[%s655 + $0x10] sm:$0xf]
      %v661 = vld [vmem:[%s655 + $0x14] sm:$0xf]
      %v662 = vld [vmem:[%s655 + $0x18] sm:$0xf]
      %v663 = vld [vmem:[%s655 + $0x1c] sm:$0xf]
      %v672 = vunpack.c.l.b16 %v656
      %v673 = vunpack.c.l.b16 %v657
      %v674 = vunpack.c.l.b16 %v658
      %v675 = vunpack.c.l.b16 %v659
      %v676 = vunpack.c.l.b16 %v660
      %v677 = vunpack.c.l.b16 %v661
      %v678 = vunpack.c.l.b16 %v662
      %v679 = vunpack.c.l.b16 %v663
      %v680 = vpack.c.b16 %v673, %v672
      %v681 = vpack.c.b16 %v675, %v674
      %v682 = vpack.c.b16 %v677, %v676
      %v683 = vpack.c.b16 %v679, %v678
      %v689 = vsel %vm317, %v651, 0
      %v692 = vsel %vm317, %v652, 0
      %v695 = vsel %vm317, %v653, 0
      %v698 = vsel %vm317, %v654, 0
      %700 = vmatprep.subr.bf16.mxu0 0
      %701 = vmatpush1.bf16.msra.mxu0 0
      %702 = vmatprep.subr.bf16.mxu0 0
      %703 = vmatpush1.bf16.msra.mxu0 0
      %704 = vmatprep.subr.bf16.mxu0 0
      %705 = vmatpush1.bf16.msra.mxu0 0
      %706 = vmatprep.subr.bf16.mxu0 0
      %707 = vmatpush1.bf16.msra.mxu0 0
      %708 = vmatprep.subr.bf16.mxu0 0
      %709 = vmatpush1.bf16.msra.mxu0 %v683
      %710 = vmatprep.subr.bf16.mxu0 0
      %711 = vmatpush1.bf16.msra.mxu0 %v682
      %712 = vmatprep.subr.bf16.mxu0 0
      %713 = vmatpush1.bf16.msra.mxu0 %v681
      %714 = vmatprep.subr.bf16.mxu0 0
      %715 = vmatpush1.bf16.msra.mxu0 %v680
      %716 = vmatprep.subr.bf16.mxu0 0
      %717 = vmatpush2.bf16.msra.mxu0 0
      %718 = vmatprep.subr.bf16.mxu0 0
      %719 = vmatpush2.bf16.msra.mxu0 0
      %720 = vmatprep.subr.bf16.mxu0 0
      %721 = vmatpush2.bf16.msra.mxu0 0
      %722 = vmatprep.subr.bf16.mxu0 0
      %723 = vmatpush2.bf16.msra.mxu0 0
      %724 = vmatprep.subr.bf16.mxu0 0
      %725 = vmatpush2.bf16.msra.mxu0 0
      %726 = vmatprep.subr.bf16.mxu0 0
      %727 = vmatpush2.bf16.msra.mxu0 0
      %728 = vmatprep.subr.bf16.mxu0 0
      %729 = vmatpush2.bf16.msra.mxu0 0
      %730 = vmatprep.subr.bf16.mxu0 0
      %731 = vmatpush2.bf16.msra.mxu0 0
      %732 = vmatprep.mubr.bf16.mxu0 0
      %733 = vmatmul.mubr.bf16.gmra.mxu0 %v689
      %v734 = vpop.f32.mrf.mxu0
      %v735 = vadd.f32 0.0, %v734
      %v736 = vpop.f32.mrf.mxu0
      %v737 = vpop.f32.mrf.mxu0
      %v738 = vadd.f32 0.0, %v737
      %v739 = vpop.f32.mrf.mxu0
      %740 = vmatprep.mubr.bf16.mxu0 0
      %741 = vmatmul.mubr.bf16.gmra.mxu0 %v692
      %v742 = vpop.f32.mrf.mxu0
      %v743 = vadd.f32 0.0, %v742
      %v744 = vpop.f32.mrf.mxu0
      %v745 = vpop.f32.mrf.mxu0
      %v746 = vadd.f32 0.0, %v745
      %v747 = vpop.f32.mrf.mxu0
      %748 = vmatprep.mubr.bf16.mxu0 0
      %749 = vmatmul.mubr.bf16.gmra.mxu0 %v695
      %v750 = vpop.f32.mrf.mxu0
      %v751 = vadd.f32 0.0, %v750
      %v752 = vpop.f32.mrf.mxu0
      %v753 = vpop.f32.mrf.mxu0
      %v754 = vadd.f32 0.0, %v753
      %v755 = vpop.f32.mrf.mxu0
      %756 = vmatprep.mubr.bf16.mxu0 0
      %757 = vmatmul.mubr.bf16.gmra.mxu0 %v698
      %v758 = vpop.f32.mrf.mxu0
      %v759 = vadd.f32 0.0, %v758
      %v760 = vpop.f32.mrf.mxu0
      %v761 = vpop.f32.mrf.mxu0
      %v762 = vadd.f32 0.0, %v761
      %v763 = vpop.f32.mrf.mxu0
      %764 = vdwg.mxu0
      %v765 = vadd.f32 %v643, %v735
      %v766 = vadd.f32 %v644, %v738
      %v767 = vadd.f32 %v645, %v743
      %v768 = vadd.f32 %v646, %v746
      %v769 = vadd.f32 %v647, %v751
      %v770 = vadd.f32 %v648, %v754
      %v771 = vadd.f32 %v649, %v759
      %v772 = vadd.f32 %v650, %v762
      %v775 = vrot.slane %v215, 1
      %v776 = vrot.slane %v216, 1
      %v777 = vsel %vm247, %v775, %v776
      %v779 = vpack.c.bf16 %v256, %v253
      %v780 = vpack.c.bf16 %v262, %v259
      %v781 = vpack.c.bf16 %v268, %v265
      %v782 = vpack.c.bf16 %v777, %v271
      %s783 = scalar_lea.vmem %s1, 128
      %v784 = vld [vmem:[%s783] sm:$0xf]
      %v785 = vld [vmem:[%s783 + $0x4] sm:$0xf]
      %v786 = vld [vmem:[%s783 + $0x8] sm:$0xf]
      %v787 = vld [vmem:[%s783 + $0xc] sm:$0xf]
      %v788 = vld [vmem:[%s783 + $0x10] sm:$0xf]
      %v789 = vld [vmem:[%s783 + $0x14] sm:$0xf]
      %v790 = vld [vmem:[%s783 + $0x18] sm:$0xf]
      %v791 = vld [vmem:[%s783 + $0x1c] sm:$0xf]
      %v800 = vunpack.c.l.b16 %v784
      %v801 = vunpack.c.l.b16 %v785
      %v802 = vunpack.c.l.b16 %v786
      %v803 = vunpack.c.l.b16 %v787
      %v804 = vunpack.c.l.b16 %v788
      %v805 = vunpack.c.l.b16 %v789
      %v806 = vunpack.c.l.b16 %v790
      %v807 = vunpack.c.l.b16 %v791
      %v808 = vpack.c.b16 %v801, %v800
      %v809 = vpack.c.b16 %v803, %v802
      %v810 = vpack.c.b16 %v805, %v804
      %v811 = vpack.c.b16 %v807, %v806
      %v817 = vsel %vm317, %v779, 0
      %v820 = vsel %vm317, %v780, 0
      %v823 = vsel %vm317, %v781, 0
      %v826 = vsel %vm317, %v782, 0
      %828 = vmatprep.subr.bf16.mxu0 0
      %829 = vmatpush1.bf16.msra.mxu0 0
      %830 = vmatprep.subr.bf16.mxu0 0
      %831 = vmatpush1.bf16.msra.mxu0 0
      %832 = vmatprep.subr.bf16.mxu0 0
      %833 = vmatpush1.bf16.msra.mxu0 0
      %834 = vmatprep.subr.bf16.mxu0 0
      %835 = vmatpush1.bf16.msra.mxu0 0
      %836 = vmatprep.subr.bf16.mxu0 0
      %837 = vmatpush1.bf16.msra.mxu0 %v811
      %838 = vmatprep.subr.bf16.mxu0 0
      %839 = vmatpush1.bf16.msra.mxu0 %v810
      %840 = vmatprep.subr.bf16.mxu0 0
      %841 = vmatpush1.bf16.msra.mxu0 %v809
      %842 = vmatprep.subr.bf16.mxu0 0
      %843 = vmatpush1.bf16.msra.mxu0 %v808
      %844 = vmatprep.subr.bf16.mxu0 0
      %845 = vmatpush2.bf16.msra.mxu0 0
      %846 = vmatprep.subr.bf16.mxu0 0
      %847 = vmatpush2.bf16.msra.mxu0 0
      %848 = vmatprep.subr.bf16.mxu0 0
      %849 = vmatpush2.bf16.msra.mxu0 0
      %850 = vmatprep.subr.bf16.mxu0 0
      %851 = vmatpush2.bf16.msra.mxu0 0
      %852 = vmatprep.subr.bf16.mxu0 0
      %853 = vmatpush2.bf16.msra.mxu0 0
      %854 = vmatprep.subr.bf16.mxu0 0
      %855 = vmatpush2.bf16.msra.mxu0 0
      %856 = vmatprep.subr.bf16.mxu0 0
      %857 = vmatpush2.bf16.msra.mxu0 0
      %858 = vmatprep.subr.bf16.mxu0 0
      %859 = vmatpush2.bf16.msra.mxu0 0
      %860 = vmatprep.mubr.bf16.mxu0 0
      %861 = vmatmul.mubr.bf16.gmra.mxu0 %v817
      %v862 = vpop.f32.mrf.mxu0
      %v863 = vadd.f32 0.0, %v862
      %v864 = vpop.f32.mrf.mxu0
      %v865 = vpop.f32.mrf.mxu0
      %v866 = vadd.f32 0.0, %v865
      %v867 = vpop.f32.mrf.mxu0
      %868 = vmatprep.mubr.bf16.mxu0 0
      %869 = vmatmul.mubr.bf16.gmra.mxu0 %v820
      %v870 = vpop.f32.mrf.mxu0
      %v871 = vadd.f32 0.0, %v870
      %v872 = vpop.f32.mrf.mxu0
      %v873 = vpop.f32.mrf.mxu0
      %v874 = vadd.f32 0.0, %v873
      %v875 = vpop.f32.mrf.mxu0
      %876 = vmatprep.mubr.bf16.mxu0 0
      %877 = vmatmul.mubr.bf16.gmra.mxu0 %v823
      %v878 = vpop.f32.mrf.mxu0
      %v879 = vadd.f32 0.0, %v878
      %v880 = vpop.f32.mrf.mxu0
      %v881 = vpop.f32.mrf.mxu0
      %v882 = vadd.f32 0.0, %v881
      %v883 = vpop.f32.mrf.mxu0
      %884 = vmatprep.mubr.bf16.mxu0 0
      %885 = vmatmul.mubr.bf16.gmra.mxu0 %v826
      %v886 = vpop.f32.mrf.mxu0
      %v887 = vadd.f32 0.0, %v886
      %v888 = vpop.f32.mrf.mxu0
      %v889 = vpop.f32.mrf.mxu0
      %v890 = vadd.f32 0.0, %v889
      %v891 = vpop.f32.mrf.mxu0
      %892 = vdwg.mxu0
      %v893 = vadd.f32 %v765, %v863
      %v894 = vadd.f32 %v766, %v866
      %v895 = vadd.f32 %v767, %v871
      %v896 = vadd.f32 %v768, %v874
      %v897 = vadd.f32 %v769, %v879
      %v898 = vadd.f32 %v770, %v882
      %v899 = vadd.f32 %v771, %v887
      %v900 = vadd.f32 %v772, %v890
      %v901 = vrot.slane %v215, 2
      %v902 = vrot.slane %v216, 2
      %v903 = vsel %vm496, %v901, %v902
      %v905 = vpack.c.bf16 %v505, %v502
      %v906 = vpack.c.bf16 %v511, %v508
      %v907 = vpack.c.bf16 %v517, %v514
      %v908 = vpack.c.bf16 %v903, %v520
      %s909 = scalar_lea.vmem %s1, 160
      %v910 = vld [vmem:[%s909] sm:$0xf]
      %v911 = vld [vmem:[%s909 + $0x4] sm:$0xf]
      %v912 = vld [vmem:[%s909 + $0x8] sm:$0xf]
      %v913 = vld [vmem:[%s909 + $0xc] sm:$0xf]
      %v914 = vld [vmem:[%s909 + $0x10] sm:$0xf]
      %v915 = vld [vmem:[%s909 + $0x14] sm:$0xf]
      %v916 = vld [vmem:[%s909 + $0x18] sm:$0xf]
      %v917 = vld [vmem:[%s909 + $0x1c] sm:$0xf]
      %v926 = vunpack.c.l.b16 %v910
      %v927 = vunpack.c.l.b16 %v911
      %v928 = vunpack.c.l.b16 %v912
      %v929 = vunpack.c.l.b16 %v913
      %v930 = vunpack.c.l.b16 %v914
      %v931 = vunpack.c.l.b16 %v915
      %v932 = vunpack.c.l.b16 %v916
      %v933 = vunpack.c.l.b16 %v917
      %v934 = vpack.c.b16 %v927, %v926
      %v935 = vpack.c.b16 %v929, %v928
      %v936 = vpack.c.b16 %v931, %v930
      %v937 = vpack.c.b16 %v933, %v932
      %v943 = vsel %vm317, %v905, 0
      %v946 = vsel %vm317, %v906, 0
      %v949 = vsel %vm317, %v907, 0
      %v952 = vsel %vm317, %v908, 0
      %954 = vmatprep.subr.bf16.mxu0 0
      %955 = vmatpush1.bf16.msra.mxu0 0
      %956 = vmatprep.subr.bf16.mxu0 0
      %957 = vmatpush1.bf16.msra.mxu0 0
      %958 = vmatprep.subr.bf16.mxu0 0
      %959 = vmatpush1.bf16.msra.mxu0 0
      %960 = vmatprep.subr.bf16.mxu0 0
      %961 = vmatpush1.bf16.msra.mxu0 0
      %962 = vmatprep.subr.bf16.mxu0 0
      %963 = vmatpush1.bf16.msra.mxu0 %v937
      %964 = vmatprep.subr.bf16.mxu0 0
      %965 = vmatpush1.bf16.msra.mxu0 %v936
      %966 = vmatprep.subr.bf16.mxu0 0
      %967 = vmatpush1.bf16.msra.mxu0 %v935
      %968 = vmatprep.subr.bf16.mxu0 0
      %969 = vmatpush1.bf16.msra.mxu0 %v934
      %970 = vmatprep.subr.bf16.mxu0 0
      %971 = vmatpush2.bf16.msra.mxu0 0
      %972 = vmatprep.subr.bf16.mxu0 0
      %973 = vmatpush2.bf16.msra.mxu0 0
      %974 = vmatprep.subr.bf16.mxu0 0
      %975 = vmatpush2.bf16.msra.mxu0 0
      %976 = vmatprep.subr.bf16.mxu0 0
      %977 = vmatpush2.bf16.msra.mxu0 0
      %978 = vmatprep.subr.bf16.mxu0 0
      %979 = vmatpush2.bf16.msra.mxu0 0
      %980 = vmatprep.subr.bf16.mxu0 0
      %981 = vmatpush2.bf16.msra.mxu0 0
      %982 = vmatprep.subr.bf16.mxu0 0
      %983 = vmatpush2.bf16.msra.mxu0 0
      %984 = vmatprep.subr.bf16.mxu0 0
      %985 = vmatpush2.bf16.msra.mxu0 0
      %986 = vmatprep.mubr.bf16.mxu0 0
      %987 = vmatmul.mubr.bf16.gmra.mxu0 %v943
      %v988 = vpop.f32.mrf.mxu0
      %v989 = vadd.f32 0.0, %v988
      %v990 = vpop.f32.mrf.mxu0
      %v991 = vpop.f32.mrf.mxu0
      %v992 = vadd.f32 0.0, %v991
      %v993 = vpop.f32.mrf.mxu0
      %994 = vmatprep.mubr.bf16.mxu0 0
      %995 = vmatmul.mubr.bf16.gmra.mxu0 %v946
      %v996 = vpop.f32.mrf.mxu0
      %v997 = vadd.f32 0.0, %v996
      %v998 = vpop.f32.mrf.mxu0
      %v999 = vpop.f32.mrf.mxu0
      %v1000 = vadd.f32 0.0, %v999
      %v1001 = vpop.f32.mrf.mxu0
      %1002 = vmatprep.mubr.bf16.mxu0 0
      %1003 = vmatmul.mubr.bf16.gmra.mxu0 %v949
      %v1004 = vpop.f32.mrf.mxu0
      %v1005 = vadd.f32 0.0, %v1004
      %v1006 = vpop.f32.mrf.mxu0
      %v1007 = vpop.f32.mrf.mxu0
      %v1008 = vadd.f32 0.0, %v1007
      %v1009 = vpop.f32.mrf.mxu0
      %1010 = vmatprep.mubr.bf16.mxu0 0
      %1011 = vmatmul.mubr.bf16.gmra.mxu0 %v952
      %v1012 = vpop.f32.mrf.mxu0
      %v1013 = vadd.f32 0.0, %v1012
      %v1014 = vpop.f32.mrf.mxu0
      %v1015 = vpop.f32.mrf.mxu0
      %v1016 = vadd.f32 0.0, %v1015
      %v1017 = vpop.f32.mrf.mxu0
      %1018 = vdwg.mxu0
      %v1019 = vadd.f32 %v893, %v989
      %v1020 = vadd.f32 %v894, %v992
      %v1021 = vadd.f32 %v895, %v997
      %v1022 = vadd.f32 %v896, %v1000
      %v1023 = vadd.f32 %v897, %v1005
      %v1024 = vadd.f32 %v898, %v1008
      %v1025 = vadd.f32 %v899, %v1013
      %v1026 = vadd.f32 %v900, %v1016
      %v1027 = vpack.c.bf16 %v217, %v215
      %s1028 = scalar_lea.vmem %s1, 192
      %v1029 = vld [vmem:[%s1028] sm:$0xf]
      %v1030 = vld [vmem:[%s1028 + $0x4] sm:$0xf]
      %v1031 = vld [vmem:[%s1028 + $0x8] sm:$0xf]
      %v1032 = vld [vmem:[%s1028 + $0xc] sm:$0xf]
      %v1033 = vld [vmem:[%s1028 + $0x10] sm:$0xf]
      %v1034 = vld [vmem:[%s1028 + $0x14] sm:$0xf]
      %v1035 = vld [vmem:[%s1028 + $0x18] sm:$0xf]
      %v1036 = vld [vmem:[%s1028 + $0x1c] sm:$0xf]
      %v1045 = vunpack.c.l.b16 %v1029
      %v1046 = vunpack.c.l.b16 %v1030
      %v1047 = vunpack.c.l.b16 %v1031
      %v1048 = vunpack.c.l.b16 %v1032
      %v1049 = vunpack.c.l.b16 %v1033
      %v1050 = vunpack.c.l.b16 %v1034
      %v1051 = vunpack.c.l.b16 %v1035
      %v1052 = vunpack.c.l.b16 %v1036
      %v1053 = vpack.c.b16 %v1046, %v1045
      %v1054 = vpack.c.b16 %v1048, %v1047
      %v1055 = vpack.c.b16 %v1050, %v1049
      %v1056 = vpack.c.b16 %v1052, %v1051
      %v1062 = vsel %vm317, %v1027, 0
      %1064 = vmatprep.subr.bf16.mxu0 0
      %1065 = vmatpush1.bf16.msra.mxu0 0
      %1066 = vmatprep.subr.bf16.mxu0 0
      %1067 = vmatpush1.bf16.msra.mxu0 0
      %1068 = vmatprep.subr.bf16.mxu0 0
      %1069 = vmatpush1.bf16.msra.mxu0 0
      %1070 = vmatprep.subr.bf16.mxu0 0
      %1071 = vmatpush1.bf16.msra.mxu0 0
      %1072 = vmatprep.subr.bf16.mxu0 0
      %1073 = vmatpush1.bf16.msra.mxu0 %v1056
      %1074 = vmatprep.subr.bf16.mxu0 0
      %1075 = vmatpush1.bf16.msra.mxu0 %v1055
      %1076 = vmatprep.subr.bf16.mxu0 0
      %1077 = vmatpush1.bf16.msra.mxu0 %v1054
      %1078 = vmatprep.subr.bf16.mxu0 0
      %1079 = vmatpush1.bf16.msra.mxu0 %v1053
      %1080 = vmatprep.subr.bf16.mxu0 0
      %1081 = vmatpush2.bf16.msra.mxu0 0
      %1082 = vmatprep.subr.bf16.mxu0 0
      %1083 = vmatpush2.bf16.msra.mxu0 0
      %1084 = vmatprep.subr.bf16.mxu0 0
      %1085 = vmatpush2.bf16.msra.mxu0 0
      %1086 = vmatprep.subr.bf16.mxu0 0
      %1087 = vmatpush2.bf16.msra.mxu0 0
      %1088 = vmatprep.subr.bf16.mxu0 0
      %1089 = vmatpush2.bf16.msra.mxu0 0
      %1090 = vmatprep.subr.bf16.mxu0 0
      %1091 = vmatpush2.bf16.msra.mxu0 0
      %1092 = vmatprep.subr.bf16.mxu0 0
      %1093 = vmatpush2.bf16.msra.mxu0 0
      %1094 = vmatprep.subr.bf16.mxu0 0
      %1095 = vmatpush2.bf16.msra.mxu0 0
      %1096 = vmatprep.mubr.bf16.mxu0 0
      %1097 = vmatmul.mubr.bf16.gmra.mxu0 %v423
      %v1098 = vpop.f32.mrf.mxu0
      %v1099 = vadd.f32 0.0, %v1098
      %v1100 = vpop.f32.mrf.mxu0
      %v1101 = vpop.f32.mrf.mxu0
      %v1102 = vadd.f32 0.0, %v1101
      %v1103 = vpop.f32.mrf.mxu0
      %1104 = vmatprep.mubr.bf16.mxu0 0
      %1105 = vmatmul.mubr.bf16.gmra.mxu0 %v426
      %v1106 = vpop.f32.mrf.mxu0
      %v1107 = vadd.f32 0.0, %v1106
      %v1108 = vpop.f32.mrf.mxu0
      %v1109 = vpop.f32.mrf.mxu0
      %v1110 = vadd.f32 0.0, %v1109
      %v1111 = vpop.f32.mrf.mxu0
      %1112 = vmatprep.mubr.bf16.mxu0 0
      %1113 = vmatmul.mubr.bf16.gmra.mxu0 %v429
      %v1114 = vpop.f32.mrf.mxu0
      %v1115 = vadd.f32 0.0, %v1114
      %v1116 = vpop.f32.mrf.mxu0
      %v1117 = vpop.f32.mrf.mxu0
      %v1118 = vadd.f32 0.0, %v1117
      %v1119 = vpop.f32.mrf.mxu0
      %1120 = vmatprep.mubr.bf16.mxu0 0
      %1121 = vmatmul.mubr.bf16.gmra.mxu0 %v1062
      %v1122 = vpop.f32.mrf.mxu0
      %v1123 = vadd.f32 0.0, %v1122
      %v1124 = vpop.f32.mrf.mxu0
      %v1125 = vpop.f32.mrf.mxu0
      %v1126 = vadd.f32 0.0, %v1125
      %v1127 = vpop.f32.mrf.mxu0
      %1128 = vdwg.mxu0
      %v1129 = vadd.f32 %v1019, %v1099
      %v1130 = vadd.f32 %v1020, %v1102
      %v1131 = vadd.f32 %v1021, %v1107
      %v1132 = vadd.f32 %v1022, %v1110
      %v1133 = vadd.f32 %v1023, %v1115
      %v1134 = vadd.f32 %v1024, %v1118
      %v1135 = vadd.f32 %v1025, %v1123
      %v1136 = vadd.f32 %v1026, %v1126
      %v1139 = vrot.slane %v217, 1
      %v1140 = vrot.slane %v218, 1
      %v1141 = vsel %vm247, %v1139, %v1140
      %v1143 = vpack.c.bf16 %v1141, %v777
      %s1144 = scalar_lea.vmem %s1, 224
      %v1145 = vld [vmem:[%s1144] sm:$0xf]
      %v1146 = vld [vmem:[%s1144 + $0x4] sm:$0xf]
      %v1147 = vld [vmem:[%s1144 + $0x8] sm:$0xf]
      %v1148 = vld [vmem:[%s1144 + $0xc] sm:$0xf]
      %v1149 = vld [vmem:[%s1144 + $0x10] sm:$0xf]
      %v1150 = vld [vmem:[%s1144 + $0x14] sm:$0xf]
      %v1151 = vld [vmem:[%s1144 + $0x18] sm:$0xf]
      %v1152 = vld [vmem:[%s1144 + $0x1c] sm:$0xf]
      %v1161 = vunpack.c.l.b16 %v1145
      %v1162 = vunpack.c.l.b16 %v1146
      %v1163 = vunpack.c.l.b16 %v1147
      %v1164 = vunpack.c.l.b16 %v1148
      %v1165 = vunpack.c.l.b16 %v1149
      %v1166 = vunpack.c.l.b16 %v1150
      %v1167 = vunpack.c.l.b16 %v1151
      %v1168 = vunpack.c.l.b16 %v1152
      %v1169 = vpack.c.b16 %v1162, %v1161
      %v1170 = vpack.c.b16 %v1164, %v1163
      %v1171 = vpack.c.b16 %v1166, %v1165
      %v1172 = vpack.c.b16 %v1168, %v1167
      %v1178 = vsel %vm317, %v1143, 0
      %1180 = vmatprep.subr.bf16.mxu0 0
      %1181 = vmatpush1.bf16.msra.mxu0 0
      %1182 = vmatprep.subr.bf16.mxu0 0
      %1183 = vmatpush1.bf16.msra.mxu0 0
      %1184 = vmatprep.subr.bf16.mxu0 0
      %1185 = vmatpush1.bf16.msra.mxu0 0
      %1186 = vmatprep.subr.bf16.mxu0 0
      %1187 = vmatpush1.bf16.msra.mxu0 0
      %1188 = vmatprep.subr.bf16.mxu0 0
      %1189 = vmatpush1.bf16.msra.mxu0 %v1172
      %1190 = vmatprep.subr.bf16.mxu0 0
      %1191 = vmatpush1.bf16.msra.mxu0 %v1171
      %1192 = vmatprep.subr.bf16.mxu0 0
      %1193 = vmatpush1.bf16.msra.mxu0 %v1170
      %1194 = vmatprep.subr.bf16.mxu0 0
      %1195 = vmatpush1.bf16.msra.mxu0 %v1169
      %1196 = vmatprep.subr.bf16.mxu0 0
      %1197 = vmatpush2.bf16.msra.mxu0 0
      %1198 = vmatprep.subr.bf16.mxu0 0
      %1199 = vmatpush2.bf16.msra.mxu0 0
      %1200 = vmatprep.subr.bf16.mxu0 0
      %1201 = vmatpush2.bf16.msra.mxu0 0
      %1202 = vmatprep.subr.bf16.mxu0 0
      %1203 = vmatpush2.bf16.msra.mxu0 0
      %1204 = vmatprep.subr.bf16.mxu0 0
      %1205 = vmatpush2.bf16.msra.mxu0 0
      %1206 = vmatprep.subr.bf16.mxu0 0
      %1207 = vmatpush2.bf16.msra.mxu0 0
      %1208 = vmatprep.subr.bf16.mxu0 0
      %1209 = vmatpush2.bf16.msra.mxu0 0
      %1210 = vmatprep.subr.bf16.mxu0 0
      %1211 = vmatpush2.bf16.msra.mxu0 0
      %1212 = vmatprep.mubr.bf16.mxu0 0
      %1213 = vmatmul.mubr.bf16.gmra.mxu0 %v322
      %v1214 = vpop.f32.mrf.mxu0
      %v1215 = vadd.f32 0.0, %v1214
      %v1216 = vpop.f32.mrf.mxu0
      %v1217 = vpop.f32.mrf.mxu0
      %v1218 = vadd.f32 0.0, %v1217
      %v1219 = vpop.f32.mrf.mxu0
      %1220 = vmatprep.mubr.bf16.mxu0 0
      %1221 = vmatmul.mubr.bf16.gmra.mxu0 %v325
      %v1222 = vpop.f32.mrf.mxu0
      %v1223 = vadd.f32 0.0, %v1222
      %v1224 = vpop.f32.mrf.mxu0
      %v1225 = vpop.f32.mrf.mxu0
      %v1226 = vadd.f32 0.0, %v1225
      %v1227 = vpop.f32.mrf.mxu0
      %1228 = vmatprep.mubr.bf16.mxu0 0
      %1229 = vmatmul.mubr.bf16.gmra.mxu0 %v328
      %v1230 = vpop.f32.mrf.mxu0
      %v1231 = vadd.f32 0.0, %v1230
      %v1232 = vpop.f32.mrf.mxu0
      %v1233 = vpop.f32.mrf.mxu0
      %v1234 = vadd.f32 0.0, %v1233
      %v1235 = vpop.f32.mrf.mxu0
      %1236 = vmatprep.mubr.bf16.mxu0 0
      %1237 = vmatmul.mubr.bf16.gmra.mxu0 %v1178
      %v1238 = vpop.f32.mrf.mxu0
      %v1239 = vadd.f32 0.0, %v1238
      %v1240 = vpop.f32.mrf.mxu0
      %v1241 = vpop.f32.mrf.mxu0
      %v1242 = vadd.f32 0.0, %v1241
      %v1243 = vpop.f32.mrf.mxu0
      %1244 = vdwg.mxu0
      %v1245 = vadd.f32 %v1129, %v1215
      %v1246 = vadd.f32 %v1130, %v1218
      %v1247 = vadd.f32 %v1131, %v1223
      %v1248 = vadd.f32 %v1132, %v1226
      %v1249 = vadd.f32 %v1133, %v1231
      %v1250 = vadd.f32 %v1134, %v1234
      %v1251 = vadd.f32 %v1135, %v1239
      %v1252 = vadd.f32 %v1136, %v1242
      %v1253 = vrot.slane %v217, 2
      %v1254 = vrot.slane %v218, 2
      %v1255 = vsel %vm496, %v1253, %v1254
      %v1257 = vpack.c.bf16 %v1255, %v903
      %s1258 = scalar_lea.vmem %s1, 256
      %v1259 = vld [vmem:[%s1258] sm:$0xf]
      %v1260 = vld [vmem:[%s1258 + $0x4] sm:$0xf]
      %v1261 = vld [vmem:[%s1258 + $0x8] sm:$0xf]
      %v1262 = vld [vmem:[%s1258 + $0xc] sm:$0xf]
      %v1263 = vld [vmem:[%s1258 + $0x10] sm:$0xf]
      %v1264 = vld [vmem:[%s1258 + $0x14] sm:$0xf]
      %v1265 = vld [vmem:[%s1258 + $0x18] sm:$0xf]
      %v1266 = vld [vmem:[%s1258 + $0x1c] sm:$0xf]
      %v1275 = vunpack.c.l.b16 %v1259
      %v1276 = vunpack.c.l.b16 %v1260
      %v1277 = vunpack.c.l.b16 %v1261
      %v1278 = vunpack.c.l.b16 %v1262
      %v1279 = vunpack.c.l.b16 %v1263
      %v1280 = vunpack.c.l.b16 %v1264
      %v1281 = vunpack.c.l.b16 %v1265
      %v1282 = vunpack.c.l.b16 %v1266
      %v1283 = vpack.c.b16 %v1276, %v1275
      %v1284 = vpack.c.b16 %v1278, %v1277
      %v1285 = vpack.c.b16 %v1280, %v1279
      %v1286 = vpack.c.b16 %v1282, %v1281
      %v1292 = vsel %vm317, %v1257, 0
      %1294 = vmatprep.subr.bf16.mxu0 0
      %1295 = vmatpush1.bf16.msra.mxu0 0
      %1296 = vmatprep.subr.bf16.mxu0 0
      %1297 = vmatpush1.bf16.msra.mxu0 0
      %1298 = vmatprep.subr.bf16.mxu0 0
      %1299 = vmatpush1.bf16.msra.mxu0 0
      %1300 = vmatprep.subr.bf16.mxu0 0
      %1301 = vmatpush1.bf16.msra.mxu0 0
      %1302 = vmatprep.subr.bf16.mxu0 0
      %1303 = vmatpush1.bf16.msra.mxu0 %v1286
      %1304 = vmatprep.subr.bf16.mxu0 0
      %1305 = vmatpush1.bf16.msra.mxu0 %v1285
      %1306 = vmatprep.subr.bf16.mxu0 0
      %1307 = vmatpush1.bf16.msra.mxu0 %v1284
      %1308 = vmatprep.subr.bf16.mxu0 0
      %1309 = vmatpush1.bf16.msra.mxu0 %v1283
      %1310 = vmatprep.subr.bf16.mxu0 0
      %1311 = vmatpush2.bf16.msra.mxu0 0
      %1312 = vmatprep.subr.bf16.mxu0 0
      %1313 = vmatpush2.bf16.msra.mxu0 0
      %1314 = vmatprep.subr.bf16.mxu0 0
      %1315 = vmatpush2.bf16.msra.mxu0 0
      %1316 = vmatprep.subr.bf16.mxu0 0
      %1317 = vmatpush2.bf16.msra.mxu0 0
      %1318 = vmatprep.subr.bf16.mxu0 0
      %1319 = vmatpush2.bf16.msra.mxu0 0
      %1320 = vmatprep.subr.bf16.mxu0 0
      %1321 = vmatpush2.bf16.msra.mxu0 0
      %1322 = vmatprep.subr.bf16.mxu0 0
      %1323 = vmatpush2.bf16.msra.mxu0 0
      %1324 = vmatprep.subr.bf16.mxu0 0
      %1325 = vmatpush2.bf16.msra.mxu0 0
      %1326 = vmatprep.mubr.bf16.mxu0 0
      %1327 = vmatmul.mubr.bf16.gmra.mxu0 %v570
      %v1328 = vpop.f32.mrf.mxu0
      %v1329 = vadd.f32 0.0, %v1328
      %v1330 = vpop.f32.mrf.mxu0
      %v1331 = vpop.f32.mrf.mxu0
      %v1332 = vadd.f32 0.0, %v1331
      %v1333 = vpop.f32.mrf.mxu0
      %1334 = vmatprep.mubr.bf16.mxu0 0
      %1335 = vmatmul.mubr.bf16.gmra.mxu0 %v573
      %v1336 = vpop.f32.mrf.mxu0
      %v1337 = vadd.f32 0.0, %v1336
      %v1338 = vpop.f32.mrf.mxu0
      %v1339 = vpop.f32.mrf.mxu0
      %v1340 = vadd.f32 0.0, %v1339
      %v1341 = vpop.f32.mrf.mxu0
      %1342 = vmatprep.mubr.bf16.mxu0 0
      %1343 = vmatmul.mubr.bf16.gmra.mxu0 %v576
      %v1344 = vpop.f32.mrf.mxu0
      %v1345 = vadd.f32 0.0, %v1344
      %v1346 = vpop.f32.mrf.mxu0
      %v1347 = vpop.f32.mrf.mxu0
      %v1348 = vadd.f32 0.0, %v1347
      %v1349 = vpop.f32.mrf.mxu0
      %1350 = vmatprep.mubr.bf16.mxu0 0
      %1351 = vmatmul.mubr.bf16.gmra.mxu0 %v1292
      %v1352 = vpop.f32.mrf.mxu0
      %v1353 = vadd.f32 0.0, %v1352
      %v1354 = vpop.f32.mrf.mxu0
      %v1355 = vpop.f32.mrf.mxu0
      %v1356 = vadd.f32 0.0, %v1355
      %v1357 = vpop.f32.mrf.mxu0
      %1358 = vdwg.mxu0
      %v1359 = vadd.f32 %v1245, %v1329
      %v1360 = vadd.f32 %v1246, %v1332
      %v1361 = vadd.f32 %v1247, %v1337
      %v1362 = vadd.f32 %v1248, %v1340
      %v1363 = vadd.f32 %v1249, %v1345
      %v1364 = vadd.f32 %v1250, %v1348
      %v1365 = vadd.f32 %v1251, %v1353
      %v1366 = vadd.f32 %v1252, %v1356
      %v1367 = vld [vmem:[%s2] sm:$0x1]
      %v1369 = vlaneseq
      %v1370 = vshrl.u32 %v1369, 7
      %v1371 = vsub.s32 0, %v1370
      %v1372 = vrot.slane %v1367, %v1371
      %v1374 = vmul.f32 %v1359, %v1372
      %v1375 = vmul.f32 %v1360, %v1372
      %v1376 = vmul.f32 %v1361, %v1372
      %v1377 = vmul.f32 %v1362, %v1372
      %v1378 = vmul.f32 %v1363, %v1372
      %v1379 = vmul.f32 %v1364, %v1372
      %v1380 = vmul.f32 %v1365, %v1372
      %v1381 = vmul.f32 %v1366, %v1372
      %v1382 = vld [vmem:[%s3] sm:$0x1]
      %v1384 = vlaneseq
      %v1385 = vshrl.u32 %v1384, 7
      %v1386 = vsub.s32 0, %v1385
      %v1387 = vrot.slane %v1382, %v1386
      %v1389 = vadd.f32 %v1374, %v1387
      %v1390 = vadd.f32 %v1375, %v1387
      %v1391 = vadd.f32 %v1376, %v1387
      %v1392 = vadd.f32 %v1377, %v1387
      %v1393 = vadd.f32 %v1378, %v1387
      %v1394 = vadd.f32 %v1379, %v1387
      %v1395 = vadd.f32 %v1380, %v1387
      %v1396 = vadd.f32 %v1381, %v1387
      %v1397 = vmax.f32 %v1389, 0.0
      %v1398 = vmax.f32 %v1390, 0.0
      %v1399 = vmax.f32 %v1391, 0.0
      %v1400 = vmax.f32 %v1392, 0.0
      %v1401 = vmax.f32 %v1393, 0.0
      %v1402 = vmax.f32 %v1394, 0.0
      %v1403 = vmax.f32 %v1395, 0.0
      %v1404 = vmax.f32 %v1396, 0.0
      %1405 = vst.msk [vmem:[%s197] sm:$0xff] %vm317, %v1397
      %1406 = vst.msk [vmem:[%s197 + $0x8] sm:$0xff] %vm317, %v1398
      %1407 = vst.msk [vmem:[%s197 + $0x10] sm:$0xff] %vm317, %v1399
      %1408 = vst.msk [vmem:[%s197 + $0x18] sm:$0xff] %vm317, %v1400
      %1409 = vst.msk [vmem:[%s197 + $0x20] sm:$0xff] %vm317, %v1401
      %1410 = vst.msk [vmem:[%s197 + $0x28] sm:$0xff] %vm317, %v1402
      %1411 = vst.msk [vmem:[%s197 + $0x30] sm:$0xff] %vm317, %v1403
      %1412 = vst.msk [vmem:[%s197 + $0x38] sm:$0xff] %vm317, %v1404
      %p1413 = scmp.lt.s32.totalorder %s15, 1
      %s1414 = scalar_select %p1413, %s15, 1
      %s1415 = smul.addr %s1414, 8
      %s1416 = smul.addr %s1415, 8
      %s1417 = scalar_lea.vmem %s4, %s1416
      // Predicated region
      $region37: #{pointpillar_forward.13} parent=35 // pred_check
        %p1418 = pneg %p122
      $region38: #{pointpillar_forward.13} parent=35 // pred_check_branch
        %1420 = sbr.rel (%p1418) target = $region40
      $region39: #{pointpillar_forward.13} parent=35 // pred_region
        _
      $region40: #{pointpillar_forward.13} parent=35 // pred_fallthru
        _
    $region36: #{pointpillar_forward.13} parent=5 // pred_fallthru
      _
    %p1421 = scmp.le.s32.totalorder 2, %s10
    // Predicated region
    $region41: #{pointpillar_forward.13} parent=5 // pred_check
      %p1422 = pneg %p1421
    $region42: #{pointpillar_forward.13} parent=5 // pred_check_branch
      %1424 = sbr.rel (%p1422) target = $region44
    $region43: #{pointpillar_forward.13} parent=5 // pred_region
      %s1425 = ssub.s32 %s10, 2
      // Predicated region
      $region45: #{pointpillar_forward.13} parent=43 // pred_check
        %p1426 = pneg %p128
      $region46: #{pointpillar_forward.13} parent=43 // pred_check_branch
        %1428 = sbr.rel (%p1426) target = $region48
      $region47: #{pointpillar_forward.13} parent=43 // pred_region
        %p1429 = scmp.lt.s32.totalorder %s16, 1
        %s1430 = scalar_select %p1429, %s16, 1
        %s1431 = smul.addr %s1430, 8
        %s1432 = smul.addr %s1431, 8
        %s1433 = scalar_lea.vmem %s4, %s1432
      $region48: #{pointpillar_forward.13} parent=43 // pred_fallthru
        _
    $region44: #{pointpillar_forward.13} parent=5 // pred_fallthru
      _
  $region6: #{pointpillar_forward.13} parent=0 // loop_footer
    %s14 = sadd.s32 1, %s10
  $region7: #{pointpillar_forward.13} parent=0 // loop_footer_branch
    %9 = sbr.rel target = $region3
  $region8: #{pointpillar_forward.13} parent=0 // loop_exit
    _

// kernel: pointpillar_forward.12
$region0: #{pointpillar_forward.12}
  #allocation0 [shape = 'u32[]', space=smem, size = 0x4, offset = 0x4, fixed_abs, tag = 'smem constant byte address 0x4 - core index']
  #allocation1 [shape = 'u32[144,128]{1,0:T(1,128)}', space=vmem, size = 0x12000, scoped, tag = 'internal scratch']
  %s0 = inlined_call_operand.vmem [shape: f32[2,9,9,32], index: 0, kind: input, shape index: {}]
  %s1 = inlined_call_operand.vmem [shape: f32[2,9,9,32], index: 1, kind: input, shape index: {}]
  %s2 = inlined_call_operand.vmem [shape: f32[2,9,9,32], index: 2, kind: input, shape index: {}]
  %s3 = inlined_call_operand.vmem [shape: f32[2,9,9,32], index: 3, kind: input, shape index: {}]
  %s4 = inlined_call_operand.vmem [shape: bf16[9,32,64], index: 4, kind: input, shape index: {}]
  %s5 = inlined_call_operand.vmem [shape: f32[1,64], index: 5, kind: input, shape index: {}]
  %s6 = inlined_call_operand.vmem [shape: f32[1,64], index: 6, kind: input, shape index: {}]
  %s7 = inlined_call_operand.vmem [shape: f32[2,8,8,64], index: 7, kind: output, shape index: {}]
  %s8 = sld [smem:[#allocation0]]
  $region61: #{pointpillar_forward.12} parent=0
    _
  %s10 = ssub.s32 1, %s8
  %s11 = scalar_select 0, %s10, %s8
  loop: start=0, step=1, limit=4
  $region2: #{pointpillar_forward.12} parent=0 // loop_pre_header
    _
  $region3: #{pointpillar_forward.12} parent=0 // loop_header
    %s13 = sphi 0, %s17
    %p14 = scmp.ge.s32.totalorder %s13, 4
    %s23 = sphi 0, %s25
    %s26 = sphi 0, %s23
    %s27 = sphi 0, %s26
    %s43 = sphi 0, %s27
    %s49 = sphi 0, %s51
    %s52 = sphi 0, %s49
    %s53 = sphi 0, %s52
    %s69 = sphi 0, %s53
    %s75 = sphi 0, %s77
    %s78 = sphi 0, %s75
    %s79 = sphi 0, %s78
    %s95 = sphi 0, %s79
    %s101 = sphi 0, %s103
    %s104 = sphi 0, %s101
    %s105 = sphi 0, %s104
    %s121 = sphi 0, %s105
    %s125 = sphi 0, %s125
    %s127 = sphi 0, %s125
    %s128 = sphi 0, %s127
    %s142 = sphi 0, %s128
    %s146 = sphi 0, %s146
    %s148 = sphi 0, %s146
    %s149 = sphi 0, %s148
    %s163 = sphi 0, %s149
    %s167 = sphi 0, %s167
    %s169 = sphi 0, %s167
    %s170 = sphi 0, %s169
    %s184 = sphi 0, %s170
    %s190 = sphi 0, %s192
    %s193 = sphi 0, %s190
    %s194 = sphi 0, %s193
    %s210 = sphi 0, %s194
  $region4: #{pointpillar_forward.12} parent=0 // loop_header_branch
    %16 = sbr.rel (%p14) target = $region8
  $region5: #{pointpillar_forward.12} parent=0 // loop_body
    %s18 = ssub.s32 %s13, 1
    %s19 = ssub.s32 %s13, 2
    %s20 = sadd.s32 %s13, 1
    %s21 = ssub.s32 %s13, %s20
    %p22 = scmp.eq.s32.totalorder %s21, 0
    %s24 = sadd.s32 %s23, 1
    %s25 = scalar_select %p22, %s23, %s24
    %p28 = pneg %p22
    %p29 = scmp.eq.s32.totalorder %s13, 1
    %p30 = por %p28, %p29
    %p31 = scmp.ne.s32.totalorder %s23, %s26
    %p32 = scmp.eq.s32.totalorder %s13, 0
    %p33 = por %p31, %p32
    %p34 = scmp.ne.s32.totalorder %s23, %s26
    %p35 = scmp.eq.s32.totalorder %s18, 1
    %p36 = por %p34, %p35
    %p37 = scmp.ne.s32.totalorder %s26, %s27
    %p38 = scmp.eq.s32.totalorder %s18, 0
    %p39 = por %p37, %p38
    %p40 = scmp.ne.s32.totalorder %s26, %s27
    %p41 = scmp.eq.s32.totalorder %s19, 1
    %p42 = por %p40, %p41
    %p44 = scmp.ne.s32.totalorder %s27, %s43
    %p45 = scmp.eq.s32.totalorder %s19, 0
    %p46 = por %p44, %p45
    %s47 = ssub.s32 %s13, %s20
    %p48 = scmp.eq.s32.totalorder %s47, 0
    %s50 = sadd.s32 %s49, 1
    %s51 = scalar_select %p48, %s49, %s50
    %p54 = pneg %p48
    %p55 = scmp.eq.s32.totalorder %s13, 1
    %p56 = por %p54, %p55
    %p57 = scmp.ne.s32.totalorder %s49, %s52
    %p58 = scmp.eq.s32.totalorder %s13, 0
    %p59 = por %p57, %p58
    %p60 = scmp.ne.s32.totalorder %s49, %s52
    %p61 = scmp.eq.s32.totalorder %s18, 1
    %p62 = por %p60, %p61
    %p63 = scmp.ne.s32.totalorder %s52, %s53
    %p64 = scmp.eq.s32.totalorder %s18, 0
    %p65 = por %p63, %p64
    %p66 = scmp.ne.s32.totalorder %s52, %s53
    %p67 = scmp.eq.s32.totalorder %s19, 1
    %p68 = por %p66, %p67
    %p70 = scmp.ne.s32.totalorder %s53, %s69
    %p71 = scmp.eq.s32.totalorder %s19, 0
    %p72 = por %p70, %p71
    %s73 = ssub.s32 %s13, %s20
    %p74 = scmp.eq.s32.totalorder %s73, 0
    %s76 = sadd.s32 %s75, 1
    %s77 = scalar_select %p74, %s75, %s76
    %p80 = pneg %p74
    %p81 = scmp.eq.s32.totalorder %s13, 1
    %p82 = por %p80, %p81
    %p83 = scmp.ne.s32.totalorder %s75, %s78
    %p84 = scmp.eq.s32.totalorder %s13, 0
    %p85 = por %p83, %p84
    %p86 = scmp.ne.s32.totalorder %s75, %s78
    %p87 = scmp.eq.s32.totalorder %s18, 1
    %p88 = por %p86, %p87
    %p89 = scmp.ne.s32.totalorder %s78, %s79
    %p90 = scmp.eq.s32.totalorder %s18, 0
    %p91 = por %p89, %p90
    %p92 = scmp.ne.s32.totalorder %s78, %s79
    %p93 = scmp.eq.s32.totalorder %s19, 1
    %p94 = por %p92, %p93
    %p96 = scmp.ne.s32.totalorder %s79, %s95
    %p97 = scmp.eq.s32.totalorder %s19, 0
    %p98 = por %p96, %p97
    %s99 = ssub.s32 %s13, %s20
    %p100 = scmp.eq.s32.totalorder %s99, 0
    %s102 = sadd.s32 %s101, 1
    %s103 = scalar_select %p100, %s101, %s102
    %p106 = pneg %p100
    %p107 = scmp.eq.s32.totalorder %s13, 1
    %p108 = por %p106, %p107
    %p109 = scmp.ne.s32.totalorder %s101, %s104
    %p110 = scmp.eq.s32.totalorder %s13, 0
    %p111 = por %p109, %p110
    %p112 = scmp.ne.s32.totalorder %s101, %s104
    %p113 = scmp.eq.s32.totalorder %s18, 1
    %p114 = por %p112, %p113
    %p115 = scmp.ne.s32.totalorder %s104, %s105
    %p116 = scmp.eq.s32.totalorder %s18, 0
    %p117 = por %p115, %p116
    %p118 = scmp.ne.s32.totalorder %s104, %s105
    %p119 = scmp.eq.s32.totalorder %s19, 1
    %p120 = por %p118, %p119
    %p122 = scmp.ne.s32.totalorder %s105, %s121
    %p123 = scmp.eq.s32.totalorder %s19, 0
    %p124 = por %p122, %p123
    %s126 = sadd.s32 %s125, 1
    %p129 = scmp.eq.s32.totalorder %s13, 1
    %p130 = scmp.ne.s32.totalorder %s125, %s127
    %p131 = scmp.eq.s32.totalorder %s13, 0
    %p132 = por %p130, %p131
    %p133 = scmp.ne.s32.totalorder %s125, %s127
    %p134 = scmp.eq.s32.totalorder %s18, 1
    %p135 = por %p133, %p134
    %p136 = scmp.ne.s32.totalorder %s127, %s128
    %p137 = scmp.eq.s32.totalorder %s18, 0
    %p138 = por %p136, %p137
    %p139 = scmp.ne.s32.totalorder %s127, %s128
    %p140 = scmp.eq.s32.totalorder %s19, 1
    %p141 = por %p139, %p140
    %p143 = scmp.ne.s32.totalorder %s128, %s142
    %p144 = scmp.eq.s32.totalorder %s19, 0
    %p145 = por %p143, %p144
    %s147 = sadd.s32 %s146, 1
    %p150 = scmp.eq.s32.totalorder %s13, 1
    %p151 = scmp.ne.s32.totalorder %s146, %s148
    %p152 = scmp.eq.s32.totalorder %s13, 0
    %p153 = por %p151, %p152
    %p154 = scmp.ne.s32.totalorder %s146, %s148
    %p155 = scmp.eq.s32.totalorder %s18, 1
    %p156 = por %p154, %p155
    %p157 = scmp.ne.s32.totalorder %s148, %s149
    %p158 = scmp.eq.s32.totalorder %s18, 0
    %p159 = por %p157, %p158
    %p160 = scmp.ne.s32.totalorder %s148, %s149
    %p161 = scmp.eq.s32.totalorder %s19, 1
    %p162 = por %p160, %p161
    %p164 = scmp.ne.s32.totalorder %s149, %s163
    %p165 = scmp.eq.s32.totalorder %s19, 0
    %p166 = por %p164, %p165
    %s168 = sadd.s32 %s167, 1
    %p171 = scmp.eq.s32.totalorder %s13, 1
    %p172 = scmp.ne.s32.totalorder %s167, %s169
    %p173 = scmp.eq.s32.totalorder %s13, 0
    %p174 = por %p172, %p173
    %p175 = scmp.ne.s32.totalorder %s167, %s169
    %p176 = scmp.eq.s32.totalorder %s18, 1
    %p177 = por %p175, %p176
    %p178 = scmp.ne.s32.totalorder %s169, %s170
    %p179 = scmp.eq.s32.totalorder %s18, 0
    %p180 = por %p178, %p179
    %p181 = scmp.ne.s32.totalorder %s169, %s170
    %p182 = scmp.eq.s32.totalorder %s19, 1
    %p183 = por %p181, %p182
    %p185 = scmp.ne.s32.totalorder %s170, %s184
    %p186 = scmp.eq.s32.totalorder %s19, 0
    %p187 = por %p185, %p186
    %s188 = ssub.s32 %s13, %s20
    %p189 = scmp.eq.s32.totalorder %s188, 0
    %s191 = sadd.s32 %s190, 1
    %s192 = scalar_select %p189, %s190, %s191
    %p195 = pneg %p189
    %p196 = scmp.eq.s32.totalorder %s13, 1
    %p197 = por %p195, %p196
    %p198 = scmp.ne.s32.totalorder %s190, %s193
    %p199 = scmp.eq.s32.totalorder %s13, 0
    %p200 = por %p198, %p199
    %p201 = scmp.ne.s32.totalorder %s190, %s193
    %p202 = scmp.eq.s32.totalorder %s18, 1
    %p203 = por %p201, %p202
    %p204 = scmp.ne.s32.totalorder %s193, %s194
    %p205 = scmp.eq.s32.totalorder %s18, 0
    %p206 = por %p204, %p205
    %p207 = scmp.ne.s32.totalorder %s193, %s194
    %p208 = scmp.eq.s32.totalorder %s19, 1
    %p209 = por %p207, %p208
    %p211 = scmp.ne.s32.totalorder %s194, %s210
    %p212 = scmp.eq.s32.totalorder %s19, 0
    %p213 = por %p211, %p212
    %p214 = scmp.le.s32.totalorder 1, %s13
    %p215 = scmp.lt.s32.totalorder %s13, 3
    %p216 = pnand %p214, %p215
    %p217 = pneg %p216
    // Predicated region
    $region9: #{pointpillar_forward.12} parent=5 // pred_check
      _
    $region10: #{pointpillar_forward.12} parent=5 // pred_check_branch
      %219 = sbr.rel (%p216) target = $region12
    $region11: #{pointpillar_forward.12} parent=5 // pred_region
      %s220 = ssub.s32 %s13, 1
      // Predicated region
      $region13: #{pointpillar_forward.12} parent=11 // pred_check
        %p221 = pneg %p138
      $region14: #{pointpillar_forward.12} parent=11 // pred_check_branch
        %223 = sbr.rel (%p221) target = $region16
      $region15: #{pointpillar_forward.12} parent=11 // pred_region
        _
      $region16: #{pointpillar_forward.12} parent=11 // pred_fallthru
        _
      // Predicated region
      $region17: #{pointpillar_forward.12} parent=11 // pred_check
        %p224 = pneg %p159
      $region18: #{pointpillar_forward.12} parent=11 // pred_check_branch
        %226 = sbr.rel (%p224) target = $region20
      $region19: #{pointpillar_forward.12} parent=11 // pred_region
        _
      $region20: #{pointpillar_forward.12} parent=11 // pred_fallthru
        _
      // Predicated region
      $region21: #{pointpillar_forward.12} parent=11 // pred_check
        %p227 = pneg %p180
      $region22: #{pointpillar_forward.12} parent=11 // pred_check_branch
        %229 = sbr.rel (%p227) target = $region24
      $region23: #{pointpillar_forward.12} parent=11 // pred_region
        _
      $region24: #{pointpillar_forward.12} parent=11 // pred_fallthru
        _
    $region12: #{pointpillar_forward.12} parent=5 // pred_fallthru
      _
    %p230 = scmp.lt.s32.totalorder %s13, 2
    // Predicated region
    $region25: #{pointpillar_forward.12} parent=5 // pred_check
      %p231 = pneg %p230
    $region26: #{pointpillar_forward.12} parent=5 // pred_check_branch
      %233 = sbr.rel (%p231) target = $region28
    $region27: #{pointpillar_forward.12} parent=5 // pred_region
      // Predicated region
      $region29: #{pointpillar_forward.12} parent=27 // pred_check
        %p234 = pneg %p33
      $region30: #{pointpillar_forward.12} parent=27 // pred_check_branch
        %236 = sbr.rel (%p234) target = $region32
      $region31: #{pointpillar_forward.12} parent=27 // pred_region
        %p237 = scmp.lt.s32.totalorder %s13, 1
        %s238 = scalar_select %p237, %s13, 1
        %s239 = smul.addr %s238, 18
        %s240 = smul.addr %s239, 8
        %s241 = scalar_lea.vmem %s0, %s240
      $region32: #{pointpillar_forward.12} parent=27 // pred_fallthru
        _
      // Predicated region
      $region33: #{pointpillar_forward.12} parent=27 // pred_check
        %p242 = pneg %p59
      $region34: #{pointpillar_forward.12} parent=27 // pred_check_branch
        %244 = sbr.rel (%p242) target = $region36
      $region35: #{pointpillar_forward.12} parent=27 // pred_region
        %p245 = scmp.lt.s32.totalorder %s13, 1
        %s246 = scalar_select %p245, %s13, 1
        %s247 = smul.addr %s246, 18
        %s248 = smul.addr %s247, 8
        %s249 = scalar_lea.vmem %s1, %s248
      $region36: #{pointpillar_forward.12} parent=27 // pred_fallthru
        _
      // Predicated region
      $region37: #{pointpillar_forward.12} parent=27 // pred_check
        %p250 = pneg %p85
      $region38: #{pointpillar_forward.12} parent=27 // pred_check_branch
        %252 = sbr.rel (%p250) target = $region40
      $region39: #{pointpillar_forward.12} parent=27 // pred_region
        %p253 = scmp.lt.s32.totalorder %s13, 1
        %s254 = scalar_select %p253, %s13, 1
        %s255 = smul.addr %s254, 18
        %s256 = smul.addr %s255, 8
        %s257 = scalar_lea.vmem %s2, %s256
      $region40: #{pointpillar_forward.12} parent=27 // pred_fallthru
        _
      // Predicated region
      $region41: #{pointpillar_forward.12} parent=27 // pred_check
        %p258 = pneg %p111
      $region42: #{pointpillar_forward.12} parent=27 // pred_check_branch
        %260 = sbr.rel (%p258) target = $region44
      $region43: #{pointpillar_forward.12} parent=27 // pred_region
        %p261 = scmp.lt.s32.totalorder %s13, 1
        %s262 = scalar_select %p261, %s13, 1
        %s263 = smul.addr %s262, 18
        %s264 = smul.addr %s263, 8
        %s265 = scalar_lea.vmem %s3, %s264
      $region44: #{pointpillar_forward.12} parent=27 // pred_fallthru
        _
    $region28: #{pointpillar_forward.12} parent=5 // pred_fallthru
      _
    %p266 = scmp.le.s32.totalorder 1, %s13
    %p267 = scmp.lt.s32.totalorder %s13, 3
    %p268 = pnand %p266, %p267
    %p269 = pneg %p268
    // Predicated region
    $region45: #{pointpillar_forward.12} parent=5 // pred_check
      _
    $region46: #{pointpillar_forward.12} parent=5 // pred_check_branch
      %271 = sbr.rel (%p268) target = $region48
    $region47: #{pointpillar_forward.12} parent=5 // pred_region
      %s272 = ssub.s32 %s13, 1
      %p273 = scmp.lt.s32.totalorder %s18, 1
      %s274 = scalar_select %p273, %s18, 1
      %s275 = smul.addr %s274, 18
      %s276 = smul.addr %s275, 8
      %s277 = scalar_lea.vmem %s0, %s276
      %p278 = pneg %p39
      %p279 = pneg %p36
      %p280 = scmp.lt.s32.totalorder %s18, 1
      %s281 = scalar_select %p280, %s18, 1
      %s282 = smul.addr %s281, 18
      %s283 = smul.addr %s282, 8
      %s284 = scalar_lea.vmem %s1, %s283
      %p285 = pneg %p65
      %p286 = pneg %p62
      %p287 = scmp.lt.s32.totalorder %s18, 1
      %s288 = scalar_select %p287, %s18, 1
      %s289 = smul.addr %s288, 18
      %s290 = smul.addr %s289, 8
      %s291 = scalar_lea.vmem %s2, %s290
      %p292 = pneg %p91
      %p293 = pneg %p88
      %p294 = scmp.lt.s32.totalorder %s18, 1
      %s295 = scalar_select %p294, %s18, 1
      %s296 = smul.addr %s295, 18
      %s297 = smul.addr %s296, 8
      %s298 = scalar_lea.vmem %s3, %s297
      %p299 = pneg %p117
      %p300 = pneg %p114
      %p301 = pneg %p138
      %p302 = pneg %p135
      %p303 = pneg %p159
      %p304 = pneg %p156
      %p305 = pneg %p180
      %p306 = pneg %p177
      %p307 = pneg %p206
      %p308 = pneg %p203
      %p309 = scmp.lt.s32.totalorder %s18, 1
      %s310 = scalar_select %p309, %s18, 1
      %s311 = smul.addr %s310, 8
      %s312 = smul.addr %s311, 8
      %s313 = scalar_lea.vmem %s7, %s312
      %p314 = scmp.lt.s32.totalorder %s18, 1
      %s315 = scalar_select %p314, %s18, 1
      %s316 = smul.addr %s315, 18
      %s317 = smul.addr %s316, 8
      %s318 = scalar_lea.vmem %s0, %s317
      %p319 = scmp.lt.s32.totalorder %s18, 1
      %s320 = scalar_select %p319, %s18, 1
      %s321 = smul.addr %s320, 18
      %s322 = smul.addr %s321, 8
      %s323 = scalar_lea.vmem %s1, %s322
      %p324 = scmp.lt.s32.totalorder %s18, 1
      %s325 = scalar_select %p324, %s18, 1
      %s326 = smul.addr %s325, 18
      %s327 = smul.addr %s326, 8
      %s328 = scalar_lea.vmem %s2, %s327
      %p329 = scmp.lt.s32.totalorder %s18, 1
      %s330 = scalar_select %p329, %s18, 1
      %s331 = smul.addr %s330, 18
      %s332 = smul.addr %s331, 8
      %s333 = scalar_lea.vmem %s3, %s332
      %p334 = scmp.lt.s32.totalorder %s18, 1
      %s335 = scalar_select %p334, %s18, 1
      %s336 = smul.addr %s335, 8
      %s337 = smul.addr %s336, 8
      %s338 = scalar_lea.vmem %s7, %s337
      %v340 = vld [vmem:[%s318] sm:$0xff]
      %v341 = vld [vmem:[%s318 + $0x8] sm:$0x1]
      %v342 = vld [vmem:[%s318 + $0x10] sm:$0xff]
      %v343 = vld [vmem:[%s318 + $0x18] sm:$0x1]
      %v344 = vld [vmem:[%s318 + $0x20] sm:$0xff]
      %v345 = vld [vmem:[%s318 + $0x28] sm:$0x1]
      %v346 = vld [vmem:[%s318 + $0x30] sm:$0xff]
      %v347 = vld [vmem:[%s318 + $0x38] sm:$0x1]
      %v348 = vld [vmem:[%s318 + $0x40] sm:$0xff]
      %v349 = vld [vmem:[%s318 + $0x48] sm:$0x1]
      %v350 = vld [vmem:[%s318 + $0x50] sm:$0xff]
      %v351 = vld [vmem:[%s318 + $0x58] sm:$0x1]
      %v352 = vld [vmem:[%s318 + $0x60] sm:$0xff]
      %v353 = vld [vmem:[%s318 + $0x68] sm:$0x1]
      %v354 = vld [vmem:[%s318 + $0x70] sm:$0xff]
      %v355 = vld [vmem:[%s318 + $0x78] sm:$0x1]
      %v356 = vld [vmem:[%s318 + $0x80] sm:$0xff]
      %v357 = vld [vmem:[%s318 + $0x88] sm:$0x1]
      %v358 = vld [vmem:[%s323] sm:$0xff]
      %v359 = vld [vmem:[%s323 + $0x10] sm:$0xff]
      %v360 = vld [vmem:[%s323 + $0x20] sm:$0xff]
      %v361 = vld [vmem:[%s323 + $0x30] sm:$0xff]
      %v362 = vld [vmem:[%s323 + $0x40] sm:$0xff]
      %v363 = vld [vmem:[%s323 + $0x50] sm:$0xff]
      %v364 = vld [vmem:[%s323 + $0x60] sm:$0xff]
      %v365 = vld [vmem:[%s323 + $0x70] sm:$0xff]
      %v366 = vld [vmem:[%s323 + $0x80] sm:$0xff]
      %v367 = vld [vmem:[%s328] sm:$0xff]
      %v368 = vld [vmem:[%s328 + $0x8] sm:$0x1]
      %v369 = vld [vmem:[%s328 + $0x10] sm:$0xff]
      %v370 = vld [vmem:[%s328 + $0x18] sm:$0x1]
      %v371 = vld [vmem:[%s328 + $0x20] sm:$0xff]
      %v372 = vld [vmem:[%s328 + $0x28] sm:$0x1]
      %v373 = vld [vmem:[%s328 + $0x30] sm:$0xff]
      %v374 = vld [vmem:[%s328 + $0x38] sm:$0x1]
      %v375 = vld [vmem:[%s328 + $0x40] sm:$0xff]
      %v376 = vld [vmem:[%s328 + $0x48] sm:$0x1]
      %v377 = vld [vmem:[%s328 + $0x50] sm:$0xff]
      %v378 = vld [vmem:[%s328 + $0x58] sm:$0x1]
      %v379 = vld [vmem:[%s328 + $0x60] sm:$0xff]
      %v380 = vld [vmem:[%s328 + $0x68] sm:$0x1]
      %v381 = vld [vmem:[%s328 + $0x70] sm:$0xff]
      %v382 = vld [vmem:[%s328 + $0x78] sm:$0x1]
      %v383 = vld [vmem:[%s333] sm:$0xff]
      %v384 = vld [vmem:[%s333 + $0x10] sm:$0xff]
      %v385 = vld [vmem:[%s333 + $0x20] sm:$0xff]
      %v386 = vld [vmem:[%s333 + $0x30] sm:$0xff]
      %v387 = vld [vmem:[%s333 + $0x40] sm:$0xff]
      %v388 = vld [vmem:[%s333 + $0x50] sm:$0xff]
      %v389 = vld [vmem:[%s333 + $0x60] sm:$0xff]
      %v390 = vld [vmem:[%s333 + $0x70] sm:$0xff]
      %v391 = vpack.c.bf16 %v342, %v340
      %v392 = vpack.c.bf16 %v346, %v344
      %v393 = vpack.c.bf16 %v350, %v348
      %v394 = vpack.c.bf16 %v354, %v352
      %v395 = vld [vmem:[%s4] sm:$0xf]
      %v396 = vld [vmem:[%s4 + $0x4] sm:$0xf]
      %v397 = vld [vmem:[%s4 + $0x8] sm:$0xf]
      %v398 = vld [vmem:[%s4 + $0xc] sm:$0xf]
      %v399 = vpack.c.bf16 %v359, %v358
      %v400 = vpack.c.bf16 %v361, %v360
      %v401 = vpack.c.bf16 %v363, %v362
      %v402 = vpack.c.bf16 %v365, %v364
      %s403 = scalar_lea.vmem %s4, 16
      %v404 = vld [vmem:[%s403] sm:$0xf]
      %v405 = vld [vmem:[%s403 + $0x4] sm:$0xf]
      %v406 = vld [vmem:[%s403 + $0x8] sm:$0xf]
      %v407 = vld [vmem:[%s403 + $0xc] sm:$0xf]
      %v412 = vunpack.c.l.b16 %v404
      %v413 = vunpack.c.l.b16 %v405
      %v414 = vunpack.c.l.b16 %v406
      %v415 = vunpack.c.l.b16 %v407
      %v416 = vpack.c.b16 %v413, %v412
      %v417 = vpack.c.b16 %v415, %v414
      %vm420 = vcmask 261120
      %v422 = vsel %vm420, %v399, 0
      %v425 = vsel %vm420, %v400, 0
      %v428 = vsel %vm420, %v401, 0
      %v431 = vsel %vm420, %v402, 0
      %433 = vmatprep.subr.bf16.mxu0 0
      %434 = vmatpush1.bf16.msra.mxu0 0
      %435 = vmatprep.subr.bf16.mxu0 0
      %436 = vmatpush1.bf16.msra.mxu0 0
      %437 = vmatprep.subr.bf16.mxu0 0
      %438 = vmatpush1.bf16.msra.mxu0 0
      %439 = vmatprep.subr.bf16.mxu0 0
      %440 = vmatpush1.bf16.msra.mxu0 0
      %441 = vmatprep.subr.bf16.mxu0 0
      %442 = vmatpush1.bf16.msra.mxu0 0
      %443 = vmatprep.subr.bf16.mxu0 0
      %444 = vmatpush1.bf16.msra.mxu0 0
      %445 = vmatprep.subr.bf16.mxu0 0
      %446 = vmatpush1.bf16.msra.mxu0 %v417
      %447 = vmatprep.subr.bf16.mxu0 0
      %448 = vmatpush1.bf16.msra.mxu0 %v416
      %449 = vmatprep.subr.bf16.mxu0 0
      %450 = vmatpush2.bf16.msra.mxu0 0
      %451 = vmatprep.subr.bf16.mxu0 0
      %452 = vmatpush2.bf16.msra.mxu0 0
      %453 = vmatprep.subr.bf16.mxu0 0
      %454 = vmatpush2.bf16.msra.mxu0 0
      %455 = vmatprep.subr.bf16.mxu0 0
      %456 = vmatpush2.bf16.msra.mxu0 0
      %457 = vmatprep.subr.bf16.mxu0 0
      %458 = vmatpush2.bf16.msra.mxu0 0
      %459 = vmatprep.subr.bf16.mxu0 0
      %460 = vmatpush2.bf16.msra.mxu0 0
      %461 = vmatprep.subr.bf16.mxu0 0
      %462 = vmatpush2.bf16.msra.mxu0 0
      %463 = vmatprep.subr.bf16.mxu0 0
      %464 = vmatpush2.bf16.msra.mxu0 0
      %465 = vmatprep.mubr.bf16.mxu0 0
      %466 = vmatmul.mubr.bf16.gmra.mxu0 %v422
      %v467 = vpop.f32.mrf.mxu0
      %v468 = vadd.f32 0.0, %v467
      %v469 = vpop.f32.mrf.mxu0
      %v470 = vpop.f32.mrf.mxu0
      %v471 = vadd.f32 0.0, %v470
      %v472 = vpop.f32.mrf.mxu0
      %473 = vmatprep.mubr.bf16.mxu0 0
      %474 = vmatmul.mubr.bf16.gmra.mxu0 %v425
      %v475 = vpop.f32.mrf.mxu0
      %v476 = vadd.f32 0.0, %v475
      %v477 = vpop.f32.mrf.mxu0
      %v478 = vpop.f32.mrf.mxu0
      %v479 = vadd.f32 0.0, %v478
      %v480 = vpop.f32.mrf.mxu0
      %481 = vmatprep.mubr.bf16.mxu0 0
      %482 = vmatmul.mubr.bf16.gmra.mxu0 %v428
      %v483 = vpop.f32.mrf.mxu0
      %v484 = vadd.f32 0.0, %v483
      %v485 = vpop.f32.mrf.mxu0
      %v486 = vpop.f32.mrf.mxu0
      %v487 = vadd.f32 0.0, %v486
      %v488 = vpop.f32.mrf.mxu0
      %489 = vmatprep.mubr.bf16.mxu0 0
      %490 = vmatmul.mubr.bf16.gmra.mxu0 %v431
      %v491 = vpop.f32.mrf.mxu0
      %v492 = vadd.f32 0.0, %v491
      %v493 = vpop.f32.mrf.mxu0
      %v494 = vpop.f32.mrf.mxu0
      %v495 = vadd.f32 0.0, %v494
      %v496 = vpop.f32.mrf.mxu0
      %497 = vdwg.mxu0
      %v502 = vunpack.c.l.b16 %v395
      %v503 = vunpack.c.l.b16 %v396
      %v504 = vunpack.c.l.b16 %v397
      %v505 = vunpack.c.l.b16 %v398
      %v506 = vpack.c.b16 %v503, %v502
      %v507 = vpack.c.b16 %v505, %v504
      %v511 = vsel %vm420, %v391, 0
      %v514 = vsel %vm420, %v392, 0
      %v517 = vsel %vm420, %v393, 0
      %v520 = vsel %vm420, %v394, 0
      %522 = vmatprep.subr.bf16.mxu0 0
      %523 = vmatpush1.bf16.msra.mxu0 0
      %524 = vmatprep.subr.bf16.mxu0 0
      %525 = vmatpush1.bf16.msra.mxu0 0
      %526 = vmatprep.subr.bf16.mxu0 0
      %527 = vmatpush1.bf16.msra.mxu0 0
      %528 = vmatprep.subr.bf16.mxu0 0
      %529 = vmatpush1.bf16.msra.mxu0 0
      %530 = vmatprep.subr.bf16.mxu0 0
      %531 = vmatpush1.bf16.msra.mxu0 0
      %532 = vmatprep.subr.bf16.mxu0 0
      %533 = vmatpush1.bf16.msra.mxu0 0
      %534 = vmatprep.subr.bf16.mxu0 0
      %535 = vmatpush1.bf16.msra.mxu0 %v507
      %536 = vmatprep.subr.bf16.mxu0 0
      %537 = vmatpush1.bf16.msra.mxu0 %v506
      %538 = vmatprep.subr.bf16.mxu0 0
      %539 = vmatpush2.bf16.msra.mxu0 0
      %540 = vmatprep.subr.bf16.mxu0 0
      %541 = vmatpush2.bf16.msra.mxu0 0
      %542 = vmatprep.subr.bf16.mxu0 0
      %543 = vmatpush2.bf16.msra.mxu0 0
      %544 = vmatprep.subr.bf16.mxu0 0
      %545 = vmatpush2.bf16.msra.mxu0 0
      %546 = vmatprep.subr.bf16.mxu0 0
      %547 = vmatpush2.bf16.msra.mxu0 0
      %548 = vmatprep.subr.bf16.mxu0 0
      %549 = vmatpush2.bf16.msra.mxu0 0
      %550 = vmatprep.subr.bf16.mxu0 0
      %551 = vmatpush2.bf16.msra.mxu0 0
      %552 = vmatprep.subr.bf16.mxu0 0
      %553 = vmatpush2.bf16.msra.mxu0 0
      %554 = vmatprep.mubr.bf16.mxu0 0
      %555 = vmatmul.mubr.bf16.gmra.mxu0 %v511
      %v556 = vpop.f32.mrf.mxu0
      %v557 = vadd.f32 %v468, %v556
      %v558 = vpop.f32.mrf.mxu0
      %v559 = vpop.f32.mrf.mxu0
      %v560 = vadd.f32 %v471, %v559
      %v561 = vpop.f32.mrf.mxu0
      %562 = vmatprep.mubr.bf16.mxu0 0
      %563 = vmatmul.mubr.bf16.gmra.mxu0 %v514
      %v564 = vpop.f32.mrf.mxu0
      %v565 = vadd.f32 %v476, %v564
      %v566 = vpop.f32.mrf.mxu0
      %v567 = vpop.f32.mrf.mxu0
      %v568 = vadd.f32 %v479, %v567
      %v569 = vpop.f32.mrf.mxu0
      %570 = vmatprep.mubr.bf16.mxu0 0
      %571 = vmatmul.mubr.bf16.gmra.mxu0 %v517
      %v572 = vpop.f32.mrf.mxu0
      %v573 = vadd.f32 %v484, %v572
      %v574 = vpop.f32.mrf.mxu0
      %v575 = vpop.f32.mrf.mxu0
      %v576 = vadd.f32 %v487, %v575
      %v577 = vpop.f32.mrf.mxu0
      %578 = vmatprep.mubr.bf16.mxu0 0
      %579 = vmatmul.mubr.bf16.gmra.mxu0 %v520
      %v580 = vpop.f32.mrf.mxu0
      %v581 = vadd.f32 %v492, %v580
      %v582 = vpop.f32.mrf.mxu0
      %v583 = vpop.f32.mrf.mxu0
      %v584 = vadd.f32 %v495, %v583
      %v585 = vpop.f32.mrf.mxu0
      %586 = vdwg.mxu0
      %vm603 = vcmask 1046528
      %v604 = vrot.slane %v340, 1
      %v605 = vrot.slane %v341, 1
      %v606 = vsel %vm603, %v604, %v605
      %v607 = vrot.slane %v342, 1
      %v608 = vrot.slane %v343, 1
      %v609 = vsel %vm603, %v607, %v608
      %v610 = vrot.slane %v344, 1
      %v611 = vrot.slane %v345, 1
      %v612 = vsel %vm603, %v610, %v611
      %v613 = vrot.slane %v346, 1
      %v614 = vrot.slane %v347, 1
      %v615 = vsel %vm603, %v613, %v614
      %v616 = vrot.slane %v348, 1
      %v617 = vrot.slane %v349, 1
      %v618 = vsel %vm603, %v616, %v617
      %v619 = vrot.slane %v350, 1
      %v620 = vrot.slane %v351, 1
      %v621 = vsel %vm603, %v619, %v620
      %v622 = vrot.slane %v352, 1
      %v623 = vrot.slane %v353, 1
      %v624 = vsel %vm603, %v622, %v623
      %v625 = vrot.slane %v354, 1
      %v626 = vrot.slane %v355, 1
      %v627 = vsel %vm603, %v625, %v626
      %v636 = vpack.c.bf16 %v609, %v606
      %v637 = vpack.c.bf16 %v615, %v612
      %v638 = vpack.c.bf16 %v621, %v618
      %v639 = vpack.c.bf16 %v627, %v624
      %s640 = scalar_lea.vmem %s4, 32
      %v641 = vld [vmem:[%s640] sm:$0xf]
      %v642 = vld [vmem:[%s640 + $0x4] sm:$0xf]
      %v643 = vld [vmem:[%s640 + $0x8] sm:$0xf]
      %v644 = vld [vmem:[%s640 + $0xc] sm:$0xf]
      %v649 = vunpack.c.l.b16 %v641
      %v650 = vunpack.c.l.b16 %v642
      %v651 = vunpack.c.l.b16 %v643
      %v652 = vunpack.c.l.b16 %v644
      %v653 = vpack.c.b16 %v650, %v649
      %v654 = vpack.c.b16 %v652, %v651
      %v658 = vsel %vm420, %v636, 0
      %v661 = vsel %vm420, %v637, 0
      %v664 = vsel %vm420, %v638, 0
      %v667 = vsel %vm420, %v639, 0
      %669 = vmatprep.subr.bf16.mxu0 0
      %670 = vmatpush1.bf16.msra.mxu0 0
      %671 = vmatprep.subr.bf16.mxu0 0
      %672 = vmatpush1.bf16.msra.mxu0 0
      %673 = vmatprep.subr.bf16.mxu0 0
      %674 = vmatpush1.bf16.msra.mxu0 0
      %675 = vmatprep.subr.bf16.mxu0 0
      %676 = vmatpush1.bf16.msra.mxu0 0
      %677 = vmatprep.subr.bf16.mxu0 0
      %678 = vmatpush1.bf16.msra.mxu0 0
      %679 = vmatprep.subr.bf16.mxu0 0
      %680 = vmatpush1.bf16.msra.mxu0 0
      %681 = vmatprep.subr.bf16.mxu0 0
      %682 = vmatpush1.bf16.msra.mxu0 %v654
      %683 = vmatprep.subr.bf16.mxu0 0
      %684 = vmatpush1.bf16.msra.mxu0 %v653
      %685 = vmatprep.subr.bf16.mxu0 0
      %686 = vmatpush2.bf16.msra.mxu0 0
      %687 = vmatprep.subr.bf16.mxu0 0
      %688 = vmatpush2.bf16.msra.mxu0 0
      %689 = vmatprep.subr.bf16.mxu0 0
      %690 = vmatpush2.bf16.msra.mxu0 0
      %691 = vmatprep.subr.bf16.mxu0 0
      %692 = vmatpush2.bf16.msra.mxu0 0
      %693 = vmatprep.subr.bf16.mxu0 0
      %694 = vmatpush2.bf16.msra.mxu0 0
      %695 = vmatprep.subr.bf16.mxu0 0
      %696 = vmatpush2.bf16.msra.mxu0 0
      %697 = vmatprep.subr.bf16.mxu0 0
      %698 = vmatpush2.bf16.msra.mxu0 0
      %699 = vmatprep.subr.bf16.mxu0 0
      %700 = vmatpush2.bf16.msra.mxu0 0
      %701 = vmatprep.mubr.bf16.mxu0 0
      %702 = vmatmul.mubr.bf16.gmra.mxu0 %v658
      %v703 = vpop.f32.mrf.mxu0
      %v704 = vadd.f32 0.0, %v703
      %v705 = vpop.f32.mrf.mxu0
      %v706 = vpop.f32.mrf.mxu0
      %v707 = vadd.f32 0.0, %v706
      %v708 = vpop.f32.mrf.mxu0
      %709 = vmatprep.mubr.bf16.mxu0 0
      %710 = vmatmul.mubr.bf16.gmra.mxu0 %v661
      %v711 = vpop.f32.mrf.mxu0
      %v712 = vadd.f32 0.0, %v711
      %v713 = vpop.f32.mrf.mxu0
      %v714 = vpop.f32.mrf.mxu0
      %v715 = vadd.f32 0.0, %v714
      %v716 = vpop.f32.mrf.mxu0
      %717 = vmatprep.mubr.bf16.mxu0 0
      %718 = vmatmul.mubr.bf16.gmra.mxu0 %v664
      %v719 = vpop.f32.mrf.mxu0
      %v720 = vadd.f32 0.0, %v719
      %v721 = vpop.f32.mrf.mxu0
      %v722 = vpop.f32.mrf.mxu0
      %v723 = vadd.f32 0.0, %v722
      %v724 = vpop.f32.mrf.mxu0
      %725 = vmatprep.mubr.bf16.mxu0 0
      %726 = vmatmul.mubr.bf16.gmra.mxu0 %v667
      %v727 = vpop.f32.mrf.mxu0
      %v728 = vadd.f32 0.0, %v727
      %v729 = vpop.f32.mrf.mxu0
      %v730 = vpop.f32.mrf.mxu0
      %v731 = vadd.f32 0.0, %v730
      %v732 = vpop.f32.mrf.mxu0
      %733 = vdwg.mxu0
      %v734 = vadd.f32 %v557, %v704
      %v735 = vadd.f32 %v560, %v707
      %v736 = vadd.f32 %v565, %v712
      %v737 = vadd.f32 %v568, %v715
      %v738 = vadd.f32 %v573, %v720
      %v739 = vadd.f32 %v576, %v723
      %v740 = vadd.f32 %v581, %v728
      %v741 = vadd.f32 %v584, %v731
      %v742 = vpack.c.bf16 %v369, %v367
      %v743 = vpack.c.bf16 %v373, %v371
      %v744 = vpack.c.bf16 %v377, %v375
      %v745 = vpack.c.bf16 %v381, %v379
      %s746 = scalar_lea.vmem %s4, 48
      %v747 = vld [vmem:[%s746] sm:$0xf]
      %v748 = vld [vmem:[%s746 + $0x4] sm:$0xf]
      %v749 = vld [vmem:[%s746 + $0x8] sm:$0xf]
      %v750 = vld [vmem:[%s746 + $0xc] sm:$0xf]
      %v755 = vunpack.c.l.b16 %v747
      %v756 = vunpack.c.l.b16 %v748
      %v757 = vunpack.c.l.b16 %v749
      %v758 = vunpack.c.l.b16 %v750
      %v759 = vpack.c.b16 %v756, %v755
      %v760 = vpack.c.b16 %v758, %v757
      %v764 = vsel %vm420, %v742, 0
      %v767 = vsel %vm420, %v743, 0
      %v770 = vsel %vm420, %v744, 0
      %v773 = vsel %vm420, %v745, 0
      %775 = vmatprep.subr.bf16.mxu0 0
      %776 = vmatpush1.bf16.msra.mxu0 0
      %777 = vmatprep.subr.bf16.mxu0 0
      %778 = vmatpush1.bf16.msra.mxu0 0
      %779 = vmatprep.subr.bf16.mxu0 0
      %780 = vmatpush1.bf16.msra.mxu0 0
      %781 = vmatprep.subr.bf16.mxu0 0
      %782 = vmatpush1.bf16.msra.mxu0 0
      %783 = vmatprep.subr.bf16.mxu0 0
      %784 = vmatpush1.bf16.msra.mxu0 0
      %785 = vmatprep.subr.bf16.mxu0 0
      %786 = vmatpush1.bf16.msra.mxu0 0
      %787 = vmatprep.subr.bf16.mxu0 0
      %788 = vmatpush1.bf16.msra.mxu0 %v760
      %789 = vmatprep.subr.bf16.mxu0 0
      %790 = vmatpush1.bf16.msra.mxu0 %v759
      %791 = vmatprep.subr.bf16.mxu0 0
      %792 = vmatpush2.bf16.msra.mxu0 0
      %793 = vmatprep.subr.bf16.mxu0 0
      %794 = vmatpush2.bf16.msra.mxu0 0
      %795 = vmatprep.subr.bf16.mxu0 0
      %796 = vmatpush2.bf16.msra.mxu0 0
      %797 = vmatprep.subr.bf16.mxu0 0
      %798 = vmatpush2.bf16.msra.mxu0 0
      %799 = vmatprep.subr.bf16.mxu0 0
      %800 = vmatpush2.bf16.msra.mxu0 0
      %801 = vmatprep.subr.bf16.mxu0 0
      %802 = vmatpush2.bf16.msra.mxu0 0
      %803 = vmatprep.subr.bf16.mxu0 0
      %804 = vmatpush2.bf16.msra.mxu0 0
      %805 = vmatprep.subr.bf16.mxu0 0
      %806 = vmatpush2.bf16.msra.mxu0 0
      %807 = vmatprep.mubr.bf16.mxu0 0
      %808 = vmatmul.mubr.bf16.gmra.mxu0 %v764
      %v809 = vpop.f32.mrf.mxu0
      %v810 = vadd.f32 0.0, %v809
      %v811 = vpop.f32.mrf.mxu0
      %v812 = vpop.f32.mrf.mxu0
      %v813 = vadd.f32 0.0, %v812
      %v814 = vpop.f32.mrf.mxu0
      %815 = vmatprep.mubr.bf16.mxu0 0
      %816 = vmatmul.mubr.bf16.gmra.mxu0 %v767
      %v817 = vpop.f32.mrf.mxu0
      %v818 = vadd.f32 0.0, %v817
      %v819 = vpop.f32.mrf.mxu0
      %v820 = vpop.f32.mrf.mxu0
      %v821 = vadd.f32 0.0, %v820
      %v822 = vpop.f32.mrf.mxu0
      %823 = vmatprep.mubr.bf16.mxu0 0
      %824 = vmatmul.mubr.bf16.gmra.mxu0 %v770
      %v825 = vpop.f32.mrf.mxu0
      %v826 = vadd.f32 0.0, %v825
      %v827 = vpop.f32.mrf.mxu0
      %v828 = vpop.f32.mrf.mxu0
      %v829 = vadd.f32 0.0, %v828
      %v830 = vpop.f32.mrf.mxu0
      %831 = vmatprep.mubr.bf16.mxu0 0
      %832 = vmatmul.mubr.bf16.gmra.mxu0 %v773
      %v833 = vpop.f32.mrf.mxu0
      %v834 = vadd.f32 0.0, %v833
      %v835 = vpop.f32.mrf.mxu0
      %v836 = vpop.f32.mrf.mxu0
      %v837 = vadd.f32 0.0, %v836
      %v838 = vpop.f32.mrf.mxu0
      %839 = vdwg.mxu0
      %v840 = vadd.f32 %v734, %v810
      %v841 = vadd.f32 %v735, %v813
      %v842 = vadd.f32 %v736, %v818
      %v843 = vadd.f32 %v737, %v821
      %v844 = vadd.f32 %v738, %v826
      %v845 = vadd.f32 %v739, %v829
      %v846 = vadd.f32 %v740, %v834
      %v847 = vadd.f32 %v741, %v837
      %v848 = vpack.c.bf16 %v384, %v383
      %v849 = vpack.c.bf16 %v386, %v385
      %v850 = vpack.c.bf16 %v388, %v387
      %v851 = vpack.c.bf16 %v390, %v389
      %s852 = scalar_lea.vmem %s4, 64
      %v853 = vld [vmem:[%s852] sm:$0xf]
      %v854 = vld [vmem:[%s852 + $0x4] sm:$0xf]
      %v855 = vld [vmem:[%s852 + $0x8] sm:$0xf]
      %v856 = vld [vmem:[%s852 + $0xc] sm:$0xf]
      %v861 = vunpack.c.l.b16 %v853
      %v862 = vunpack.c.l.b16 %v854
      %v863 = vunpack.c.l.b16 %v855
      %v864 = vunpack.c.l.b16 %v856
      %v865 = vpack.c.b16 %v862, %v861
      %v866 = vpack.c.b16 %v864, %v863
      %v870 = vsel %vm420, %v848, 0
      %v873 = vsel %vm420, %v849, 0
      %v876 = vsel %vm420, %v850, 0
      %v879 = vsel %vm420, %v851, 0
      %881 = vmatprep.subr.bf16.mxu0 0
      %882 = vmatpush1.bf16.msra.mxu0 0
      %883 = vmatprep.subr.bf16.mxu0 0
      %884 = vmatpush1.bf16.msra.mxu0 0
      %885 = vmatprep.subr.bf16.mxu0 0
      %886 = vmatpush1.bf16.msra.mxu0 0
      %887 = vmatprep.subr.bf16.mxu0 0
      %888 = vmatpush1.bf16.msra.mxu0 0
      %889 = vmatprep.subr.bf16.mxu0 0
      %890 = vmatpush1.bf16.msra.mxu0 0
      %891 = vmatprep.subr.bf16.mxu0 0
      %892 = vmatpush1.bf16.msra.mxu0 0
      %893 = vmatprep.subr.bf16.mxu0 0
      %894 = vmatpush1.bf16.msra.mxu0 %v866
      %895 = vmatprep.subr.bf16.mxu0 0
      %896 = vmatpush1.bf16.msra.mxu0 %v865
      %897 = vmatprep.subr.bf16.mxu0 0
      %898 = vmatpush2.bf16.msra.mxu0 0
      %899 = vmatprep.subr.bf16.mxu0 0
      %900 = vmatpush2.bf16.msra.mxu0 0
      %901 = vmatprep.subr.bf16.mxu0 0
      %902 = vmatpush2.bf16.msra.mxu0 0
      %903 = vmatprep.subr.bf16.mxu0 0
      %904 = vmatpush2.bf16.msra.mxu0 0
      %905 = vmatprep.subr.bf16.mxu0 0
      %906 = vmatpush2.bf16.msra.mxu0 0
      %907 = vmatprep.subr.bf16.mxu0 0
      %908 = vmatpush2.bf16.msra.mxu0 0
      %909 = vmatprep.subr.bf16.mxu0 0
      %910 = vmatpush2.bf16.msra.mxu0 0
      %911 = vmatprep.subr.bf16.mxu0 0
      %912 = vmatpush2.bf16.msra.mxu0 0
      %913 = vmatprep.mubr.bf16.mxu0 0
      %914 = vmatmul.mubr.bf16.gmra.mxu0 %v870
      %v915 = vpop.f32.mrf.mxu0
      %v916 = vadd.f32 0.0, %v915
      %v917 = vpop.f32.mrf.mxu0
      %v918 = vpop.f32.mrf.mxu0
      %v919 = vadd.f32 0.0, %v918
      %v920 = vpop.f32.mrf.mxu0
      %921 = vmatprep.mubr.bf16.mxu0 0
      %922 = vmatmul.mubr.bf16.gmra.mxu0 %v873
      %v923 = vpop.f32.mrf.mxu0
      %v924 = vadd.f32 0.0, %v923
      %v925 = vpop.f32.mrf.mxu0
      %v926 = vpop.f32.mrf.mxu0
      %v927 = vadd.f32 0.0, %v926
      %v928 = vpop.f32.mrf.mxu0
      %929 = vmatprep.mubr.bf16.mxu0 0
      %930 = vmatmul.mubr.bf16.gmra.mxu0 %v876
      %v931 = vpop.f32.mrf.mxu0
      %v932 = vadd.f32 0.0, %v931
      %v933 = vpop.f32.mrf.mxu0
      %v934 = vpop.f32.mrf.mxu0
      %v935 = vadd.f32 0.0, %v934
      %v936 = vpop.f32.mrf.mxu0
      %937 = vmatprep.mubr.bf16.mxu0 0
      %938 = vmatmul.mubr.bf16.gmra.mxu0 %v879
      %v939 = vpop.f32.mrf.mxu0
      %v940 = vadd.f32 0.0, %v939
      %v941 = vpop.f32.mrf.mxu0
      %v942 = vpop.f32.mrf.mxu0
      %v943 = vadd.f32 0.0, %v942
      %v944 = vpop.f32.mrf.mxu0
      %945 = vdwg.mxu0
      %v946 = vadd.f32 %v840, %v916
      %v947 = vadd.f32 %v841, %v919
      %v948 = vadd.f32 %v842, %v924
      %v949 = vadd.f32 %v843, %v927
      %v950 = vadd.f32 %v844, %v932
      %v951 = vadd.f32 %v845, %v935
      %v952 = vadd.f32 %v846, %v940
      %v953 = vadd.f32 %v847, %v943
      %v970 = vrot.slane %v367, 1
      %v971 = vrot.slane %v368, 1
      %v972 = vsel %vm603, %v970, %v971
      %v973 = vrot.slane %v369, 1
      %v974 = vrot.slane %v370, 1
      %v975 = vsel %vm603, %v973, %v974
      %v976 = vrot.slane %v371, 1
      %v977 = vrot.slane %v372, 1
      %v978 = vsel %vm603, %v976, %v977
      %v979 = vrot.slane %v373, 1
      %v980 = vrot.slane %v374, 1
      %v981 = vsel %vm603, %v979, %v980
      %v982 = vrot.slane %v375, 1
      %v983 = vrot.slane %v376, 1
      %v984 = vsel %vm603, %v982, %v983
      %v985 = vrot.slane %v377, 1
      %v986 = vrot.slane %v378, 1
      %v987 = vsel %vm603, %v985, %v986
      %v988 = vrot.slane %v379, 1
      %v989 = vrot.slane %v380, 1
      %v990 = vsel %vm603, %v988, %v989
      %v991 = vrot.slane %v381, 1
      %v992 = vrot.slane %v382, 1
      %v993 = vsel %vm603, %v991, %v992
      %v1002 = vpack.c.bf16 %v975, %v972
      %v1003 = vpack.c.bf16 %v981, %v978
      %v1004 = vpack.c.bf16 %v987, %v984
      %v1005 = vpack.c.bf16 %v993, %v990
      %s1006 = scalar_lea.vmem %s4, 80
      %v1007 = vld [vmem:[%s1006] sm:$0xf]
      %v1008 = vld [vmem:[%s1006 + $0x4] sm:$0xf]
      %v1009 = vld [vmem:[%s1006 + $0x8] sm:$0xf]
      %v1010 = vld [vmem:[%s1006 + $0xc] sm:$0xf]
      %v1015 = vunpack.c.l.b16 %v1007
      %v1016 = vunpack.c.l.b16 %v1008
      %v1017 = vunpack.c.l.b16 %v1009
      %v1018 = vunpack.c.l.b16 %v1010
      %v1019 = vpack.c.b16 %v1016, %v1015
      %v1020 = vpack.c.b16 %v1018, %v1017
      %v1024 = vsel %vm420, %v1002, 0
      %v1027 = vsel %vm420, %v1003, 0
      %v1030 = vsel %vm420, %v1004, 0
      %v1033 = vsel %vm420, %v1005, 0
      %1035 = vmatprep.subr.bf16.mxu0 0
      %1036 = vmatpush1.bf16.msra.mxu0 0
      %1037 = vmatprep.subr.bf16.mxu0 0
      %1038 = vmatpush1.bf16.msra.mxu0 0
      %1039 = vmatprep.subr.bf16.mxu0 0
      %1040 = vmatpush1.bf16.msra.mxu0 0
      %1041 = vmatprep.subr.bf16.mxu0 0
      %1042 = vmatpush1.bf16.msra.mxu0 0
      %1043 = vmatprep.subr.bf16.mxu0 0
      %1044 = vmatpush1.bf16.msra.mxu0 0
      %1045 = vmatprep.subr.bf16.mxu0 0
      %1046 = vmatpush1.bf16.msra.mxu0 0
      %1047 = vmatprep.subr.bf16.mxu0 0
      %1048 = vmatpush1.bf16.msra.mxu0 %v1020
      %1049 = vmatprep.subr.bf16.mxu0 0
      %1050 = vmatpush1.bf16.msra.mxu0 %v1019
      %1051 = vmatprep.subr.bf16.mxu0 0
      %1052 = vmatpush2.bf16.msra.mxu0 0
      %1053 = vmatprep.subr.bf16.mxu0 0
      %1054 = vmatpush2.bf16.msra.mxu0 0
      %1055 = vmatprep.subr.bf16.mxu0 0
      %1056 = vmatpush2.bf16.msra.mxu0 0
      %1057 = vmatprep.subr.bf16.mxu0 0
      %1058 = vmatpush2.bf16.msra.mxu0 0
      %1059 = vmatprep.subr.bf16.mxu0 0
      %1060 = vmatpush2.bf16.msra.mxu0 0
      %1061 = vmatprep.subr.bf16.mxu0 0
      %1062 = vmatpush2.bf16.msra.mxu0 0
      %1063 = vmatprep.subr.bf16.mxu0 0
      %1064 = vmatpush2.bf16.msra.mxu0 0
      %1065 = vmatprep.subr.bf16.mxu0 0
      %1066 = vmatpush2.bf16.msra.mxu0 0
      %1067 = vmatprep.mubr.bf16.mxu0 0
      %1068 = vmatmul.mubr.bf16.gmra.mxu0 %v1024
      %v1069 = vpop.f32.mrf.mxu0
      %v1070 = vadd.f32 0.0, %v1069
      %v1071 = vpop.f32.mrf.mxu0
      %v1072 = vpop.f32.mrf.mxu0
      %v1073 = vadd.f32 0.0, %v1072
      %v1074 = vpop.f32.mrf.mxu0
      %1075 = vmatprep.mubr.bf16.mxu0 0
      %1076 = vmatmul.mubr.bf16.gmra.mxu0 %v1027
      %v1077 = vpop.f32.mrf.mxu0
      %v1078 = vadd.f32 0.0, %v1077
      %v1079 = vpop.f32.mrf.mxu0
      %v1080 = vpop.f32.mrf.mxu0
      %v1081 = vadd.f32 0.0, %v1080
      %v1082 = vpop.f32.mrf.mxu0
      %1083 = vmatprep.mubr.bf16.mxu0 0
      %1084 = vmatmul.mubr.bf16.gmra.mxu0 %v1030
      %v1085 = vpop.f32.mrf.mxu0
      %v1086 = vadd.f32 0.0, %v1085
      %v1087 = vpop.f32.mrf.mxu0
      %v1088 = vpop.f32.mrf.mxu0
      %v1089 = vadd.f32 0.0, %v1088
      %v1090 = vpop.f32.mrf.mxu0
      %1091 = vmatprep.mubr.bf16.mxu0 0
      %1092 = vmatmul.mubr.bf16.gmra.mxu0 %v1033
      %v1093 = vpop.f32.mrf.mxu0
      %v1094 = vadd.f32 0.0, %v1093
      %v1095 = vpop.f32.mrf.mxu0
      %v1096 = vpop.f32.mrf.mxu0
      %v1097 = vadd.f32 0.0, %v1096
      %v1098 = vpop.f32.mrf.mxu0
      %1099 = vdwg.mxu0
      %v1100 = vadd.f32 %v946, %v1070
      %v1101 = vadd.f32 %v947, %v1073
      %v1102 = vadd.f32 %v948, %v1078
      %v1103 = vadd.f32 %v949, %v1081
      %v1104 = vadd.f32 %v950, %v1086
      %v1105 = vadd.f32 %v951, %v1089
      %v1106 = vadd.f32 %v952, %v1094
      %v1107 = vadd.f32 %v953, %v1097
      %v1108 = vpack.c.bf16 %v344, %v342
      %v1109 = vpack.c.bf16 %v348, %v346
      %v1110 = vpack.c.bf16 %v352, %v350
      %v1111 = vpack.c.bf16 %v356, %v354
      %s1112 = scalar_lea.vmem %s4, 96
      %v1113 = vld [vmem:[%s1112] sm:$0xf]
      %v1114 = vld [vmem:[%s1112 + $0x4] sm:$0xf]
      %v1115 = vld [vmem:[%s1112 + $0x8] sm:$0xf]
      %v1116 = vld [vmem:[%s1112 + $0xc] sm:$0xf]
      %v1121 = vunpack.c.l.b16 %v1113
      %v1122 = vunpack.c.l.b16 %v1114
      %v1123 = vunpack.c.l.b16 %v1115
      %v1124 = vunpack.c.l.b16 %v1116
      %v1125 = vpack.c.b16 %v1122, %v1121
      %v1126 = vpack.c.b16 %v1124, %v1123
      %v1130 = vsel %vm420, %v1108, 0
      %v1133 = vsel %vm420, %v1109, 0
      %v1136 = vsel %vm420, %v1110, 0
      %v1139 = vsel %vm420, %v1111, 0
      %1141 = vmatprep.subr.bf16.mxu0 0
      %1142 = vmatpush1.bf16.msra.mxu0 0
      %1143 = vmatprep.subr.bf16.mxu0 0
      %1144 = vmatpush1.bf16.msra.mxu0 0
      %1145 = vmatprep.subr.bf16.mxu0 0
      %1146 = vmatpush1.bf16.msra.mxu0 0
      %1147 = vmatprep.subr.bf16.mxu0 0
      %1148 = vmatpush1.bf16.msra.mxu0 0
      %1149 = vmatprep.subr.bf16.mxu0 0
      %1150 = vmatpush1.bf16.msra.mxu0 0
      %1151 = vmatprep.subr.bf16.mxu0 0
      %1152 = vmatpush1.bf16.msra.mxu0 0
      %1153 = vmatprep.subr.bf16.mxu0 0
      %1154 = vmatpush1.bf16.msra.mxu0 %v1126
      %1155 = vmatprep.subr.bf16.mxu0 0
      %1156 = vmatpush1.bf16.msra.mxu0 %v1125
      %1157 = vmatprep.subr.bf16.mxu0 0
      %1158 = vmatpush2.bf16.msra.mxu0 0
      %1159 = vmatprep.subr.bf16.mxu0 0
      %1160 = vmatpush2.bf16.msra.mxu0 0
      %1161 = vmatprep.subr.bf16.mxu0 0
      %1162 = vmatpush2.bf16.msra.mxu0 0
      %1163 = vmatprep.subr.bf16.mxu0 0
      %1164 = vmatpush2.bf16.msra.mxu0 0
      %1165 = vmatprep.subr.bf16.mxu0 0
      %1166 = vmatpush2.bf16.msra.mxu0 0
      %1167 = vmatprep.subr.bf16.mxu0 0
      %1168 = vmatpush2.bf16.msra.mxu0 0
      %1169 = vmatprep.subr.bf16.mxu0 0
      %1170 = vmatpush2.bf16.msra.mxu0 0
      %1171 = vmatprep.subr.bf16.mxu0 0
      %1172 = vmatpush2.bf16.msra.mxu0 0
      %1173 = vmatprep.mubr.bf16.mxu0 0
      %1174 = vmatmul.mubr.bf16.gmra.mxu0 %v1130
      %v1175 = vpop.f32.mrf.mxu0
      %v1176 = vadd.f32 0.0, %v1175
      %v1177 = vpop.f32.mrf.mxu0
      %v1178 = vpop.f32.mrf.mxu0
      %v1179 = vadd.f32 0.0, %v1178
      %v1180 = vpop.f32.mrf.mxu0
      %1181 = vmatprep.mubr.bf16.mxu0 0
      %1182 = vmatmul.mubr.bf16.gmra.mxu0 %v1133
      %v1183 = vpop.f32.mrf.mxu0
      %v1184 = vadd.f32 0.0, %v1183
      %v1185 = vpop.f32.mrf.mxu0
      %v1186 = vpop.f32.mrf.mxu0
      %v1187 = vadd.f32 0.0, %v1186
      %v1188 = vpop.f32.mrf.mxu0
      %1189 = vmatprep.mubr.bf16.mxu0 0
      %1190 = vmatmul.mubr.bf16.gmra.mxu0 %v1136
      %v1191 = vpop.f32.mrf.mxu0
      %v1192 = vadd.f32 0.0, %v1191
      %v1193 = vpop.f32.mrf.mxu0
      %v1194 = vpop.f32.mrf.mxu0
      %v1195 = vadd.f32 0.0, %v1194
      %v1196 = vpop.f32.mrf.mxu0
      %1197 = vmatprep.mubr.bf16.mxu0 0
      %1198 = vmatmul.mubr.bf16.gmra.mxu0 %v1139
      %v1199 = vpop.f32.mrf.mxu0
      %v1200 = vadd.f32 0.0, %v1199
      %v1201 = vpop.f32.mrf.mxu0
      %v1202 = vpop.f32.mrf.mxu0
      %v1203 = vadd.f32 0.0, %v1202
      %v1204 = vpop.f32.mrf.mxu0
      %1205 = vdwg.mxu0
      %v1206 = vadd.f32 %v1100, %v1176
      %v1207 = vadd.f32 %v1101, %v1179
      %v1208 = vadd.f32 %v1102, %v1184
      %v1209 = vadd.f32 %v1103, %v1187
      %v1210 = vadd.f32 %v1104, %v1192
      %v1211 = vadd.f32 %v1105, %v1195
      %v1212 = vadd.f32 %v1106, %v1200
      %v1213 = vadd.f32 %v1107, %v1203
      %v1214 = vpack.c.bf16 %v360, %v359
      %v1215 = vpack.c.bf16 %v362, %v361
      %v1216 = vpack.c.bf16 %v364, %v363
      %v1217 = vpack.c.bf16 %v366, %v365
      %s1218 = scalar_lea.vmem %s4, 112
      %v1219 = vld [vmem:[%s1218] sm:$0xf]
      %v1220 = vld [vmem:[%s1218 + $0x4] sm:$0xf]
      %v1221 = vld [vmem:[%s1218 + $0x8] sm:$0xf]
      %v1222 = vld [vmem:[%s1218 + $0xc] sm:$0xf]
      %v1227 = vunpack.c.l.b16 %v1219
      %v1228 = vunpack.c.l.b16 %v1220
      %v1229 = vunpack.c.l.b16 %v1221
      %v1230 = vunpack.c.l.b16 %v1222
      %v1231 = vpack.c.b16 %v1228, %v1227
      %v1232 = vpack.c.b16 %v1230, %v1229
      %v1236 = vsel %vm420, %v1214, 0
      %v1239 = vsel %vm420, %v1215, 0
      %v1242 = vsel %vm420, %v1216, 0
      %v1245 = vsel %vm420, %v1217, 0
      %1247 = vmatprep.subr.bf16.mxu0 0
      %1248 = vmatpush1.bf16.msra.mxu0 0
      %1249 = vmatprep.subr.bf16.mxu0 0
      %1250 = vmatpush1.bf16.msra.mxu0 0
      %1251 = vmatprep.subr.bf16.mxu0 0
      %1252 = vmatpush1.bf16.msra.mxu0 0
      %1253 = vmatprep.subr.bf16.mxu0 0
      %1254 = vmatpush1.bf16.msra.mxu0 0
      %1255 = vmatprep.subr.bf16.mxu0 0
      %1256 = vmatpush1.bf16.msra.mxu0 0
      %1257 = vmatprep.subr.bf16.mxu0 0
      %1258 = vmatpush1.bf16.msra.mxu0 0
      %1259 = vmatprep.subr.bf16.mxu0 0
      %1260 = vmatpush1.bf16.msra.mxu0 %v1232
      %1261 = vmatprep.subr.bf16.mxu0 0
      %1262 = vmatpush1.bf16.msra.mxu0 %v1231
      %1263 = vmatprep.subr.bf16.mxu0 0
      %1264 = vmatpush2.bf16.msra.mxu0 0
      %1265 = vmatprep.subr.bf16.mxu0 0
      %1266 = vmatpush2.bf16.msra.mxu0 0
      %1267 = vmatprep.subr.bf16.mxu0 0
      %1268 = vmatpush2.bf16.msra.mxu0 0
      %1269 = vmatprep.subr.bf16.mxu0 0
      %1270 = vmatpush2.bf16.msra.mxu0 0
      %1271 = vmatprep.subr.bf16.mxu0 0
      %1272 = vmatpush2.bf16.msra.mxu0 0
      %1273 = vmatprep.subr.bf16.mxu0 0
      %1274 = vmatpush2.bf16.msra.mxu0 0
      %1275 = vmatprep.subr.bf16.mxu0 0
      %1276 = vmatpush2.bf16.msra.mxu0 0
      %1277 = vmatprep.subr.bf16.mxu0 0
      %1278 = vmatpush2.bf16.msra.mxu0 0
      %1279 = vmatprep.mubr.bf16.mxu0 0
      %1280 = vmatmul.mubr.bf16.gmra.mxu0 %v1236
      %v1281 = vpop.f32.mrf.mxu0
      %v1282 = vadd.f32 0.0, %v1281
      %v1283 = vpop.f32.mrf.mxu0
      %v1284 = vpop.f32.mrf.mxu0
      %v1285 = vadd.f32 0.0, %v1284
      %v1286 = vpop.f32.mrf.mxu0
      %1287 = vmatprep.mubr.bf16.mxu0 0
      %1288 = vmatmul.mubr.bf16.gmra.mxu0 %v1239
      %v1289 = vpop.f32.mrf.mxu0
      %v1290 = vadd.f32 0.0, %v1289
      %v1291 = vpop.f32.mrf.mxu0
      %v1292 = vpop.f32.mrf.mxu0
      %v1293 = vadd.f32 0.0, %v1292
      %v1294 = vpop.f32.mrf.mxu0
      %1295 = vmatprep.mubr.bf16.mxu0 0
      %1296 = vmatmul.mubr.bf16.gmra.mxu0 %v1242
      %v1297 = vpop.f32.mrf.mxu0
      %v1298 = vadd.f32 0.0, %v1297
      %v1299 = vpop.f32.mrf.mxu0
      %v1300 = vpop.f32.mrf.mxu0
      %v1301 = vadd.f32 0.0, %v1300
      %v1302 = vpop.f32.mrf.mxu0
      %1303 = vmatprep.mubr.bf16.mxu0 0
      %1304 = vmatmul.mubr.bf16.gmra.mxu0 %v1245
      %v1305 = vpop.f32.mrf.mxu0
      %v1306 = vadd.f32 0.0, %v1305
      %v1307 = vpop.f32.mrf.mxu0
      %v1308 = vpop.f32.mrf.mxu0
      %v1309 = vadd.f32 0.0, %v1308
      %v1310 = vpop.f32.mrf.mxu0
      %1311 = vdwg.mxu0
      %v1312 = vadd.f32 %v1206, %v1282
      %v1313 = vadd.f32 %v1207, %v1285
      %v1314 = vadd.f32 %v1208, %v1290
      %v1315 = vadd.f32 %v1209, %v1293
      %v1316 = vadd.f32 %v1210, %v1298
      %v1317 = vadd.f32 %v1211, %v1301
      %v1318 = vadd.f32 %v1212, %v1306
      %v1319 = vadd.f32 %v1213, %v1309
      %v1322 = vrot.slane %v356, 1
      %v1323 = vrot.slane %v357, 1
      %v1324 = vsel %vm603, %v1322, %v1323
      %v1326 = vpack.c.bf16 %v612, %v609
      %v1327 = vpack.c.bf16 %v618, %v615
      %v1328 = vpack.c.bf16 %v624, %v621
      %v1329 = vpack.c.bf16 %v1324, %v627
      %s1330 = scalar_lea.vmem %s4, 128
      %v1331 = vld [vmem:[%s1330] sm:$0xf]
      %v1332 = vld [vmem:[%s1330 + $0x4] sm:$0xf]
      %v1333 = vld [vmem:[%s1330 + $0x8] sm:$0xf]
      %v1334 = vld [vmem:[%s1330 + $0xc] sm:$0xf]
      %v1339 = vunpack.c.l.b16 %v1331
      %v1340 = vunpack.c.l.b16 %v1332
      %v1341 = vunpack.c.l.b16 %v1333
      %v1342 = vunpack.c.l.b16 %v1334
      %v1343 = vpack.c.b16 %v1340, %v1339
      %v1344 = vpack.c.b16 %v1342, %v1341
      %v1348 = vsel %vm420, %v1326, 0
      %v1351 = vsel %vm420, %v1327, 0
      %v1354 = vsel %vm420, %v1328, 0
      %v1357 = vsel %vm420, %v1329, 0
      %1359 = vmatprep.subr.bf16.mxu0 0
      %1360 = vmatpush1.bf16.msra.mxu0 0
      %1361 = vmatprep.subr.bf16.mxu0 0
      %1362 = vmatpush1.bf16.msra.mxu0 0
      %1363 = vmatprep.subr.bf16.mxu0 0
      %1364 = vmatpush1.bf16.msra.mxu0 0
      %1365 = vmatprep.subr.bf16.mxu0 0
      %1366 = vmatpush1.bf16.msra.mxu0 0
      %1367 = vmatprep.subr.bf16.mxu0 0
      %1368 = vmatpush1.bf16.msra.mxu0 0
      %1369 = vmatprep.subr.bf16.mxu0 0
      %1370 = vmatpush1.bf16.msra.mxu0 0
      %1371 = vmatprep.subr.bf16.mxu0 0
      %1372 = vmatpush1.bf16.msra.mxu0 %v1344
      %1373 = vmatprep.subr.bf16.mxu0 0
      %1374 = vmatpush1.bf16.msra.mxu0 %v1343
      %1375 = vmatprep.subr.bf16.mxu0 0
      %1376 = vmatpush2.bf16.msra.mxu0 0
      %1377 = vmatprep.subr.bf16.mxu0 0
      %1378 = vmatpush2.bf16.msra.mxu0 0
      %1379 = vmatprep.subr.bf16.mxu0 0
      %1380 = vmatpush2.bf16.msra.mxu0 0
      %1381 = vmatprep.subr.bf16.mxu0 0
      %1382 = vmatpush2.bf16.msra.mxu0 0
      %1383 = vmatprep.subr.bf16.mxu0 0
      %1384 = vmatpush2.bf16.msra.mxu0 0
      %1385 = vmatprep.subr.bf16.mxu0 0
      %1386 = vmatpush2.bf16.msra.mxu0 0
      %1387 = vmatprep.subr.bf16.mxu0 0
      %1388 = vmatpush2.bf16.msra.mxu0 0
      %1389 = vmatprep.subr.bf16.mxu0 0
      %1390 = vmatpush2.bf16.msra.mxu0 0
      %1391 = vmatprep.mubr.bf16.mxu0 0
      %1392 = vmatmul.mubr.bf16.gmra.mxu0 %v1348
      %v1393 = vpop.f32.mrf.mxu0
      %v1394 = vadd.f32 0.0, %v1393
      %v1395 = vpop.f32.mrf.mxu0
      %v1396 = vpop.f32.mrf.mxu0
      %v1397 = vadd.f32 0.0, %v1396
      %v1398 = vpop.f32.mrf.mxu0
      %1399 = vmatprep.mubr.bf16.mxu0 0
      %1400 = vmatmul.mubr.bf16.gmra.mxu0 %v1351
      %v1401 = vpop.f32.mrf.mxu0
      %v1402 = vadd.f32 0.0, %v1401
      %v1403 = vpop.f32.mrf.mxu0
      %v1404 = vpop.f32.mrf.mxu0
      %v1405 = vadd.f32 0.0, %v1404
      %v1406 = vpop.f32.mrf.mxu0
      %1407 = vmatprep.mubr.bf16.mxu0 0
      %1408 = vmatmul.mubr.bf16.gmra.mxu0 %v1354
      %v1409 = vpop.f32.mrf.mxu0
      %v1410 = vadd.f32 0.0, %v1409
      %v1411 = vpop.f32.mrf.mxu0
      %v1412 = vpop.f32.mrf.mxu0
      %v1413 = vadd.f32 0.0, %v1412
      %v1414 = vpop.f32.mrf.mxu0
      %1415 = vmatprep.mubr.bf16.mxu0 0
      %1416 = vmatmul.mubr.bf16.gmra.mxu0 %v1357
      %v1417 = vpop.f32.mrf.mxu0
      %v1418 = vadd.f32 0.0, %v1417
      %v1419 = vpop.f32.mrf.mxu0
      %v1420 = vpop.f32.mrf.mxu0
      %v1421 = vadd.f32 0.0, %v1420
      %v1422 = vpop.f32.mrf.mxu0
      %1423 = vdwg.mxu0
      %v1424 = vadd.f32 %v1312, %v1394
      %v1425 = vadd.f32 %v1313, %v1397
      %v1426 = vadd.f32 %v1314, %v1402
      %v1427 = vadd.f32 %v1315, %v1405
      %v1428 = vadd.f32 %v1316, %v1410
      %v1429 = vadd.f32 %v1317, %v1413
      %v1430 = vadd.f32 %v1318, %v1418
      %v1431 = vadd.f32 %v1319, %v1421
      %v1432 = vld [vmem:[%s5] sm:$0x1]
      %v1434 = vlaneseq
      %v1435 = vshrl.u32 %v1434, 7
      %v1436 = vsub.s32 0, %v1435
      %v1437 = vrot.slane %v1432, %v1436
      %v1439 = vmul.f32 %v1424, %v1437
      %v1440 = vmul.f32 %v1425, %v1437
      %v1441 = vmul.f32 %v1426, %v1437
      %v1442 = vmul.f32 %v1427, %v1437
      %v1443 = vmul.f32 %v1428, %v1437
      %v1444 = vmul.f32 %v1429, %v1437
      %v1445 = vmul.f32 %v1430, %v1437
      %v1446 = vmul.f32 %v1431, %v1437
      %v1447 = vld [vmem:[%s6] sm:$0x1]
      %v1449 = vlaneseq
      %v1450 = vshrl.u32 %v1449, 7
      %v1451 = vsub.s32 0, %v1450
      %v1452 = vrot.slane %v1447, %v1451
      %v1454 = vadd.f32 %v1439, %v1452
      %v1455 = vadd.f32 %v1440, %v1452
      %v1456 = vadd.f32 %v1441, %v1452
      %v1457 = vadd.f32 %v1442, %v1452
      %v1458 = vadd.f32 %v1443, %v1452
      %v1459 = vadd.f32 %v1444, %v1452
      %v1460 = vadd.f32 %v1445, %v1452
      %v1461 = vadd.f32 %v1446, %v1452
      %v1462 = vmax.f32 %v1454, 0.0
      %v1463 = vmax.f32 %v1455, 0.0
      %v1464 = vmax.f32 %v1456, 0.0
      %v1465 = vmax.f32 %v1457, 0.0
      %v1466 = vmax.f32 %v1458, 0.0
      %v1467 = vmax.f32 %v1459, 0.0
      %v1468 = vmax.f32 %v1460, 0.0
      %v1469 = vmax.f32 %v1461, 0.0
      %vm1470 = vcmask 523264
      %1471 = vst.msk [vmem:[%s338] sm:$0xff] %vm1470, %v1462
      %1472 = vst.msk [vmem:[%s338 + $0x8] sm:$0xff] %vm1470, %v1463
      %1473 = vst.msk [vmem:[%s338 + $0x10] sm:$0xff] %vm1470, %v1464
      %1474 = vst.msk [vmem:[%s338 + $0x18] sm:$0xff] %vm1470, %v1465
      %1475 = vst.msk [vmem:[%s338 + $0x20] sm:$0xff] %vm1470, %v1466
      %1476 = vst.msk [vmem:[%s338 + $0x28] sm:$0xff] %vm1470, %v1467
      %1477 = vst.msk [vmem:[%s338 + $0x30] sm:$0xff] %vm1470, %v1468
      %1478 = vst.msk [vmem:[%s338 + $0x38] sm:$0xff] %vm1470, %v1469
      %p1479 = scmp.lt.s32.totalorder %s18, 1
      %s1480 = scalar_select %p1479, %s18, 1
      %s1481 = smul.addr %s1480, 8
      %s1482 = smul.addr %s1481, 8
      %s1483 = scalar_lea.vmem %s7, %s1482
      // Predicated region
      $region49: #{pointpillar_forward.12} parent=47 // pred_check
        %p1484 = pneg %p203
      $region50: #{pointpillar_forward.12} parent=47 // pred_check_branch
        %1486 = sbr.rel (%p1484) target = $region52
      $region51: #{pointpillar_forward.12} parent=47 // pred_region
        _
      $region52: #{pointpillar_forward.12} parent=47 // pred_fallthru
        _
    $region48: #{pointpillar_forward.12} parent=5 // pred_fallthru
      _
    %p1487 = scmp.le.s32.totalorder 2, %s13
    // Predicated region
    $region53: #{pointpillar_forward.12} parent=5 // pred_check
      %p1488 = pneg %p1487
    $region54: #{pointpillar_forward.12} parent=5 // pred_check_branch
      %1490 = sbr.rel (%p1488) target = $region56
    $region55: #{pointpillar_forward.12} parent=5 // pred_region
      %s1491 = ssub.s32 %s13, 2
      // Predicated region
      $region57: #{pointpillar_forward.12} parent=55 // pred_check
        %p1492 = pneg %p209
      $region58: #{pointpillar_forward.12} parent=55 // pred_check_branch
        %1494 = sbr.rel (%p1492) target = $region60
      $region59: #{pointpillar_forward.12} parent=55 // pred_region
        %p1495 = scmp.lt.s32.totalorder %s19, 1
        %s1496 = scalar_select %p1495, %s19, 1
        %s1497 = smul.addr %s1496, 8
        %s1498 = smul.addr %s1497, 8
        %s1499 = scalar_lea.vmem %s7, %s1498
      $region60: #{pointpillar_forward.12} parent=55 // pred_fallthru
        _
    $region56: #{pointpillar_forward.12} parent=5 // pred_fallthru
      _
  $region6: #{pointpillar_forward.12} parent=0 // loop_footer
    %s17 = sadd.s32 1, %s13
  $region7: #{pointpillar_forward.12} parent=0 // loop_footer_branch
    %12 = sbr.rel target = $region3
  $region8: #{pointpillar_forward.12} parent=0 // loop_exit
    _

// kernel: pointpillar_forward.14
$region0: #{pointpillar_forward.14}
  #allocation0 [shape = 'u32[]', space=smem, size = 0x4, offset = 0x4, fixed_abs, tag = 'smem constant byte address 0x4 - core index']
  #allocation1 [shape = 'u32[144,128]{1,0:T(1,128)}', space=vmem, size = 0x12000, scoped, tag = 'internal scratch']
  %s0 = inlined_call_operand.vmem [shape: bf16[2,4,64,32], index: 0, kind: input, shape index: {}]
  %s1 = inlined_call_operand.vmem [shape: bf16[2,64,64], index: 1, kind: input, shape index: {}]
  %s2 = inlined_call_operand.vmem [shape: bf16[32,64], index: 2, kind: input, shape index: {}]
  %s3 = inlined_call_operand.vmem [shape: f32[1,64], index: 3, kind: input, shape index: {}]
  %s4 = inlined_call_operand.vmem [shape: f32[1,64], index: 4, kind: input, shape index: {}]
  %s5 = inlined_call_operand.vmem [shape: bf16[4,64,64], index: 5, kind: input, shape index: {}]
  %s6 = inlined_call_operand.vmem [shape: f32[1,64], index: 6, kind: input, shape index: {}]
  %s7 = inlined_call_operand.vmem [shape: f32[1,64], index: 7, kind: input, shape index: {}]
  %s8 = inlined_call_operand.vmem [shape: bf16[64,128], index: 8, kind: input, shape index: {}]
  %s9 = inlined_call_operand.vmem [shape: bf16[64,128], index: 9, kind: input, shape index: {}]
  %s10 = inlined_call_operand.vmem [shape: f32[1,128], index: 10, kind: input, shape index: {}]
  %s11 = inlined_call_operand.vmem [shape: f32[2,4,64,128], index: 11, kind: output, shape index: {}]
  %s12 = sld [smem:[#allocation0]]
  $region77: #{pointpillar_forward.14} parent=0
    _
  %s14 = ssub.s32 1, %s12
  %s15 = scalar_select 0, %s14, %s12
  loop: start=0, step=1, limit=4
  $region2: #{pointpillar_forward.14} parent=0 // loop_pre_header
    _
  $region3: #{pointpillar_forward.14} parent=0 // loop_header
    %s17 = sphi 0, %s21
    %p18 = scmp.ge.s32.totalorder %s17, 4
    %s27 = sphi 0, %s29
    %s30 = sphi 0, %s27
    %s31 = sphi 0, %s30
    %s47 = sphi 0, %s31
    %s53 = sphi 0, %s55
    %s56 = sphi 0, %s53
    %s57 = sphi 0, %s56
    %s73 = sphi 0, %s57
    %s77 = sphi 0, %s77
    %s79 = sphi 0, %s77
    %s80 = sphi 0, %s79
    %s94 = sphi 0, %s80
    %s98 = sphi 0, %s98
    %s100 = sphi 0, %s98
    %s101 = sphi 0, %s100
    %s115 = sphi 0, %s101
    %s119 = sphi 0, %s119
    %s121 = sphi 0, %s119
    %s122 = sphi 0, %s121
    %s136 = sphi 0, %s122
    %s140 = sphi 0, %s140
    %s142 = sphi 0, %s140
    %s143 = sphi 0, %s142
    %s157 = sphi 0, %s143
    %s161 = sphi 0, %s161
    %s163 = sphi 0, %s161
    %s164 = sphi 0, %s163
    %s178 = sphi 0, %s164
    %s182 = sphi 0, %s182
    %s184 = sphi 0, %s182
    %s185 = sphi 0, %s184
    %s199 = sphi 0, %s185
    %s203 = sphi 0, %s203
    %s205 = sphi 0, %s203
    %s206 = sphi 0, %s205
    %s220 = sphi 0, %s206
    %s224 = sphi 0, %s224
    %s226 = sphi 0, %s224
    %s227 = sphi 0, %s226
    %s241 = sphi 0, %s227
    %s245 = sphi 0, %s245
    %s247 = sphi 0, %s245
    %s248 = sphi 0, %s247
    %s262 = sphi 0, %s248
    %s268 = sphi 0, %s270
    %s271 = sphi 0, %s268
    %s272 = sphi 0, %s271
    %s288 = sphi 0, %s272
  $region4: #{pointpillar_forward.14} parent=0 // loop_header_branch
    %20 = sbr.rel (%p18) target = $region8
  $region5: #{pointpillar_forward.14} parent=0 // loop_body
    %s22 = ssub.s32 %s17, 1
    %s23 = ssub.s32 %s17, 2
    %s24 = sadd.s32 %s17, 1
    %s25 = ssub.s32 %s17, %s24
    %p26 = scmp.eq.s32.totalorder %s25, 0
    %s28 = sadd.s32 %s27, 1
    %s29 = scalar_select %p26, %s27, %s28
    %p32 = pneg %p26
    %p33 = scmp.eq.s32.totalorder %s17, 1
    %p34 = por %p32, %p33
    %p35 = scmp.ne.s32.totalorder %s27, %s30
    %p36 = scmp.eq.s32.totalorder %s17, 0
    %p37 = por %p35, %p36
    %p38 = scmp.ne.s32.totalorder %s27, %s30
    %p39 = scmp.eq.s32.totalorder %s22, 1
    %p40 = por %p38, %p39
    %p41 = scmp.ne.s32.totalorder %s30, %s31
    %p42 = scmp.eq.s32.totalorder %s22, 0
    %p43 = por %p41, %p42
    %p44 = scmp.ne.s32.totalorder %s30, %s31
    %p45 = scmp.eq.s32.totalorder %s23, 1
    %p46 = por %p44, %p45
    %p48 = scmp.ne.s32.totalorder %s31, %s47
    %p49 = scmp.eq.s32.totalorder %s23, 0
    %p50 = por %p48, %p49
    %s51 = ssub.s32 %s17, %s24
    %p52 = scmp.eq.s32.totalorder %s51, 0
    %s54 = sadd.s32 %s53, 1
    %s55 = scalar_select %p52, %s53, %s54
    %p58 = pneg %p52
    %p59 = scmp.eq.s32.totalorder %s17, 1
    %p60 = por %p58, %p59
    %p61 = scmp.ne.s32.totalorder %s53, %s56
    %p62 = scmp.eq.s32.totalorder %s17, 0
    %p63 = por %p61, %p62
    %p64 = scmp.ne.s32.totalorder %s53, %s56
    %p65 = scmp.eq.s32.totalorder %s22, 1
    %p66 = por %p64, %p65
    %p67 = scmp.ne.s32.totalorder %s56, %s57
    %p68 = scmp.eq.s32.totalorder %s22, 0
    %p69 = por %p67, %p68
    %p70 = scmp.ne.s32.totalorder %s56, %s57
    %p71 = scmp.eq.s32.totalorder %s23, 1
    %p72 = por %p70, %p71
    %p74 = scmp.ne.s32.totalorder %s57, %s73
    %p75 = scmp.eq.s32.totalorder %s23, 0
    %p76 = por %p74, %p75
    %s78 = sadd.s32 %s77, 1
    %p81 = scmp.eq.s32.totalorder %s17, 1
    %p82 = scmp.ne.s32.totalorder %s77, %s79
    %p83 = scmp.eq.s32.totalorder %s17, 0
    %p84 = por %p82, %p83
    %p85 = scmp.ne.s32.totalorder %s77, %s79
    %p86 = scmp.eq.s32.totalorder %s22, 1
    %p87 = por %p85, %p86
    %p88 = scmp.ne.s32.totalorder %s79, %s80
    %p89 = scmp.eq.s32.totalorder %s22, 0
    %p90 = por %p88, %p89
    %p91 = scmp.ne.s32.totalorder %s79, %s80
    %p92 = scmp.eq.s32.totalorder %s23, 1
    %p93 = por %p91, %p92
    %p95 = scmp.ne.s32.totalorder %s80, %s94
    %p96 = scmp.eq.s32.totalorder %s23, 0
    %p97 = por %p95, %p96
    %s99 = sadd.s32 %s98, 1
    %p102 = scmp.eq.s32.totalorder %s17, 1
    %p103 = scmp.ne.s32.totalorder %s98, %s100
    %p104 = scmp.eq.s32.totalorder %s17, 0
    %p105 = por %p103, %p104
    %p106 = scmp.ne.s32.totalorder %s98, %s100
    %p107 = scmp.eq.s32.totalorder %s22, 1
    %p108 = por %p106, %p107
    %p109 = scmp.ne.s32.totalorder %s100, %s101
    %p110 = scmp.eq.s32.totalorder %s22, 0
    %p111 = por %p109, %p110
    %p112 = scmp.ne.s32.totalorder %s100, %s101
    %p113 = scmp.eq.s32.totalorder %s23, 1
    %p114 = por %p112, %p113
    %p116 = scmp.ne.s32.totalorder %s101, %s115
    %p117 = scmp.eq.s32.totalorder %s23, 0
    %p118 = por %p116, %p117
    %s120 = sadd.s32 %s119, 1
    %p123 = scmp.eq.s32.totalorder %s17, 1
    %p124 = scmp.ne.s32.totalorder %s119, %s121
    %p125 = scmp.eq.s32.totalorder %s17, 0
    %p126 = por %p124, %p125
    %p127 = scmp.ne.s32.totalorder %s119, %s121
    %p128 = scmp.eq.s32.totalorder %s22, 1
    %p129 = por %p127, %p128
    %p130 = scmp.ne.s32.totalorder %s121, %s122
    %p131 = scmp.eq.s32.totalorder %s22, 0
    %p132 = por %p130, %p131
    %p133 = scmp.ne.s32.totalorder %s121, %s122
    %p134 = scmp.eq.s32.totalorder %s23, 1
    %p135 = por %p133, %p134
    %p137 = scmp.ne.s32.totalorder %s122, %s136
    %p138 = scmp.eq.s32.totalorder %s23, 0
    %p139 = por %p137, %p138
    %s141 = sadd.s32 %s140, 1
    %p144 = scmp.eq.s32.totalorder %s17, 1
    %p145 = scmp.ne.s32.totalorder %s140, %s142
    %p146 = scmp.eq.s32.totalorder %s17, 0
    %p147 = por %p145, %p146
    %p148 = scmp.ne.s32.totalorder %s140, %s142
    %p149 = scmp.eq.s32.totalorder %s22, 1
    %p150 = por %p148, %p149
    %p151 = scmp.ne.s32.totalorder %s142, %s143
    %p152 = scmp.eq.s32.totalorder %s22, 0
    %p153 = por %p151, %p152
    %p154 = scmp.ne.s32.totalorder %s142, %s143
    %p155 = scmp.eq.s32.totalorder %s23, 1
    %p156 = por %p154, %p155
    %p158 = scmp.ne.s32.totalorder %s143, %s157
    %p159 = scmp.eq.s32.totalorder %s23, 0
    %p160 = por %p158, %p159
    %s162 = sadd.s32 %s161, 1
    %p165 = scmp.eq.s32.totalorder %s17, 1
    %p166 = scmp.ne.s32.totalorder %s161, %s163
    %p167 = scmp.eq.s32.totalorder %s17, 0
    %p168 = por %p166, %p167
    %p169 = scmp.ne.s32.totalorder %s161, %s163
    %p170 = scmp.eq.s32.totalorder %s22, 1
    %p171 = por %p169, %p170
    %p172 = scmp.ne.s32.totalorder %s163, %s164
    %p173 = scmp.eq.s32.totalorder %s22, 0
    %p174 = por %p172, %p173
    %p175 = scmp.ne.s32.totalorder %s163, %s164
    %p176 = scmp.eq.s32.totalorder %s23, 1
    %p177 = por %p175, %p176
    %p179 = scmp.ne.s32.totalorder %s164, %s178
    %p180 = scmp.eq.s32.totalorder %s23, 0
    %p181 = por %p179, %p180
    %s183 = sadd.s32 %s182, 1
    %p186 = scmp.eq.s32.totalorder %s17, 1
    %p187 = scmp.ne.s32.totalorder %s182, %s184
    %p188 = scmp.eq.s32.totalorder %s17, 0
    %p189 = por %p187, %p188
    %p190 = scmp.ne.s32.totalorder %s182, %s184
    %p191 = scmp.eq.s32.totalorder %s22, 1
    %p192 = por %p190, %p191
    %p193 = scmp.ne.s32.totalorder %s184, %s185
    %p194 = scmp.eq.s32.totalorder %s22, 0
    %p195 = por %p193, %p194
    %p196 = scmp.ne.s32.totalorder %s184, %s185
    %p197 = scmp.eq.s32.totalorder %s23, 1
    %p198 = por %p196, %p197
    %p200 = scmp.ne.s32.totalorder %s185, %s199
    %p201 = scmp.eq.s32.totalorder %s23, 0
    %p202 = por %p200, %p201
    %s204 = sadd.s32 %s203, 1
    %p207 = scmp.eq.s32.totalorder %s17, 1
    %p208 = scmp.ne.s32.totalorder %s203, %s205
    %p209 = scmp.eq.s32.totalorder %s17, 0
    %p210 = por %p208, %p209
    %p211 = scmp.ne.s32.totalorder %s203, %s205
    %p212 = scmp.eq.s32.totalorder %s22, 1
    %p213 = por %p211, %p212
    %p214 = scmp.ne.s32.totalorder %s205, %s206
    %p215 = scmp.eq.s32.totalorder %s22, 0
    %p216 = por %p214, %p215
    %p217 = scmp.ne.s32.totalorder %s205, %s206
    %p218 = scmp.eq.s32.totalorder %s23, 1
    %p219 = por %p217, %p218
    %p221 = scmp.ne.s32.totalorder %s206, %s220
    %p222 = scmp.eq.s32.totalorder %s23, 0
    %p223 = por %p221, %p222
    %s225 = sadd.s32 %s224, 1
    %p228 = scmp.eq.s32.totalorder %s17, 1
    %p229 = scmp.ne.s32.totalorder %s224, %s226
    %p230 = scmp.eq.s32.totalorder %s17, 0
    %p231 = por %p229, %p230
    %p232 = scmp.ne.s32.totalorder %s224, %s226
    %p233 = scmp.eq.s32.totalorder %s22, 1
    %p234 = por %p232, %p233
    %p235 = scmp.ne.s32.totalorder %s226, %s227
    %p236 = scmp.eq.s32.totalorder %s22, 0
    %p237 = por %p235, %p236
    %p238 = scmp.ne.s32.totalorder %s226, %s227
    %p239 = scmp.eq.s32.totalorder %s23, 1
    %p240 = por %p238, %p239
    %p242 = scmp.ne.s32.totalorder %s227, %s241
    %p243 = scmp.eq.s32.totalorder %s23, 0
    %p244 = por %p242, %p243
    %s246 = sadd.s32 %s245, 1
    %p249 = scmp.eq.s32.totalorder %s17, 1
    %p250 = scmp.ne.s32.totalorder %s245, %s247
    %p251 = scmp.eq.s32.totalorder %s17, 0
    %p252 = por %p250, %p251
    %p253 = scmp.ne.s32.totalorder %s245, %s247
    %p254 = scmp.eq.s32.totalorder %s22, 1
    %p255 = por %p253, %p254
    %p256 = scmp.ne.s32.totalorder %s247, %s248
    %p257 = scmp.eq.s32.totalorder %s22, 0
    %p258 = por %p256, %p257
    %p259 = scmp.ne.s32.totalorder %s247, %s248
    %p260 = scmp.eq.s32.totalorder %s23, 1
    %p261 = por %p259, %p260
    %p263 = scmp.ne.s32.totalorder %s248, %s262
    %p264 = scmp.eq.s32.totalorder %s23, 0
    %p265 = por %p263, %p264
    %s266 = ssub.s32 %s17, %s24
    %p267 = scmp.eq.s32.totalorder %s266, 0
    %s269 = sadd.s32 %s268, 1
    %s270 = scalar_select %p267, %s268, %s269
    %p273 = pneg %p267
    %p274 = scmp.eq.s32.totalorder %s17, 1
    %p275 = por %p273, %p274
    %p276 = scmp.ne.s32.totalorder %s268, %s271
    %p277 = scmp.eq.s32.totalorder %s17, 0
    %p278 = por %p276, %p277
    %p279 = scmp.ne.s32.totalorder %s268, %s271
    %p280 = scmp.eq.s32.totalorder %s22, 1
    %p281 = por %p279, %p280
    %p282 = scmp.ne.s32.totalorder %s271, %s272
    %p283 = scmp.eq.s32.totalorder %s22, 0
    %p284 = por %p282, %p283
    %p285 = scmp.ne.s32.totalorder %s271, %s272
    %p286 = scmp.eq.s32.totalorder %s23, 1
    %p287 = por %p285, %p286
    %p289 = scmp.ne.s32.totalorder %s272, %s288
    %p290 = scmp.eq.s32.totalorder %s23, 0
    %p291 = por %p289, %p290
    %p292 = scmp.le.s32.totalorder 1, %s17
    %p293 = scmp.lt.s32.totalorder %s17, 3
    %p294 = pnand %p292, %p293
    %p295 = pneg %p294
    // Predicated region
    $region9: #{pointpillar_forward.14} parent=5 // pred_check
      _
    $region10: #{pointpillar_forward.14} parent=5 // pred_check_branch
      %297 = sbr.rel (%p294) target = $region12
    $region11: #{pointpillar_forward.14} parent=5 // pred_region
      %s298 = ssub.s32 %s17, 1
      // Predicated region
      $region13: #{pointpillar_forward.14} parent=11 // pred_check
        %p299 = pneg %p90
      $region14: #{pointpillar_forward.14} parent=11 // pred_check_branch
        %301 = sbr.rel (%p299) target = $region16
      $region15: #{pointpillar_forward.14} parent=11 // pred_region
        _
      $region16: #{pointpillar_forward.14} parent=11 // pred_fallthru
        _
      // Predicated region
      $region17: #{pointpillar_forward.14} parent=11 // pred_check
        %p302 = pneg %p111
      $region18: #{pointpillar_forward.14} parent=11 // pred_check_branch
        %304 = sbr.rel (%p302) target = $region20
      $region19: #{pointpillar_forward.14} parent=11 // pred_region
        _
      $region20: #{pointpillar_forward.14} parent=11 // pred_fallthru
        _
      // Predicated region
      $region21: #{pointpillar_forward.14} parent=11 // pred_check
        %p305 = pneg %p132
      $region22: #{pointpillar_forward.14} parent=11 // pred_check_branch
        %307 = sbr.rel (%p305) target = $region24
      $region23: #{pointpillar_forward.14} parent=11 // pred_region
        _
      $region24: #{pointpillar_forward.14} parent=11 // pred_fallthru
        _
      // Predicated region
      $region25: #{pointpillar_forward.14} parent=11 // pred_check
        %p308 = pneg %p153
      $region26: #{pointpillar_forward.14} parent=11 // pred_check_branch
        %310 = sbr.rel (%p308) target = $region28
      $region27: #{pointpillar_forward.14} parent=11 // pred_region
        _
      $region28: #{pointpillar_forward.14} parent=11 // pred_fallthru
        _
      // Predicated region
      $region29: #{pointpillar_forward.14} parent=11 // pred_check
        %p311 = pneg %p174
      $region30: #{pointpillar_forward.14} parent=11 // pred_check_branch
        %313 = sbr.rel (%p311) target = $region32
      $region31: #{pointpillar_forward.14} parent=11 // pred_region
        _
      $region32: #{pointpillar_forward.14} parent=11 // pred_fallthru
        _
      // Predicated region
      $region33: #{pointpillar_forward.14} parent=11 // pred_check
        %p314 = pneg %p195
      $region34: #{pointpillar_forward.14} parent=11 // pred_check_branch
        %316 = sbr.rel (%p314) target = $region36
      $region35: #{pointpillar_forward.14} parent=11 // pred_region
        _
      $region36: #{pointpillar_forward.14} parent=11 // pred_fallthru
        _
      // Predicated region
      $region37: #{pointpillar_forward.14} parent=11 // pred_check
        %p317 = pneg %p216
      $region38: #{pointpillar_forward.14} parent=11 // pred_check_branch
        %319 = sbr.rel (%p317) target = $region40
      $region39: #{pointpillar_forward.14} parent=11 // pred_region
        _
      $region40: #{pointpillar_forward.14} parent=11 // pred_fallthru
        _
      // Predicated region
      $region41: #{pointpillar_forward.14} parent=11 // pred_check
        %p320 = pneg %p237
      $region42: #{pointpillar_forward.14} parent=11 // pred_check_branch
        %322 = sbr.rel (%p320) target = $region44
      $region43: #{pointpillar_forward.14} parent=11 // pred_region
        _
      $region44: #{pointpillar_forward.14} parent=11 // pred_fallthru
        _
      // Predicated region
      $region45: #{pointpillar_forward.14} parent=11 // pred_check
        %p323 = pneg %p258
      $region46: #{pointpillar_forward.14} parent=11 // pred_check_branch
        %325 = sbr.rel (%p323) target = $region48
      $region47: #{pointpillar_forward.14} parent=11 // pred_region
        _
      $region48: #{pointpillar_forward.14} parent=11 // pred_fallthru
        _
    $region12: #{pointpillar_forward.14} parent=5 // pred_fallthru
      _
    %p326 = scmp.lt.s32.totalorder %s17, 2
    // Predicated region
    $region49: #{pointpillar_forward.14} parent=5 // pred_check
      %p327 = pneg %p326
    $region50: #{pointpillar_forward.14} parent=5 // pred_check_branch
      %329 = sbr.rel (%p327) target = $region52
    $region51: #{pointpillar_forward.14} parent=5 // pred_region
      // Predicated region
      $region53: #{pointpillar_forward.14} parent=51 // pred_check
        %p330 = pneg %p37
      $region54: #{pointpillar_forward.14} parent=51 // pred_check_branch
        %332 = sbr.rel (%p330) target = $region56
      $region55: #{pointpillar_forward.14} parent=51 // pred_region
        %p333 = scmp.lt.s32.totalorder %s17, 1
        %s334 = scalar_select %p333, %s17, 1
        %s335 = smul.addr %s334, 32
        %s336 = smul.addr %s335, 4
        %s337 = scalar_lea.vmem %s0, %s336
      $region56: #{pointpillar_forward.14} parent=51 // pred_fallthru
        _
      // Predicated region
      $region57: #{pointpillar_forward.14} parent=51 // pred_check
        %p338 = pneg %p63
      $region58: #{pointpillar_forward.14} parent=51 // pred_check_branch
        %340 = sbr.rel (%p338) target = $region60
      $region59: #{pointpillar_forward.14} parent=51 // pred_region
        %p341 = scmp.lt.s32.totalorder %s17, 1
        %s342 = scalar_select %p341, %s17, 1
        %s343 = smul.addr %s342, 8
        %s344 = smul.addr %s343, 4
        %s345 = scalar_lea.vmem %s1, %s344
      $region60: #{pointpillar_forward.14} parent=51 // pred_fallthru
        _
    $region52: #{pointpillar_forward.14} parent=5 // pred_fallthru
      _
    %p346 = scmp.le.s32.totalorder 1, %s17
    %p347 = scmp.lt.s32.totalorder %s17, 3
    %p348 = pnand %p346, %p347
    %p349 = pneg %p348
    // Predicated region
    $region61: #{pointpillar_forward.14} parent=5 // pred_check
      _
    $region62: #{pointpillar_forward.14} parent=5 // pred_check_branch
      %351 = sbr.rel (%p348) target = $region64
    $region63: #{pointpillar_forward.14} parent=5 // pred_region
      %s352 = ssub.s32 %s17, 1
      %p353 = scmp.lt.s32.totalorder %s22, 1
      %s354 = scalar_select %p353, %s22, 1
      %s355 = smul.addr %s354, 32
      %s356 = smul.addr %s355, 4
      %s357 = scalar_lea.vmem %s0, %s356
      %p358 = pneg %p43
      %p359 = pneg %p40
      %p360 = scmp.lt.s32.totalorder %s22, 1
      %s361 = scalar_select %p360, %s22, 1
      %s362 = smul.addr %s361, 8
      %s363 = smul.addr %s362, 4
      %s364 = scalar_lea.vmem %s1, %s363
      %p365 = pneg %p69
      %p366 = pneg %p66
      %p367 = pneg %p90
      %p368 = pneg %p87
      %p369 = pneg %p111
      %p370 = pneg %p108
      %p371 = pneg %p132
      %p372 = pneg %p129
      %p373 = pneg %p153
      %p374 = pneg %p150
      %p375 = pneg %p174
      %p376 = pneg %p171
      %p377 = pneg %p195
      %p378 = pneg %p192
      %p379 = pneg %p216
      %p380 = pneg %p213
      %p381 = pneg %p237
      %p382 = pneg %p234
      %p383 = pneg %p258
      %p384 = pneg %p255
      %p385 = pneg %p284
      %p386 = pneg %p281
      %p387 = scmp.lt.s32.totalorder %s22, 1
      %s388 = scalar_select %p387, %s22, 1
      %s389 = smul.addr %s388, 32
      %s390 = smul.addr %s389, 8
      %s391 = scalar_lea.vmem %s11, %s390
      %p392 = scmp.lt.s32.totalorder %s22, 1
      %s393 = scalar_select %p392, %s22, 1
      %s394 = smul.addr %s393, 32
      %s395 = smul.addr %s394, 4
      %s396 = scalar_lea.vmem %s0, %s395
      %p397 = scmp.lt.s32.totalorder %s22, 1
      %s398 = scalar_select %p397, %s22, 1
      %s399 = smul.addr %s398, 8
      %s400 = smul.addr %s399, 4
      %s401 = scalar_lea.vmem %s1, %s400
      %p402 = scmp.lt.s32.totalorder %s22, 1
      %s403 = scalar_select %p402, %s22, 1
      %s404 = smul.addr %s403, 32
      %s405 = smul.addr %s404, 8
      %s406 = scalar_lea.vmem %s11, %s405
      %v408 = vld [vmem:[%s401] sm:$0xf]
      %v409 = vld [vmem:[%s401 + $0x4] sm:$0xf]
      %v410 = vld [vmem:[%s401 + $0x8] sm:$0xf]
      %v411 = vld [vmem:[%s401 + $0xc] sm:$0xf]
      %v412 = vld [vmem:[%s401 + $0x10] sm:$0xf]
      %v413 = vld [vmem:[%s401 + $0x14] sm:$0xf]
      %v414 = vld [vmem:[%s401 + $0x18] sm:$0xf]
      %v415 = vld [vmem:[%s401 + $0x1c] sm:$0xf]
      %v416 = vld [vmem:[%s2] sm:$0xf]
      %v417 = vld [vmem:[%s2 + $0x4] sm:$0xf]
      %v418 = vld [vmem:[%s2 + $0x8] sm:$0xf]
      %v419 = vld [vmem:[%s2 + $0xc] sm:$0xf]
      %v420 = vld [vmem:[%s8] sm:$0xf]
      %v421 = vld [vmem:[%s8 + $0x4] sm:$0xf]
      %v422 = vld [vmem:[%s8 + $0x8] sm:$0xf]
      %v423 = vld [vmem:[%s8 + $0xc] sm:$0xf]
      %v424 = vld [vmem:[%s8 + $0x10] sm:$0xf]
      %v425 = vld [vmem:[%s8 + $0x14] sm:$0xf]
      %v426 = vld [vmem:[%s8 + $0x18] sm:$0xf]
      %v427 = vld [vmem:[%s8 + $0x1c] sm:$0xf]
      %v428 = vld [vmem:[%s9] sm:$0xf]
      %v429 = vld [vmem:[%s9 + $0x4] sm:$0xf]
      %v430 = vld [vmem:[%s9 + $0x8] sm:$0xf]
      %v431 = vld [vmem:[%s9 + $0xc] sm:$0xf]
      %v432 = vld [vmem:[%s9 + $0x10] sm:$0xf]
      %v433 = vld [vmem:[%s9 + $0x14] sm:$0xf]
      %v434 = vld [vmem:[%s9 + $0x18] sm:$0xf]
      %v435 = vld [vmem:[%s9 + $0x1c] sm:$0xf]
      %v436 = vld [vmem:[%s396] sm:$0xf]
      %v437 = vld [vmem:[%s396 + $0x4] sm:$0xf]
      %v438 = vld [vmem:[%s396 + $0x8] sm:$0xf]
      %v439 = vld [vmem:[%s396 + $0xc] sm:$0xf]
      %v440 = vld [vmem:[%s396 + $0x10] sm:$0xf]
      %v441 = vld [vmem:[%s396 + $0x14] sm:$0xf]
      %v442 = vld [vmem:[%s396 + $0x18] sm:$0xf]
      %v443 = vld [vmem:[%s396 + $0x1c] sm:$0xf]
      %v452 = vunpack.c.l.b16 %v436
      %v453 = vunpack.c.l.b16 %v437
      %v454 = vunpack.c.l.b16 %v438
      %v455 = vunpack.c.l.b16 %v439
      %v456 = vunpack.c.l.b16 %v440
      %v457 = vunpack.c.l.b16 %v441
      %v458 = vunpack.c.l.b16 %v442
      %v459 = vunpack.c.l.b16 %v443
      %v460 = vpack.c.b16 %v453, %v452
      %v461 = vpack.c.b16 %v455, %v454
      %v462 = vpack.c.b16 %v457, %v456
      %v463 = vpack.c.b16 %v459, %v458
      %v468 = vunpack.c.l.b16 %v416
      %v469 = vunpack.c.l.b16 %v417
      %v470 = vunpack.c.l.b16 %v418
      %v471 = vunpack.c.l.b16 %v419
      %v472 = vpack.c.b16 %v469, %v468
      %v473 = vpack.c.b16 %v471, %v470
      %vm476 = vcmask 261120
      %v478 = vsel %vm476, %v460, 0
      %v481 = vsel %vm476, %v461, 0
      %v484 = vsel %vm476, %v462, 0
      %v487 = vsel %vm476, %v463, 0
      %489 = vmatprep.subr.bf16.mxu0 0
      %490 = vmatpush1.bf16.msra.mxu0 0
      %491 = vmatprep.subr.bf16.mxu0 0
      %492 = vmatpush1.bf16.msra.mxu0 0
      %493 = vmatprep.subr.bf16.mxu0 0
      %494 = vmatpush1.bf16.msra.mxu0 0
      %495 = vmatprep.subr.bf16.mxu0 0
      %496 = vmatpush1.bf16.msra.mxu0 0
      %497 = vmatprep.subr.bf16.mxu0 0
      %498 = vmatpush1.bf16.msra.mxu0 0
      %499 = vmatprep.subr.bf16.mxu0 0
      %500 = vmatpush1.bf16.msra.mxu0 0
      %501 = vmatprep.subr.bf16.mxu0 0
      %502 = vmatpush1.bf16.msra.mxu0 %v473
      %503 = vmatprep.subr.bf16.mxu0 0
      %504 = vmatpush1.bf16.msra.mxu0 %v472
      %505 = vmatprep.subr.bf16.mxu0 0
      %506 = vmatpush2.bf16.msra.mxu0 0
      %507 = vmatprep.subr.bf16.mxu0 0
      %508 = vmatpush2.bf16.msra.mxu0 0
      %509 = vmatprep.subr.bf16.mxu0 0
      %510 = vmatpush2.bf16.msra.mxu0 0
      %511 = vmatprep.subr.bf16.mxu0 0
      %512 = vmatpush2.bf16.msra.mxu0 0
      %513 = vmatprep.subr.bf16.mxu0 0
      %514 = vmatpush2.bf16.msra.mxu0 0
      %515 = vmatprep.subr.bf16.mxu0 0
      %516 = vmatpush2.bf16.msra.mxu0 0
      %517 = vmatprep.subr.bf16.mxu0 0
      %518 = vmatpush2.bf16.msra.mxu0 0
      %519 = vmatprep.subr.bf16.mxu0 0
      %520 = vmatpush2.bf16.msra.mxu0 0
      %521 = vmatprep.mubr.bf16.mxu0 0
      %522 = vmatmul.mubr.bf16.gmra.mxu0 %v478
      %v523 = vpop.f32.mrf.mxu0
      %v524 = vadd.f32 0.0, %v523
      %v525 = vpop.f32.mrf.mxu0
      %v526 = vpop.f32.mrf.mxu0
      %v527 = vadd.f32 0.0, %v526
      %v528 = vpop.f32.mrf.mxu0
      %529 = vmatprep.mubr.bf16.mxu0 0
      %530 = vmatmul.mubr.bf16.gmra.mxu0 %v481
      %v531 = vpop.f32.mrf.mxu0
      %v532 = vadd.f32 0.0, %v531
      %v533 = vpop.f32.mrf.mxu0
      %v534 = vpop.f32.mrf.mxu0
      %v535 = vadd.f32 0.0, %v534
      %v536 = vpop.f32.mrf.mxu0
      %537 = vmatprep.mubr.bf16.mxu0 0
      %538 = vmatmul.mubr.bf16.gmra.mxu0 %v484
      %v539 = vpop.f32.mrf.mxu0
      %v540 = vadd.f32 0.0, %v539
      %v541 = vpop.f32.mrf.mxu0
      %v542 = vpop.f32.mrf.mxu0
      %v543 = vadd.f32 0.0, %v542
      %v544 = vpop.f32.mrf.mxu0
      %545 = vmatprep.mubr.bf16.mxu0 0
      %546 = vmatmul.mubr.bf16.gmra.mxu0 %v487
      %v547 = vpop.f32.mrf.mxu0
      %v548 = vadd.f32 0.0, %v547
      %v549 = vpop.f32.mrf.mxu0
      %v550 = vpop.f32.mrf.mxu0
      %v551 = vadd.f32 0.0, %v550
      %v552 = vpop.f32.mrf.mxu0
      %553 = vdwg.mxu0
      %v554 = vld [vmem:[%s3] sm:$0x1]
      %v556 = vlaneseq
      %v557 = vshrl.u32 %v556, 7
      %v558 = vsub.s32 0, %v557
      %v559 = vrot.slane %v554, %v558
      %v561 = vmul.f32 %v524, %v559
      %v562 = vmul.f32 %v527, %v559
      %v563 = vmul.f32 %v532, %v559
      %v564 = vmul.f32 %v535, %v559
      %v565 = vmul.f32 %v540, %v559
      %v566 = vmul.f32 %v543, %v559
      %v567 = vmul.f32 %v548, %v559
      %v568 = vmul.f32 %v551, %v559
      %v569 = vld [vmem:[%s4] sm:$0x1]
      %v571 = vlaneseq
      %v572 = vshrl.u32 %v571, 7
      %v573 = vsub.s32 0, %v572
      %v574 = vrot.slane %v569, %v573
      %v576 = vadd.f32 %v561, %v574
      %v577 = vadd.f32 %v562, %v574
      %v578 = vadd.f32 %v563, %v574
      %v579 = vadd.f32 %v564, %v574
      %v580 = vadd.f32 %v565, %v574
      %v581 = vadd.f32 %v566, %v574
      %v582 = vadd.f32 %v567, %v574
      %v583 = vadd.f32 %v568, %v574
      %v584 = vmax.f32 %v576, 0.0
      %v585 = vmax.f32 %v577, 0.0
      %v586 = vmax.f32 %v578, 0.0
      %v587 = vmax.f32 %v579, 0.0
      %v588 = vmax.f32 %v580, 0.0
      %v589 = vmax.f32 %v581, 0.0
      %v590 = vmax.f32 %v582, 0.0
      %v591 = vmax.f32 %v583, 0.0
      %v592 = vld [vmem:[%s5] sm:$0xf]
      %v593 = vld [vmem:[%s5 + $0x4] sm:$0xf]
      %v594 = vld [vmem:[%s5 + $0x8] sm:$0xf]
      %v595 = vld [vmem:[%s5 + $0xc] sm:$0xf]
      %v596 = vld [vmem:[%s5 + $0x10] sm:$0xf]
      %v597 = vld [vmem:[%s5 + $0x14] sm:$0xf]
      %v598 = vld [vmem:[%s5 + $0x18] sm:$0xf]
      %v599 = vld [vmem:[%s5 + $0x1c] sm:$0xf]
      %v608 = vunpack.c.l.b16 %v408
      %v609 = vunpack.c.l.b16 %v409
      %v610 = vunpack.c.l.b16 %v410
      %v611 = vunpack.c.l.b16 %v411
      %v612 = vunpack.c.l.b16 %v412
      %v613 = vunpack.c.l.b16 %v413
      %v614 = vunpack.c.l.b16 %v414
      %v615 = vunpack.c.l.b16 %v415
      %v616 = vpack.c.b16 %v609, %v608
      %v617 = vpack.c.b16 %v611, %v610
      %v618 = vpack.c.b16 %v613, %v612
      %v619 = vpack.c.b16 %v615, %v614
      %v628 = vunpack.c.l.b16 %v592
      %v629 = vunpack.c.l.b16 %v593
      %v630 = vunpack.c.l.b16 %v594
      %v631 = vunpack.c.l.b16 %v595
      %v632 = vunpack.c.l.b16 %v596
      %v633 = vunpack.c.l.b16 %v597
      %v634 = vunpack.c.l.b16 %v598
      %v635 = vunpack.c.l.b16 %v599
      %v636 = vpack.c.b16 %v629, %v628
      %v637 = vpack.c.b16 %v631, %v630
      %v638 = vpack.c.b16 %v633, %v632
      %v639 = vpack.c.b16 %v635, %v634
      %vm644 = vcmask 523264
      %v646 = vsel %vm644, %v616, 0
      %v649 = vsel %vm644, %v617, 0
      %v652 = vsel %vm644, %v618, 0
      %v655 = vsel %vm644, %v619, 0
      %657 = vmatprep.subr.bf16.mxu0 0
      %658 = vmatpush1.bf16.msra.mxu0 0
      %659 = vmatprep.subr.bf16.mxu0 0
      %660 = vmatpush1.bf16.msra.mxu0 0
      %661 = vmatprep.subr.bf16.mxu0 0
      %662 = vmatpush1.bf16.msra.mxu0 0
      %663 = vmatprep.subr.bf16.mxu0 0
      %664 = vmatpush1.bf16.msra.mxu0 0
      %665 = vmatprep.subr.bf16.mxu0 0
      %666 = vmatpush1.bf16.msra.mxu0 %v639
      %667 = vmatprep.subr.bf16.mxu0 0
      %668 = vmatpush1.bf16.msra.mxu0 %v638
      %669 = vmatprep.subr.bf16.mxu0 0
      %670 = vmatpush1.bf16.msra.mxu0 %v637
      %671 = vmatprep.subr.bf16.mxu0 0
      %672 = vmatpush1.bf16.msra.mxu0 %v636
      %673 = vmatprep.subr.bf16.mxu0 0
      %674 = vmatpush2.bf16.msra.mxu0 0
      %675 = vmatprep.subr.bf16.mxu0 0
      %676 = vmatpush2.bf16.msra.mxu0 0
      %677 = vmatprep.subr.bf16.mxu0 0
      %678 = vmatpush2.bf16.msra.mxu0 0
      %679 = vmatprep.subr.bf16.mxu0 0
      %680 = vmatpush2.bf16.msra.mxu0 0
      %681 = vmatprep.subr.bf16.mxu0 0
      %682 = vmatpush2.bf16.msra.mxu0 0
      %683 = vmatprep.subr.bf16.mxu0 0
      %684 = vmatpush2.bf16.msra.mxu0 0
      %685 = vmatprep.subr.bf16.mxu0 0
      %686 = vmatpush2.bf16.msra.mxu0 0
      %687 = vmatprep.subr.bf16.mxu0 0
      %688 = vmatpush2.bf16.msra.mxu0 0
      %689 = vmatprep.mubr.bf16.mxu0 0
      %690 = vmatmul.mubr.bf16.gmra.mxu0 %v646
      %v691 = vpop.f32.mrf.mxu0
      %v692 = vadd.f32 0.0, %v691
      %v693 = vpop.f32.mrf.mxu0
      %v694 = vpop.f32.mrf.mxu0
      %v695 = vadd.f32 0.0, %v694
      %v696 = vpop.f32.mrf.mxu0
      %697 = vmatprep.mubr.bf16.mxu0 0
      %698 = vmatmul.mubr.bf16.gmra.mxu0 %v649
      %v699 = vpop.f32.mrf.mxu0
      %v700 = vadd.f32 0.0, %v699
      %v701 = vpop.f32.mrf.mxu0
      %v702 = vpop.f32.mrf.mxu0
      %v703 = vadd.f32 0.0, %v702
      %v704 = vpop.f32.mrf.mxu0
      %705 = vmatprep.mubr.bf16.mxu0 0
      %706 = vmatmul.mubr.bf16.gmra.mxu0 %v652
      %v707 = vpop.f32.mrf.mxu0
      %v708 = vadd.f32 0.0, %v707
      %v709 = vpop.f32.mrf.mxu0
      %v710 = vpop.f32.mrf.mxu0
      %v711 = vadd.f32 0.0, %v710
      %v712 = vpop.f32.mrf.mxu0
      %713 = vmatprep.mubr.bf16.mxu0 0
      %714 = vmatmul.mubr.bf16.gmra.mxu0 %v655
      %v715 = vpop.f32.mrf.mxu0
      %v716 = vadd.f32 0.0, %v715
      %v717 = vpop.f32.mrf.mxu0
      %v718 = vpop.f32.mrf.mxu0
      %v719 = vadd.f32 0.0, %v718
      %v720 = vpop.f32.mrf.mxu0
      %721 = vdwg.mxu0
      %v722 = vld [vmem:[%s6] sm:$0x1]
      %v724 = vlaneseq
      %v725 = vshrl.u32 %v724, 7
      %v726 = vsub.s32 0, %v725
      %v727 = vrot.slane %v722, %v726
      %v729 = vmul.f32 %v692, %v727
      %v730 = vmul.f32 %v695, %v727
      %v731 = vmul.f32 %v700, %v727
      %v732 = vmul.f32 %v703, %v727
      %v733 = vmul.f32 %v708, %v727
      %v734 = vmul.f32 %v711, %v727
      %v735 = vmul.f32 %v716, %v727
      %v736 = vmul.f32 %v719, %v727
      %v737 = vld [vmem:[%s7] sm:$0x1]
      %v739 = vlaneseq
      %v740 = vshrl.u32 %v739, 7
      %v741 = vsub.s32 0, %v740
      %v742 = vrot.slane %v737, %v741
      %v744 = vadd.f32 %v729, %v742
      %v745 = vadd.f32 %v730, %v742
      %v746 = vadd.f32 %v731, %v742
      %v747 = vadd.f32 %v732, %v742
      %v748 = vadd.f32 %v733, %v742
      %v749 = vadd.f32 %v734, %v742
      %v750 = vadd.f32 %v735, %v742
      %v751 = vadd.f32 %v736, %v742
      %v752 = vmax.f32 %v744, 0.0
      %v753 = vmax.f32 %v745, 0.0
      %v754 = vmax.f32 %v746, 0.0
      %v755 = vmax.f32 %v747, 0.0
      %v756 = vmax.f32 %v748, 0.0
      %v757 = vmax.f32 %v749, 0.0
      %v758 = vmax.f32 %v750, 0.0
      %v759 = vmax.f32 %v751, 0.0
      %v760 = vpack.c.bf16 %v585, %v584
      %v761 = vpack.c.bf16 %v587, %v586
      %v762 = vpack.c.bf16 %v589, %v588
      %v763 = vpack.c.bf16 %v591, %v590
      %v764 = vpack.c.bf16 %v753, %v752
      %v765 = vpack.c.bf16 %v755, %v754
      %v766 = vpack.c.bf16 %v757, %v756
      %v767 = vpack.c.bf16 %v759, %v758
      %v776 = vunpack.c.l.b16 %v428
      %v777 = vunpack.c.l.b16 %v429
      %v778 = vunpack.c.l.b16 %v430
      %v779 = vunpack.c.l.b16 %v431
      %v780 = vunpack.c.l.b16 %v432
      %v781 = vunpack.c.l.b16 %v433
      %v782 = vunpack.c.l.b16 %v434
      %v783 = vunpack.c.l.b16 %v435
      %v784 = vpack.c.b16 %v777, %v776
      %v785 = vpack.c.b16 %v779, %v778
      %v786 = vpack.c.b16 %v781, %v780
      %v787 = vpack.c.b16 %v783, %v782
      %v793 = vsel %vm644, %v764, 0
      %v796 = vsel %vm644, %v765, 0
      %v799 = vsel %vm644, %v766, 0
      %v802 = vsel %vm644, %v767, 0
      %804 = vmatprep.subr.bf16.mxu0 0
      %805 = vmatpush1.bf16.msra.mxu0 0
      %806 = vmatprep.subr.bf16.mxu0 0
      %807 = vmatpush1.bf16.msra.mxu0 0
      %808 = vmatprep.subr.bf16.mxu0 0
      %809 = vmatpush1.bf16.msra.mxu0 0
      %810 = vmatprep.subr.bf16.mxu0 0
      %811 = vmatpush1.bf16.msra.mxu0 0
      %812 = vmatprep.subr.bf16.mxu0 0
      %813 = vmatpush1.bf16.msra.mxu0 %v787
      %814 = vmatprep.subr.bf16.mxu0 0
      %815 = vmatpush1.bf16.msra.mxu0 %v786
      %816 = vmatprep.subr.bf16.mxu0 0
      %817 = vmatpush1.bf16.msra.mxu0 %v785
      %818 = vmatprep.subr.bf16.mxu0 0
      %819 = vmatpush1.bf16.msra.mxu0 %v784
      %820 = vmatprep.subr.bf16.mxu0 0
      %821 = vmatpush2.bf16.msra.mxu0 0
      %822 = vmatprep.subr.bf16.mxu0 0
      %823 = vmatpush2.bf16.msra.mxu0 0
      %824 = vmatprep.subr.bf16.mxu0 0
      %825 = vmatpush2.bf16.msra.mxu0 0
      %826 = vmatprep.subr.bf16.mxu0 0
      %827 = vmatpush2.bf16.msra.mxu0 0
      %828 = vmatprep.subr.bf16.mxu0 0
      %829 = vmatpush2.bf16.msra.mxu0 0
      %830 = vmatprep.subr.bf16.mxu0 0
      %831 = vmatpush2.bf16.msra.mxu0 0
      %832 = vmatprep.subr.bf16.mxu0 0
      %833 = vmatpush2.bf16.msra.mxu0 0
      %834 = vmatprep.subr.bf16.mxu0 0
      %835 = vmatpush2.bf16.msra.mxu0 0
      %836 = vmatprep.mubr.bf16.mxu0 0
      %837 = vmatmul.mubr.bf16.gmra.mxu0 %v793
      %v838 = vpop.f32.mrf.mxu0
      %v839 = vadd.f32 0.0, %v838
      %v840 = vpop.f32.mrf.mxu0
      %v841 = vpop.f32.mrf.mxu0
      %v842 = vadd.f32 0.0, %v841
      %v843 = vpop.f32.mrf.mxu0
      %844 = vmatprep.mubr.bf16.mxu0 0
      %845 = vmatmul.mubr.bf16.gmra.mxu0 %v796
      %v846 = vpop.f32.mrf.mxu0
      %v847 = vadd.f32 0.0, %v846
      %v848 = vpop.f32.mrf.mxu0
      %v849 = vpop.f32.mrf.mxu0
      %v850 = vadd.f32 0.0, %v849
      %v851 = vpop.f32.mrf.mxu0
      %852 = vmatprep.mubr.bf16.mxu0 0
      %853 = vmatmul.mubr.bf16.gmra.mxu0 %v799
      %v854 = vpop.f32.mrf.mxu0
      %v855 = vadd.f32 0.0, %v854
      %v856 = vpop.f32.mrf.mxu0
      %v857 = vpop.f32.mrf.mxu0
      %v858 = vadd.f32 0.0, %v857
      %v859 = vpop.f32.mrf.mxu0
      %860 = vmatprep.mubr.bf16.mxu0 0
      %861 = vmatmul.mubr.bf16.gmra.mxu0 %v802
      %v862 = vpop.f32.mrf.mxu0
      %v863 = vadd.f32 0.0, %v862
      %v864 = vpop.f32.mrf.mxu0
      %v865 = vpop.f32.mrf.mxu0
      %v866 = vadd.f32 0.0, %v865
      %v867 = vpop.f32.mrf.mxu0
      %868 = vdwg.mxu0
      %v877 = vunpack.c.l.b16 %v420
      %v878 = vunpack.c.l.b16 %v421
      %v879 = vunpack.c.l.b16 %v422
      %v880 = vunpack.c.l.b16 %v423
      %v881 = vunpack.c.l.b16 %v424
      %v882 = vunpack.c.l.b16 %v425
      %v883 = vunpack.c.l.b16 %v426
      %v884 = vunpack.c.l.b16 %v427
      %v885 = vpack.c.b16 %v878, %v877
      %v886 = vpack.c.b16 %v880, %v879
      %v887 = vpack.c.b16 %v882, %v881
      %v888 = vpack.c.b16 %v884, %v883
      %v894 = vsel %vm644, %v760, 0
      %v897 = vsel %vm644, %v761, 0
      %v900 = vsel %vm644, %v762, 0
      %v903 = vsel %vm644, %v763, 0
      %905 = vmatprep.subr.bf16.mxu0 0
      %906 = vmatpush1.bf16.msra.mxu0 0
      %907 = vmatprep.subr.bf16.mxu0 0
      %908 = vmatpush1.bf16.msra.mxu0 0
      %909 = vmatprep.subr.bf16.mxu0 0
      %910 = vmatpush1.bf16.msra.mxu0 0
      %911 = vmatprep.subr.bf16.mxu0 0
      %912 = vmatpush1.bf16.msra.mxu0 0
      %913 = vmatprep.subr.bf16.mxu0 0
      %914 = vmatpush1.bf16.msra.mxu0 %v888
      %915 = vmatprep.subr.bf16.mxu0 0
      %916 = vmatpush1.bf16.msra.mxu0 %v887
      %917 = vmatprep.subr.bf16.mxu0 0
      %918 = vmatpush1.bf16.msra.mxu0 %v886
      %919 = vmatprep.subr.bf16.mxu0 0
      %920 = vmatpush1.bf16.msra.mxu0 %v885
      %921 = vmatprep.subr.bf16.mxu0 0
      %922 = vmatpush2.bf16.msra.mxu0 0
      %923 = vmatprep.subr.bf16.mxu0 0
      %924 = vmatpush2.bf16.msra.mxu0 0
      %925 = vmatprep.subr.bf16.mxu0 0
      %926 = vmatpush2.bf16.msra.mxu0 0
      %927 = vmatprep.subr.bf16.mxu0 0
      %928 = vmatpush2.bf16.msra.mxu0 0
      %929 = vmatprep.subr.bf16.mxu0 0
      %930 = vmatpush2.bf16.msra.mxu0 0
      %931 = vmatprep.subr.bf16.mxu0 0
      %932 = vmatpush2.bf16.msra.mxu0 0
      %933 = vmatprep.subr.bf16.mxu0 0
      %934 = vmatpush2.bf16.msra.mxu0 0
      %935 = vmatprep.subr.bf16.mxu0 0
      %936 = vmatpush2.bf16.msra.mxu0 0
      %937 = vmatprep.mubr.bf16.mxu0 0
      %938 = vmatmul.mubr.bf16.gmra.mxu0 %v894
      %v939 = vpop.f32.mrf.mxu0
      %v940 = vadd.f32 %v839, %v939
      %v941 = vpop.f32.mrf.mxu0
      %v942 = vpop.f32.mrf.mxu0
      %v943 = vadd.f32 %v842, %v942
      %v944 = vpop.f32.mrf.mxu0
      %945 = vmatprep.mubr.bf16.mxu0 0
      %946 = vmatmul.mubr.bf16.gmra.mxu0 %v897
      %v947 = vpop.f32.mrf.mxu0
      %v948 = vadd.f32 %v847, %v947
      %v949 = vpop.f32.mrf.mxu0
      %v950 = vpop.f32.mrf.mxu0
      %v951 = vadd.f32 %v850, %v950
      %v952 = vpop.f32.mrf.mxu0
      %953 = vmatprep.mubr.bf16.mxu0 0
      %954 = vmatmul.mubr.bf16.gmra.mxu0 %v900
      %v955 = vpop.f32.mrf.mxu0
      %v956 = vadd.f32 %v855, %v955
      %v957 = vpop.f32.mrf.mxu0
      %v958 = vpop.f32.mrf.mxu0
      %v959 = vadd.f32 %v858, %v958
      %v960 = vpop.f32.mrf.mxu0
      %961 = vmatprep.mubr.bf16.mxu0 0
      %962 = vmatmul.mubr.bf16.gmra.mxu0 %v903
      %v963 = vpop.f32.mrf.mxu0
      %v964 = vadd.f32 %v863, %v963
      %v965 = vpop.f32.mrf.mxu0
      %v966 = vpop.f32.mrf.mxu0
      %v967 = vadd.f32 %v866, %v966
      %v968 = vpop.f32.mrf.mxu0
      %969 = vdwg.mxu0
      %v970 = vld [vmem:[%s10] sm:$0x1]
      %v972 = vlaneseq
      %v973 = vshrl.u32 %v972, 7
      %v974 = vsub.s32 0, %v973
      %v975 = vrot.slane %v970, %v974
      %v977 = vadd.f32 %v940, %v975
      %v978 = vadd.f32 %v943, %v975
      %v979 = vadd.f32 %v948, %v975
      %v980 = vadd.f32 %v951, %v975
      %v981 = vadd.f32 %v956, %v975
      %v982 = vadd.f32 %v959, %v975
      %v983 = vadd.f32 %v964, %v975
      %v984 = vadd.f32 %v967, %v975
      %985 = vst [vmem:[%s406] sm:$0xff] %v977
      %986 = vst [vmem:[%s406 + $0x8] sm:$0xff] %v978
      %987 = vst [vmem:[%s406 + $0x10] sm:$0xff] %v979
      %988 = vst [vmem:[%s406 + $0x18] sm:$0xff] %v980
      %989 = vst [vmem:[%s406 + $0x20] sm:$0xff] %v981
      %990 = vst [vmem:[%s406 + $0x28] sm:$0xff] %v982
      %991 = vst [vmem:[%s406 + $0x30] sm:$0xff] %v983
      %992 = vst [vmem:[%s406 + $0x38] sm:$0xff] %v984
      %s993 = scalar_lea.vmem %s396, 32
      %v994 = vld [vmem:[%s993] sm:$0xf]
      %v995 = vld [vmem:[%s993 + $0x4] sm:$0xf]
      %v996 = vld [vmem:[%s993 + $0x8] sm:$0xf]
      %v997 = vld [vmem:[%s993 + $0xc] sm:$0xf]
      %v998 = vld [vmem:[%s993 + $0x10] sm:$0xf]
      %v999 = vld [vmem:[%s993 + $0x14] sm:$0xf]
      %v1000 = vld [vmem:[%s993 + $0x18] sm:$0xf]
      %v1001 = vld [vmem:[%s993 + $0x1c] sm:$0xf]
      %v1010 = vunpack.c.l.b16 %v994
      %v1011 = vunpack.c.l.b16 %v995
      %v1012 = vunpack.c.l.b16 %v996
      %v1013 = vunpack.c.l.b16 %v997
      %v1014 = vunpack.c.l.b16 %v998
      %v1015 = vunpack.c.l.b16 %v999
      %v1016 = vunpack.c.l.b16 %v1000
      %v1017 = vunpack.c.l.b16 %v1001
      %v1018 = vpack.c.b16 %v1011, %v1010
      %v1019 = vpack.c.b16 %v1013, %v1012
      %v1020 = vpack.c.b16 %v1015, %v1014
      %v1021 = vpack.c.b16 %v1017, %v1016
      %v1023 = vsel %vm476, %v1018, 0
      %v1026 = vsel %vm476, %v1019, 0
      %v1029 = vsel %vm476, %v1020, 0
      %v1032 = vsel %vm476, %v1021, 0
      %1034 = vmatprep.subr.bf16.mxu0 0
      %1035 = vmatpush1.bf16.msra.mxu0 0
      %1036 = vmatprep.subr.bf16.mxu0 0
      %1037 = vmatpush1.bf16.msra.mxu0 0
      %1038 = vmatprep.subr.bf16.mxu0 0
      %1039 = vmatpush1.bf16.msra.mxu0 0
      %1040 = vmatprep.subr.bf16.mxu0 0
      %1041 = vmatpush1.bf16.msra.mxu0 0
      %1042 = vmatprep.subr.bf16.mxu0 0
      %1043 = vmatpush1.bf16.msra.mxu0 0
      %1044 = vmatprep.subr.bf16.mxu0 0
      %1045 = vmatpush1.bf16.msra.mxu0 0
      %1046 = vmatprep.subr.bf16.mxu0 0
      %1047 = vmatpush1.bf16.msra.mxu0 %v473
      %1048 = vmatprep.subr.bf16.mxu0 0
      %1049 = vmatpush1.bf16.msra.mxu0 %v472
      %1050 = vmatprep.subr.bf16.mxu0 0
      %1051 = vmatpush2.bf16.msra.mxu0 0
      %1052 = vmatprep.subr.bf16.mxu0 0
      %1053 = vmatpush2.bf16.msra.mxu0 0
      %1054 = vmatprep.subr.bf16.mxu0 0
      %1055 = vmatpush2.bf16.msra.mxu0 0
      %1056 = vmatprep.subr.bf16.mxu0 0
      %1057 = vmatpush2.bf16.msra.mxu0 0
      %1058 = vmatprep.subr.bf16.mxu0 0
      %1059 = vmatpush2.bf16.msra.mxu0 0
      %1060 = vmatprep.subr.bf16.mxu0 0
      %1061 = vmatpush2.bf16.msra.mxu0 0
      %1062 = vmatprep.subr.bf16.mxu0 0
      %1063 = vmatpush2.bf16.msra.mxu0 0
      %1064 = vmatprep.subr.bf16.mxu0 0
      %1065 = vmatpush2.bf16.msra.mxu0 0
      %1066 = vmatprep.mubr.bf16.mxu0 0
      %1067 = vmatmul.mubr.bf16.gmra.mxu0 %v1023
      %v1068 = vpop.f32.mrf.mxu0
      %v1069 = vadd.f32 0.0, %v1068
      %v1070 = vpop.f32.mrf.mxu0
      %v1071 = vpop.f32.mrf.mxu0
      %v1072 = vadd.f32 0.0, %v1071
      %v1073 = vpop.f32.mrf.mxu0
      %1074 = vmatprep.mubr.bf16.mxu0 0
      %1075 = vmatmul.mubr.bf16.gmra.mxu0 %v1026
      %v1076 = vpop.f32.mrf.mxu0
      %v1077 = vadd.f32 0.0, %v1076
      %v1078 = vpop.f32.mrf.mxu0
      %v1079 = vpop.f32.mrf.mxu0
      %v1080 = vadd.f32 0.0, %v1079
      %v1081 = vpop.f32.mrf.mxu0
      %1082 = vmatprep.mubr.bf16.mxu0 0
      %1083 = vmatmul.mubr.bf16.gmra.mxu0 %v1029
      %v1084 = vpop.f32.mrf.mxu0
      %v1085 = vadd.f32 0.0, %v1084
      %v1086 = vpop.f32.mrf.mxu0
      %v1087 = vpop.f32.mrf.mxu0
      %v1088 = vadd.f32 0.0, %v1087
      %v1089 = vpop.f32.mrf.mxu0
      %1090 = vmatprep.mubr.bf16.mxu0 0
      %1091 = vmatmul.mubr.bf16.gmra.mxu0 %v1032
      %v1092 = vpop.f32.mrf.mxu0
      %v1093 = vadd.f32 0.0, %v1092
      %v1094 = vpop.f32.mrf.mxu0
      %v1095 = vpop.f32.mrf.mxu0
      %v1096 = vadd.f32 0.0, %v1095
      %v1097 = vpop.f32.mrf.mxu0
      %1098 = vdwg.mxu0
      %v1099 = vld [vmem:[%s3] sm:$0x1]
      %v1101 = vlaneseq
      %v1102 = vshrl.u32 %v1101, 7
      %v1103 = vsub.s32 0, %v1102
      %v1104 = vrot.slane %v1099, %v1103
      %v1106 = vmul.f32 %v1069, %v1104
      %v1107 = vmul.f32 %v1072, %v1104
      %v1108 = vmul.f32 %v1077, %v1104
      %v1109 = vmul.f32 %v1080, %v1104
      %v1110 = vmul.f32 %v1085, %v1104
      %v1111 = vmul.f32 %v1088, %v1104
      %v1112 = vmul.f32 %v1093, %v1104
      %v1113 = vmul.f32 %v1096, %v1104
      %v1114 = vld [vmem:[%s4] sm:$0x1]
      %v1116 = vlaneseq
      %v1117 = vshrl.u32 %v1116, 7
      %v1118 = vsub.s32 0, %v1117
      %v1119 = vrot.slane %v1114, %v1118
      %v1121 = vadd.f32 %v1106, %v1119
      %v1122 = vadd.f32 %v1107, %v1119
      %v1123 = vadd.f32 %v1108, %v1119
      %v1124 = vadd.f32 %v1109, %v1119
      %v1125 = vadd.f32 %v1110, %v1119
      %v1126 = vadd.f32 %v1111, %v1119
      %v1127 = vadd.f32 %v1112, %v1119
      %v1128 = vadd.f32 %v1113, %v1119
      %v1129 = vmax.f32 %v1121, 0.0
      %v1130 = vmax.f32 %v1122, 0.0
      %v1131 = vmax.f32 %v1123, 0.0
      %v1132 = vmax.f32 %v1124, 0.0
      %v1133 = vmax.f32 %v1125, 0.0
      %v1134 = vmax.f32 %v1126, 0.0
      %v1135 = vmax.f32 %v1127, 0.0
      %v1136 = vmax.f32 %v1128, 0.0
      %s1137 = scalar_lea.vmem %s5, 32
      %v1138 = vld [vmem:[%s1137] sm:$0xf]
      %v1139 = vld [vmem:[%s1137 + $0x4] sm:$0xf]
      %v1140 = vld [vmem:[%s1137 + $0x8] sm:$0xf]
      %v1141 = vld [vmem:[%s1137 + $0xc] sm:$0xf]
      %v1142 = vld [vmem:[%s1137 + $0x10] sm:$0xf]
      %v1143 = vld [vmem:[%s1137 + $0x14] sm:$0xf]
      %v1144 = vld [vmem:[%s1137 + $0x18] sm:$0xf]
      %v1145 = vld [vmem:[%s1137 + $0x1c] sm:$0xf]
      %v1154 = vunpack.c.l.b16 %v1138
      %v1155 = vunpack.c.l.b16 %v1139
      %v1156 = vunpack.c.l.b16 %v1140
      %v1157 = vunpack.c.l.b16 %v1141
      %v1158 = vunpack.c.l.b16 %v1142
      %v1159 = vunpack.c.l.b16 %v1143
      %v1160 = vunpack.c.l.b16 %v1144
      %v1161 = vunpack.c.l.b16 %v1145
      %v1162 = vpack.c.b16 %v1155, %v1154
      %v1163 = vpack.c.b16 %v1157, %v1156
      %v1164 = vpack.c.b16 %v1159, %v1158
      %v1165 = vpack.c.b16 %v1161, %v1160
      %1170 = vmatprep.subr.bf16.mxu0 0
      %1171 = vmatpush1.bf16.msra.mxu0 0
      %1172 = vmatprep.subr.bf16.mxu0 0
      %1173 = vmatpush1.bf16.msra.mxu0 0
      %1174 = vmatprep.subr.bf16.mxu0 0
      %1175 = vmatpush1.bf16.msra.mxu0 0
      %1176 = vmatprep.subr.bf16.mxu0 0
      %1177 = vmatpush1.bf16.msra.mxu0 0
      %1178 = vmatprep.subr.bf16.mxu0 0
      %1179 = vmatpush1.bf16.msra.mxu0 %v1165
      %1180 = vmatprep.subr.bf16.mxu0 0
      %1181 = vmatpush1.bf16.msra.mxu0 %v1164
      %1182 = vmatprep.subr.bf16.mxu0 0
      %1183 = vmatpush1.bf16.msra.mxu0 %v1163
      %1184 = vmatprep.subr.bf16.mxu0 0
      %1185 = vmatpush1.bf16.msra.mxu0 %v1162
      %1186 = vmatprep.subr.bf16.mxu0 0
      %1187 = vmatpush2.bf16.msra.mxu0 0
      %1188 = vmatprep.subr.bf16.mxu0 0
      %1189 = vmatpush2.bf16.msra.mxu0 0
      %1190 = vmatprep.subr.bf16.mxu0 0
      %1191 = vmatpush2.bf16.msra.mxu0 0
      %1192 = vmatprep.subr.bf16.mxu0 0
      %1193 = vmatpush2.bf16.msra.mxu0 0
      %1194 = vmatprep.subr.bf16.mxu0 0
      %1195 = vmatpush2.bf16.msra.mxu0 0
      %1196 = vmatprep.subr.bf16.mxu0 0
      %1197 = vmatpush2.bf16.msra.mxu0 0
      %1198 = vmatprep.subr.bf16.mxu0 0
      %1199 = vmatpush2.bf16.msra.mxu0 0
      %1200 = vmatprep.subr.bf16.mxu0 0
      %1201 = vmatpush2.bf16.msra.mxu0 0
      %1202 = vmatprep.mubr.bf16.mxu0 0
      %1203 = vmatmul.mubr.bf16.gmra.mxu0 %v646
      %v1204 = vpop.f32.mrf.mxu0
      %v1205 = vadd.f32 0.0, %v1204
      %v1206 = vpop.f32.mrf.mxu0
      %v1207 = vpop.f32.mrf.mxu0
      %v1208 = vadd.f32 0.0, %v1207
      %v1209 = vpop.f32.mrf.mxu0
      %1210 = vmatprep.mubr.bf16.mxu0 0
      %1211 = vmatmul.mubr.bf16.gmra.mxu0 %v649
      %v1212 = vpop.f32.mrf.mxu0
      %v1213 = vadd.f32 0.0, %v1212
      %v1214 = vpop.f32.mrf.mxu0
      %v1215 = vpop.f32.mrf.mxu0
      %v1216 = vadd.f32 0.0, %v1215
      %v1217 = vpop.f32.mrf.mxu0
      %1218 = vmatprep.mubr.bf16.mxu0 0
      %1219 = vmatmul.mubr.bf16.gmra.mxu0 %v652
      %v1220 = vpop.f32.mrf.mxu0
      %v1221 = vadd.f32 0.0, %v1220
      %v1222 = vpop.f32.mrf.mxu0
      %v1223 = vpop.f32.mrf.mxu0
      %v1224 = vadd.f32 0.0, %v1223
      %v1225 = vpop.f32.mrf.mxu0
      %1226 = vmatprep.mubr.bf16.mxu0 0
      %1227 = vmatmul.mubr.bf16.gmra.mxu0 %v655
      %v1228 = vpop.f32.mrf.mxu0
      %v1229 = vadd.f32 0.0, %v1228
      %v1230 = vpop.f32.mrf.mxu0
      %v1231 = vpop.f32.mrf.mxu0
      %v1232 = vadd.f32 0.0, %v1231
      %v1233 = vpop.f32.mrf.mxu0
      %1234 = vdwg.mxu0
      %v1235 = vld [vmem:[%s6] sm:$0x1]
      %v1237 = vlaneseq
      %v1238 = vshrl.u32 %v1237, 7
      %v1239 = vsub.s32 0, %v1238
      %v1240 = vrot.slane %v1235, %v1239
      %v1242 = vmul.f32 %v1205, %v1240
      %v1243 = vmul.f32 %v1208, %v1240
      %v1244 = vmul.f32 %v1213, %v1240
      %v1245 = vmul.f32 %v1216, %v1240
      %v1246 = vmul.f32 %v1221, %v1240
      %v1247 = vmul.f32 %v1224, %v1240
      %v1248 = vmul.f32 %v1229, %v1240
      %v1249 = vmul.f32 %v1232, %v1240
      %v1250 = vld [vmem:[%s7] sm:$0x1]
      %v1252 = vlaneseq
      %v1253 = vshrl.u32 %v1252, 7
      %v1254 = vsub.s32 0, %v1253
      %v1255 = vrot.slane %v1250, %v1254
      %v1257 = vadd.f32 %v1242, %v1255
      %v1258 = vadd.f32 %v1243, %v1255
      %v1259 = vadd.f32 %v1244, %v1255
      %v1260 = vadd.f32 %v1245, %v1255
      %v1261 = vadd.f32 %v1246, %v1255
      %v1262 = vadd.f32 %v1247, %v1255
      %v1263 = vadd.f32 %v1248, %v1255
      %v1264 = vadd.f32 %v1249, %v1255
      %v1265 = vmax.f32 %v1257, 0.0
      %v1266 = vmax.f32 %v1258, 0.0
      %v1267 = vmax.f32 %v1259, 0.0
      %v1268 = vmax.f32 %v1260, 0.0
      %v1269 = vmax.f32 %v1261, 0.0
      %v1270 = vmax.f32 %v1262, 0.0
      %v1271 = vmax.f32 %v1263, 0.0
      %v1272 = vmax.f32 %v1264, 0.0
      %v1273 = vpack.c.bf16 %v1130, %v1129
      %v1274 = vpack.c.bf16 %v1132, %v1131
      %v1275 = vpack.c.bf16 %v1134, %v1133
      %v1276 = vpack.c.bf16 %v1136, %v1135
      %v1277 = vpack.c.bf16 %v1266, %v1265
      %v1278 = vpack.c.bf16 %v1268, %v1267
      %v1279 = vpack.c.bf16 %v1270, %v1269
      %v1280 = vpack.c.bf16 %v1272, %v1271
      %v1282 = vsel %vm644, %v1277, 0
      %v1285 = vsel %vm644, %v1278, 0
      %v1288 = vsel %vm644, %v1279, 0
      %v1291 = vsel %vm644, %v1280, 0
      %1293 = vmatprep.subr.bf16.mxu0 0
      %1294 = vmatpush1.bf16.msra.mxu0 0
      %1295 = vmatprep.subr.bf16.mxu0 0
      %1296 = vmatpush1.bf16.msra.mxu0 0
      %1297 = vmatprep.subr.bf16.mxu0 0
      %1298 = vmatpush1.bf16.msra.mxu0 0
      %1299 = vmatprep.subr.bf16.mxu0 0
      %1300 = vmatpush1.bf16.msra.mxu0 0
      %1301 = vmatprep.subr.bf16.mxu0 0
      %1302 = vmatpush1.bf16.msra.mxu0 %v787
      %1303 = vmatprep.subr.bf16.mxu0 0
      %1304 = vmatpush1.bf16.msra.mxu0 %v786
      %1305 = vmatprep.subr.bf16.mxu0 0
      %1306 = vmatpush1.bf16.msra.mxu0 %v785
      %1307 = vmatprep.subr.bf16.mxu0 0
      %1308 = vmatpush1.bf16.msra.mxu0 %v784
      %1309 = vmatprep.subr.bf16.mxu0 0
      %1310 = vmatpush2.bf16.msra.mxu0 0
      %1311 = vmatprep.subr.bf16.mxu0 0
      %1312 = vmatpush2.bf16.msra.mxu0 0
      %1313 = vmatprep.subr.bf16.mxu0 0
      %1314 = vmatpush2.bf16.msra.mxu0 0
      %1315 = vmatprep.subr.bf16.mxu0 0
      %1316 = vmatpush2.bf16.msra.mxu0 0
      %1317 = vmatprep.subr.bf16.mxu0 0
      %1318 = vmatpush2.bf16.msra.mxu0 0
      %1319 = vmatprep.subr.bf16.mxu0 0
      %1320 = vmatpush2.bf16.msra.mxu0 0
      %1321 = vmatprep.subr.bf16.mxu0 0
      %1322 = vmatpush2.bf16.msra.mxu0 0
      %1323 = vmatprep.subr.bf16.mxu0 0
      %1324 = vmatpush2.bf16.msra.mxu0 0
      %1325 = vmatprep.mubr.bf16.mxu0 0
      %1326 = vmatmul.mubr.bf16.gmra.mxu0 %v1282
      %v1327 = vpop.f32.mrf.mxu0
      %v1328 = vadd.f32 0.0, %v1327
      %v1329 = vpop.f32.mrf.mxu0
      %v1330 = vpop.f32.mrf.mxu0
      %v1331 = vadd.f32 0.0, %v1330
      %v1332 = vpop.f32.mrf.mxu0
      %1333 = vmatprep.mubr.bf16.mxu0 0
      %1334 = vmatmul.mubr.bf16.gmra.mxu0 %v1285
      %v1335 = vpop.f32.mrf.mxu0
      %v1336 = vadd.f32 0.0, %v1335
      %v1337 = vpop.f32.mrf.mxu0
      %v1338 = vpop.f32.mrf.mxu0
      %v1339 = vadd.f32 0.0, %v1338
      %v1340 = vpop.f32.mrf.mxu0
      %1341 = vmatprep.mubr.bf16.mxu0 0
      %1342 = vmatmul.mubr.bf16.gmra.mxu0 %v1288
      %v1343 = vpop.f32.mrf.mxu0
      %v1344 = vadd.f32 0.0, %v1343
      %v1345 = vpop.f32.mrf.mxu0
      %v1346 = vpop.f32.mrf.mxu0
      %v1347 = vadd.f32 0.0, %v1346
      %v1348 = vpop.f32.mrf.mxu0
      %1349 = vmatprep.mubr.bf16.mxu0 0
      %1350 = vmatmul.mubr.bf16.gmra.mxu0 %v1291
      %v1351 = vpop.f32.mrf.mxu0
      %v1352 = vadd.f32 0.0, %v1351
      %v1353 = vpop.f32.mrf.mxu0
      %v1354 = vpop.f32.mrf.mxu0
      %v1355 = vadd.f32 0.0, %v1354
      %v1356 = vpop.f32.mrf.mxu0
      %1357 = vdwg.mxu0
      %v1359 = vsel %vm644, %v1273, 0
      %v1362 = vsel %vm644, %v1274, 0
      %v1365 = vsel %vm644, %v1275, 0
      %v1368 = vsel %vm644, %v1276, 0
      %1370 = vmatprep.subr.bf16.mxu0 0
      %1371 = vmatpush1.bf16.msra.mxu0 0
      %1372 = vmatprep.subr.bf16.mxu0 0
      %1373 = vmatpush1.bf16.msra.mxu0 0
      %1374 = vmatprep.subr.bf16.mxu0 0
      %1375 = vmatpush1.bf16.msra.mxu0 0
      %1376 = vmatprep.subr.bf16.mxu0 0
      %1377 = vmatpush1.bf16.msra.mxu0 0
      %1378 = vmatprep.subr.bf16.mxu0 0
      %1379 = vmatpush1.bf16.msra.mxu0 %v888
      %1380 = vmatprep.subr.bf16.mxu0 0
      %1381 = vmatpush1.bf16.msra.mxu0 %v887
      %1382 = vmatprep.subr.bf16.mxu0 0
      %1383 = vmatpush1.bf16.msra.mxu0 %v886
      %1384 = vmatprep.subr.bf16.mxu0 0
      %1385 = vmatpush1.bf16.msra.mxu0 %v885
      %1386 = vmatprep.subr.bf16.mxu0 0
      %1387 = vmatpush2.bf16.msra.mxu0 0
      %1388 = vmatprep.subr.bf16.mxu0 0
      %1389 = vmatpush2.bf16.msra.mxu0 0
      %1390 = vmatprep.subr.bf16.mxu0 0
      %1391 = vmatpush2.bf16.msra.mxu0 0
      %1392 = vmatprep.subr.bf16.mxu0 0
      %1393 = vmatpush2.bf16.msra.mxu0 0
      %1394 = vmatprep.subr.bf16.mxu0 0
      %1395 = vmatpush2.bf16.msra.mxu0 0
      %1396 = vmatprep.subr.bf16.mxu0 0
      %1397 = vmatpush2.bf16.msra.mxu0 0
      %1398 = vmatprep.subr.bf16.mxu0 0
      %1399 = vmatpush2.bf16.msra.mxu0 0
      %1400 = vmatprep.subr.bf16.mxu0 0
      %1401 = vmatpush2.bf16.msra.mxu0 0
      %1402 = vmatprep.mubr.bf16.mxu0 0
      %1403 = vmatmul.mubr.bf16.gmra.mxu0 %v1359
      %v1404 = vpop.f32.mrf.mxu0
      %v1405 = vadd.f32 %v1328, %v1404
      %v1406 = vpop.f32.mrf.mxu0
      %v1407 = vpop.f32.mrf.mxu0
      %v1408 = vadd.f32 %v1331, %v1407
      %v1409 = vpop.f32.mrf.mxu0
      %1410 = vmatprep.mubr.bf16.mxu0 0
      %1411 = vmatmul.mubr.bf16.gmra.mxu0 %v1362
      %v1412 = vpop.f32.mrf.mxu0
      %v1413 = vadd.f32 %v1336, %v1412
      %v1414 = vpop.f32.mrf.mxu0
      %v1415 = vpop.f32.mrf.mxu0
      %v1416 = vadd.f32 %v1339, %v1415
      %v1417 = vpop.f32.mrf.mxu0
      %1418 = vmatprep.mubr.bf16.mxu0 0
      %1419 = vmatmul.mubr.bf16.gmra.mxu0 %v1365
      %v1420 = vpop.f32.mrf.mxu0
      %v1421 = vadd.f32 %v1344, %v1420
      %v1422 = vpop.f32.mrf.mxu0
      %v1423 = vpop.f32.mrf.mxu0
      %v1424 = vadd.f32 %v1347, %v1423
      %v1425 = vpop.f32.mrf.mxu0
      %1426 = vmatprep.mubr.bf16.mxu0 0
      %1427 = vmatmul.mubr.bf16.gmra.mxu0 %v1368
      %v1428 = vpop.f32.mrf.mxu0
      %v1429 = vadd.f32 %v1352, %v1428
      %v1430 = vpop.f32.mrf.mxu0
      %v1431 = vpop.f32.mrf.mxu0
      %v1432 = vadd.f32 %v1355, %v1431
      %v1433 = vpop.f32.mrf.mxu0
      %1434 = vdwg.mxu0
      %v1435 = vld [vmem:[%s10] sm:$0x1]
      %v1437 = vlaneseq
      %v1438 = vshrl.u32 %v1437, 7
      %v1439 = vsub.s32 0, %v1438
      %v1440 = vrot.slane %v1435, %v1439
      %v1442 = vadd.f32 %v1405, %v1440
      %v1443 = vadd.f32 %v1408, %v1440
      %v1444 = vadd.f32 %v1413, %v1440
      %v1445 = vadd.f32 %v1416, %v1440
      %v1446 = vadd.f32 %v1421, %v1440
      %v1447 = vadd.f32 %v1424, %v1440
      %v1448 = vadd.f32 %v1429, %v1440
      %v1449 = vadd.f32 %v1432, %v1440
      %s1450 = scalar_lea.vmem %s406, 64
      %1451 = vst [vmem:[%s1450] sm:$0xff] %v1442
      %1452 = vst [vmem:[%s1450 + $0x8] sm:$0xff] %v1443
      %1453 = vst [vmem:[%s1450 + $0x10] sm:$0xff] %v1444
      %1454 = vst [vmem:[%s1450 + $0x18] sm:$0xff] %v1445
      %1455 = vst [vmem:[%s1450 + $0x20] sm:$0xff] %v1446
      %1456 = vst [vmem:[%s1450 + $0x28] sm:$0xff] %v1447
      %1457 = vst [vmem:[%s1450 + $0x30] sm:$0xff] %v1448
      %1458 = vst [vmem:[%s1450 + $0x38] sm:$0xff] %v1449
      %s1459 = scalar_lea.vmem %s396, 64
      %v1460 = vld [vmem:[%s1459] sm:$0xf]
      %v1461 = vld [vmem:[%s1459 + $0x4] sm:$0xf]
      %v1462 = vld [vmem:[%s1459 + $0x8] sm:$0xf]
      %v1463 = vld [vmem:[%s1459 + $0xc] sm:$0xf]
      %v1464 = vld [vmem:[%s1459 + $0x10] sm:$0xf]
      %v1465 = vld [vmem:[%s1459 + $0x14] sm:$0xf]
      %v1466 = vld [vmem:[%s1459 + $0x18] sm:$0xf]
      %v1467 = vld [vmem:[%s1459 + $0x1c] sm:$0xf]
      %v1476 = vunpack.c.l.b16 %v1460
      %v1477 = vunpack.c.l.b16 %v1461
      %v1478 = vunpack.c.l.b16 %v1462
      %v1479 = vunpack.c.l.b16 %v1463
      %v1480 = vunpack.c.l.b16 %v1464
      %v1481 = vunpack.c.l.b16 %v1465
      %v1482 = vunpack.c.l.b16 %v1466
      %v1483 = vunpack.c.l.b16 %v1467
      %v1484 = vpack.c.b16 %v1477, %v1476
      %v1485 = vpack.c.b16 %v1479, %v1478
      %v1486 = vpack.c.b16 %v1481, %v1480
      %v1487 = vpack.c.b16 %v1483, %v1482
      %v1489 = vsel %vm476, %v1484, 0
      %v1492 = vsel %vm476, %v1485, 0
      %v1495 = vsel %vm476, %v1486, 0
      %v1498 = vsel %vm476, %v1487, 0
      %1500 = vmatprep.subr.bf16.mxu0 0
      %1501 = vmatpush1.bf16.msra.mxu0 0
      %1502 = vmatprep.subr.bf16.mxu0 0
      %1503 = vmatpush1.bf16.msra.mxu0 0
      %1504 = vmatprep.subr.bf16.mxu0 0
      %1505 = vmatpush1.bf16.msra.mxu0 0
      %1506 = vmatprep.subr.bf16.mxu0 0
      %1507 = vmatpush1.bf16.msra.mxu0 0
      %1508 = vmatprep.subr.bf16.mxu0 0
      %1509 = vmatpush1.bf16.msra.mxu0 0
      %1510 = vmatprep.subr.bf16.mxu0 0
      %1511 = vmatpush1.bf16.msra.mxu0 0
      %1512 = vmatprep.subr.bf16.mxu0 0
      %1513 = vmatpush1.bf16.msra.mxu0 %v473
      %1514 = vmatprep.subr.bf16.mxu0 0
      %1515 = vmatpush1.bf16.msra.mxu0 %v472
      %1516 = vmatprep.subr.bf16.mxu0 0
      %1517 = vmatpush2.bf16.msra.mxu0 0
      %1518 = vmatprep.subr.bf16.mxu0 0
      %1519 = vmatpush2.bf16.msra.mxu0 0
      %1520 = vmatprep.subr.bf16.mxu0 0
      %1521 = vmatpush2.bf16.msra.mxu0 0
      %1522 = vmatprep.subr.bf16.mxu0 0
      %1523 = vmatpush2.bf16.msra.mxu0 0
      %1524 = vmatprep.subr.bf16.mxu0 0
      %1525 = vmatpush2.bf16.msra.mxu0 0
      %1526 = vmatprep.subr.bf16.mxu0 0
      %1527 = vmatpush2.bf16.msra.mxu0 0
      %1528 = vmatprep.subr.bf16.mxu0 0
      %1529 = vmatpush2.bf16.msra.mxu0 0
      %1530 = vmatprep.subr.bf16.mxu0 0
      %1531 = vmatpush2.bf16.msra.mxu0 0
      %1532 = vmatprep.mubr.bf16.mxu0 0
      %1533 = vmatmul.mubr.bf16.gmra.mxu0 %v1489
      %v1534 = vpop.f32.mrf.mxu0
      %v1535 = vadd.f32 0.0, %v1534
      %v1536 = vpop.f32.mrf.mxu0
      %v1537 = vpop.f32.mrf.mxu0
      %v1538 = vadd.f32 0.0, %v1537
      %v1539 = vpop.f32.mrf.mxu0
      %1540 = vmatprep.mubr.bf16.mxu0 0
      %1541 = vmatmul.mubr.bf16.gmra.mxu0 %v1492
      %v1542 = vpop.f32.mrf.mxu0
      %v1543 = vadd.f32 0.0, %v1542
      %v1544 = vpop.f32.mrf.mxu0
      %v1545 = vpop.f32.mrf.mxu0
      %v1546 = vadd.f32 0.0, %v1545
      %v1547 = vpop.f32.mrf.mxu0
      %1548 = vmatprep.mubr.bf16.mxu0 0
      %1549 = vmatmul.mubr.bf16.gmra.mxu0 %v1495
      %v1550 = vpop.f32.mrf.mxu0
      %v1551 = vadd.f32 0.0, %v1550
      %v1552 = vpop.f32.mrf.mxu0
      %v1553 = vpop.f32.mrf.mxu0
      %v1554 = vadd.f32 0.0, %v1553
      %v1555 = vpop.f32.mrf.mxu0
      %1556 = vmatprep.mubr.bf16.mxu0 0
      %1557 = vmatmul.mubr.bf16.gmra.mxu0 %v1498
      %v1558 = vpop.f32.mrf.mxu0
      %v1559 = vadd.f32 0.0, %v1558
      %v1560 = vpop.f32.mrf.mxu0
      %v1561 = vpop.f32.mrf.mxu0
      %v1562 = vadd.f32 0.0, %v1561
      %v1563 = vpop.f32.mrf.mxu0
      %1564 = vdwg.mxu0
      %v1565 = vld [vmem:[%s3] sm:$0x1]
      %v1567 = vlaneseq
      %v1568 = vshrl.u32 %v1567, 7
      %v1569 = vsub.s32 0, %v1568
      %v1570 = vrot.slane %v1565, %v1569
      %v1572 = vmul.f32 %v1535, %v1570
      %v1573 = vmul.f32 %v1538, %v1570
      %v1574 = vmul.f32 %v1543, %v1570
      %v1575 = vmul.f32 %v1546, %v1570
      %v1576 = vmul.f32 %v1551, %v1570
      %v1577 = vmul.f32 %v1554, %v1570
      %v1578 = vmul.f32 %v1559, %v1570
      %v1579 = vmul.f32 %v1562, %v1570
      %v1580 = vld [vmem:[%s4] sm:$0x1]
      %v1582 = vlaneseq
      %v1583 = vshrl.u32 %v1582, 7
      %v1584 = vsub.s32 0, %v1583
      %v1585 = vrot.slane %v1580, %v1584
      %v1587 = vadd.f32 %v1572, %v1585
      %v1588 = vadd.f32 %v1573, %v1585
      %v1589 = vadd.f32 %v1574, %v1585
      %v1590 = vadd.f32 %v1575, %v1585
      %v1591 = vadd.f32 %v1576, %v1585
      %v1592 = vadd.f32 %v1577, %v1585
      %v1593 = vadd.f32 %v1578, %v1585
      %v1594 = vadd.f32 %v1579, %v1585
      %v1595 = vmax.f32 %v1587, 0.0
      %v1596 = vmax.f32 %v1588, 0.0
      %v1597 = vmax.f32 %v1589, 0.0
      %v1598 = vmax.f32 %v1590, 0.0
      %v1599 = vmax.f32 %v1591, 0.0
      %v1600 = vmax.f32 %v1592, 0.0
      %v1601 = vmax.f32 %v1593, 0.0
      %v1602 = vmax.f32 %v1594, 0.0
      %s1603 = scalar_lea.vmem %s5, 64
      %v1604 = vld [vmem:[%s1603] sm:$0xf]
      %v1605 = vld [vmem:[%s1603 + $0x4] sm:$0xf]
      %v1606 = vld [vmem:[%s1603 + $0x8] sm:$0xf]
      %v1607 = vld [vmem:[%s1603 + $0xc] sm:$0xf]
      %v1608 = vld [vmem:[%s1603 + $0x10] sm:$0xf]
      %v1609 = vld [vmem:[%s1603 + $0x14] sm:$0xf]
      %v1610 = vld [vmem:[%s1603 + $0x18] sm:$0xf]
      %v1611 = vld [vmem:[%s1603 + $0x1c] sm:$0xf]
      %v1620 = vunpack.c.l.b16 %v1604
      %v1621 = vunpack.c.l.b16 %v1605
      %v1622 = vunpack.c.l.b16 %v1606
      %v1623 = vunpack.c.l.b16 %v1607
      %v1624 = vunpack.c.l.b16 %v1608
      %v1625 = vunpack.c.l.b16 %v1609
      %v1626 = vunpack.c.l.b16 %v1610
      %v1627 = vunpack.c.l.b16 %v1611
      %v1628 = vpack.c.b16 %v1621, %v1620
      %v1629 = vpack.c.b16 %v1623, %v1622
      %v1630 = vpack.c.b16 %v1625, %v1624
      %v1631 = vpack.c.b16 %v1627, %v1626
      %1636 = vmatprep.subr.bf16.mxu0 0
      %1637 = vmatpush1.bf16.msra.mxu0 0
      %1638 = vmatprep.subr.bf16.mxu0 0
      %1639 = vmatpush1.bf16.msra.mxu0 0
      %1640 = vmatprep.subr.bf16.mxu0 0
      %1641 = vmatpush1.bf16.msra.mxu0 0
      %1642 = vmatprep.subr.bf16.mxu0 0
      %1643 = vmatpush1.bf16.msra.mxu0 0
      %1644 = vmatprep.subr.bf16.mxu0 0
      %1645 = vmatpush1.bf16.msra.mxu0 %v1631
      %1646 = vmatprep.subr.bf16.mxu0 0
      %1647 = vmatpush1.bf16.msra.mxu0 %v1630
      %1648 = vmatprep.subr.bf16.mxu0 0
      %1649 = vmatpush1.bf16.msra.mxu0 %v1629
      %1650 = vmatprep.subr.bf16.mxu0 0
      %1651 = vmatpush1.bf16.msra.mxu0 %v1628
      %1652 = vmatprep.subr.bf16.mxu0 0
      %1653 = vmatpush2.bf16.msra.mxu0 0
      %1654 = vmatprep.subr.bf16.mxu0 0
      %1655 = vmatpush2.bf16.msra.mxu0 0
      %1656 = vmatprep.subr.bf16.mxu0 0
      %1657 = vmatpush2.bf16.msra.mxu0 0
      %1658 = vmatprep.subr.bf16.mxu0 0
      %1659 = vmatpush2.bf16.msra.mxu0 0
      %1660 = vmatprep.subr.bf16.mxu0 0
      %1661 = vmatpush2.bf16.msra.mxu0 0
      %1662 = vmatprep.subr.bf16.mxu0 0
      %1663 = vmatpush2.bf16.msra.mxu0 0
      %1664 = vmatprep.subr.bf16.mxu0 0
      %1665 = vmatpush2.bf16.msra.mxu0 0
      %1666 = vmatprep.subr.bf16.mxu0 0
      %1667 = vmatpush2.bf16.msra.mxu0 0
      %1668 = vmatprep.mubr.bf16.mxu0 0
      %1669 = vmatmul.mubr.bf16.gmra.mxu0 %v646
      %v1670 = vpop.f32.mrf.mxu0
      %v1671 = vadd.f32 0.0, %v1670
      %v1672 = vpop.f32.mrf.mxu0
      %v1673 = vpop.f32.mrf.mxu0
      %v1674 = vadd.f32 0.0, %v1673
      %v1675 = vpop.f32.mrf.mxu0
      %1676 = vmatprep.mubr.bf16.mxu0 0
      %1677 = vmatmul.mubr.bf16.gmra.mxu0 %v649
      %v1678 = vpop.f32.mrf.mxu0
      %v1679 = vadd.f32 0.0, %v1678
      %v1680 = vpop.f32.mrf.mxu0
      %v1681 = vpop.f32.mrf.mxu0
      %v1682 = vadd.f32 0.0, %v1681
      %v1683 = vpop.f32.mrf.mxu0
      %1684 = vmatprep.mubr.bf16.mxu0 0
      %1685 = vmatmul.mubr.bf16.gmra.mxu0 %v652
      %v1686 = vpop.f32.mrf.mxu0
      %v1687 = vadd.f32 0.0, %v1686
      %v1688 = vpop.f32.mrf.mxu0
      %v1689 = vpop.f32.mrf.mxu0
      %v1690 = vadd.f32 0.0, %v1689
      %v1691 = vpop.f32.mrf.mxu0
      %1692 = vmatprep.mubr.bf16.mxu0 0
      %1693 = vmatmul.mubr.bf16.gmra.mxu0 %v655
      %v1694 = vpop.f32.mrf.mxu0
      %v1695 = vadd.f32 0.0, %v1694
      %v1696 = vpop.f32.mrf.mxu0
      %v1697 = vpop.f32.mrf.mxu0
      %v1698 = vadd.f32 0.0, %v1697
      %v1699 = vpop.f32.mrf.mxu0
      %1700 = vdwg.mxu0
      %v1701 = vld [vmem:[%s6] sm:$0x1]
      %v1703 = vlaneseq
      %v1704 = vshrl.u32 %v1703, 7
      %v1705 = vsub.s32 0, %v1704
      %v1706 = vrot.slane %v1701, %v1705
      %v1708 = vmul.f32 %v1671, %v1706
      %v1709 = vmul.f32 %v1674, %v1706
      %v1710 = vmul.f32 %v1679, %v1706
      %v1711 = vmul.f32 %v1682, %v1706
      %v1712 = vmul.f32 %v1687, %v1706
      %v1713 = vmul.f32 %v1690, %v1706
      %v1714 = vmul.f32 %v1695, %v1706
      %v1715 = vmul.f32 %v1698, %v1706
      %v1716 = vld [vmem:[%s7] sm:$0x1]
      %v1718 = vlaneseq
      %v1719 = vshrl.u32 %v1718, 7
      %v1720 = vsub.s32 0, %v1719
      %v1721 = vrot.slane %v1716, %v1720
      %v1723 = vadd.f32 %v1708, %v1721
      %v1724 = vadd.f32 %v1709, %v1721
      %v1725 = vadd.f32 %v1710, %v1721
      %v1726 = vadd.f32 %v1711, %v1721
      %v1727 = vadd.f32 %v1712, %v1721
      %v1728 = vadd.f32 %v1713, %v1721
      %v1729 = vadd.f32 %v1714, %v1721
      %v1730 = vadd.f32 %v1715, %v1721
      %v1731 = vmax.f32 %v1723, 0.0
      %v1732 = vmax.f32 %v1724, 0.0
      %v1733 = vmax.f32 %v1725, 0.0
      %v1734 = vmax.f32 %v1726, 0.0
      %v1735 = vmax.f32 %v1727, 0.0
      %v1736 = vmax.f32 %v1728, 0.0
      %v1737 = vmax.f32 %v1729, 0.0
      %v1738 = vmax.f32 %v1730, 0.0
      %v1739 = vpack.c.bf16 %v1596, %v1595
      %v1740 = vpack.c.bf16 %v1598, %v1597
      %v1741 = vpack.c.bf16 %v1600, %v1599
      %v1742 = vpack.c.bf16 %v1602, %v1601
      %v1743 = vpack.c.bf16 %v1732, %v1731
      %v1744 = vpack.c.bf16 %v1734, %v1733
      %v1745 = vpack.c.bf16 %v1736, %v1735
      %v1746 = vpack.c.bf16 %v1738, %v1737
      %v1748 = vsel %vm644, %v1743, 0
      %v1751 = vsel %vm644, %v1744, 0
      %v1754 = vsel %vm644, %v1745, 0
      %v1757 = vsel %vm644, %v1746, 0
      %1759 = vmatprep.subr.bf16.mxu0 0
      %1760 = vmatpush1.bf16.msra.mxu0 0
      %1761 = vmatprep.subr.bf16.mxu0 0
      %1762 = vmatpush1.bf16.msra.mxu0 0
      %1763 = vmatprep.subr.bf16.mxu0 0
      %1764 = vmatpush1.bf16.msra.mxu0 0
      %1765 = vmatprep.subr.bf16.mxu0 0
      %1766 = vmatpush1.bf16.msra.mxu0 0
      %1767 = vmatprep.subr.bf16.mxu0 0
      %1768 = vmatpush1.bf16.msra.mxu0 %v787
      %1769 = vmatprep.subr.bf16.mxu0 0
      %1770 = vmatpush1.bf16.msra.mxu0 %v786
      %1771 = vmatprep.subr.bf16.mxu0 0
      %1772 = vmatpush1.bf16.msra.mxu0 %v785
      %1773 = vmatprep.subr.bf16.mxu0 0
      %1774 = vmatpush1.bf16.msra.mxu0 %v784
      %1775 = vmatprep.subr.bf16.mxu0 0
      %1776 = vmatpush2.bf16.msra.mxu0 0
      %1777 = vmatprep.subr.bf16.mxu0 0
      %1778 = vmatpush2.bf16.msra.mxu0 0
      %1779 = vmatprep.subr.bf16.mxu0 0
      %1780 = vmatpush2.bf16.msra.mxu0 0
      %1781 = vmatprep.subr.bf16.mxu0 0
      %1782 = vmatpush2.bf16.msra.mxu0 0
      %1783 = vmatprep.subr.bf16.mxu0 0
      %1784 = vmatpush2.bf16.msra.mxu0 0
      %1785 = vmatprep.subr.bf16.mxu0 0
      %1786 = vmatpush2.bf16.msra.mxu0 0
      %1787 = vmatprep.subr.bf16.mxu0 0
      %1788 = vmatpush2.bf16.msra.mxu0 0
      %1789 = vmatprep.subr.bf16.mxu0 0
      %1790 = vmatpush2.bf16.msra.mxu0 0
      %1791 = vmatprep.mubr.bf16.mxu0 0
      %1792 = vmatmul.mubr.bf16.gmra.mxu0 %v1748
      %v1793 = vpop.f32.mrf.mxu0
      %v1794 = vadd.f32 0.0, %v1793
      %v1795 = vpop.f32.mrf.mxu0
      %v1796 = vpop.f32.mrf.mxu0
      %v1797 = vadd.f32 0.0, %v1796
      %v1798 = vpop.f32.mrf.mxu0
      %1799 = vmatprep.mubr.bf16.mxu0 0
      %1800 = vmatmul.mubr.bf16.gmra.mxu0 %v1751
      %v1801 = vpop.f32.mrf.mxu0
      %v1802 = vadd.f32 0.0, %v1801
      %v1803 = vpop.f32.mrf.mxu0
      %v1804 = vpop.f32.mrf.mxu0
      %v1805 = vadd.f32 0.0, %v1804
      %v1806 = vpop.f32.mrf.mxu0
      %1807 = vmatprep.mubr.bf16.mxu0 0
      %1808 = vmatmul.mubr.bf16.gmra.mxu0 %v1754
      %v1809 = vpop.f32.mrf.mxu0
      %v1810 = vadd.f32 0.0, %v1809
      %v1811 = vpop.f32.mrf.mxu0
      %v1812 = vpop.f32.mrf.mxu0
      %v1813 = vadd.f32 0.0, %v1812
      %v1814 = vpop.f32.mrf.mxu0
      %1815 = vmatprep.mubr.bf16.mxu0 0
      %1816 = vmatmul.mubr.bf16.gmra.mxu0 %v1757
      %v1817 = vpop.f32.mrf.mxu0
      %v1818 = vadd.f32 0.0, %v1817
      %v1819 = vpop.f32.mrf.mxu0
      %v1820 = vpop.f32.mrf.mxu0
      %v1821 = vadd.f32 0.0, %v1820
      %v1822 = vpop.f32.mrf.mxu0
      %1823 = vdwg.mxu0
      %v1825 = vsel %vm644, %v1739, 0
      %v1828 = vsel %vm644, %v1740, 0
      %v1831 = vsel %vm644, %v1741, 0
      %v1834 = vsel %vm644, %v1742, 0
      %1836 = vmatprep.subr.bf16.mxu0 0
      %1837 = vmatpush1.bf16.msra.mxu0 0
      %1838 = vmatprep.subr.bf16.mxu0 0
      %1839 = vmatpush1.bf16.msra.mxu0 0
      %1840 = vmatprep.subr.bf16.mxu0 0
      %1841 = vmatpush1.bf16.msra.mxu0 0
      %1842 = vmatprep.subr.bf16.mxu0 0
      %1843 = vmatpush1.bf16.msra.mxu0 0
      %1844 = vmatprep.subr.bf16.mxu0 0
      %1845 = vmatpush1.bf16.msra.mxu0 %v888
      %1846 = vmatprep.subr.bf16.mxu0 0
      %1847 = vmatpush1.bf16.msra.mxu0 %v887
      %1848 = vmatprep.subr.bf16.mxu0 0
      %1849 = vmatpush1.bf16.msra.mxu0 %v886
      %1850 = vmatprep.subr.bf16.mxu0 0
      %1851 = vmatpush1.bf16.msra.mxu0 %v885
      %1852 = vmatprep.subr.bf16.mxu0 0
      %1853 = vmatpush2.bf16.msra.mxu0 0
      %1854 = vmatprep.subr.bf16.mxu0 0
      %1855 = vmatpush2.bf16.msra.mxu0 0
      %1856 = vmatprep.subr.bf16.mxu0 0
      %1857 = vmatpush2.bf16.msra.mxu0 0
      %1858 = vmatprep.subr.bf16.mxu0 0
      %1859 = vmatpush2.bf16.msra.mxu0 0
      %1860 = vmatprep.subr.bf16.mxu0 0
      %1861 = vmatpush2.bf16.msra.mxu0 0
      %1862 = vmatprep.subr.bf16.mxu0 0
      %1863 = vmatpush2.bf16.msra.mxu0 0
      %1864 = vmatprep.subr.bf16.mxu0 0
      %1865 = vmatpush2.bf16.msra.mxu0 0
      %1866 = vmatprep.subr.bf16.mxu0 0
      %1867 = vmatpush2.bf16.msra.mxu0 0
      %1868 = vmatprep.mubr.bf16.mxu0 0
      %1869 = vmatmul.mubr.bf16.gmra.mxu0 %v1825
      %v1870 = vpop.f32.mrf.mxu0
      %v1871 = vadd.f32 %v1794, %v1870
      %v1872 = vpop.f32.mrf.mxu0
      %v1873 = vpop.f32.mrf.mxu0
      %v1874 = vadd.f32 %v1797, %v1873
      %v1875 = vpop.f32.mrf.mxu0
      %1876 = vmatprep.mubr.bf16.mxu0 0
      %1877 = vmatmul.mubr.bf16.gmra.mxu0 %v1828
      %v1878 = vpop.f32.mrf.mxu0
      %v1879 = vadd.f32 %v1802, %v1878
      %v1880 = vpop.f32.mrf.mxu0
      %v1881 = vpop.f32.mrf.mxu0
      %v1882 = vadd.f32 %v1805, %v1881
      %v1883 = vpop.f32.mrf.mxu0
      %1884 = vmatprep.mubr.bf16.mxu0 0
      %1885 = vmatmul.mubr.bf16.gmra.mxu0 %v1831
      %v1886 = vpop.f32.mrf.mxu0
      %v1887 = vadd.f32 %v1810, %v1886
      %v1888 = vpop.f32.mrf.mxu0
      %v1889 = vpop.f32.mrf.mxu0
      %v1890 = vadd.f32 %v1813, %v1889
      %v1891 = vpop.f32.mrf.mxu0
      %1892 = vmatprep.mubr.bf16.mxu0 0
      %1893 = vmatmul.mubr.bf16.gmra.mxu0 %v1834
      %v1894 = vpop.f32.mrf.mxu0
      %v1895 = vadd.f32 %v1818, %v1894
      %v1896 = vpop.f32.mrf.mxu0
      %v1897 = vpop.f32.mrf.mxu0
      %v1898 = vadd.f32 %v1821, %v1897
      %v1899 = vpop.f32.mrf.mxu0
      %1900 = vdwg.mxu0
      %v1901 = vld [vmem:[%s10] sm:$0x1]
      %v1903 = vlaneseq
      %v1904 = vshrl.u32 %v1903, 7
      %v1905 = vsub.s32 0, %v1904
      %v1906 = vrot.slane %v1901, %v1905
      %v1908 = vadd.f32 %v1871, %v1906
      %v1909 = vadd.f32 %v1874, %v1906
      %v1910 = vadd.f32 %v1879, %v1906
      %v1911 = vadd.f32 %v1882, %v1906
      %v1912 = vadd.f32 %v1887, %v1906
      %v1913 = vadd.f32 %v1890, %v1906
      %v1914 = vadd.f32 %v1895, %v1906
      %v1915 = vadd.f32 %v1898, %v1906
      %s1916 = scalar_lea.vmem %s406, 128
      %1917 = vst [vmem:[%s1916] sm:$0xff] %v1908
      %1918 = vst [vmem:[%s1916 + $0x8] sm:$0xff] %v1909
      %1919 = vst [vmem:[%s1916 + $0x10] sm:$0xff] %v1910
      %1920 = vst [vmem:[%s1916 + $0x18] sm:$0xff] %v1911
      %1921 = vst [vmem:[%s1916 + $0x20] sm:$0xff] %v1912
      %1922 = vst [vmem:[%s1916 + $0x28] sm:$0xff] %v1913
      %1923 = vst [vmem:[%s1916 + $0x30] sm:$0xff] %v1914
      %1924 = vst [vmem:[%s1916 + $0x38] sm:$0xff] %v1915
      %s1925 = scalar_lea.vmem %s396, 96
      %v1926 = vld [vmem:[%s1925] sm:$0xf]
      %v1927 = vld [vmem:[%s1925 + $0x4] sm:$0xf]
      %v1928 = vld [vmem:[%s1925 + $0x8] sm:$0xf]
      %v1929 = vld [vmem:[%s1925 + $0xc] sm:$0xf]
      %v1930 = vld [vmem:[%s1925 + $0x10] sm:$0xf]
      %v1931 = vld [vmem:[%s1925 + $0x14] sm:$0xf]
      %v1932 = vld [vmem:[%s1925 + $0x18] sm:$0xf]
      %v1933 = vld [vmem:[%s1925 + $0x1c] sm:$0xf]
      %v1942 = vunpack.c.l.b16 %v1926
      %v1943 = vunpack.c.l.b16 %v1927
      %v1944 = vunpack.c.l.b16 %v1928
      %v1945 = vunpack.c.l.b16 %v1929
      %v1946 = vunpack.c.l.b16 %v1930
      %v1947 = vunpack.c.l.b16 %v1931
      %v1948 = vunpack.c.l.b16 %v1932
      %v1949 = vunpack.c.l.b16 %v1933
      %v1950 = vpack.c.b16 %v1943, %v1942
      %v1951 = vpack.c.b16 %v1945, %v1944
      %v1952 = vpack.c.b16 %v1947, %v1946
      %v1953 = vpack.c.b16 %v1949, %v1948
      %v1955 = vsel %vm476, %v1950, 0
      %v1958 = vsel %vm476, %v1951, 0
      %v1961 = vsel %vm476, %v1952, 0
      %v1964 = vsel %vm476, %v1953, 0
      %1966 = vmatprep.subr.bf16.mxu0 0
      %1967 = vmatpush1.bf16.msra.mxu0 0
      %1968 = vmatprep.subr.bf16.mxu0 0
      %1969 = vmatpush1.bf16.msra.mxu0 0
      %1970 = vmatprep.subr.bf16.mxu0 0
      %1971 = vmatpush1.bf16.msra.mxu0 0
      %1972 = vmatprep.subr.bf16.mxu0 0
      %1973 = vmatpush1.bf16.msra.mxu0 0
      %1974 = vmatprep.subr.bf16.mxu0 0
      %1975 = vmatpush1.bf16.msra.mxu0 0
      %1976 = vmatprep.subr.bf16.mxu0 0
      %1977 = vmatpush1.bf16.msra.mxu0 0
      %1978 = vmatprep.subr.bf16.mxu0 0
      %1979 = vmatpush1.bf16.msra.mxu0 %v473
      %1980 = vmatprep.subr.bf16.mxu0 0
      %1981 = vmatpush1.bf16.msra.mxu0 %v472
      %1982 = vmatprep.subr.bf16.mxu0 0
      %1983 = vmatpush2.bf16.msra.mxu0 0
      %1984 = vmatprep.subr.bf16.mxu0 0
      %1985 = vmatpush2.bf16.msra.mxu0 0
      %1986 = vmatprep.subr.bf16.mxu0 0
      %1987 = vmatpush2.bf16.msra.mxu0 0
      %1988 = vmatprep.subr.bf16.mxu0 0
      %1989 = vmatpush2.bf16.msra.mxu0 0
      %1990 = vmatprep.subr.bf16.mxu0 0
      %1991 = vmatpush2.bf16.msra.mxu0 0
      %1992 = vmatprep.subr.bf16.mxu0 0
      %1993 = vmatpush2.bf16.msra.mxu0 0
      %1994 = vmatprep.subr.bf16.mxu0 0
      %1995 = vmatpush2.bf16.msra.mxu0 0
      %1996 = vmatprep.subr.bf16.mxu0 0
      %1997 = vmatpush2.bf16.msra.mxu0 0
      %1998 = vmatprep.mubr.bf16.mxu0 0
      %1999 = vmatmul.mubr.bf16.gmra.mxu0 %v1955
      %v2000 = vpop.f32.mrf.mxu0
      %v2001 = vadd.f32 0.0, %v2000
      %v2002 = vpop.f32.mrf.mxu0
      %v2003 = vpop.f32.mrf.mxu0
      %v2004 = vadd.f32 0.0, %v2003
      %v2005 = vpop.f32.mrf.mxu0
      %2006 = vmatprep.mubr.bf16.mxu0 0
      %2007 = vmatmul.mubr.bf16.gmra.mxu0 %v1958
      %v2008 = vpop.f32.mrf.mxu0
      %v2009 = vadd.f32 0.0, %v2008
      %v2010 = vpop.f32.mrf.mxu0
      %v2011 = vpop.f32.mrf.mxu0
      %v2012 = vadd.f32 0.0, %v2011
      %v2013 = vpop.f32.mrf.mxu0
      %2014 = vmatprep.mubr.bf16.mxu0 0
      %2015 = vmatmul.mubr.bf16.gmra.mxu0 %v1961
      %v2016 = vpop.f32.mrf.mxu0
      %v2017 = vadd.f32 0.0, %v2016
      %v2018 = vpop.f32.mrf.mxu0
      %v2019 = vpop.f32.mrf.mxu0
      %v2020 = vadd.f32 0.0, %v2019
      %v2021 = vpop.f32.mrf.mxu0
      %2022 = vmatprep.mubr.bf16.mxu0 0
      %2023 = vmatmul.mubr.bf16.gmra.mxu0 %v1964
      %v2024 = vpop.f32.mrf.mxu0
      %v2025 = vadd.f32 0.0, %v2024
      %v2026 = vpop.f32.mrf.mxu0
      %v2027 = vpop.f32.mrf.mxu0
      %v2028 = vadd.f32 0.0, %v2027
      %v2029 = vpop.f32.mrf.mxu0
      %2030 = vdwg.mxu0
      %v2031 = vld [vmem:[%s3] sm:$0x1]
      %v2033 = vlaneseq
      %v2034 = vshrl.u32 %v2033, 7
      %v2035 = vsub.s32 0, %v2034
      %v2036 = vrot.slane %v2031, %v2035
      %v2038 = vmul.f32 %v2001, %v2036
      %v2039 = vmul.f32 %v2004, %v2036
      %v2040 = vmul.f32 %v2009, %v2036
      %v2041 = vmul.f32 %v2012, %v2036
      %v2042 = vmul.f32 %v2017, %v2036
      %v2043 = vmul.f32 %v2020, %v2036
      %v2044 = vmul.f32 %v2025, %v2036
      %v2045 = vmul.f32 %v2028, %v2036
      %v2046 = vld [vmem:[%s4] sm:$0x1]
      %v2048 = vlaneseq
      %v2049 = vshrl.u32 %v2048, 7
      %v2050 = vsub.s32 0, %v2049
      %v2051 = vrot.slane %v2046, %v2050
      %v2053 = vadd.f32 %v2038, %v2051
      %v2054 = vadd.f32 %v2039, %v2051
      %v2055 = vadd.f32 %v2040, %v2051
      %v2056 = vadd.f32 %v2041, %v2051
      %v2057 = vadd.f32 %v2042, %v2051
      %v2058 = vadd.f32 %v2043, %v2051
      %v2059 = vadd.f32 %v2044, %v2051
      %v2060 = vadd.f32 %v2045, %v2051
      %v2061 = vmax.f32 %v2053, 0.0
      %v2062 = vmax.f32 %v2054, 0.0
      %v2063 = vmax.f32 %v2055, 0.0
      %v2064 = vmax.f32 %v2056, 0.0
      %v2065 = vmax.f32 %v2057, 0.0
      %v2066 = vmax.f32 %v2058, 0.0
      %v2067 = vmax.f32 %v2059, 0.0
      %v2068 = vmax.f32 %v2060, 0.0
      %s2069 = scalar_lea.vmem %s5, 96
      %v2070 = vld [vmem:[%s2069] sm:$0xf]
      %v2071 = vld [vmem:[%s2069 + $0x4] sm:$0xf]
      %v2072 = vld [vmem:[%s2069 + $0x8] sm:$0xf]
      %v2073 = vld [vmem:[%s2069 + $0xc] sm:$0xf]
      %v2074 = vld [vmem:[%s2069 + $0x10] sm:$0xf]
      %v2075 = vld [vmem:[%s2069 + $0x14] sm:$0xf]
      %v2076 = vld [vmem:[%s2069 + $0x18] sm:$0xf]
      %v2077 = vld [vmem:[%s2069 + $0x1c] sm:$0xf]
      %v2086 = vunpack.c.l.b16 %v2070
      %v2087 = vunpack.c.l.b16 %v2071
      %v2088 = vunpack.c.l.b16 %v2072
      %v2089 = vunpack.c.l.b16 %v2073
      %v2090 = vunpack.c.l.b16 %v2074
      %v2091 = vunpack.c.l.b16 %v2075
      %v2092 = vunpack.c.l.b16 %v2076
      %v2093 = vunpack.c.l.b16 %v2077
      %v2094 = vpack.c.b16 %v2087, %v2086
      %v2095 = vpack.c.b16 %v2089, %v2088
      %v2096 = vpack.c.b16 %v2091, %v2090
      %v2097 = vpack.c.b16 %v2093, %v2092
      %2102 = vmatprep.subr.bf16.mxu0 0
      %2103 = vmatpush1.bf16.msra.mxu0 0
      %2104 = vmatprep.subr.bf16.mxu0 0
      %2105 = vmatpush1.bf16.msra.mxu0 0
      %2106 = vmatprep.subr.bf16.mxu0 0
      %2107 = vmatpush1.bf16.msra.mxu0 0
      %2108 = vmatprep.subr.bf16.mxu0 0
      %2109 = vmatpush1.bf16.msra.mxu0 0
      %2110 = vmatprep.subr.bf16.mxu0 0
      %2111 = vmatpush1.bf16.msra.mxu0 %v2097
      %2112 = vmatprep.subr.bf16.mxu0 0
      %2113 = vmatpush1.bf16.msra.mxu0 %v2096
      %2114 = vmatprep.subr.bf16.mxu0 0
      %2115 = vmatpush1.bf16.msra.mxu0 %v2095
      %2116 = vmatprep.subr.bf16.mxu0 0
      %2117 = vmatpush1.bf16.msra.mxu0 %v2094
      %2118 = vmatprep.subr.bf16.mxu0 0
      %2119 = vmatpush2.bf16.msra.mxu0 0
      %2120 = vmatprep.subr.bf16.mxu0 0
      %2121 = vmatpush2.bf16.msra.mxu0 0
      %2122 = vmatprep.subr.bf16.mxu0 0
      %2123 = vmatpush2.bf16.msra.mxu0 0
      %2124 = vmatprep.subr.bf16.mxu0 0
      %2125 = vmatpush2.bf16.msra.mxu0 0
      %2126 = vmatprep.subr.bf16.mxu0 0
      %2127 = vmatpush2.bf16.msra.mxu0 0
      %2128 = vmatprep.subr.bf16.mxu0 0
      %2129 = vmatpush2.bf16.msra.mxu0 0
      %2130 = vmatprep.subr.bf16.mxu0 0
      %2131 = vmatpush2.bf16.msra.mxu0 0
      %2132 = vmatprep.subr.bf16.mxu0 0
      %2133 = vmatpush2.bf16.msra.mxu0 0
      %2134 = vmatprep.mubr.bf16.mxu0 0
      %2135 = vmatmul.mubr.bf16.gmra.mxu0 %v646
      %v2136 = vpop.f32.mrf.mxu0
      %v2137 = vadd.f32 0.0, %v2136
      %v2138 = vpop.f32.mrf.mxu0
      %v2139 = vpop.f32.mrf.mxu0
      %v2140 = vadd.f32 0.0, %v2139
      %v2141 = vpop.f32.mrf.mxu0
      %2142 = vmatprep.mubr.bf16.mxu0 0
      %2143 = vmatmul.mubr.bf16.gmra.mxu0 %v649
      %v2144 = vpop.f32.mrf.mxu0
      %v2145 = vadd.f32 0.0, %v2144
      %v2146 = vpop.f32.mrf.mxu0
      %v2147 = vpop.f32.mrf.mxu0
      %v2148 = vadd.f32 0.0, %v2147
      %v2149 = vpop.f32.mrf.mxu0
      %2150 = vmatprep.mubr.bf16.mxu0 0
      %2151 = vmatmul.mubr.bf16.gmra.mxu0 %v652
      %v2152 = vpop.f32.mrf.mxu0
      %v2153 = vadd.f32 0.0, %v2152
      %v2154 = vpop.f32.mrf.mxu0
      %v2155 = vpop.f32.mrf.mxu0
      %v2156 = vadd.f32 0.0, %v2155
      %v2157 = vpop.f32.mrf.mxu0
      %2158 = vmatprep.mubr.bf16.mxu0 0
      %2159 = vmatmul.mubr.bf16.gmra.mxu0 %v655
      %v2160 = vpop.f32.mrf.mxu0
      %v2161 = vadd.f32 0.0, %v2160
      %v2162 = vpop.f32.mrf.mxu0
      %v2163 = vpop.f32.mrf.mxu0
      %v2164 = vadd.f32 0.0, %v2163
      %v2165 = vpop.f32.mrf.mxu0
      %2166 = vdwg.mxu0
      %v2167 = vld [vmem:[%s6] sm:$0x1]
      %v2169 = vlaneseq
      %v2170 = vshrl.u32 %v2169, 7
      %v2171 = vsub.s32 0, %v2170
      %v2172 = vrot.slane %v2167, %v2171
      %v2174 = vmul.f32 %v2137, %v2172
      %v2175 = vmul.f32 %v2140, %v2172
      %v2176 = vmul.f32 %v2145, %v2172
      %v2177 = vmul.f32 %v2148, %v2172
      %v2178 = vmul.f32 %v2153, %v2172
      %v2179 = vmul.f32 %v2156, %v2172
      %v2180 = vmul.f32 %v2161, %v2172
      %v2181 = vmul.f32 %v2164, %v2172
      %v2182 = vld [vmem:[%s7] sm:$0x1]
      %v2184 = vlaneseq
      %v2185 = vshrl.u32 %v2184, 7
      %v2186 = vsub.s32 0, %v2185
      %v2187 = vrot.slane %v2182, %v2186
      %v2189 = vadd.f32 %v2174, %v2187
      %v2190 = vadd.f32 %v2175, %v2187
      %v2191 = vadd.f32 %v2176, %v2187
      %v2192 = vadd.f32 %v2177, %v2187
      %v2193 = vadd.f32 %v2178, %v2187
      %v2194 = vadd.f32 %v2179, %v2187
      %v2195 = vadd.f32 %v2180, %v2187
      %v2196 = vadd.f32 %v2181, %v2187
      %v2197 = vmax.f32 %v2189, 0.0
      %v2198 = vmax.f32 %v2190, 0.0
      %v2199 = vmax.f32 %v2191, 0.0
      %v2200 = vmax.f32 %v2192, 0.0
      %v2201 = vmax.f32 %v2193, 0.0
      %v2202 = vmax.f32 %v2194, 0.0
      %v2203 = vmax.f32 %v2195, 0.0
      %v2204 = vmax.f32 %v2196, 0.0
      %v2205 = vpack.c.bf16 %v2062, %v2061
      %v2206 = vpack.c.bf16 %v2064, %v2063
      %v2207 = vpack.c.bf16 %v2066, %v2065
      %v2208 = vpack.c.bf16 %v2068, %v2067
      %v2209 = vpack.c.bf16 %v2198, %v2197
      %v2210 = vpack.c.bf16 %v2200, %v2199
      %v2211 = vpack.c.bf16 %v2202, %v2201
      %v2212 = vpack.c.bf16 %v2204, %v2203
      %v2214 = vsel %vm644, %v2209, 0
      %v2217 = vsel %vm644, %v2210, 0
      %v2220 = vsel %vm644, %v2211, 0
      %v2223 = vsel %vm644, %v2212, 0
      %2225 = vmatprep.subr.bf16.mxu0 0
      %2226 = vmatpush1.bf16.msra.mxu0 0
      %2227 = vmatprep.subr.bf16.mxu0 0
      %2228 = vmatpush1.bf16.msra.mxu0 0
      %2229 = vmatprep.subr.bf16.mxu0 0
      %2230 = vmatpush1.bf16.msra.mxu0 0
      %2231 = vmatprep.subr.bf16.mxu0 0
      %2232 = vmatpush1.bf16.msra.mxu0 0
      %2233 = vmatprep.subr.bf16.mxu0 0
      %2234 = vmatpush1.bf16.msra.mxu0 %v787
      %2235 = vmatprep.subr.bf16.mxu0 0
      %2236 = vmatpush1.bf16.msra.mxu0 %v786
      %2237 = vmatprep.subr.bf16.mxu0 0
      %2238 = vmatpush1.bf16.msra.mxu0 %v785
      %2239 = vmatprep.subr.bf16.mxu0 0
      %2240 = vmatpush1.bf16.msra.mxu0 %v784
      %2241 = vmatprep.subr.bf16.mxu0 0
      %2242 = vmatpush2.bf16.msra.mxu0 0
      %2243 = vmatprep.subr.bf16.mxu0 0
      %2244 = vmatpush2.bf16.msra.mxu0 0
      %2245 = vmatprep.subr.bf16.mxu0 0
      %2246 = vmatpush2.bf16.msra.mxu0 0
      %2247 = vmatprep.subr.bf16.mxu0 0
      %2248 = vmatpush2.bf16.msra.mxu0 0
      %2249 = vmatprep.subr.bf16.mxu0 0
      %2250 = vmatpush2.bf16.msra.mxu0 0
      %2251 = vmatprep.subr.bf16.mxu0 0
      %2252 = vmatpush2.bf16.msra.mxu0 0
      %2253 = vmatprep.subr.bf16.mxu0 0
      %2254 = vmatpush2.bf16.msra.mxu0 0
      %2255 = vmatprep.subr.bf16.mxu0 0
      %2256 = vmatpush2.bf16.msra.mxu0 0
      %2257 = vmatprep.mubr.bf16.mxu0 0
      %2258 = vmatmul.mubr.bf16.gmra.mxu0 %v2214
      %v2259 = vpop.f32.mrf.mxu0
      %v2260 = vadd.f32 0.0, %v2259
      %v2261 = vpop.f32.mrf.mxu0
      %v2262 = vpop.f32.mrf.mxu0
      %v2263 = vadd.f32 0.0, %v2262
      %v2264 = vpop.f32.mrf.mxu0
      %2265 = vmatprep.mubr.bf16.mxu0 0
      %2266 = vmatmul.mubr.bf16.gmra.mxu0 %v2217
      %v2267 = vpop.f32.mrf.mxu0
      %v2268 = vadd.f32 0.0, %v2267
      %v2269 = vpop.f32.mrf.mxu0
      %v2270 = vpop.f32.mrf.mxu0
      %v2271 = vadd.f32 0.0, %v2270
      %v2272 = vpop.f32.mrf.mxu0
      %2273 = vmatprep.mubr.bf16.mxu0 0
      %2274 = vmatmul.mubr.bf16.gmra.mxu0 %v2220
      %v2275 = vpop.f32.mrf.mxu0
      %v2276 = vadd.f32 0.0, %v2275
      %v2277 = vpop.f32.mrf.mxu0
      %v2278 = vpop.f32.mrf.mxu0
      %v2279 = vadd.f32 0.0, %v2278
      %v2280 = vpop.f32.mrf.mxu0
      %2281 = vmatprep.mubr.bf16.mxu0 0
      %2282 = vmatmul.mubr.bf16.gmra.mxu0 %v2223
      %v2283 = vpop.f32.mrf.mxu0
      %v2284 = vadd.f32 0.0, %v2283
      %v2285 = vpop.f32.mrf.mxu0
      %v2286 = vpop.f32.mrf.mxu0
      %v2287 = vadd.f32 0.0, %v2286
      %v2288 = vpop.f32.mrf.mxu0
      %2289 = vdwg.mxu0
      %v2291 = vsel %vm644, %v2205, 0
      %v2294 = vsel %vm644, %v2206, 0
      %v2297 = vsel %vm644, %v2207, 0
      %v2300 = vsel %vm644, %v2208, 0
      %2302 = vmatprep.subr.bf16.mxu0 0
      %2303 = vmatpush1.bf16.msra.mxu0 0
      %2304 = vmatprep.subr.bf16.mxu0 0
      %2305 = vmatpush1.bf16.msra.mxu0 0
      %2306 = vmatprep.subr.bf16.mxu0 0
      %2307 = vmatpush1.bf16.msra.mxu0 0
      %2308 = vmatprep.subr.bf16.mxu0 0
      %2309 = vmatpush1.bf16.msra.mxu0 0
      %2310 = vmatprep.subr.bf16.mxu0 0
      %2311 = vmatpush1.bf16.msra.mxu0 %v888
      %2312 = vmatprep.subr.bf16.mxu0 0
      %2313 = vmatpush1.bf16.msra.mxu0 %v887
      %2314 = vmatprep.subr.bf16.mxu0 0
      %2315 = vmatpush1.bf16.msra.mxu0 %v886
      %2316 = vmatprep.subr.bf16.mxu0 0
      %2317 = vmatpush1.bf16.msra.mxu0 %v885
      %2318 = vmatprep.subr.bf16.mxu0 0
      %2319 = vmatpush2.bf16.msra.mxu0 0
      %2320 = vmatprep.subr.bf16.mxu0 0
      %2321 = vmatpush2.bf16.msra.mxu0 0
      %2322 = vmatprep.subr.bf16.mxu0 0
      %2323 = vmatpush2.bf16.msra.mxu0 0
      %2324 = vmatprep.subr.bf16.mxu0 0
      %2325 = vmatpush2.bf16.msra.mxu0 0
      %2326 = vmatprep.subr.bf16.mxu0 0
      %2327 = vmatpush2.bf16.msra.mxu0 0
      %2328 = vmatprep.subr.bf16.mxu0 0
      %2329 = vmatpush2.bf16.msra.mxu0 0
      %2330 = vmatprep.subr.bf16.mxu0 0
      %2331 = vmatpush2.bf16.msra.mxu0 0
      %2332 = vmatprep.subr.bf16.mxu0 0
      %2333 = vmatpush2.bf16.msra.mxu0 0
      %2334 = vmatprep.mubr.bf16.mxu0 0
      %2335 = vmatmul.mubr.bf16.gmra.mxu0 %v2291
      %v2336 = vpop.f32.mrf.mxu0
      %v2337 = vadd.f32 %v2260, %v2336
      %v2338 = vpop.f32.mrf.mxu0
      %v2339 = vpop.f32.mrf.mxu0
      %v2340 = vadd.f32 %v2263, %v2339
      %v2341 = vpop.f32.mrf.mxu0
      %2342 = vmatprep.mubr.bf16.mxu0 0
      %2343 = vmatmul.mubr.bf16.gmra.mxu0 %v2294
      %v2344 = vpop.f32.mrf.mxu0
      %v2345 = vadd.f32 %v2268, %v2344
      %v2346 = vpop.f32.mrf.mxu0
      %v2347 = vpop.f32.mrf.mxu0
      %v2348 = vadd.f32 %v2271, %v2347
      %v2349 = vpop.f32.mrf.mxu0
      %2350 = vmatprep.mubr.bf16.mxu0 0
      %2351 = vmatmul.mubr.bf16.gmra.mxu0 %v2297
      %v2352 = vpop.f32.mrf.mxu0
      %v2353 = vadd.f32 %v2276, %v2352
      %v2354 = vpop.f32.mrf.mxu0
      %v2355 = vpop.f32.mrf.mxu0
      %v2356 = vadd.f32 %v2279, %v2355
      %v2357 = vpop.f32.mrf.mxu0
      %2358 = vmatprep.mubr.bf16.mxu0 0
      %2359 = vmatmul.mubr.bf16.gmra.mxu0 %v2300
      %v2360 = vpop.f32.mrf.mxu0
      %v2361 = vadd.f32 %v2284, %v2360
      %v2362 = vpop.f32.mrf.mxu0
      %v2363 = vpop.f32.mrf.mxu0
      %v2364 = vadd.f32 %v2287, %v2363
      %v2365 = vpop.f32.mrf.mxu0
      %2366 = vdwg.mxu0
      %v2367 = vld [vmem:[%s10] sm:$0x1]
      %v2369 = vlaneseq
      %v2370 = vshrl.u32 %v2369, 7
      %v2371 = vsub.s32 0, %v2370
      %v2372 = vrot.slane %v2367, %v2371
      %v2374 = vadd.f32 %v2337, %v2372
      %v2375 = vadd.f32 %v2340, %v2372
      %v2376 = vadd.f32 %v2345, %v2372
      %v2377 = vadd.f32 %v2348, %v2372
      %v2378 = vadd.f32 %v2353, %v2372
      %v2379 = vadd.f32 %v2356, %v2372
      %v2380 = vadd.f32 %v2361, %v2372
      %v2381 = vadd.f32 %v2364, %v2372
      %s2382 = scalar_lea.vmem %s406, 192
      %2383 = vst [vmem:[%s2382] sm:$0xff] %v2374
      %2384 = vst [vmem:[%s2382 + $0x8] sm:$0xff] %v2375
      %2385 = vst [vmem:[%s2382 + $0x10] sm:$0xff] %v2376
      %2386 = vst [vmem:[%s2382 + $0x18] sm:$0xff] %v2377
      %2387 = vst [vmem:[%s2382 + $0x20] sm:$0xff] %v2378
      %2388 = vst [vmem:[%s2382 + $0x28] sm:$0xff] %v2379
      %2389 = vst [vmem:[%s2382 + $0x30] sm:$0xff] %v2380
      %2390 = vst [vmem:[%s2382 + $0x38] sm:$0xff] %v2381
      %p2391 = scmp.lt.s32.totalorder %s22, 1
      %s2392 = scalar_select %p2391, %s22, 1
      %s2393 = smul.addr %s2392, 32
      %s2394 = smul.addr %s2393, 8
      %s2395 = scalar_lea.vmem %s11, %s2394
      // Predicated region
      $region65: #{pointpillar_forward.14} parent=63 // pred_check
        %p2396 = pneg %p281
      $region66: #{pointpillar_forward.14} parent=63 // pred_check_branch
        %2398 = sbr.rel (%p2396) target = $region68
      $region67: #{pointpillar_forward.14} parent=63 // pred_region
        _
      $region68: #{pointpillar_forward.14} parent=63 // pred_fallthru
        _
    $region64: #{pointpillar_forward.14} parent=5 // pred_fallthru
      _
    %p2399 = scmp.le.s32.totalorder 2, %s17
    // Predicated region
    $region69: #{pointpillar_forward.14} parent=5 // pred_check
      %p2400 = pneg %p2399
    $region70: #{pointpillar_forward.14} parent=5 // pred_check_branch
      %2402 = sbr.rel (%p2400) target = $region72
    $region71: #{pointpillar_forward.14} parent=5 // pred_region
      %s2403 = ssub.s32 %s17, 2
      // Predicated region
      $region73: #{pointpillar_forward.14} parent=71 // pred_check
        %p2404 = pneg %p287
      $region74: #{pointpillar_forward.14} parent=71 // pred_check_branch
        %2406 = sbr.rel (%p2404) target = $region76
      $region75: #{pointpillar_forward.14} parent=71 // pred_region
        %p2407 = scmp.lt.s32.totalorder %s23, 1
        %s2408 = scalar_select %p2407, %s23, 1
        %s2409 = smul.addr %s2408, 32
        %s2410 = smul.addr %s2409, 8
        %s2411 = scalar_lea.vmem %s11, %s2410
      $region76: #{pointpillar_forward.14} parent=71 // pred_fallthru
        _
    $region72: #{pointpillar_forward.14} parent=5 // pred_fallthru
      _
  $region6: #{pointpillar_forward.14} parent=0 // loop_footer
    %s21 = sadd.s32 1, %s17
  $region7: #{pointpillar_forward.14} parent=0 // loop_footer_branch
    %16 = sbr.rel target = $region3
  $region8: #{pointpillar_forward.14} parent=0 // loop_exit
    _

// kernel: pointpillar_forward.15
$region0: #{pointpillar_forward.15}
  #allocation0 [shape = 'u32[]', space=smem, size = 0x4, offset = 0x4, fixed_abs, tag = 'smem constant byte address 0x4 - core index']
  #allocation1 [shape = 'u32[144,128]{1,0:T(1,128)}', space=vmem, size = 0x12000, scoped, tag = 'internal scratch']
  %s0 = inlined_call_operand.vmem [shape: f32[8,1024], index: 0, kind: input, shape index: {}]
  %s1 = inlined_call_operand.vmem [shape: f32[8,1024], index: 1, kind: input, shape index: {}]
  %s2 = inlined_call_operand.vmem [shape: f32[1,1024], index: 2, kind: input, shape index: {}]
  %s3 = inlined_call_operand.vmem [shape: f32[8,1024], index: 3, kind: output, shape index: {}]
  %s4 = sld [smem:[#allocation0]]
  $region45: #{pointpillar_forward.15} parent=0
    _
  %s6 = ssub.s32 1, %s4
  %s7 = scalar_select 0, %s6, %s4
  loop: start=0, step=1, limit=4
  $region2: #{pointpillar_forward.15} parent=0 // loop_pre_header
    _
  $region3: #{pointpillar_forward.15} parent=0 // loop_header
    %s9 = sphi 0, %s13
    %p10 = scmp.ge.s32.totalorder %s9, 4
    %s19 = sphi 0, %s21
    %s22 = sphi 0, %s19
    %s23 = sphi 0, %s22
    %s39 = sphi 0, %s23
    %s45 = sphi 0, %s47
    %s48 = sphi 0, %s45
    %s49 = sphi 0, %s48
    %s65 = sphi 0, %s49
    %s71 = sphi 0, %s73
    %s74 = sphi 0, %s71
    %s75 = sphi 0, %s74
    %s91 = sphi 0, %s75
    %s97 = sphi 0, %s99
    %s100 = sphi 0, %s97
    %s101 = sphi 0, %s100
    %s117 = sphi 0, %s101
  $region4: #{pointpillar_forward.15} parent=0 // loop_header_branch
    %12 = sbr.rel (%p10) target = $region8
  $region5: #{pointpillar_forward.15} parent=0 // loop_body
    %s14 = ssub.s32 %s9, 1
    %s15 = ssub.s32 %s9, 2
    %s16 = sadd.s32 %s9, 1
    %s17 = ssub.s32 %s9, %s16
    %p18 = scmp.eq.s32.totalorder %s17, 0
    %s20 = sadd.s32 %s19, 1
    %s21 = scalar_select %p18, %s19, %s20
    %p24 = pneg %p18
    %p25 = scmp.eq.s32.totalorder %s9, 1
    %p26 = por %p24, %p25
    %p27 = scmp.ne.s32.totalorder %s19, %s22
    %p28 = scmp.eq.s32.totalorder %s9, 0
    %p29 = por %p27, %p28
    %p30 = scmp.ne.s32.totalorder %s19, %s22
    %p31 = scmp.eq.s32.totalorder %s14, 1
    %p32 = por %p30, %p31
    %p33 = scmp.ne.s32.totalorder %s22, %s23
    %p34 = scmp.eq.s32.totalorder %s14, 0
    %p35 = por %p33, %p34
    %p36 = scmp.ne.s32.totalorder %s22, %s23
    %p37 = scmp.eq.s32.totalorder %s15, 1
    %p38 = por %p36, %p37
    %p40 = scmp.ne.s32.totalorder %s23, %s39
    %p41 = scmp.eq.s32.totalorder %s15, 0
    %p42 = por %p40, %p41
    %s43 = ssub.s32 %s9, %s16
    %p44 = scmp.eq.s32.totalorder %s43, 0
    %s46 = sadd.s32 %s45, 1
    %s47 = scalar_select %p44, %s45, %s46
    %p50 = pneg %p44
    %p51 = scmp.eq.s32.totalorder %s9, 1
    %p52 = por %p50, %p51
    %p53 = scmp.ne.s32.totalorder %s45, %s48
    %p54 = scmp.eq.s32.totalorder %s9, 0
    %p55 = por %p53, %p54
    %p56 = scmp.ne.s32.totalorder %s45, %s48
    %p57 = scmp.eq.s32.totalorder %s14, 1
    %p58 = por %p56, %p57
    %p59 = scmp.ne.s32.totalorder %s48, %s49
    %p60 = scmp.eq.s32.totalorder %s14, 0
    %p61 = por %p59, %p60
    %p62 = scmp.ne.s32.totalorder %s48, %s49
    %p63 = scmp.eq.s32.totalorder %s15, 1
    %p64 = por %p62, %p63
    %p66 = scmp.ne.s32.totalorder %s49, %s65
    %p67 = scmp.eq.s32.totalorder %s15, 0
    %p68 = por %p66, %p67
    %s69 = ssub.s32 %s9, %s16
    %p70 = scmp.eq.s32.totalorder %s69, 0
    %s72 = sadd.s32 %s71, 1
    %s73 = scalar_select %p70, %s71, %s72
    %p76 = pneg %p70
    %p77 = scmp.eq.s32.totalorder %s9, 1
    %p78 = por %p76, %p77
    %p79 = scmp.ne.s32.totalorder %s71, %s74
    %p80 = scmp.eq.s32.totalorder %s9, 0
    %p81 = por %p79, %p80
    %p82 = scmp.ne.s32.totalorder %s71, %s74
    %p83 = scmp.eq.s32.totalorder %s14, 1
    %p84 = por %p82, %p83
    %p85 = scmp.ne.s32.totalorder %s74, %s75
    %p86 = scmp.eq.s32.totalorder %s14, 0
    %p87 = por %p85, %p86
    %p88 = scmp.ne.s32.totalorder %s74, %s75
    %p89 = scmp.eq.s32.totalorder %s15, 1
    %p90 = por %p88, %p89
    %p92 = scmp.ne.s32.totalorder %s75, %s91
    %p93 = scmp.eq.s32.totalorder %s15, 0
    %p94 = por %p92, %p93
    %s95 = ssub.s32 %s9, %s16
    %p96 = scmp.eq.s32.totalorder %s95, 0
    %s98 = sadd.s32 %s97, 1
    %s99 = scalar_select %p96, %s97, %s98
    %p102 = pneg %p96
    %p103 = scmp.eq.s32.totalorder %s9, 1
    %p104 = por %p102, %p103
    %p105 = scmp.ne.s32.totalorder %s97, %s100
    %p106 = scmp.eq.s32.totalorder %s9, 0
    %p107 = por %p105, %p106
    %p108 = scmp.ne.s32.totalorder %s97, %s100
    %p109 = scmp.eq.s32.totalorder %s14, 1
    %p110 = por %p108, %p109
    %p111 = scmp.ne.s32.totalorder %s100, %s101
    %p112 = scmp.eq.s32.totalorder %s14, 0
    %p113 = por %p111, %p112
    %p114 = scmp.ne.s32.totalorder %s100, %s101
    %p115 = scmp.eq.s32.totalorder %s15, 1
    %p116 = por %p114, %p115
    %p118 = scmp.ne.s32.totalorder %s101, %s117
    %p119 = scmp.eq.s32.totalorder %s15, 0
    %p120 = por %p118, %p119
    %p121 = scmp.le.s32.totalorder 1, %s9
    %p122 = scmp.lt.s32.totalorder %s9, 3
    %p123 = pnand %p121, %p122
    %p124 = pneg %p123
    // Predicated region
    $region9: #{pointpillar_forward.15} parent=5 // pred_check
      _
    $region10: #{pointpillar_forward.15} parent=5 // pred_check_branch
      %126 = sbr.rel (%p123) target = $region12
    $region11: #{pointpillar_forward.15} parent=5 // pred_region
      %s127 = ssub.s32 %s9, 1
    $region12: #{pointpillar_forward.15} parent=5 // pred_fallthru
      _
    %p128 = scmp.lt.s32.totalorder %s9, 2
    // Predicated region
    $region13: #{pointpillar_forward.15} parent=5 // pred_check
      %p129 = pneg %p128
    $region14: #{pointpillar_forward.15} parent=5 // pred_check_branch
      %131 = sbr.rel (%p129) target = $region16
    $region15: #{pointpillar_forward.15} parent=5 // pred_region
      // Predicated region
      $region17: #{pointpillar_forward.15} parent=15 // pred_check
        %p132 = pneg %p29
      $region18: #{pointpillar_forward.15} parent=15 // pred_check_branch
        %134 = sbr.rel (%p132) target = $region20
      $region19: #{pointpillar_forward.15} parent=15 // pred_region
        %s135 = smul.u32 4, %s9
        %p136 = scmp.lt.s32.totalorder %s135, 7
        %s137 = scalar_select %p136, %s135, 7
        %s138 = smul.addr %s137, 8
        %s139 = scalar_lea.vmem %s0, %s138
        %s140 = smul.u32 4, %s9
      $region20: #{pointpillar_forward.15} parent=15 // pred_fallthru
        _
      // Predicated region
      $region21: #{pointpillar_forward.15} parent=15 // pred_check
        %p141 = pneg %p55
      $region22: #{pointpillar_forward.15} parent=15 // pred_check_branch
        %143 = sbr.rel (%p141) target = $region24
      $region23: #{pointpillar_forward.15} parent=15 // pred_region
        %s144 = smul.u32 4, %s9
        %p145 = scmp.lt.s32.totalorder %s144, 7
        %s146 = scalar_select %p145, %s144, 7
        %s147 = smul.addr %s146, 8
        %s148 = scalar_lea.vmem %s1, %s147
        %s149 = smul.u32 4, %s9
      $region24: #{pointpillar_forward.15} parent=15 // pred_fallthru
        _
      // Predicated region
      $region25: #{pointpillar_forward.15} parent=15 // pred_check
        %p150 = pneg %p81
      $region26: #{pointpillar_forward.15} parent=15 // pred_check_branch
        %152 = sbr.rel (%p150) target = $region28
      $region27: #{pointpillar_forward.15} parent=15 // pred_region
        %s153 = smul.u32 4, %s9
        %p154 = scmp.lt.s32.totalorder %s153, 7
        %s155 = scalar_select %p154, %s153, 7
        %s156 = scalar_lea.vmem %s2, %s155
        %s157 = smul.u32 4, %s9
      $region28: #{pointpillar_forward.15} parent=15 // pred_fallthru
        _
    $region16: #{pointpillar_forward.15} parent=5 // pred_fallthru
      _
    %p158 = scmp.le.s32.totalorder 1, %s9
    %p159 = scmp.lt.s32.totalorder %s9, 3
    %p160 = pnand %p158, %p159
    %p161 = pneg %p160
    // Predicated region
    $region29: #{pointpillar_forward.15} parent=5 // pred_check
      _
    $region30: #{pointpillar_forward.15} parent=5 // pred_check_branch
      %163 = sbr.rel (%p160) target = $region32
    $region31: #{pointpillar_forward.15} parent=5 // pred_region
      %s164 = ssub.s32 %s9, 1
      %s165 = smul.u32 4, %s14
      %p166 = scmp.lt.s32.totalorder %s165, 7
      %s167 = scalar_select %p166, %s165, 7
      %s168 = smul.addr %s167, 8
      %s169 = scalar_lea.vmem %s0, %s168
      %p170 = pneg %p35
      %p171 = pneg %p32
      %s172 = smul.u32 4, %s14
      %p173 = scmp.lt.s32.totalorder %s172, 7
      %s174 = scalar_select %p173, %s172, 7
      %s175 = smul.addr %s174, 8
      %s176 = scalar_lea.vmem %s1, %s175
      %p177 = pneg %p61
      %p178 = pneg %p58
      %s179 = smul.u32 4, %s14
      %p180 = scmp.lt.s32.totalorder %s179, 7
      %s181 = scalar_select %p180, %s179, 7
      %s182 = scalar_lea.vmem %s2, %s181
      %p183 = pneg %p87
      %p184 = pneg %p84
      %p185 = pneg %p113
      %p186 = pneg %p110
      %s187 = smul.u32 4, %s14
      %p188 = scmp.lt.s32.totalorder %s187, 7
      %s189 = scalar_select %p188, %s187, 7
      %s190 = smul.addr %s189, 8
      %s191 = scalar_lea.vmem %s3, %s190
      %s192 = smul.u32 4, %s14
      %p193 = scmp.lt.s32.totalorder %s192, 7
      %s194 = scalar_select %p193, %s192, 7
      %s195 = smul.addr %s194, 8
      %s196 = scalar_lea.vmem %s0, %s195
      %s197 = smul.u32 4, %s14
      %s198 = smul.u32 4, %s14
      %p199 = scmp.lt.s32.totalorder %s198, 7
      %s200 = scalar_select %p199, %s198, 7
      %s201 = smul.addr %s200, 8
      %s202 = scalar_lea.vmem %s1, %s201
      %s203 = smul.u32 4, %s14
      %s204 = smul.u32 4, %s14
      %p205 = scmp.lt.s32.totalorder %s204, 7
      %s206 = scalar_select %p205, %s204, 7
      %s207 = scalar_lea.vmem %s2, %s206
      %s208 = smul.u32 4, %s14
      %s209 = smul.u32 4, %s14
      %p210 = scmp.lt.s32.totalorder %s209, 7
      %s211 = scalar_select %p210, %s209, 7
      %s212 = smul.addr %s211, 8
      %s213 = scalar_lea.vmem %s3, %s212
      %s214 = smul.u32 4, %s14
      %v215 = vld [vmem:[%s196] sm:$0xff]
      %v216 = vld [vmem:[%s196 + $0x8] sm:$0xff]
      %v217 = vld [vmem:[%s196 + $0x10] sm:$0xff]
      %v218 = vld [vmem:[%s196 + $0x18] sm:$0xff]
      %v219 = vld [vmem:[%s202] sm:$0xff]
      %v220 = vld [vmem:[%s202 + $0x8] sm:$0xff]
      %v221 = vld [vmem:[%s202 + $0x10] sm:$0xff]
      %v222 = vld [vmem:[%s202 + $0x18] sm:$0xff]
      %v223 = vlaneseq
      %v224 = vshrl.u32 %v223, 7
      %v225 = vmul.f32 %v219, %v219
      %v226 = vmul.f32 %v220, %v220
      %v227 = vmul.f32 %v221, %v221
      %v228 = vmul.f32 %v222, %v222
      %v233 = vrot.slane %v225, 1
      %v234 = vrot.slane %v226, 1
      %v235 = vrot.slane %v227, 1
      %v236 = vrot.slane %v228, 1
      %v241 = vadd.f32 %v225, %v233
      %v242 = vadd.f32 %v226, %v234
      %v243 = vadd.f32 %v227, %v235
      %v244 = vadd.f32 %v228, %v236
      %v245 = vrsqrt.pop %v241
      %v246 = vmul.f32 %v241, %v245
      %vm247 = vcmp.eq.f32.partialorder %v241, inf
      %v248 = vsel %vm247, %v241, %v246
      %vm249 = vcmp.eq.f32.partialorder %v241, 0.0
      %v250 = vand.u32 %v241, 2147483648
      %v251 = vsel %vm249, %v250, %v248
      %v252 = vrsqrt.pop %v242
      %v253 = vmul.f32 %v242, %v252
      %vm254 = vcmp.eq.f32.partialorder %v242, inf
      %v255 = vsel %vm254, %v242, %v253
      %vm256 = vcmp.eq.f32.partialorder %v242, 0.0
      %v257 = vand.u32 %v242, 2147483648
      %v258 = vsel %vm256, %v257, %v255
      %v259 = vrsqrt.pop %v243
      %v260 = vmul.f32 %v243, %v259
      %vm261 = vcmp.eq.f32.partialorder %v243, inf
      %v262 = vsel %vm261, %v243, %v260
      %vm263 = vcmp.eq.f32.partialorder %v243, 0.0
      %v264 = vand.u32 %v243, 2147483648
      %v265 = vsel %vm263, %v264, %v262
      %v266 = vrsqrt.pop %v244
      %v267 = vmul.f32 %v244, %v266
      %vm268 = vcmp.eq.f32.partialorder %v244, inf
      %v269 = vsel %vm268, %v244, %v267
      %vm270 = vcmp.eq.f32.partialorder %v244, 0.0
      %v271 = vand.u32 %v244, 2147483648
      %v272 = vsel %vm270, %v271, %v269
      %vm273 = vcmp.lt.s32.totalorder %v224, 2
      %vm274 = vcmp.eq.s32.totalorder %v224, 2
      %v275 = vlaneseq
      %v276 = vshrl.u32 %v275, 7
      %v277 = vsub.s32 5, %v276
      %v278 = vrot.slane %v219, %v277
      %v279 = vlaneseq
      %v280 = vshrl.u32 %v279, 7
      %v281 = vsub.s32 5, %v280
      %v282 = vrot.slane %v220, %v281
      %v283 = vlaneseq
      %v284 = vshrl.u32 %v283, 7
      %v285 = vsub.s32 5, %v284
      %v286 = vrot.slane %v221, %v285
      %v287 = vlaneseq
      %v288 = vshrl.u32 %v287, 7
      %v289 = vsub.s32 5, %v288
      %v290 = vrot.slane %v222, %v289
      %v291 = vsel %vm274, %v278, 1.0
      %v292 = vsel %vm274, %v282, 1.0
      %v293 = vsel %vm274, %v286, 1.0
      %v294 = vsel %vm274, %v290, 1.0
      %v295 = vlaneseq
      %v296 = vshrl.u32 %v295, 7
      %v297 = vsub.s32 3, %v296
      %v298 = vrot.slane %v251, %v297
      %v299 = vlaneseq
      %v300 = vshrl.u32 %v299, 7
      %v301 = vsub.s32 3, %v300
      %v302 = vrot.slane %v258, %v301
      %v303 = vlaneseq
      %v304 = vshrl.u32 %v303, 7
      %v305 = vsub.s32 3, %v304
      %v306 = vrot.slane %v265, %v305
      %v307 = vlaneseq
      %v308 = vshrl.u32 %v307, 7
      %v309 = vsub.s32 3, %v308
      %v310 = vrot.slane %v272, %v309
      %v311 = vsel %vm273, %v298, %v291
      %v312 = vsel %vm273, %v302, %v292
      %v313 = vsel %vm273, %v306, %v293
      %v314 = vsel %vm273, %v310, %v294
      %v315 = vmul.f32 %v215, %v311
      %v316 = vmul.f32 %v216, %v312
      %v317 = vmul.f32 %v217, %v313
      %v318 = vmul.f32 %v218, %v314
      %v319 = vadd.f32 %v315, %v219
      %v320 = vadd.f32 %v316, %v220
      %v321 = vadd.f32 %v317, %v221
      %v322 = vadd.f32 %v318, %v222
      %v323 = vmul.f32 %v215, 1.442695
      %v324 = vpow.pop %v323
      %v325 = vmul.f32 %v216, 1.442695
      %v326 = vpow.pop %v325
      %v327 = vmul.f32 %v217, 1.442695
      %v328 = vpow.pop %v327
      %v329 = vmul.f32 %v218, 1.442695
      %v330 = vpow.pop %v329
      %v331 = vmul.f32 %v324, %v219
      %v332 = vmul.f32 %v326, %v220
      %v333 = vmul.f32 %v328, %v221
      %v334 = vmul.f32 %v330, %v222
      %vm335 = vcmp.ge.s32.totalorder %v224, 3
      %vm336 = vcmp.le.s32.totalorder %v224, 5
      %vm337 = vmand %vm335, %vm336
      %v338 = vsel %vm337, %v331, %v319
      %v339 = vsel %vm337, %v332, %v320
      %v340 = vsel %vm337, %v333, %v321
      %v341 = vsel %vm337, %v334, %v322
      %v342 = vsub.f32 %v338, 0.78539
      %v343 = vsub.f32 %v339, 0.78539
      %v344 = vsub.f32 %v340, 0.78539
      %v345 = vsub.f32 %v341, 0.78539
      %v346 = vrcp.pop 3.1415927
      %v347 = vmul.f32 %v342, %v346
      %v348 = vmul.f32 %v343, %v346
      %v349 = vmul.f32 %v344, %v346
      %v350 = vmul.f32 %v345, %v346
      %v351 = vadd.f32 %v347, 0.0
      %v352 = vadd.f32 %v348, 0.0
      %v353 = vadd.f32 %v349, 0.0
      %v354 = vadd.f32 %v350, 0.0
      %v355 = vfloor.f32 %v351
      %v356 = vfloor.f32 %v352
      %v357 = vfloor.f32 %v353
      %v358 = vfloor.f32 %v354
      %v359 = vmul.f32 %v355, 3.1415927
      %v360 = vmul.f32 %v356, 3.1415927
      %v361 = vmul.f32 %v357, 3.1415927
      %v362 = vmul.f32 %v358, 3.1415927
      %v363 = vsub.f32 %v342, %v359
      %v364 = vsub.f32 %v343, %v360
      %v365 = vsub.f32 %v344, %v361
      %v366 = vsub.f32 %v345, %v362
      %vm367 = vcmp.eq.s32.totalorder %v224, 6
      %v368 = vadd.f32 %v363, 0.78539
      %v369 = vadd.f32 %v364, 0.78539
      %v370 = vadd.f32 %v365, 0.78539
      %v371 = vadd.f32 %v366, 0.78539
      %v372 = vld [vmem:[%s207] sm:$0xf]
      %v373 = vmul.f32 %v372, 3.1415927
      %v375 = vlaneseq
      %v376 = vshrl.u32 %v375, 7
      %v377 = vsub.s32 0, %v376
      %v378 = vrot.slane %v373, %v377
      %v379 = vlaneseq
      %v380 = vshrl.u32 %v379, 7
      %v381 = vsub.s32 1, %v380
      %v382 = vrot.slane %v373, %v381
      %v383 = vlaneseq
      %v384 = vshrl.u32 %v383, 7
      %v385 = vsub.s32 2, %v384
      %v386 = vrot.slane %v373, %v385
      %v387 = vlaneseq
      %v388 = vshrl.u32 %v387, 7
      %v389 = vsub.s32 3, %v388
      %v390 = vrot.slane %v373, %v389
      %v395 = vadd.f32 %v368, %v378
      %v396 = vadd.f32 %v369, %v382
      %v397 = vadd.f32 %v370, %v386
      %v398 = vadd.f32 %v371, %v390
      %v399 = vsel %vm367, %v395, %v338
      %v400 = vsel %vm367, %v396, %v339
      %v401 = vsel %vm367, %v397, %v340
      %v402 = vsel %vm367, %v398, %v341
      %403 = vst [vmem:[%s213] sm:$0xff] %v399
      %404 = vst [vmem:[%s213 + $0x8] sm:$0xff] %v400
      %405 = vst [vmem:[%s213 + $0x10] sm:$0xff] %v401
      %406 = vst [vmem:[%s213 + $0x18] sm:$0xff] %v402
      %s407 = smul.u32 4, %s14
      %p408 = scmp.lt.s32.totalorder %s407, 7
      %s409 = scalar_select %p408, %s407, 7
      %s410 = smul.addr %s409, 8
      %s411 = scalar_lea.vmem %s3, %s410
      // Predicated region
      $region33: #{pointpillar_forward.15} parent=31 // pred_check
        %p412 = pneg %p110
      $region34: #{pointpillar_forward.15} parent=31 // pred_check_branch
        %414 = sbr.rel (%p412) target = $region36
      $region35: #{pointpillar_forward.15} parent=31 // pred_region
        %s415 = smul.u32 4, %s14
      $region36: #{pointpillar_forward.15} parent=31 // pred_fallthru
        _
    $region32: #{pointpillar_forward.15} parent=5 // pred_fallthru
      _
    %p416 = scmp.le.s32.totalorder 2, %s9
    // Predicated region
    $region37: #{pointpillar_forward.15} parent=5 // pred_check
      %p417 = pneg %p416
    $region38: #{pointpillar_forward.15} parent=5 // pred_check_branch
      %419 = sbr.rel (%p417) target = $region40
    $region39: #{pointpillar_forward.15} parent=5 // pred_region
      %s420 = ssub.s32 %s9, 2
      // Predicated region
      $region41: #{pointpillar_forward.15} parent=39 // pred_check
        %p421 = pneg %p116
      $region42: #{pointpillar_forward.15} parent=39 // pred_check_branch
        %423 = sbr.rel (%p421) target = $region44
      $region43: #{pointpillar_forward.15} parent=39 // pred_region
        %s424 = smul.u32 4, %s15
        %p425 = scmp.lt.s32.totalorder %s424, 7
        %s426 = scalar_select %p425, %s424, 7
        %s427 = smul.addr %s426, 8
        %s428 = scalar_lea.vmem %s3, %s427
      $region44: #{pointpillar_forward.15} parent=39 // pred_fallthru
        _
    $region40: #{pointpillar_forward.15} parent=5 // pred_fallthru
      _
  $region6: #{pointpillar_forward.15} parent=0 // loop_footer
    %s13 = sadd.s32 1, %s9
  $region7: #{pointpillar_forward.15} parent=0 // loop_footer_branch
    %8 = sbr.rel target = $region3
  $region8: #{pointpillar_forward.15} parent=0 // loop_exit
    _

</llo_original>
